<compile_context>
chip_gen: v7x
topology: tpu7x:2x2x1
jax: 0.10.0
libtpu: 0.0.40
codegen_flags: <defaults>
</compile_context>

<pallas_src>
import functools
import math

import jax
import jax.numpy as jnp
import numpy as np
from jax.experimental import pallas as pl
from jax.experimental.pallas import tpu as pltpu

EPS = 1e-5       # PyTorch BatchNorm2d default eps
_ALIGN = 16      # sublane alignment for padded row groups (bf16 packing)


def _vmem_spec():
    return pl.BlockSpec(memory_space=pltpu.MemorySpace.VMEM)


def _round_up(x, m):
    return (x + m - 1) // m * m


@functools.lru_cache(maxsize=None)
def _vmem_limit():
    """Generation-aware scoped-VMEM budget (v7x: 64 MiB physical, v5e/v6e: 128 MiB)."""
    cap = 128 << 20
    try:
        cap = int(pltpu.get_tpu_info().vmem_capacity_bytes)
    except Exception:
        pass
    return max(16 << 20, min(int(cap * 0.45), 96 << 20))


# ---------------------------------------------------------------------------
# Shared in-kernel math: BN (batch stats, two-pass var) + MaxPool 2x2 + ReLU.
# ---------------------------------------------------------------------------

def _bn_relu_pool(y, gamma, beta, count, n_pad):
    """y: (4*Mp, C) f32 conv outputs, rows grouped by 2x2-pool position.

    Zero padding rows (n_pad of them, conv has no bias so they are exactly 0)
    contribute 0 to the sum; the two-pass variance subtracts their (0-mean)^2
    excess so the statistics match PyTorch BatchNorm exactly for even spatial
    sizes.  max(relu(.)) == relu(max(.)) lets us pool first, ReLU once.
    """
    rows = y.shape[0]
    mp = rows // 4
    mean = jnp.sum(y, axis=0, keepdims=True) / count
    centered = y - mean
    ss = jnp.sum(centered * centered, axis=0, keepdims=True)
    if n_pad:
        ss = ss - float(n_pad) * (mean * mean)
    var = ss / count
    inv = jax.lax.rsqrt(var + EPS)
    scale = gamma * inv
    shift = beta - mean * scale
    yn = y * scale + shift
    p0 = yn[0 * mp:1 * mp, :]
    p1 = yn[1 * mp:2 * mp, :]
    p2 = yn[2 * mp:3 * mp, :]
    p3 = yn[3 * mp:4 * mp, :]
    pooled = jnp.maximum(jnp.maximum(p0, p1), jnp.maximum(p2, p3))
    return jnp.maximum(pooled, 0.0)


# ---------------------------------------------------------------------------
# Whole-network fused kernel (canonical Net4CNN config): backbone + head.
# ---------------------------------------------------------------------------

def net4cnn_fused_kernel(*refs, num_layers, counts, pads, hidden):
    """refs = [a1, w_1..w_L, gammas, betas, g_2..g_L, cls_w, cls_b, feat, logit].

    a1      : (4*Mp1, 9*Cin) bf16 grouped im2col of the network input.
    w_l     : (9*C_in_l, hidden) bf16 conv weights.
    gammas  : (L, hidden) f32 ; betas: (L, hidden) f32.
    g_l     : (9, 4*m_l, m_{l-1}) bf16 0/1 gather matrices -- tap t row-gathers
              the previous layer's pooled output into this layer's grouped
              im2col operand (all-zero rows reproduce the conv zero padding).
    """
    L = num_layers
    a1_ref = refs[0]
    w_refs = refs[1:1 + L]
    gammas = refs[1 + L][...]
    betas = refs[2 + L][...]
    g_refs = refs[3 + L:3 + L + (L - 1)]
    clsw_ref = refs[2 + 2 * L]
    clsb_ref = refs[3 + 2 * L]
    feat_ref = refs[4 + 2 * L]
    logit_ref = refs[5 + 2 * L]

    # Layer 1: conv as one concatenated im2col matmul.
    y = jnp.dot(a1_ref[...], w_refs[0][...], preferred_element_type=jnp.float32)
    pooled = _bn_relu_pool(y, gammas[0:1, :], betas[0:1, :], counts[0], pads[0])

    # Layers 2..L: in-VMEM gather (exact bf16 copy via 0/1 matmul) + 9 tap matmuls.
    for l in range(1, L):
        g_ref = g_refs[l - 1]
        w = w_refs[l][...]                                   # (9*hidden, hidden)
        p_b = pooled.astype(jnp.bfloat16)
        y = None
        for t in range(9):
            gathered = jnp.dot(g_ref[t], p_b,
                               preferred_element_type=jnp.float32)
            gathered = gathered.astype(jnp.bfloat16)         # exact round-trip
            wt = w[t * hidden:(t + 1) * hidden, :]
            contrib = jnp.dot(gathered, wt, preferred_element_type=jnp.float32)
            y = contrib if y is None else y + contrib
        pooled = _bn_relu_pool(y, gammas[l:l + 1, :], betas[l:l + 1, :],
                               counts[l], pads[l])

    feat_ref[...] = pooled                                   # (N, hidden) f32
    logit_ref[...] = (jnp.dot(pooled.astype(jnp.bfloat16), clsw_ref[...],
                              preferred_element_type=jnp.float32)
                      + clsb_ref[...])


# ---------------------------------------------------------------------------
# Per-block kernels (fallback path / large shapes).
# ---------------------------------------------------------------------------

def conv_block_kernel(a_ref, w_ref, gamma_ref, beta_ref, out_ref, *, count, n_pad):
    y = jnp.dot(a_ref[...], w_ref[...], preferred_element_type=jnp.float32)
    out_ref[...] = _bn_relu_pool(y, gamma_ref[...], beta_ref[...], count, n_pad)


def conv_block_head_kernel(a_ref, w_ref, gamma_ref, beta_ref, cw_ref, cb_ref,
                           feat_ref, logit_ref, *, count, n_pad):
    """Final ConvBlock (1x1 spatial output) with the linear classifier folded in."""
    pooled = _bn_relu_pool(
        jnp.dot(a_ref[...], w_ref[...], preferred_element_type=jnp.float32),
        gamma_ref[...], beta_ref[...], count, n_pad)
    feat_ref[...] = pooled
    logit_ref[...] = (jnp.dot(pooled.astype(jnp.bfloat16), cw_ref[...],
                              preferred_element_type=jnp.float32) + cb_ref[...])


def conv_block_stats_kernel(a_ref, w_ref, gamma_ref, beta_ref,
                            pmax_ref, pmin_ref, scale_ref, shift_ref,
                            sum_ref, sumsq_ref, *, count):
    """Single pass over A: 4 matmuls, accumulate BN sum/sumsq, emit pooled
    MAX and MIN of the raw conv output.  scale/shift written at the last tile.
    (Streaming one-pass variance is kept here; the fused paths use two-pass.)"""
    t = pl.program_id(0)

    @pl.when(t == 0)
    def _():
        sum_ref[...] = jnp.zeros_like(sum_ref)
        sumsq_ref[...] = jnp.zeros_like(sumsq_ref)

    w = w_ref[...]
    ys = [jnp.dot(a_ref[p], w, preferred_element_type=jnp.float32)
          for p in range(4)]

    s = sq = None
    for yp in ys:
        rs = jnp.sum(yp, axis=0, keepdims=True)
        rq = jnp.sum(yp * yp, axis=0, keepdims=True)
        s = rs if s is None else s + rs
        sq = rq if sq is None else sq + rq
    sum_ref[...] += s
    sumsq_ref[...] += sq

    pmax_ref[...] = jnp.maximum(jnp.maximum(ys[0], ys[1]),
                                jnp.maximum(ys[2], ys[3]))
    pmin_ref[...] = jnp.minimum(jnp.minimum(ys[0], ys[1]),
                                jnp.minimum(ys[2], ys[3]))

    @pl.when(t == pl.num_programs(0) - 1)
    def _():
        mean = sum_ref[...] / count
        var = sumsq_ref[...] / count - mean * mean
        inv = jax.lax.rsqrt(var + EPS)
        sc = gamma_ref[...] * inv
        scale_ref[...] = sc
        shift_ref[...] = beta_ref[...] - mean * sc


def bn_pool_finalize_kernel(pmax_ref, pmin_ref, scale_ref, shift_ref, out_ref):
    """max(y*scale+shift) over the pool == (scale>=0 ? max(y) : min(y))*scale+shift."""
    sc = scale_ref[...]
    sh = shift_ref[...]
    pooled = jnp.where(sc >= 0.0, pmax_ref[...], pmin_ref[...]) * sc + sh
    out_ref[...] = jnp.maximum(pooled, 0.0)


def linear_kernel(x_ref, w_ref, b_ref, o_ref):
    """Fallback classifier (only when the final spatial size is not 1x1)."""
    o_ref[...] = (jnp.dot(x_ref[...].astype(jnp.bfloat16), w_ref[...],
                          preferred_element_type=jnp.float32) + b_ref[...])


# ---------------------------------------------------------------------------
# Glue (pure data rearrangement; XLA fuses the im2col producer via
# allow_input_fusion -- if it declines, the extra traffic is bounded and only
# affects the fallback paths).
# ---------------------------------------------------------------------------

def _im2col_grouped(x_nhwc, mp):
    """Four im2col matrices (one per 2x2-pool position), zero-padded to mp rows."""
    n, h, w, cin = x_nhwc.shape
    ho, wo = h // 2, w // 2
    m = n * ho * wo
    k9 = 9 * cin
    xp = jnp.pad(x_nhwc, ((0, 0), (1, 1), (1, 1), (0, 0)))

    def one(p, q):
        taps = []
        for dy in range(3):
            for dx in range(3):
                taps.append(xp[:, p + dy: p + dy + 2 * ho: 2,
                                  q + dx: q + dx + 2 * wo: 2, :])
        a = jnp.concatenate(taps, axis=-1).reshape(m, k9)
        if mp != m:
            a = jnp.pad(a, ((0, mp - m), (0, 0)))   # zero rows: exact for BN stats
        return a

    return [one(0, 0), one(0, 1), one(1, 0), one(1, 1)]


def _gather_mats(n, s, src_rows):
    """(9, 4*m_dst, src_rows) 0/1 matrices mapping a (src_rows, C) pooled
    activation with spatial s x s (rows (n, y, x) row-major) to the next
    layer's grouped im2col rows; out-of-bounds taps get all-zero rows."""
    so = s // 2
    m_dst = n * so * so
    g = np.zeros((9, 4 * m_dst, src_rows), np.float32)
    for t in range(9):
        dy, dx = t // 3, t % 3
        for grp in range(4):
            p, q = grp // 2, grp % 2
            for u in range(m_dst):
                nn = u // (so * so)
                rem = u % (so * so)
                io, jo = rem // so, rem % so
                yy = 2 * io + p + dy - 1
                xx = 2 * jo + q + dx - 1
                if 0 <= yy < s and 0 <= xx < s:
                    g[t, grp * m_dst + u, nn * s * s + yy * s + xx] = 1.0
    return g


def _pick_tile_m(mp, cap=512):
    tm = min(mp, cap)
    tm -= tm % _ALIGN
    tm = max(tm, _ALIGN)
    while mp % tm != 0:
        tm -= _ALIGN
    return tm


# ---------------------------------------------------------------------------
# Per-block wrapper (fallback path).
# ---------------------------------------------------------------------------

def conv_block(x_nhwc, w_hwio, gamma, beta, tile_m=None):
    """One ConvBlock: (N, H, W, Cin) -> (N, H//2, W//2, Cout)."""
    n, h, wdt, cin = x_nhwc.shape
    cout = w_hwio.shape[-1]
    ho, wo = h // 2, wdt // 2
    m = n * ho * wo
    mp = _round_up(m, _ALIGN)
    k9 = 9 * cin
    count = float(4 * m)
    n_pad = 4 * (mp - m)

    groups = _im2col_grouped(x_nhwc, mp)
    w_mat = w_hwio.reshape(k9, cout).astype(jnp.bfloat16)
    gamma2 = gamma.reshape(1, cout).astype(jnp.float32)
    beta2 = beta.reshape(1, cout).astype(jnp.float32)

    limit = _vmem_limit()
    fused_bytes = (4 * mp * k9) * 2 + (4 * mp * cout) * 8 + mp * cout * 4
    use_tiled = (tile_m is not None) or fused_bytes > limit // 2

    if not use_tiled:
        a2 = jnp.concatenate(groups, axis=0).astype(jnp.bfloat16)   # (4*Mp, 9*Cin)
        out = pl.pallas_call(
            functools.partial(conv_block_kernel, count=count, n_pad=n_pad),
            out_shape=jax.ShapeDtypeStruct((mp, cout), jnp.float32),
            in_specs=[_vmem_spec()] * 4,
            out_specs=_vmem_spec(),
            compiler_params=pltpu.CompilerParams(
                vmem_limit_bytes=limit,
                allow_input_fusion=[True] * 4),
        )(a2, w_mat, gamma2, beta2)
    else:
        a3 = jnp.stack(groups, axis=0).astype(jnp.bfloat16)         # (4, Mp, 9*Cin)
        tm = tile_m if tile_m is not None else _pick_tile_m(mp)
        assert tm % _ALIGN == 0 and mp % tm == 0, (tm, mp)
        grid_m = mp // tm
        # Pass 1: single read of A, matmuls once, stats + pooled max/min.
        pmax, pmin, scale, shift = pl.pallas_call(
            functools.partial(conv_block_stats_kernel, count=count),
            out_shape=(jax.ShapeDtypeStruct((mp, cout), jnp.float32),
                       jax.ShapeDtypeStruct((mp, cout), jnp.float32),
                       jax.ShapeDtypeStruct((1, cout), jnp.float32),
                       jax.ShapeDtypeStruct((1, cout), jnp.float32)),
            grid_spec=pltpu.PrefetchScalarGridSpec(
                num_scalar_prefetch=0,
                grid=(grid_m,),
                in_specs=[
                    pl.BlockSpec((4, tm, k9), lambda t: (0, t, 0)),
                    pl.BlockSpec((k9, cout), lambda t: (0, 0)),
                    pl.BlockSpec((1, cout), lambda t: (0, 0)),
                    pl.BlockSpec((1, cout), lambda t: (0, 0)),
                ],
                out_specs=(pl.BlockSpec((tm, cout), lambda t: (t, 0)),
                           pl.BlockSpec((tm, cout), lambda t: (t, 0)),
                           pl.BlockSpec((1, cout), lambda t: (0, 0)),
                           pl.BlockSpec((1, cout), lambda t: (0, 0))),
                scratch_shapes=[pltpu.VMEM((1, cout), jnp.float32)] * 2),
            compiler_params=pltpu.CompilerParams(
                vmem_limit_bytes=limit,
                dimension_semantics=("arbitrary",),
                allow_input_fusion=[True, False, False, False]),
        )(a3, w_mat, gamma2, beta2)
        # Pass 2: tiny elementwise finalize (parallel across M tiles).
        out = pl.pallas_call(
            bn_pool_finalize_kernel,
            out_shape=jax.ShapeDtypeStruct((mp, cout), jnp.float32),
            grid_spec=pltpu.PrefetchScalarGridSpec(
                num_scalar_prefetch=0,
                grid=(grid_m,),
                in_specs=[pl.BlockSpec((tm, cout), lambda t: (t, 0)),
                          pl.BlockSpec((tm, cout), lambda t: (t, 0)),
                          pl.BlockSpec((1, cout), lambda t: (0, 0)),
                          pl.BlockSpec((1, cout), lambda t: (0, 0))],
                out_specs=pl.BlockSpec((tm, cout), lambda t: (t, 0))),
            compiler_params=pltpu.CompilerParams(
                vmem_limit_bytes=limit,
                dimension_semantics=("parallel",)),
        )(pmax, pmin, scale, shift)

    return out[:m].reshape(n, ho, wo, cout)


def conv_block_with_head(x_nhwc, w_hwio, gamma, beta, cls_w, cls_b):
    """Final ConvBlock (spatial output 1x1) + linear classifier in one kernel."""
    n, h, wdt, cin = x_nhwc.shape
    cout = w_hwio.shape[-1]
    assert h // 2 == 1 and wdt // 2 == 1, "head fold requires 1x1 spatial output"
    m = n
    mp = _round_up(m, _ALIGN)
    k9 = 9 * cin
    nout = cls_w.shape[-1]
    count = float(4 * m)
    n_pad = 4 * (mp - m)

    groups = _im2col_grouped(x_nhwc, mp)
    a2 = jnp.concatenate(groups, axis=0).astype(jnp.bfloat16)
    w_mat = w_hwio.reshape(k9, cout).astype(jnp.bfloat16)
    gamma2 = gamma.reshape(1, cout).astype(jnp.float32)
    beta2 = beta.reshape(1, cout).astype(jnp.float32)

    feat, logit = pl.pallas_call(
        functools.partial(conv_block_head_kernel, count=count, n_pad=n_pad),
        out_shape=(jax.ShapeDtypeStruct((mp, cout), jnp.float32),
                   jax.ShapeDtypeStruct((mp, nout), jnp.float32)),
        in_specs=[_vmem_spec()] * 6,
        out_specs=(_vmem_spec(), _vmem_spec()),
        compiler_params=pltpu.CompilerParams(
            vmem_limit_bytes=_vmem_limit(),
            allow_input_fusion=[True] * 6),
    )(a2, w_mat, gamma2, beta2,
      cls_w.astype(jnp.bfloat16), cls_b.reshape(1, nout).astype(jnp.float32))
    return feat[:m], logit[:m]


# ---------------------------------------------------------------------------
# Forward: whole-net fused path + per-block fallback.
# ---------------------------------------------------------------------------

def _fused_whole_net_bytes(n, h, cin, hidden, layers):
    m1 = n * (h // 2) ** 2
    mp1 = _round_up(m1, _ALIGN)
    total = 4 * mp1 * 9 * cin * 2 + 4 * mp1 * hidden * 8
    total += layers * 9 * hidden * hidden * 2
    src = mp1
    s = h // 2
    for _ in range(1, layers):
        m_dst = n * (s // 2) ** 2
        total += 9 * 4 * m_dst * src * 2 + 4 * m_dst * hidden * 8
        src = m_dst
        s //= 2
    return total


def _forward_fused(params, x_nhwc):
    blocks = params["blocks"]
    L = len(blocks)
    n, h, _, cin = x_nhwc.shape
    hidden = blocks[0][0].shape[-1]
    out_dim = params["cls_w"].shape[-1]

    m1 = n * (h // 2) ** 2
    mp1 = _round_up(m1, _ALIGN)
    a1 = jnp.concatenate(_im2col_grouped(x_nhwc, mp1), axis=0).astype(jnp.bfloat16)

    w_mats, gammas, betas = [], [], []
    for (w, gamma, beta) in blocks:
        k = w.shape[0] * w.shape[1] * w.shape[2]
        w_mats.append(w.reshape(k, hidden).astype(jnp.bfloat16))
        gammas.append(gamma.astype(jnp.float32))
        betas.append(beta.astype(jnp.float32))
    gammas = jnp.stack(gammas)
    betas = jnp.stack(betas)

    g_mats = []
    counts = [float(4 * m1)]
    pads = [4 * (mp1 - m1)]
    src_rows = mp1
    s = h // 2
    for _ in range(1, L):
        g_mats.append(jnp.asarray(_gather_mats(n, s, src_rows), jnp.bfloat16))
        m_dst = n * (s // 2) ** 2
        counts.append(float(4 * m_dst))
        pads.append(0)
        src_rows = m_dst
        s //= 2

    cls_w = params["cls_w"].astype(jnp.bfloat16)
    cls_b = params["cls_b"].reshape(1, out_dim).astype(jnp.float32)

    inputs = [a1] + w_mats + [gammas, betas] + g_mats + [cls_w, cls_b]
    kernel = functools.partial(net4cnn_fused_kernel, num_layers=L,
                               counts=tuple(counts), pads=tuple(pads),
                               hidden=hidden)
    feat, logit = pl.pallas_call(
        kernel,
        out_shape=(jax.ShapeDtypeStruct((n, hidden), jnp.float32),
                   jax.ShapeDtypeStruct((n, out_dim), jnp.float32)),
        in_specs=[_vmem_spec()] * len(inputs),
        out_specs=(_vmem_spec(), _vmem_spec()),
        compiler_params=pltpu.CompilerParams(
            vmem_limit_bytes=_vmem_limit(),
            allow_input_fusion=[True] + [False] * (len(inputs) - 1)),
    )(*inputs)
    return feat, logit


def _forward_blocks(params, x_nhwc):
    blocks = params["blocks"]
    x = x_nhwc
    for (w, gamma, beta) in blocks[:-1]:
        x = conv_block(x, w, gamma, beta)
    w, gamma, beta = blocks[-1]
    n, h, wdt, _ = x.shape
    if h // 2 == 1 and wdt // 2 == 1:
        return conv_block_with_head(x, w, gamma, beta,
                                    params["cls_w"], params["cls_b"])
    x = conv_block(x, w, gamma, beta)
    nb, ho, wo, c = x.shape
    x1 = jnp.transpose(x, (0, 3, 1, 2)).reshape(nb, c * ho * wo)  # NCHW flatten
    o = params["cls_w"].shape[1]
    x2 = pl.pallas_call(
        linear_kernel,
        out_shape=jax.ShapeDtypeStruct((nb, o), jnp.float32),
        in_specs=[_vmem_spec()] * 3,
        out_specs=_vmem_spec(),
        compiler_params=pltpu.CompilerParams(vmem_limit_bytes=_vmem_limit()),
    )(x1, params["cls_w"].astype(jnp.bfloat16),
      params["cls_b"].reshape(1, o).astype(jnp.float32))
    return x1, x2


def net4cnn_forward(params, x_nchw):
    """Returns (x1, x2) = (flattened backbone features, classifier logits)."""
    x = jnp.transpose(x_nchw, (0, 2, 3, 1))                  # NCHW -> NHWC
    blocks = params["blocks"]
    L = len(blocks)
    n, h, wdt, cin = x.shape
    hidden = blocks[0][0].shape[-1]

    s = h
    fused_ok = (h == wdt)
    for _ in range(L):
        fused_ok = fused_ok and (s % 2 == 0)
        s //= 2
    fused_ok = fused_ok and (s == 1)      # final 1x1 -> classifier fold is exact
    if fused_ok:
        fused_ok = _fused_whole_net_bytes(n, h, cin, hidden, L) < _vmem_limit() // 2
    # TODO(synk): for odd intermediate spatial sizes PyTorch BN normalizes over
    # all conv pixels (not only pool-covered ones); such shapes take the
    # per-block path which has the same limitation (even sizes are exact).
    if fused_ok:
        return _forward_fused(params, x)
    return _forward_blocks(params, x)


# ---------------------------------------------------------------------------
# Parameters / pure-JAX reference.
# ---------------------------------------------------------------------------

def init_params(key, hidden, channels, layers, embedding, output):
    """PyTorch init: xavier_uniform conv/linear weights, U(0,1) BN gamma, zero
    BN beta / biases.  The zero conv bias is omitted: exactly absorbed by
    batch-statistic BatchNorm."""
    params = {"blocks": []}
    cin = channels
    for _ in range(layers):
        key, kw, kg = jax.random.split(key, 3)
        bound = math.sqrt(6.0 / (cin * 9 + hidden * 9))
        w = jax.random.uniform(kw, (3, 3, cin, hidden), jnp.float32, -bound, bound)
        gamma = jax.random.uniform(kg, (hidden,), jnp.float32, 0.0, 1.0)
        beta = jnp.zeros((hidden,), jnp.float32)
        params["blocks"].append((w, gamma, beta))
        cin = hidden
    key, kw = jax.random.split(key)
    bound = math.sqrt(6.0 / (embedding + output))
    params["cls_w"] = jax.random.uniform(kw, (embedding, output),
                                         jnp.float32, -bound, bound)
    params["cls_b"] = jnp.zeros((output,), jnp.float32)
    return params


def net4cnn_forward_ref(params, x_nchw):
    """Pure-JAX reference (same bf16 matmul-operand precision, f32 elsewhere)."""
    x = jnp.transpose(x_nchw, (0, 2, 3, 1))
    for (w, gamma, beta) in params["blocks"]:
        y = jax.lax.conv_general_dilated(
            x.astype(jnp.bfloat16), w.astype(jnp.bfloat16),
            window_strides=(1, 1), padding=((1, 1), (1, 1)),
            dimension_numbers=("NHWC", "HWIO", "NHWC"),
            preferred_element_type=jnp.float32)
        mean = jnp.mean(y, axis=(0, 1, 2))
        var = jnp.var(y, axis=(0, 1, 2))
        yn = (y - mean) * jax.lax.rsqrt(var + EPS) * gamma + beta
        yn = jnp.maximum(yn, 0.0)
        nb, hh, ww, c = yn.shape
        x = jnp.max(yn.reshape(nb, hh // 2, 2, ww // 2, 2, c), axis=(2, 4))
    nb, ho, wo, c = x.shape
    x1 = jnp.transpose(x, (0, 3, 1, 2)).reshape(nb, c * ho * wo)
    x2 = jnp.dot(x1.astype(jnp.bfloat16), params["cls_w"].astype(jnp.bfloat16),
                 preferred_element_type=jnp.float32) + params["cls_b"]
    return x1, x2


if __name__ == "__main__":
    # Net4CNN(output_size=5, hidden_size=32, layers=4, channels=3, embedding_size=32)
    hidden, channels, layers, output = 32, 3, 4, 5
    n, hw = 2, 16
    embedding = hidden * (hw // (2 ** layers)) ** 2          # 32 * 1 * 1 = 32

    key = jax.random.PRNGKey(0)
    kp, kx = jax.random.split(key)
    params = init_params(kp, hidden, channels, layers, embedding, output)
    x = jax.random.normal(kx, (n, channels, hw, hw), jnp.float32)

    # Whole-network fused path (one pallas_call for backbone + head).
    fwd = jax.jit(functools.partial(net4cnn_forward, params))
    x1, x2 = fwd(x)
    jax.block_until_ready((x1, x2))
    assert x1.shape == (n, embedding), x1.shape
    assert x2.shape == (n, output), x2.shape
    assert bool(jnp.all(jnp.isfinite(x1))) and bool(jnp.all(jnp.isfinite(x2)))

    # Cross-check against a pure-JAX reference with matching matmul precision.
    r1, r2 = jax.jit(functools.partial(net4cnn_forward_ref, params))(x)
    assert jnp.allclose(x1, r1, rtol=2e-2, atol=2e-2), float(jnp.max(jnp.abs(x1 - r1)))
    assert jnp.allclose(x2, r2, rtol=2e-2, atol=2e-2), float(jnp.max(jnp.abs(x2 - r2)))

    # Per-block fallback path (exercises conv_block + folded-head kernels).
    x_nhwc = jnp.transpose(x, (0, 2, 3, 1))
    b1, b2 = jax.jit(functools.partial(_forward_blocks, params))(x_nhwc)
    jax.block_until_ready((b1, b2))
    assert jnp.allclose(x1, b1, rtol=5e-3, atol=5e-3), float(jnp.max(jnp.abs(x1 - b1)))
    assert jnp.allclose(x2, b2, rtol=5e-3, atol=5e-3), float(jnp.max(jnp.abs(x2 - b2)))

    # Exercise the single-pass M-tiled path (used for large / v7x shapes) and
    # check it against the fused single-tile path on the first layer.
    w0p, g0, bt0 = params["blocks"][0]
    y_fused = jax.jit(conv_block)(x_nhwc, w0p, g0, bt0)
    y_tiled = jax.jit(functools.partial(conv_block, tile_m=32))(x_nhwc, w0p, g0, bt0)
    jax.block_until_ready((y_fused, y_tiled))
    assert jnp.allclose(y_fused, y_tiled, rtol=5e-3, atol=5e-3), \
        float(jnp.max(jnp.abs(y_fused - y_tiled)))

    # TODO(synk): BatchNorm running-mean/var updates (training-mode side effect)
    # are not materialized; they do not affect the forward outputs.
    print("KERNEL_OK")
</pallas_src>

<mosaic_0001>
module attributes {stable_mosaic.version = 11 : i64} {
  func.func @net4cnn_fused_kernel(%arg0: memref<512x27xbf16, #tpu.memory_space<vmem>>, %arg1: memref<27x32xbf16, #tpu.memory_space<vmem>>, %arg2: memref<288x32xbf16, #tpu.memory_space<vmem>>, %arg3: memref<288x32xbf16, #tpu.memory_space<vmem>>, %arg4: memref<288x32xbf16, #tpu.memory_space<vmem>>, %arg5: memref<4x32xf32, #tpu.memory_space<vmem>>, %arg6: memref<4x32xf32, #tpu.memory_space<vmem>>, %arg7: memref<9x128x128xbf16, #tpu.memory_space<vmem>>, %arg8: memref<9x32x32xbf16, #tpu.memory_space<vmem>>, %arg9: memref<9x8x8xbf16, #tpu.memory_space<vmem>>, %arg10: memref<32x5xbf16, #tpu.memory_space<vmem>>, %arg11: memref<1x5xf32, #tpu.memory_space<vmem>>, %arg12: memref<2x32xf32, #tpu.memory_space<vmem>>, %arg13: memref<2x5xf32, #tpu.memory_space<vmem>>) attributes {dimension_semantics = [], scalar_prefetch = 0 : i64, scratch_operands = 0 : i64, tpu.core_type = #tpu.core_type<tc>} {
    %c0 = arith.constant 0 : index
    %c0_0 = arith.constant 0 : index
    %0 = vector.load %arg5[%c0, %c0_0] : memref<4x32xf32, #tpu.memory_space<vmem>>, vector<4x32xf32>
    %c0_1 = arith.constant 0 : index
    %c0_2 = arith.constant 0 : index
    %1 = vector.load %arg6[%c0_1, %c0_2] : memref<4x32xf32, #tpu.memory_space<vmem>>, vector<4x32xf32>
    %c0_3 = arith.constant 0 : index
    %c0_4 = arith.constant 0 : index
    %2 = vector.load %arg0[%c0_3, %c0_4] : memref<512x27xbf16, #tpu.memory_space<vmem>>, vector<512x27xbf16>
    %c0_5 = arith.constant 0 : index
    %c0_6 = arith.constant 0 : index
    %3 = vector.load %arg1[%c0_5, %c0_6] : memref<27x32xbf16, #tpu.memory_space<vmem>>, vector<27x32xbf16>
    %cst = arith.constant dense<0.000000e+00> : vector<512x32xf32>
    %4 = tpu.matmul %2, %3, %cst {dimension_numbers = #tpu.dot_dimension_numbers<[1], [0], [0], [1], [0, 0, 1, 1], [], []>} : vector<512x27xbf16>, vector<27x32xbf16>, vector<512x32xf32> -> vector<512x32xf32>
    %5 = vector.extract_strided_slice %0 {offsets = [0, 0], sizes = [1, 32], strides = [1, 1]} : vector<4x32xf32> to vector<1x32xf32>
    %6 = vector.extract_strided_slice %1 {offsets = [0, 0], sizes = [1, 32], strides = [1, 1]} : vector<4x32xf32> to vector<1x32xf32>
    %cst_7 = arith.constant dense<0.000000e+00> : vector<32xf32>
    %7 = vector.multi_reduction <add>, %4, %cst_7 [0] : vector<512x32xf32> to vector<32xf32>
    %8 = vector.shape_cast %7 : vector<32xf32> to vector<1x32xf32>
    %cst_8 = arith.constant 5.120000e+02 : f32
    %9 = vector.broadcast %cst_8 : f32 to vector<1x32xf32>
    %10 = arith.divf %8, %9 : vector<1x32xf32>
    %11 = vector.broadcast %10 : vector<1x32xf32> to vector<512x32xf32>
    %12 = arith.subf %4, %11 : vector<512x32xf32>
    %13 = arith.mulf %12, %12 : vector<512x32xf32>
    %cst_9 = arith.constant dense<0.000000e+00> : vector<32xf32>
    %14 = vector.multi_reduction <add>, %13, %cst_9 [0] : vector<512x32xf32> to vector<32xf32>
    %15 = vector.shape_cast %14 : vector<32xf32> to vector<1x32xf32>
    %cst_10 = arith.constant 5.120000e+02 : f32
    %16 = vector.broadcast %cst_10 : f32 to vector<1x32xf32>
    %17 = arith.divf %15, %16 : vector<1x32xf32>
    %cst_11 = arith.constant 9.99999974E-6 : f32
    %18 = vector.broadcast %cst_11 : f32 to vector<1x32xf32>
    %19 = arith.addf %17, %18 : vector<1x32xf32>
    %20 = math.rsqrt %19 : vector<1x32xf32>
    %21 = arith.mulf %5, %20 : vector<1x32xf32>
    %22 = arith.mulf %10, %21 : vector<1x32xf32>
    %23 = arith.subf %6, %22 : vector<1x32xf32>
    %24 = vector.broadcast %21 : vector<1x32xf32> to vector<512x32xf32>
    %25 = arith.mulf %4, %24 : vector<512x32xf32>
    %26 = vector.broadcast %23 : vector<1x32xf32> to vector<512x32xf32>
    %27 = arith.addf %25, %26 : vector<512x32xf32>
    %28 = vector.extract_strided_slice %27 {offsets = [0, 0], sizes = [128, 32], strides = [1, 1]} : vector<512x32xf32> to vector<128x32xf32>
    %29 = vector.extract_strided_slice %27 {offsets = [128, 0], sizes = [128, 32], strides = [1, 1]} : vector<512x32xf32> to vector<128x32xf32>
    %30 = vector.extract_strided_slice %27 {offsets = [256, 0], sizes = [128, 32], strides = [1, 1]} : vector<512x32xf32> to vector<128x32xf32>
    %31 = vector.extract_strided_slice %27 {offsets = [384, 0], sizes = [128, 32], strides = [1, 1]} : vector<512x32xf32> to vector<128x32xf32>
    %32 = arith.maximumf %28, %29 : vector<128x32xf32>
    %33 = arith.maximumf %30, %31 : vector<128x32xf32>
    %34 = arith.maximumf %32, %33 : vector<128x32xf32>
    %cst_12 = arith.constant 0.000000e+00 : f32
    %35 = vector.broadcast %cst_12 : f32 to vector<128x32xf32>
    %36 = arith.maximumf %34, %35 : vector<128x32xf32>
    %c0_13 = arith.constant 0 : index
    %c0_14 = arith.constant 0 : index
    %37 = vector.load %arg2[%c0_13, %c0_14] : memref<288x32xbf16, #tpu.memory_space<vmem>>, vector<288x32xbf16>
    %38 = arith.truncf %36 : vector<128x32xf32> to vector<128x32xbf16>
    %c0_15 = arith.constant 0 : index
    %c0_16 = arith.constant 0 : index
    %c0_17 = arith.constant 0 : index
    %39 = vector.load %arg7[%c0_15, %c0_16, %c0_17] : memref<9x128x128xbf16, #tpu.memory_space<vmem>>, vector<1x128x128xbf16>
    %40 = vector.shape_cast %39 : vector<1x128x128xbf16> to vector<128x128xbf16>
    %cst_18 = arith.constant dense<0.000000e+00> : vector<128x32xf32>
    %41 = tpu.matmul %40, %38, %cst_18 {dimension_numbers = #tpu.dot_dimension_numbers<[1], [0], [0], [1], [0, 0, 1, 1], [], []>} : vector<128x128xbf16>, vector<128x32xbf16>, vector<128x32xf32> -> vector<128x32xf32>
    %42 = arith.truncf %41 : vector<128x32xf32> to vector<128x32xbf16>
    %43 = vector.extract_strided_slice %37 {offsets = [0, 0], sizes = [32, 32], strides = [1, 1]} : vector<288x32xbf16> to vector<32x32xbf16>
    %cst_19 = arith.constant dense<0.000000e+00> : vector<128x32xf32>
    %44 = tpu.matmul %42, %43, %cst_19 {dimension_numbers = #tpu.dot_dimension_numbers<[1], [0], [0], [1], [0, 0, 1, 1], [], []>} : vector<128x32xbf16>, vector<32x32xbf16>, vector<128x32xf32> -> vector<128x32xf32>
    %c1 = arith.constant 1 : index
    %c0_20 = arith.constant 0 : index
    %c0_21 = arith.constant 0 : index
    %45 = vector.load %arg7[%c1, %c0_20, %c0_21] : memref<9x128x128xbf16, #tpu.memory_space<vmem>>, vector<1x128x128xbf16>
    %46 = vector.shape_cast %45 : vector<1x128x128xbf16> to vector<128x128xbf16>
    %cst_22 = arith.constant dense<0.000000e+00> : vector<128x32xf32>
    %47 = tpu.matmul %46, %38, %cst_22 {dimension_numbers = #tpu.dot_dimension_numbers<[1], [0], [0], [1], [0, 0, 1, 1], [], []>} : vector<128x128xbf16>, vector<128x32xbf16>, vector<128x32xf32> -> vector<128x32xf32>
    %48 = arith.truncf %47 : vector<128x32xf32> to vector<128x32xbf16>
    %49 = vector.extract_strided_slice %37 {offsets = [32, 0], sizes = [32, 32], strides = [1, 1]} : vector<288x32xbf16> to vector<32x32xbf16>
    %cst_23 = arith.constant dense<0.000000e+00> : vector<128x32xf32>
    %50 = tpu.matmul %48, %49, %cst_23 {dimension_numbers = #tpu.dot_dimension_numbers<[1], [0], [0], [1], [0, 0, 1, 1], [], []>} : vector<128x32xbf16>, vector<32x32xbf16>, vector<128x32xf32> -> vector<128x32xf32>
    %51 = arith.addf %44, %50 : vector<128x32xf32>
    %c2 = arith.constant 2 : index
    %c0_24 = arith.constant 0 : index
    %c0_25 = arith.constant 0 : index
    %52 = vector.load %arg7[%c2, %c0_24, %c0_25] : memref<9x128x128xbf16, #tpu.memory_space<vmem>>, vector<1x128x128xbf16>
    %53 = vector.shape_cast %52 : vector<1x128x128xbf16> to vector<128x128xbf16>
    %cst_26 = arith.constant dense<0.000000e+00> : vector<128x32xf32>
    %54 = tpu.matmul %53, %38, %cst_26 {dimension_numbers = #tpu.dot_dimension_numbers<[1], [0], [0], [1], [0, 0, 1, 1], [], []>} : vector<128x128xbf16>, vector<128x32xbf16>, vector<128x32xf32> -> vector<128x32xf32>
    %55 = arith.truncf %54 : vector<128x32xf32> to vector<128x32xbf16>
    %56 = vector.extract_strided_slice %37 {offsets = [64, 0], sizes = [32, 32], strides = [1, 1]} : vector<288x32xbf16> to vector<32x32xbf16>
    %cst_27 = arith.constant dense<0.000000e+00> : vector<128x32xf32>
    %57 = tpu.matmul %55, %56, %cst_27 {dimension_numbers = #tpu.dot_dimension_numbers<[1], [0], [0], [1], [0, 0, 1, 1], [], []>} : vector<128x32xbf16>, vector<32x32xbf16>, vector<128x32xf32> -> vector<128x32xf32>
    %58 = arith.addf %51, %57 : vector<128x32xf32>
    %c3 = arith.constant 3 : index
    %c0_28 = arith.constant 0 : index
    %c0_29 = arith.constant 0 : index
    %59 = vector.load %arg7[%c3, %c0_28, %c0_29] : memref<9x128x128xbf16, #tpu.memory_space<vmem>>, vector<1x128x128xbf16>
    %60 = vector.shape_cast %59 : vector<1x128x128xbf16> to vector<128x128xbf16>
    %cst_30 = arith.constant dense<0.000000e+00> : vector<128x32xf32>
    %61 = tpu.matmul %60, %38, %cst_30 {dimension_numbers = #tpu.dot_dimension_numbers<[1], [0], [0], [1], [0, 0, 1, 1], [], []>} : vector<128x128xbf16>, vector<128x32xbf16>, vector<128x32xf32> -> vector<128x32xf32>
    %62 = arith.truncf %61 : vector<128x32xf32> to vector<128x32xbf16>
    %63 = vector.extract_strided_slice %37 {offsets = [96, 0], sizes = [32, 32], strides = [1, 1]} : vector<288x32xbf16> to vector<32x32xbf16>
    %cst_31 = arith.constant dense<0.000000e+00> : vector<128x32xf32>
    %64 = tpu.matmul %62, %63, %cst_31 {dimension_numbers = #tpu.dot_dimension_numbers<[1], [0], [0], [1], [0, 0, 1, 1], [], []>} : vector<128x32xbf16>, vector<32x32xbf16>, vector<128x32xf32> -> vector<128x32xf32>
    %65 = arith.addf %58, %64 : vector<128x32xf32>
    %c4 = arith.constant 4 : index
    %c0_32 = arith.constant 0 : index
    %c0_33 = arith.constant 0 : index
    %66 = vector.load %arg7[%c4, %c0_32, %c0_33] : memref<9x128x128xbf16, #tpu.memory_space<vmem>>, vector<1x128x128xbf16>
    %67 = vector.shape_cast %66 : vector<1x128x128xbf16> to vector<128x128xbf16>
    %cst_34 = arith.constant dense<0.000000e+00> : vector<128x32xf32>
    %68 = tpu.matmul %67, %38, %cst_34 {dimension_numbers = #tpu.dot_dimension_numbers<[1], [0], [0], [1], [0, 0, 1, 1], [], []>} : vector<128x128xbf16>, vector<128x32xbf16>, vector<128x32xf32> -> vector<128x32xf32>
    %69 = arith.truncf %68 : vector<128x32xf32> to vector<128x32xbf16>
    %70 = vector.extract_strided_slice %37 {offsets = [128, 0], sizes = [32, 32], strides = [1, 1]} : vector<288x32xbf16> to vector<32x32xbf16>
    %cst_35 = arith.constant dense<0.000000e+00> : vector<128x32xf32>
    %71 = tpu.matmul %69, %70, %cst_35 {dimension_numbers = #tpu.dot_dimension_numbers<[1], [0], [0], [1], [0, 0, 1, 1], [], []>} : vector<128x32xbf16>, vector<32x32xbf16>, vector<128x32xf32> -> vector<128x32xf32>
    %72 = arith.addf %65, %71 : vector<128x32xf32>
    %c5 = arith.constant 5 : index
    %c0_36 = arith.constant 0 : index
    %c0_37 = arith.constant 0 : index
    %73 = vector.load %arg7[%c5, %c0_36, %c0_37] : memref<9x128x128xbf16, #tpu.memory_space<vmem>>, vector<1x128x128xbf16>
    %74 = vector.shape_cast %73 : vector<1x128x128xbf16> to vector<128x128xbf16>
    %cst_38 = arith.constant dense<0.000000e+00> : vector<128x32xf32>
    %75 = tpu.matmul %74, %38, %cst_38 {dimension_numbers = #tpu.dot_dimension_numbers<[1], [0], [0], [1], [0, 0, 1, 1], [], []>} : vector<128x128xbf16>, vector<128x32xbf16>, vector<128x32xf32> -> vector<128x32xf32>
    %76 = arith.truncf %75 : vector<128x32xf32> to vector<128x32xbf16>
    %77 = vector.extract_strided_slice %37 {offsets = [160, 0], sizes = [32, 32], strides = [1, 1]} : vector<288x32xbf16> to vector<32x32xbf16>
    %cst_39 = arith.constant dense<0.000000e+00> : vector<128x32xf32>
    %78 = tpu.matmul %76, %77, %cst_39 {dimension_numbers = #tpu.dot_dimension_numbers<[1], [0], [0], [1], [0, 0, 1, 1], [], []>} : vector<128x32xbf16>, vector<32x32xbf16>, vector<128x32xf32> -> vector<128x32xf32>
    %79 = arith.addf %72, %78 : vector<128x32xf32>
    %c6 = arith.constant 6 : index
    %c0_40 = arith.constant 0 : index
    %c0_41 = arith.constant 0 : index
    %80 = vector.load %arg7[%c6, %c0_40, %c0_41] : memref<9x128x128xbf16, #tpu.memory_space<vmem>>, vector<1x128x128xbf16>
    %81 = vector.shape_cast %80 : vector<1x128x128xbf16> to vector<128x128xbf16>
    %cst_42 = arith.constant dense<0.000000e+00> : vector<128x32xf32>
    %82 = tpu.matmul %81, %38, %cst_42 {dimension_numbers = #tpu.dot_dimension_numbers<[1], [0], [0], [1], [0, 0, 1, 1], [], []>} : vector<128x128xbf16>, vector<128x32xbf16>, vector<128x32xf32> -> vector<128x32xf32>
    %83 = arith.truncf %82 : vector<128x32xf32> to vector<128x32xbf16>
    %84 = vector.extract_strided_slice %37 {offsets = [192, 0], sizes = [32, 32], strides = [1, 1]} : vector<288x32xbf16> to vector<32x32xbf16>
    %cst_43 = arith.constant dense<0.000000e+00> : vector<128x32xf32>
    %85 = tpu.matmul %83, %84, %cst_43 {dimension_numbers = #tpu.dot_dimension_numbers<[1], [0], [0], [1], [0, 0, 1, 1], [], []>} : vector<128x32xbf16>, vector<32x32xbf16>, vector<128x32xf32> -> vector<128x32xf32>
    %86 = arith.addf %79, %85 : vector<128x32xf32>
    %c7 = arith.constant 7 : index
    %c0_44 = arith.constant 0 : index
    %c0_45 = arith.constant 0 : index
    %87 = vector.load %arg7[%c7, %c0_44, %c0_45] : memref<9x128x128xbf16, #tpu.memory_space<vmem>>, vector<1x128x128xbf16>
    %88 = vector.shape_cast %87 : vector<1x128x128xbf16> to vector<128x128xbf16>
    %cst_46 = arith.constant dense<0.000000e+00> : vector<128x32xf32>
    %89 = tpu.matmul %88, %38, %cst_46 {dimension_numbers = #tpu.dot_dimension_numbers<[1], [0], [0], [1], [0, 0, 1, 1], [], []>} : vector<128x128xbf16>, vector<128x32xbf16>, vector<128x32xf32> -> vector<128x32xf32>
    %90 = arith.truncf %89 : vector<128x32xf32> to vector<128x32xbf16>
    %91 = vector.extract_strided_slice %37 {offsets = [224, 0], sizes = [32, 32], strides = [1, 1]} : vector<288x32xbf16> to vector<32x32xbf16>
    %cst_47 = arith.constant dense<0.000000e+00> : vector<128x32xf32>
    %92 = tpu.matmul %90, %91, %cst_47 {dimension_numbers = #tpu.dot_dimension_numbers<[1], [0], [0], [1], [0, 0, 1, 1], [], []>} : vector<128x32xbf16>, vector<32x32xbf16>, vector<128x32xf32> -> vector<128x32xf32>
    %93 = arith.addf %86, %92 : vector<128x32xf32>
    %c8 = arith.constant 8 : index
    %c0_48 = arith.constant 0 : index
    %c0_49 = arith.constant 0 : index
    %94 = vector.load %arg7[%c8, %c0_48, %c0_49] : memref<9x128x128xbf16, #tpu.memory_space<vmem>>, vector<1x128x128xbf16>
    %95 = vector.shape_cast %94 : vector<1x128x128xbf16> to vector<128x128xbf16>
    %cst_50 = arith.constant dense<0.000000e+00> : vector<128x32xf32>
    %96 = tpu.matmul %95, %38, %cst_50 {dimension_numbers = #tpu.dot_dimension_numbers<[1], [0], [0], [1], [0, 0, 1, 1], [], []>} : vector<128x128xbf16>, vector<128x32xbf16>, vector<128x32xf32> -> vector<128x32xf32>
    %97 = arith.truncf %96 : vector<128x32xf32> to vector<128x32xbf16>
    %98 = vector.extract_strided_slice %37 {offsets = [256, 0], sizes = [32, 32], strides = [1, 1]} : vector<288x32xbf16> to vector<32x32xbf16>
    %cst_51 = arith.constant dense<0.000000e+00> : vector<128x32xf32>
    %99 = tpu.matmul %97, %98, %cst_51 {dimension_numbers = #tpu.dot_dimension_numbers<[1], [0], [0], [1], [0, 0, 1, 1], [], []>} : vector<128x32xbf16>, vector<32x32xbf16>, vector<128x32xf32> -> vector<128x32xf32>
    %100 = arith.addf %93, %99 : vector<128x32xf32>
    %101 = vector.extract_strided_slice %0 {offsets = [1, 0], sizes = [1, 32], strides = [1, 1]} : vector<4x32xf32> to vector<1x32xf32>
    %102 = vector.extract_strided_slice %1 {offsets = [1, 0], sizes = [1, 32], strides = [1, 1]} : vector<4x32xf32> to vector<1x32xf32>
    %cst_52 = arith.constant dense<0.000000e+00> : vector<32xf32>
    %103 = vector.multi_reduction <add>, %100, %cst_52 [0] : vector<128x32xf32> to vector<32xf32>
    %104 = vector.shape_cast %103 : vector<32xf32> to vector<1x32xf32>
    %cst_53 = arith.constant 1.280000e+02 : f32
    %105 = vector.broadcast %cst_53 : f32 to vector<1x32xf32>
    %106 = arith.divf %104, %105 : vector<1x32xf32>
    %107 = vector.broadcast %106 : vector<1x32xf32> to vector<128x32xf32>
    %108 = arith.subf %100, %107 : vector<128x32xf32>
    %109 = arith.mulf %108, %108 : vector<128x32xf32>
    %cst_54 = arith.constant dense<0.000000e+00> : vector<32xf32>
    %110 = vector.multi_reduction <add>, %109, %cst_54 [0] : vector<128x32xf32> to vector<32xf32>
    %111 = vector.shape_cast %110 : vector<32xf32> to vector<1x32xf32>
    %cst_55 = arith.constant 1.280000e+02 : f32
    %112 = vector.broadcast %cst_55 : f32 to vector<1x32xf32>
    %113 = arith.divf %111, %112 : vector<1x32xf32>
    %cst_56 = arith.constant 9.99999974E-6 : f32
    %114 = vector.broadcast %cst_56 : f32 to vector<1x32xf32>
    %115 = arith.addf %113, %114 : vector<1x32xf32>
    %116 = math.rsqrt %115 : vector<1x32xf32>
    %117 = arith.mulf %101, %116 : vector<1x32xf32>
    %118 = arith.mulf %106, %117 : vector<1x32xf32>
    %119 = arith.subf %102, %118 : vector<1x32xf32>
    %120 = vector.broadcast %117 : vector<1x32xf32> to vector<128x32xf32>
    %121 = arith.mulf %100, %120 : vector<128x32xf32>
    %122 = vector.broadcast %119 : vector<1x32xf32> to vector<128x32xf32>
    %123 = arith.addf %121, %122 : vector<128x32xf32>
    %124 = vector.extract_strided_slice %123 {offsets = [0, 0], sizes = [32, 32], strides = [1, 1]} : vector<128x32xf32> to vector<32x32xf32>
    %125 = vector.extract_strided_slice %123 {offsets = [32, 0], sizes = [32, 32], strides = [1, 1]} : vector<128x32xf32> to vector<32x32xf32>
    %126 = vector.extract_strided_slice %123 {offsets = [64, 0], sizes = [32, 32], strides = [1, 1]} : vector<128x32xf32> to vector<32x32xf32>
    %127 = vector.extract_strided_slice %123 {offsets = [96, 0], sizes = [32, 32], strides = [1, 1]} : vector<128x32xf32> to vector<32x32xf32>
    %128 = arith.maximumf %124, %125 : vector<32x32xf32>
    %129 = arith.maximumf %126, %127 : vector<32x32xf32>
    %130 = arith.maximumf %128, %129 : vector<32x32xf32>
    %cst_57 = arith.constant 0.000000e+00 : f32
    %131 = vector.broadcast %cst_57 : f32 to vector<32x32xf32>
    %132 = arith.maximumf %130, %131 : vector<32x32xf32>
    %c0_58 = arith.constant 0 : index
    %c0_59 = arith.constant 0 : index
    %133 = vector.load %arg3[%c0_58, %c0_59] : memref<288x32xbf16, #tpu.memory_space<vmem>>, vector<288x32xbf16>
    %134 = arith.truncf %132 : vector<32x32xf32> to vector<32x32xbf16>
    %c0_60 = arith.constant 0 : index
    %c0_61 = arith.constant 0 : index
    %c0_62 = arith.constant 0 : index
    %135 = vector.load %arg8[%c0_60, %c0_61, %c0_62] : memref<9x32x32xbf16, #tpu.memory_space<vmem>>, vector<1x32x32xbf16>
    %136 = vector.shape_cast %135 : vector<1x32x32xbf16> to vector<32x32xbf16>
    %cst_63 = arith.constant dense<0.000000e+00> : vector<32x32xf32>
    %137 = tpu.matmul %136, %134, %cst_63 {dimension_numbers = #tpu.dot_dimension_numbers<[1], [0], [0], [1], [0, 0, 1, 1], [], []>} : vector<32x32xbf16>, vector<32x32xbf16>, vector<32x32xf32> -> vector<32x32xf32>
    %138 = arith.truncf %137 : vector<32x32xf32> to vector<32x32xbf16>
    %139 = vector.extract_strided_slice %133 {offsets = [0, 0], sizes = [32, 32], strides = [1, 1]} : vector<288x32xbf16> to vector<32x32xbf16>
    %cst_64 = arith.constant dense<0.000000e+00> : vector<32x32xf32>
    %140 = tpu.matmul %138, %139, %cst_64 {dimension_numbers = #tpu.dot_dimension_numbers<[1], [0], [0], [1], [0, 0, 1, 1], [], []>} : vector<32x32xbf16>, vector<32x32xbf16>, vector<32x32xf32> -> vector<32x32xf32>
    %c1_65 = arith.constant 1 : index
    %c0_66 = arith.constant 0 : index
    %c0_67 = arith.constant 0 : index
    %141 = vector.load %arg8[%c1_65, %c0_66, %c0_67] : memref<9x32x32xbf16, #tpu.memory_space<vmem>>, vector<1x32x32xbf16>
    %142 = vector.shape_cast %141 : vector<1x32x32xbf16> to vector<32x32xbf16>
    %cst_68 = arith.constant dense<0.000000e+00> : vector<32x32xf32>
    %143 = tpu.matmul %142, %134, %cst_68 {dimension_numbers = #tpu.dot_dimension_numbers<[1], [0], [0], [1], [0, 0, 1, 1], [], []>} : vector<32x32xbf16>, vector<32x32xbf16>, vector<32x32xf32> -> vector<32x32xf32>
    %144 = arith.truncf %143 : vector<32x32xf32> to vector<32x32xbf16>
    %145 = vector.extract_strided_slice %133 {offsets = [32, 0], sizes = [32, 32], strides = [1, 1]} : vector<288x32xbf16> to vector<32x32xbf16>
    %cst_69 = arith.constant dense<0.000000e+00> : vector<32x32xf32>
    %146 = tpu.matmul %144, %145, %cst_69 {dimension_numbers = #tpu.dot_dimension_numbers<[1], [0], [0], [1], [0, 0, 1, 1], [], []>} : vector<32x32xbf16>, vector<32x32xbf16>, vector<32x32xf32> -> vector<32x32xf32>
    %147 = arith.addf %140, %146 : vector<32x32xf32>
    %c2_70 = arith.constant 2 : index
    %c0_71 = arith.constant 0 : index
    %c0_72 = arith.constant 0 : index
    %148 = vector.load %arg8[%c2_70, %c0_71, %c0_72] : memref<9x32x32xbf16, #tpu.memory_space<vmem>>, vector<1x32x32xbf16>
    %149 = vector.shape_cast %148 : vector<1x32x32xbf16> to vector<32x32xbf16>
    %cst_73 = arith.constant dense<0.000000e+00> : vector<32x32xf32>
    %150 = tpu.matmul %149, %134, %cst_73 {dimension_numbers = #tpu.dot_dimension_numbers<[1], [0], [0], [1], [0, 0, 1, 1], [], []>} : vector<32x32xbf16>, vector<32x32xbf16>, vector<32x32xf32> -> vector<32x32xf32>
    %151 = arith.truncf %150 : vector<32x32xf32> to vector<32x32xbf16>
    %152 = vector.extract_strided_slice %133 {offsets = [64, 0], sizes = [32, 32], strides = [1, 1]} : vector<288x32xbf16> to vector<32x32xbf16>
    %cst_74 = arith.constant dense<0.000000e+00> : vector<32x32xf32>
    %153 = tpu.matmul %151, %152, %cst_74 {dimension_numbers = #tpu.dot_dimension_numbers<[1], [0], [0], [1], [0, 0, 1, 1], [], []>} : vector<32x32xbf16>, vector<32x32xbf16>, vector<32x32xf32> -> vector<32x32xf32>
    %154 = arith.addf %147, %153 : vector<32x32xf32>
    %c3_75 = arith.constant 3 : index
    %c0_76 = arith.constant 0 : index
    %c0_77 = arith.constant 0 : index
    %155 = vector.load %arg8[%c3_75, %c0_76, %c0_77] : memref<9x32x32xbf16, #tpu.memory_space<vmem>>, vector<1x32x32xbf16>
    %156 = vector.shape_cast %155 : vector<1x32x32xbf16> to vector<32x32xbf16>
    %cst_78 = arith.constant dense<0.000000e+00> : vector<32x32xf32>
    %157 = tpu.matmul %156, %134, %cst_78 {dimension_numbers = #tpu.dot_dimension_numbers<[1], [0], [0], [1], [0, 0, 1, 1], [], []>} : vector<32x32xbf16>, vector<32x32xbf16>, vector<32x32xf32> -> vector<32x32xf32>
    %158 = arith.truncf %157 : vector<32x32xf32> to vector<32x32xbf16>
    %159 = vector.extract_strided_slice %133 {offsets = [96, 0], sizes = [32, 32], strides = [1, 1]} : vector<288x32xbf16> to vector<32x32xbf16>
    %cst_79 = arith.constant dense<0.000000e+00> : vector<32x32xf32>
    %160 = tpu.matmul %158, %159, %cst_79 {dimension_numbers = #tpu.dot_dimension_numbers<[1], [0], [0], [1], [0, 0, 1, 1], [], []>} : vector<32x32xbf16>, vector<32x32xbf16>, vector<32x32xf32> -> vector<32x32xf32>
    %161 = arith.addf %154, %160 : vector<32x32xf32>
    %c4_80 = arith.constant 4 : index
    %c0_81 = arith.constant 0 : index
    %c0_82 = arith.constant 0 : index
    %162 = vector.load %arg8[%c4_80, %c0_81, %c0_82] : memref<9x32x32xbf16, #tpu.memory_space<vmem>>, vector<1x32x32xbf16>
    %163 = vector.shape_cast %162 : vector<1x32x32xbf16> to vector<32x32xbf16>
    %cst_83 = arith.constant dense<0.000000e+00> : vector<32x32xf32>
    %164 = tpu.matmul %163, %134, %cst_83 {dimension_numbers = #tpu.dot_dimension_numbers<[1], [0], [0], [1], [0, 0, 1, 1], [], []>} : vector<32x32xbf16>, vector<32x32xbf16>, vector<32x32xf32> -> vector<32x32xf32>
    %165 = arith.truncf %164 : vector<32x32xf32> to vector<32x32xbf16>
    %166 = vector.extract_strided_slice %133 {offsets = [128, 0], sizes = [32, 32], strides = [1, 1]} : vector<288x32xbf16> to vector<32x32xbf16>
    %cst_84 = arith.constant dense<0.000000e+00> : vector<32x32xf32>
    %167 = tpu.matmul %165, %166, %cst_84 {dimension_numbers = #tpu.dot_dimension_numbers<[1], [0], [0], [1], [0, 0, 1, 1], [], []>} : vector<32x32xbf16>, vector<32x32xbf16>, vector<32x32xf32> -> vector<32x32xf32>
    %168 = arith.addf %161, %167 : vector<32x32xf32>
    %c5_85 = arith.constant 5 : index
    %c0_86 = arith.constant 0 : index
    %c0_87 = arith.constant 0 : index
    %169 = vector.load %arg8[%c5_85, %c0_86, %c0_87] : memref<9x32x32xbf16, #tpu.memory_space<vmem>>, vector<1x32x32xbf16>
    %170 = vector.shape_cast %169 : vector<1x32x32xbf16> to vector<32x32xbf16>
    %cst_88 = arith.constant dense<0.000000e+00> : vector<32x32xf32>
    %171 = tpu.matmul %170, %134, %cst_88 {dimension_numbers = #tpu.dot_dimension_numbers<[1], [0], [0], [1], [0, 0, 1, 1], [], []>} : vector<32x32xbf16>, vector<32x32xbf16>, vector<32x32xf32> -> vector<32x32xf32>
    %172 = arith.truncf %171 : vector<32x32xf32> to vector<32x32xbf16>
    %173 = vector.extract_strided_slice %133 {offsets = [160, 0], sizes = [32, 32], strides = [1, 1]} : vector<288x32xbf16> to vector<32x32xbf16>
    %cst_89 = arith.constant dense<0.000000e+00> : vector<32x32xf32>
    %174 = tpu.matmul %172, %173, %cst_89 {dimension_numbers = #tpu.dot_dimension_numbers<[1], [0], [0], [1], [0, 0, 1, 1], [], []>} : vector<32x32xbf16>, vector<32x32xbf16>, vector<32x32xf32> -> vector<32x32xf32>
    %175 = arith.addf %168, %174 : vector<32x32xf32>
    %c6_90 = arith.constant 6 : index
    %c0_91 = arith.constant 0 : index
    %c0_92 = arith.constant 0 : index
    %176 = vector.load %arg8[%c6_90, %c0_91, %c0_92] : memref<9x32x32xbf16, #tpu.memory_space<vmem>>, vector<1x32x32xbf16>
    %177 = vector.shape_cast %176 : vector<1x32x32xbf16> to vector<32x32xbf16>
    %cst_93 = arith.constant dense<0.000000e+00> : vector<32x32xf32>
    %178 = tpu.matmul %177, %134, %cst_93 {dimension_numbers = #tpu.dot_dimension_numbers<[1], [0], [0], [1], [0, 0, 1, 1], [], []>} : vector<32x32xbf16>, vector<32x32xbf16>, vector<32x32xf32> -> vector<32x32xf32>
    %179 = arith.truncf %178 : vector<32x32xf32> to vector<32x32xbf16>
    %180 = vector.extract_strided_slice %133 {offsets = [192, 0], sizes = [32, 32], strides = [1, 1]} : vector<288x32xbf16> to vector<32x32xbf16>
    %cst_94 = arith.constant dense<0.000000e+00> : vector<32x32xf32>
    %181 = tpu.matmul %179, %180, %cst_94 {dimension_numbers = #tpu.dot_dimension_numbers<[1], [0], [0], [1], [0, 0, 1, 1], [], []>} : vector<32x32xbf16>, vector<32x32xbf16>, vector<32x32xf32> -> vector<32x32xf32>
    %182 = arith.addf %175, %181 : vector<32x32xf32>
    %c7_95 = arith.constant 7 : index
    %c0_96 = arith.constant 0 : index
    %c0_97 = arith.constant 0 : index
    %183 = vector.load %arg8[%c7_95, %c0_96, %c0_97] : memref<9x32x32xbf16, #tpu.memory_space<vmem>>, vector<1x32x32xbf16>
    %184 = vector.shape_cast %183 : vector<1x32x32xbf16> to vector<32x32xbf16>
    %cst_98 = arith.constant dense<0.000000e+00> : vector<32x32xf32>
    %185 = tpu.matmul %184, %134, %cst_98 {dimension_numbers = #tpu.dot_dimension_numbers<[1], [0], [0], [1], [0, 0, 1, 1], [], []>} : vector<32x32xbf16>, vector<32x32xbf16>, vector<32x32xf32> -> vector<32x32xf32>
    %186 = arith.truncf %185 : vector<32x32xf32> to vector<32x32xbf16>
    %187 = vector.extract_strided_slice %133 {offsets = [224, 0], sizes = [32, 32], strides = [1, 1]} : vector<288x32xbf16> to vector<32x32xbf16>
    %cst_99 = arith.constant dense<0.000000e+00> : vector<32x32xf32>
    %188 = tpu.matmul %186, %187, %cst_99 {dimension_numbers = #tpu.dot_dimension_numbers<[1], [0], [0], [1], [0, 0, 1, 1], [], []>} : vector<32x32xbf16>, vector<32x32xbf16>, vector<32x32xf32> -> vector<32x32xf32>
    %189 = arith.addf %182, %188 : vector<32x32xf32>
    %c8_100 = arith.constant 8 : index
    %c0_101 = arith.constant 0 : index
    %c0_102 = arith.constant 0 : index
    %190 = vector.load %arg8[%c8_100, %c0_101, %c0_102] : memref<9x32x32xbf16, #tpu.memory_space<vmem>>, vector<1x32x32xbf16>
    %191 = vector.shape_cast %190 : vector<1x32x32xbf16> to vector<32x32xbf16>
    %cst_103 = arith.constant dense<0.000000e+00> : vector<32x32xf32>
    %192 = tpu.matmul %191, %134, %cst_103 {dimension_numbers = #tpu.dot_dimension_numbers<[1], [0], [0], [1], [0, 0, 1, 1], [], []>} : vector<32x32xbf16>, vector<32x32xbf16>, vector<32x32xf32> -> vector<32x32xf32>
    %193 = arith.truncf %192 : vector<32x32xf32> to vector<32x32xbf16>
    %194 = vector.extract_strided_slice %133 {offsets = [256, 0], sizes = [32, 32], strides = [1, 1]} : vector<288x32xbf16> to vector<32x32xbf16>
    %cst_104 = arith.constant dense<0.000000e+00> : vector<32x32xf32>
    %195 = tpu.matmul %193, %194, %cst_104 {dimension_numbers = #tpu.dot_dimension_numbers<[1], [0], [0], [1], [0, 0, 1, 1], [], []>} : vector<32x32xbf16>, vector<32x32xbf16>, vector<32x32xf32> -> vector<32x32xf32>
    %196 = arith.addf %189, %195 : vector<32x32xf32>
    %197 = vector.extract_strided_slice %0 {offsets = [2, 0], sizes = [1, 32], strides = [1, 1]} : vector<4x32xf32> to vector<1x32xf32>
    %198 = vector.extract_strided_slice %1 {offsets = [2, 0], sizes = [1, 32], strides = [1, 1]} : vector<4x32xf32> to vector<1x32xf32>
    %cst_105 = arith.constant dense<0.000000e+00> : vector<32xf32>
    %199 = vector.multi_reduction <add>, %196, %cst_105 [0] : vector<32x32xf32> to vector<32xf32>
    %200 = vector.shape_cast %199 : vector<32xf32> to vector<1x32xf32>
    %cst_106 = arith.constant 3.200000e+01 : f32
    %201 = vector.broadcast %cst_106 : f32 to vector<1x32xf32>
    %202 = arith.divf %200, %201 : vector<1x32xf32>
    %203 = vector.broadcast %202 : vector<1x32xf32> to vector<32x32xf32>
    %204 = arith.subf %196, %203 : vector<32x32xf32>
    %205 = arith.mulf %204, %204 : vector<32x32xf32>
    %cst_107 = arith.constant dense<0.000000e+00> : vector<32xf32>
    %206 = vector.multi_reduction <add>, %205, %cst_107 [0] : vector<32x32xf32> to vector<32xf32>
    %207 = vector.shape_cast %206 : vector<32xf32> to vector<1x32xf32>
    %cst_108 = arith.constant 3.200000e+01 : f32
    %208 = vector.broadcast %cst_108 : f32 to vector<1x32xf32>
    %209 = arith.divf %207, %208 : vector<1x32xf32>
    %cst_109 = arith.constant 9.99999974E-6 : f32
    %210 = vector.broadcast %cst_109 : f32 to vector<1x32xf32>
    %211 = arith.addf %209, %210 : vector<1x32xf32>
    %212 = math.rsqrt %211 : vector<1x32xf32>
    %213 = arith.mulf %197, %212 : vector<1x32xf32>
    %214 = arith.mulf %202, %213 : vector<1x32xf32>
    %215 = arith.subf %198, %214 : vector<1x32xf32>
    %216 = vector.broadcast %213 : vector<1x32xf32> to vector<32x32xf32>
    %217 = arith.mulf %196, %216 : vector<32x32xf32>
    %218 = vector.broadcast %215 : vector<1x32xf32> to vector<32x32xf32>
    %219 = arith.addf %217, %218 : vector<32x32xf32>
    %220 = vector.extract_strided_slice %219 {offsets = [0, 0], sizes = [8, 32], strides = [1, 1]} : vector<32x32xf32> to vector<8x32xf32>
    %221 = vector.extract_strided_slice %219 {offsets = [8, 0], sizes = [8, 32], strides = [1, 1]} : vector<32x32xf32> to vector<8x32xf32>
    %222 = vector.extract_strided_slice %219 {offsets = [16, 0], sizes = [8, 32], strides = [1, 1]} : vector<32x32xf32> to vector<8x32xf32>
    %223 = vector.extract_strided_slice %219 {offsets = [24, 0], sizes = [8, 32], strides = [1, 1]} : vector<32x32xf32> to vector<8x32xf32>
    %224 = arith.maximumf %220, %221 : vector<8x32xf32>
    %225 = arith.maximumf %222, %223 : vector<8x32xf32>
    %226 = arith.maximumf %224, %225 : vector<8x32xf32>
    %cst_110 = arith.constant 0.000000e+00 : f32
    %227 = vector.broadcast %cst_110 : f32 to vector<8x32xf32>
    %228 = arith.maximumf %226, %227 : vector<8x32xf32>
    %c0_111 = arith.constant 0 : index
    %c0_112 = arith.constant 0 : index
    %229 = vector.load %arg4[%c0_111, %c0_112] : memref<288x32xbf16, #tpu.memory_space<vmem>>, vector<288x32xbf16>
    %230 = arith.truncf %228 : vector<8x32xf32> to vector<8x32xbf16>
    %c0_113 = arith.constant 0 : index
    %c0_114 = arith.constant 0 : index
    %c0_115 = arith.constant 0 : index
    %231 = vector.load %arg9[%c0_113, %c0_114, %c0_115] : memref<9x8x8xbf16, #tpu.memory_space<vmem>>, vector<1x8x8xbf16>
    %232 = vector.shape_cast %231 : vector<1x8x8xbf16> to vector<8x8xbf16>
    %cst_116 = arith.constant dense<0.000000e+00> : vector<8x32xf32>
    %233 = tpu.matmul %232, %230, %cst_116 {dimension_numbers = #tpu.dot_dimension_numbers<[1], [0], [0], [1], [0, 0, 1, 1], [], []>} : vector<8x8xbf16>, vector<8x32xbf16>, vector<8x32xf32> -> vector<8x32xf32>
    %234 = arith.truncf %233 : vector<8x32xf32> to vector<8x32xbf16>
    %235 = vector.extract_strided_slice %229 {offsets = [0, 0], sizes = [32, 32], strides = [1, 1]} : vector<288x32xbf16> to vector<32x32xbf16>
    %cst_117 = arith.constant dense<0.000000e+00> : vector<8x32xf32>
    %236 = tpu.matmul %234, %235, %cst_117 {dimension_numbers = #tpu.dot_dimension_numbers<[1], [0], [0], [1], [0, 0, 1, 1], [], []>} : vector<8x32xbf16>, vector<32x32xbf16>, vector<8x32xf32> -> vector<8x32xf32>
    %c1_118 = arith.constant 1 : index
    %c0_119 = arith.constant 0 : index
    %c0_120 = arith.constant 0 : index
    %237 = vector.load %arg9[%c1_118, %c0_119, %c0_120] : memref<9x8x8xbf16, #tpu.memory_space<vmem>>, vector<1x8x8xbf16>
    %238 = vector.shape_cast %237 : vector<1x8x8xbf16> to vector<8x8xbf16>
    %cst_121 = arith.constant dense<0.000000e+00> : vector<8x32xf32>
    %239 = tpu.matmul %238, %230, %cst_121 {dimension_numbers = #tpu.dot_dimension_numbers<[1], [0], [0], [1], [0, 0, 1, 1], [], []>} : vector<8x8xbf16>, vector<8x32xbf16>, vector<8x32xf32> -> vector<8x32xf32>
    %240 = arith.truncf %239 : vector<8x32xf32> to vector<8x32xbf16>
    %241 = vector.extract_strided_slice %229 {offsets = [32, 0], sizes = [32, 32], strides = [1, 1]} : vector<288x32xbf16> to vector<32x32xbf16>
    %cst_122 = arith.constant dense<0.000000e+00> : vector<8x32xf32>
    %242 = tpu.matmul %240, %241, %cst_122 {dimension_numbers = #tpu.dot_dimension_numbers<[1], [0], [0], [1], [0, 0, 1, 1], [], []>} : vector<8x32xbf16>, vector<32x32xbf16>, vector<8x32xf32> -> vector<8x32xf32>
    %243 = arith.addf %236, %242 : vector<8x32xf32>
    %c2_123 = arith.constant 2 : index
    %c0_124 = arith.constant 0 : index
    %c0_125 = arith.constant 0 : index
    %244 = vector.load %arg9[%c2_123, %c0_124, %c0_125] : memref<9x8x8xbf16, #tpu.memory_space<vmem>>, vector<1x8x8xbf16>
    %245 = vector.shape_cast %244 : vector<1x8x8xbf16> to vector<8x8xbf16>
    %cst_126 = arith.constant dense<0.000000e+00> : vector<8x32xf32>
    %246 = tpu.matmul %245, %230, %cst_126 {dimension_numbers = #tpu.dot_dimension_numbers<[1], [0], [0], [1], [0, 0, 1, 1], [], []>} : vector<8x8xbf16>, vector<8x32xbf16>, vector<8x32xf32> -> vector<8x32xf32>
    %247 = arith.truncf %246 : vector<8x32xf32> to vector<8x32xbf16>
    %248 = vector.extract_strided_slice %229 {offsets = [64, 0], sizes = [32, 32], strides = [1, 1]} : vector<288x32xbf16> to vector<32x32xbf16>
    %cst_127 = arith.constant dense<0.000000e+00> : vector<8x32xf32>
    %249 = tpu.matmul %247, %248, %cst_127 {dimension_numbers = #tpu.dot_dimension_numbers<[1], [0], [0], [1], [0, 0, 1, 1], [], []>} : vector<8x32xbf16>, vector<32x32xbf16>, vector<8x32xf32> -> vector<8x32xf32>
    %250 = arith.addf %243, %249 : vector<8x32xf32>
    %c3_128 = arith.constant 3 : index
    %c0_129 = arith.constant 0 : index
    %c0_130 = arith.constant 0 : index
    %251 = vector.load %arg9[%c3_128, %c0_129, %c0_130] : memref<9x8x8xbf16, #tpu.memory_space<vmem>>, vector<1x8x8xbf16>
    %252 = vector.shape_cast %251 : vector<1x8x8xbf16> to vector<8x8xbf16>
    %cst_131 = arith.constant dense<0.000000e+00> : vector<8x32xf32>
    %253 = tpu.matmul %252, %230, %cst_131 {dimension_numbers = #tpu.dot_dimension_numbers<[1], [0], [0], [1], [0, 0, 1, 1], [], []>} : vector<8x8xbf16>, vector<8x32xbf16>, vector<8x32xf32> -> vector<8x32xf32>
    %254 = arith.truncf %253 : vector<8x32xf32> to vector<8x32xbf16>
    %255 = vector.extract_strided_slice %229 {offsets = [96, 0], sizes = [32, 32], strides = [1, 1]} : vector<288x32xbf16> to vector<32x32xbf16>
    %cst_132 = arith.constant dense<0.000000e+00> : vector<8x32xf32>
    %256 = tpu.matmul %254, %255, %cst_132 {dimension_numbers = #tpu.dot_dimension_numbers<[1], [0], [0], [1], [0, 0, 1, 1], [], []>} : vector<8x32xbf16>, vector<32x32xbf16>, vector<8x32xf32> -> vector<8x32xf32>
    %257 = arith.addf %250, %256 : vector<8x32xf32>
    %c4_133 = arith.constant 4 : index
    %c0_134 = arith.constant 0 : index
    %c0_135 = arith.constant 0 : index
    %258 = vector.load %arg9[%c4_133, %c0_134, %c0_135] : memref<9x8x8xbf16, #tpu.memory_space<vmem>>, vector<1x8x8xbf16>
    %259 = vector.shape_cast %258 : vector<1x8x8xbf16> to vector<8x8xbf16>
    %cst_136 = arith.constant dense<0.000000e+00> : vector<8x32xf32>
    %260 = tpu.matmul %259, %230, %cst_136 {dimension_numbers = #tpu.dot_dimension_numbers<[1], [0], [0], [1], [0, 0, 1, 1], [], []>} : vector<8x8xbf16>, vector<8x32xbf16>, vector<8x32xf32> -> vector<8x32xf32>
    %261 = arith.truncf %260 : vector<8x32xf32> to vector<8x32xbf16>
    %262 = vector.extract_strided_slice %229 {offsets = [128, 0], sizes = [32, 32], strides = [1, 1]} : vector<288x32xbf16> to vector<32x32xbf16>
    %cst_137 = arith.constant dense<0.000000e+00> : vector<8x32xf32>
    %263 = tpu.matmul %261, %262, %cst_137 {dimension_numbers = #tpu.dot_dimension_numbers<[1], [0], [0], [1], [0, 0, 1, 1], [], []>} : vector<8x32xbf16>, vector<32x32xbf16>, vector<8x32xf32> -> vector<8x32xf32>
    %264 = arith.addf %257, %263 : vector<8x32xf32>
    %c5_138 = arith.constant 5 : index
    %c0_139 = arith.constant 0 : index
    %c0_140 = arith.constant 0 : index
    %265 = vector.load %arg9[%c5_138, %c0_139, %c0_140] : memref<9x8x8xbf16, #tpu.memory_space<vmem>>, vector<1x8x8xbf16>
    %266 = vector.shape_cast %265 : vector<1x8x8xbf16> to vector<8x8xbf16>
    %cst_141 = arith.constant dense<0.000000e+00> : vector<8x32xf32>
    %267 = tpu.matmul %266, %230, %cst_141 {dimension_numbers = #tpu.dot_dimension_numbers<[1], [0], [0], [1], [0, 0, 1, 1], [], []>} : vector<8x8xbf16>, vector<8x32xbf16>, vector<8x32xf32> -> vector<8x32xf32>
    %268 = arith.truncf %267 : vector<8x32xf32> to vector<8x32xbf16>
    %269 = vector.extract_strided_slice %229 {offsets = [160, 0], sizes = [32, 32], strides = [1, 1]} : vector<288x32xbf16> to vector<32x32xbf16>
    %cst_142 = arith.constant dense<0.000000e+00> : vector<8x32xf32>
    %270 = tpu.matmul %268, %269, %cst_142 {dimension_numbers = #tpu.dot_dimension_numbers<[1], [0], [0], [1], [0, 0, 1, 1], [], []>} : vector<8x32xbf16>, vector<32x32xbf16>, vector<8x32xf32> -> vector<8x32xf32>
    %271 = arith.addf %264, %270 : vector<8x32xf32>
    %c6_143 = arith.constant 6 : index
    %c0_144 = arith.constant 0 : index
    %c0_145 = arith.constant 0 : index
    %272 = vector.load %arg9[%c6_143, %c0_144, %c0_145] : memref<9x8x8xbf16, #tpu.memory_space<vmem>>, vector<1x8x8xbf16>
    %273 = vector.shape_cast %272 : vector<1x8x8xbf16> to vector<8x8xbf16>
    %cst_146 = arith.constant dense<0.000000e+00> : vector<8x32xf32>
    %274 = tpu.matmul %273, %230, %cst_146 {dimension_numbers = #tpu.dot_dimension_numbers<[1], [0], [0], [1], [0, 0, 1, 1], [], []>} : vector<8x8xbf16>, vector<8x32xbf16>, vector<8x32xf32> -> vector<8x32xf32>
    %275 = arith.truncf %274 : vector<8x32xf32> to vector<8x32xbf16>
    %276 = vector.extract_strided_slice %229 {offsets = [192, 0], sizes = [32, 32], strides = [1, 1]} : vector<288x32xbf16> to vector<32x32xbf16>
    %cst_147 = arith.constant dense<0.000000e+00> : vector<8x32xf32>
    %277 = tpu.matmul %275, %276, %cst_147 {dimension_numbers = #tpu.dot_dimension_numbers<[1], [0], [0], [1], [0, 0, 1, 1], [], []>} : vector<8x32xbf16>, vector<32x32xbf16>, vector<8x32xf32> -> vector<8x32xf32>
    %278 = arith.addf %271, %277 : vector<8x32xf32>
    %c7_148 = arith.constant 7 : index
    %c0_149 = arith.constant 0 : index
    %c0_150 = arith.constant 0 : index
    %279 = vector.load %arg9[%c7_148, %c0_149, %c0_150] : memref<9x8x8xbf16, #tpu.memory_space<vmem>>, vector<1x8x8xbf16>
    %280 = vector.shape_cast %279 : vector<1x8x8xbf16> to vector<8x8xbf16>
    %cst_151 = arith.constant dense<0.000000e+00> : vector<8x32xf32>
    %281 = tpu.matmul %280, %230, %cst_151 {dimension_numbers = #tpu.dot_dimension_numbers<[1], [0], [0], [1], [0, 0, 1, 1], [], []>} : vector<8x8xbf16>, vector<8x32xbf16>, vector<8x32xf32> -> vector<8x32xf32>
    %282 = arith.truncf %281 : vector<8x32xf32> to vector<8x32xbf16>
    %283 = vector.extract_strided_slice %229 {offsets = [224, 0], sizes = [32, 32], strides = [1, 1]} : vector<288x32xbf16> to vector<32x32xbf16>
    %cst_152 = arith.constant dense<0.000000e+00> : vector<8x32xf32>
    %284 = tpu.matmul %282, %283, %cst_152 {dimension_numbers = #tpu.dot_dimension_numbers<[1], [0], [0], [1], [0, 0, 1, 1], [], []>} : vector<8x32xbf16>, vector<32x32xbf16>, vector<8x32xf32> -> vector<8x32xf32>
    %285 = arith.addf %278, %284 : vector<8x32xf32>
    %c8_153 = arith.constant 8 : index
    %c0_154 = arith.constant 0 : index
    %c0_155 = arith.constant 0 : index
    %286 = vector.load %arg9[%c8_153, %c0_154, %c0_155] : memref<9x8x8xbf16, #tpu.memory_space<vmem>>, vector<1x8x8xbf16>
    %287 = vector.shape_cast %286 : vector<1x8x8xbf16> to vector<8x8xbf16>
    %cst_156 = arith.constant dense<0.000000e+00> : vector<8x32xf32>
    %288 = tpu.matmul %287, %230, %cst_156 {dimension_numbers = #tpu.dot_dimension_numbers<[1], [0], [0], [1], [0, 0, 1, 1], [], []>} : vector<8x8xbf16>, vector<8x32xbf16>, vector<8x32xf32> -> vector<8x32xf32>
    %289 = arith.truncf %288 : vector<8x32xf32> to vector<8x32xbf16>
    %290 = vector.extract_strided_slice %229 {offsets = [256, 0], sizes = [32, 32], strides = [1, 1]} : vector<288x32xbf16> to vector<32x32xbf16>
    %cst_157 = arith.constant dense<0.000000e+00> : vector<8x32xf32>
    %291 = tpu.matmul %289, %290, %cst_157 {dimension_numbers = #tpu.dot_dimension_numbers<[1], [0], [0], [1], [0, 0, 1, 1], [], []>} : vector<8x32xbf16>, vector<32x32xbf16>, vector<8x32xf32> -> vector<8x32xf32>
    %292 = arith.addf %285, %291 : vector<8x32xf32>
    %293 = vector.extract_strided_slice %0 {offsets = [3, 0], sizes = [1, 32], strides = [1, 1]} : vector<4x32xf32> to vector<1x32xf32>
    %294 = vector.extract_strided_slice %1 {offsets = [3, 0], sizes = [1, 32], strides = [1, 1]} : vector<4x32xf32> to vector<1x32xf32>
    %cst_158 = arith.constant dense<0.000000e+00> : vector<32xf32>
    %295 = vector.multi_reduction <add>, %292, %cst_158 [0] : vector<8x32xf32> to vector<32xf32>
    %296 = vector.shape_cast %295 : vector<32xf32> to vector<1x32xf32>
    %cst_159 = arith.constant 8.000000e+00 : f32
    %297 = vector.broadcast %cst_159 : f32 to vector<1x32xf32>
    %298 = arith.divf %296, %297 : vector<1x32xf32>
    %299 = vector.broadcast %298 : vector<1x32xf32> to vector<8x32xf32>
    %300 = arith.subf %292, %299 : vector<8x32xf32>
    %301 = arith.mulf %300, %300 : vector<8x32xf32>
    %cst_160 = arith.constant dense<0.000000e+00> : vector<32xf32>
    %302 = vector.multi_reduction <add>, %301, %cst_160 [0] : vector<8x32xf32> to vector<32xf32>
    %303 = vector.shape_cast %302 : vector<32xf32> to vector<1x32xf32>
    %cst_161 = arith.constant 8.000000e+00 : f32
    %304 = vector.broadcast %cst_161 : f32 to vector<1x32xf32>
    %305 = arith.divf %303, %304 : vector<1x32xf32>
    %cst_162 = arith.constant 9.99999974E-6 : f32
    %306 = vector.broadcast %cst_162 : f32 to vector<1x32xf32>
    %307 = arith.addf %305, %306 : vector<1x32xf32>
    %308 = math.rsqrt %307 : vector<1x32xf32>
    %309 = arith.mulf %293, %308 : vector<1x32xf32>
    %310 = arith.mulf %298, %309 : vector<1x32xf32>
    %311 = arith.subf %294, %310 : vector<1x32xf32>
    %312 = vector.broadcast %309 : vector<1x32xf32> to vector<8x32xf32>
    %313 = arith.mulf %292, %312 : vector<8x32xf32>
    %314 = vector.broadcast %311 : vector<1x32xf32> to vector<8x32xf32>
    %315 = arith.addf %313, %314 : vector<8x32xf32>
    %316 = vector.extract_strided_slice %315 {offsets = [0, 0], sizes = [2, 32], strides = [1, 1]} : vector<8x32xf32> to vector<2x32xf32>
    %317 = vector.extract_strided_slice %315 {offsets = [2, 0], sizes = [2, 32], strides = [1, 1]} : vector<8x32xf32> to vector<2x32xf32>
    %318 = vector.extract_strided_slice %315 {offsets = [4, 0], sizes = [2, 32], strides = [1, 1]} : vector<8x32xf32> to vector<2x32xf32>
    %319 = vector.extract_strided_slice %315 {offsets = [6, 0], sizes = [2, 32], strides = [1, 1]} : vector<8x32xf32> to vector<2x32xf32>
    %320 = arith.maximumf %316, %317 : vector<2x32xf32>
    %321 = arith.maximumf %318, %319 : vector<2x32xf32>
    %322 = arith.maximumf %320, %321 : vector<2x32xf32>
    %cst_163 = arith.constant 0.000000e+00 : f32
    %323 = vector.broadcast %cst_163 : f32 to vector<2x32xf32>
    %324 = arith.maximumf %322, %323 : vector<2x32xf32>
    %c0_164 = arith.constant 0 : index
    %c0_165 = arith.constant 0 : index
    %325 = vector.load %arg12[%c0_164, %c0_165] : memref<2x32xf32, #tpu.memory_space<vmem>>, vector<2x32xf32>
    tpu.vector_store %arg12[%c0_164, %c0_165], %324 {strides = array<i32>} : memref<2x32xf32, #tpu.memory_space<vmem>>, vector<2x32xf32>,
    %326 = arith.truncf %324 : vector<2x32xf32> to vector<2x32xbf16>
    %c0_166 = arith.constant 0 : index
    %c0_167 = arith.constant 0 : index
    %327 = vector.load %arg10[%c0_166, %c0_167] : memref<32x5xbf16, #tpu.memory_space<vmem>>, vector<32x5xbf16>
    %cst_168 = arith.constant dense<0.000000e+00> : vector<2x5xf32>
    %328 = tpu.matmul %326, %327, %cst_168 {dimension_numbers = #tpu.dot_dimension_numbers<[1], [0], [0], [1], [0, 0, 1, 1], [], []>} : vector<2x32xbf16>, vector<32x5xbf16>, vector<2x5xf32> -> vector<2x5xf32>
    %c0_169 = arith.constant 0 : index
    %c0_170 = arith.constant 0 : index
    %329 = vector.load %arg11[%c0_169, %c0_170] : memref<1x5xf32, #tpu.memory_space<vmem>>, vector<1x5xf32>
    %330 = vector.broadcast %329 : vector<1x5xf32> to vector<2x5xf32>
    %331 = arith.addf %328, %330 : vector<2x5xf32>
    %c0_171 = arith.constant 0 : index
    %c0_172 = arith.constant 0 : index
    %332 = vector.load %arg13[%c0_171, %c0_172] : memref<2x5xf32, #tpu.memory_space<vmem>>, vector<2x5xf32>
    tpu.vector_store %arg13[%c0_171, %c0_172], %331 {strides = array<i32>} : memref<2x5xf32, #tpu.memory_space<vmem>>, vector<2x5xf32>,
    return
  }
}

</mosaic_0001>

<llo_original>
// kernel: net4cnn_forward.2
$region0: #{net4cnn_forward.2}
  #allocation0 [shape = 'u32[]', space=smem, size = 0x4, offset = 0x4, fixed_abs, tag = 'smem constant byte address 0x4 - core index']
  #allocation1 [shape = 'u32[144,128]{1,0:T(1,128)}', space=vmem, size = 0x12000, scoped, tag = 'internal scratch']
  #allocation2 [shape = 'u32[2048]{0}', space=vmem, size = 0x2000, scoped, tag = 'scoped memory for net4cnn_forward.2']
  #allocation3 [shape = 'u32[2048]{0}', space=vmem, size = 0x2000, scoped, tag = 'scoped memory for net4cnn_forward.2']
  #allocation4 [shape = 'u32[2048]{0}', space=vmem, size = 0x2000, scoped, tag = 'scoped memory for net4cnn_forward.2']
  #allocation5 [shape = 'u32[2048]{0}', space=vmem, size = 0x2000, scoped, tag = 'scoped memory for net4cnn_forward.2']
  #allocation6 [shape = 'u32[2048]{0}', space=vmem, size = 0x2000, scoped, tag = 'scoped memory for net4cnn_forward.2']
  #allocation7 [shape = 'u32[2048]{0}', space=vmem, size = 0x2000, scoped, tag = 'scoped memory for net4cnn_forward.2']
  #allocation8 [shape = 'u32[2048]{0}', space=vmem, size = 0x2000, scoped, tag = 'scoped memory for net4cnn_forward.2']
  #allocation9 [shape = 'u32[2048]{0}', space=vmem, size = 0x2000, scoped, tag = 'scoped memory for net4cnn_forward.2']
  #allocation10 [shape = 'u32[2048]{0}', space=vmem, size = 0x2000, scoped, tag = 'scoped memory for net4cnn_forward.2']
  #allocation11 [shape = 'u32[2048]{0}', space=vmem, size = 0x2000, scoped, tag = 'scoped memory for net4cnn_forward.2']
  #allocation12 [shape = 'u32[2048]{0}', space=vmem, size = 0x2000, scoped, tag = 'scoped memory for net4cnn_forward.2']
  #allocation13 [shape = 'u32[2048]{0}', space=vmem, size = 0x2000, scoped, tag = 'scoped memory for net4cnn_forward.2']
  #allocation14 [shape = 'u32[2048]{0}', space=vmem, size = 0x2000, scoped, tag = 'scoped memory for net4cnn_forward.2']
  #allocation15 [shape = 'u32[2048]{0}', space=vmem, size = 0x2000, scoped, tag = 'scoped memory for net4cnn_forward.2']
  #allocation16 [shape = 'u32[2048]{0}', space=vmem, size = 0x2000, scoped, tag = 'scoped memory for net4cnn_forward.2']
  #allocation17 [shape = 'u32[2048]{0}', space=vmem, size = 0x2000, scoped, tag = 'scoped memory for net4cnn_forward.2']
  #allocation18 [shape = 'u32[2048]{0}', space=vmem, size = 0x2000, scoped, tag = 'scoped memory for net4cnn_forward.2']
  #allocation19 [shape = 'u32[2048]{0}', space=vmem, size = 0x2000, scoped, tag = 'scoped memory for net4cnn_forward.2']
  #allocation20 [shape = 'u32[2048]{0}', space=vmem, size = 0x2000, scoped, tag = 'scoped memory for net4cnn_forward.2']
  #allocation21 [shape = 'u32[2048]{0}', space=vmem, size = 0x2000, scoped, tag = 'scoped memory for net4cnn_forward.2']
  %s0 = inlined_call_operand.vmem [shape: bf16[27,32], index: 0, kind: input, shape index: {}]
  %s1 = inlined_call_operand.vmem [shape: bf16[288,32], index: 1, kind: input, shape index: {}]
  %s2 = inlined_call_operand.vmem [shape: bf16[288,32], index: 2, kind: input, shape index: {}]
  %s3 = inlined_call_operand.vmem [shape: bf16[288,32], index: 3, kind: input, shape index: {}]
  %s4 = inlined_call_operand.vmem [shape: f32[4,32], index: 4, kind: input, shape index: {}]
  %s5 = inlined_call_operand.vmem [shape: f32[4,32], index: 5, kind: input, shape index: {}]
  %s6 = inlined_call_operand.vmem [shape: bf16[9,128,128], index: 6, kind: input, shape index: {}]
  %s7 = inlined_call_operand.vmem [shape: bf16[9,32,32], index: 7, kind: input, shape index: {}]
  %s8 = inlined_call_operand.vmem [shape: bf16[9,8,8], index: 8, kind: input, shape index: {}]
  %s9 = inlined_call_operand.vmem [shape: bf16[32,5], index: 9, kind: input, shape index: {}]
  %s10 = inlined_call_operand.vmem [shape: f32[1,5], index: 10, kind: input, shape index: {}]
  %s11 = inlined_call_operand.vmem [shape: bf16[128,27], index: 11, kind: input, shape index: {}]
  %s12 = inlined_call_operand.<no memory space> [shape: bf16[], index: 12, kind: input, shape index: {}]
  %s13 = inlined_call_operand.vmem [shape: bf16[128,27], index: 13, kind: input, shape index: {}]
  %s14 = inlined_call_operand.vmem [shape: bf16[128,27], index: 14, kind: input, shape index: {}]
  %s15 = inlined_call_operand.vmem [shape: bf16[128,27], index: 15, kind: input, shape index: {}]
  %s16 = inlined_call_operand.hbm [shape: f32[2,32], index: 16, kind: output, shape index: {0}]
  %s17 = inlined_call_operand.hbm [shape: f32[2,5], index: 17, kind: output, shape index: {1}]
  %18 = xla_tuple %s16, %s17
  %s19 = sld [smem:[#allocation0]]
  $region78: #{net4cnn_forward.2} parent=0
    _
  %s21 = ssub.s32 1, %s19
  %s22 = scalar_select 0, %s21, %s19
  %v23 = vstv %s12
  %v24 = vunpack.i.l.bf16 %v23
  %v26 = vunpack.i.h.bf16 %v23
  %v28 = vstv %s12
  %v29 = vunpack.i.l.bf16 %v28
  %v31 = vunpack.i.h.bf16 %v28
  %v33 = vstv %s12
  %v34 = vunpack.i.l.bf16 %v33
  %v36 = vunpack.i.h.bf16 %v33
  %v38 = vstv %s12
  %v39 = vunpack.i.l.bf16 %v38
  %v41 = vunpack.i.h.bf16 %v38
  $region1: #{net4cnn_forward.2} parent=0
    #allocation22 [shape = 'u8[1024]{0}', space=vmem, size = 0x400, scoped, tag = 'output window, operand 0, single buffered']
    #allocation23 [shape = 's32[1]{0}', space=sflag, size = 0x4, scoped, tag = 'scoped memory for net4cnn_forward.2']
    #allocation24 [shape = 'u8[1024]{0}', space=vmem, size = 0x400, scoped, tag = 'output window, operand 1, single buffered']
    #allocation25 [shape = 's32[1]{0}', space=sflag, size = 0x4, scoped, tag = 'scoped memory for net4cnn_forward.2']
    #allocation26 [shape = 'u8[131072]{0}', space=vmem, size = 0x20000, dematerialized = true, scoped, tag = 'FusionAdapter Buffer %fusion.1 = bf16[512,27]{1,0:T(8,128)(2,1)} fusion(%param_11.2, %param_12.2, %param_13.2, %param_14.3, %param_15.2), kind=kLoop, calls=%fused_computation.1.clone, metadata={op_name="jit(net4cnn_forward)/concatenate" stack_frame_id=26}']
    %43 = vsyncpa [#allocation23], 0
    %44 = vsyncpa [#allocation25], 0
    // Predicated region
    $region2: #{net4cnn_forward.2} parent=1 // pred_check
      _
    $region3: #{net4cnn_forward.2} parent=1 // pred_check_branch
      %46 = sbr.rel (0) target = $region5
    $region4: #{net4cnn_forward.2} parent=1 // pred_region
      %s47 = scalar_lea.vmem %s11, 4294967104
    $region5: #{net4cnn_forward.2} parent=1 // pred_fallthru
      _
    // Predicated region
    $region6: #{net4cnn_forward.2} parent=1 // pred_check
      _
    $region7: #{net4cnn_forward.2} parent=1 // pred_check_branch
      %49 = sbr.rel (0) target = $region9
    $region8: #{net4cnn_forward.2} parent=1 // pred_region
      %s50 = scalar_lea.vmem %s13, 4294967168
    $region9: #{net4cnn_forward.2} parent=1 // pred_fallthru
      _
    // Predicated region
    $region10: #{net4cnn_forward.2} parent=1 // pred_check
      _
    $region11: #{net4cnn_forward.2} parent=1 // pred_check_branch
      %52 = sbr.rel (0) target = $region13
    $region12: #{net4cnn_forward.2} parent=1 // pred_region
      %s53 = scalar_lea.vmem %s14, 4294967232
    $region13: #{net4cnn_forward.2} parent=1 // pred_fallthru
      _
    // Predicated region
    $region14: #{net4cnn_forward.2} parent=1 // pred_check
      _
    $region15: #{net4cnn_forward.2} parent=1 // pred_check_branch
      %55 = sbr.rel (0) target = $region17
    $region16: #{net4cnn_forward.2} parent=1 // pred_region
      _
    $region17: #{net4cnn_forward.2} parent=1 // pred_fallthru
      _
    // Predicated region
    $region18: #{net4cnn_forward.2} parent=1 // pred_check
      _
    $region19: #{net4cnn_forward.2} parent=1 // pred_check_branch
      %57 = sbr.rel (0) target = $region21
    $region20: #{net4cnn_forward.2} parent=1 // pred_region
      _
    $region21: #{net4cnn_forward.2} parent=1 // pred_fallthru
      _
    // Predicated region
    $region22: #{net4cnn_forward.2} parent=1 // pred_check
      _
    $region23: #{net4cnn_forward.2} parent=1 // pred_check_branch
      %59 = sbr.rel (0) target = $region25
    $region24: #{net4cnn_forward.2} parent=1 // pred_region
      _
    $region25: #{net4cnn_forward.2} parent=1 // pred_fallthru
      _
    // Predicated region
    $region26: #{net4cnn_forward.2} parent=1 // pred_check
      _
    $region27: #{net4cnn_forward.2} parent=1 // pred_check_branch
      %61 = sbr.rel (0) target = $region29
    $region28: #{net4cnn_forward.2} parent=1 // pred_region
      _
    $region29: #{net4cnn_forward.2} parent=1 // pred_fallthru
      _
    // Predicated region
    $region30: #{net4cnn_forward.2} parent=1 // pred_check
      _
    $region31: #{net4cnn_forward.2} parent=1 // pred_check_branch
      %63 = sbr.rel (0) target = $region33
    $region32: #{net4cnn_forward.2} parent=1 // pred_region
      _
    $region33: #{net4cnn_forward.2} parent=1 // pred_fallthru
      _
    // Predicated region
    $region34: #{net4cnn_forward.2} parent=1 // pred_check
      _
    $region35: #{net4cnn_forward.2} parent=1 // pred_check_branch
      %65 = sbr.rel (0) target = $region37
    $region36: #{net4cnn_forward.2} parent=1 // pred_region
      _
    $region37: #{net4cnn_forward.2} parent=1 // pred_fallthru
      _
    // Predicated region
    $region38: #{net4cnn_forward.2} parent=1 // pred_check
      _
    $region39: #{net4cnn_forward.2} parent=1 // pred_check_branch
      %67 = sbr.rel (0) target = $region41
    $region40: #{net4cnn_forward.2} parent=1 // pred_region
      _
    $region41: #{net4cnn_forward.2} parent=1 // pred_fallthru
      _
    // Predicated region
    $region42: #{net4cnn_forward.2} parent=1 // pred_check
      _
    $region43: #{net4cnn_forward.2} parent=1 // pred_check_branch
      %69 = sbr.rel (0) target = $region45
    $region44: #{net4cnn_forward.2} parent=1 // pred_region
      _
    $region45: #{net4cnn_forward.2} parent=1 // pred_fallthru
      _
    // Predicated region
    $region46: #{net4cnn_forward.2} parent=1 // pred_check
      _
    $region47: #{net4cnn_forward.2} parent=1 // pred_check_branch
      %71 = sbr.rel (0) target = $region49
    $region48: #{net4cnn_forward.2} parent=1 // pred_region
      _
    $region49: #{net4cnn_forward.2} parent=1 // pred_fallthru
      _
    // Predicated region
    $region50: #{net4cnn_forward.2} parent=1 // pred_check
      _
    $region51: #{net4cnn_forward.2} parent=1 // pred_check_branch
      %73 = sbr.rel (0) target = $region53
    $region52: #{net4cnn_forward.2} parent=1 // pred_region
      _
    $region53: #{net4cnn_forward.2} parent=1 // pred_fallthru
      _
    // Predicated region
    $region54: #{net4cnn_forward.2} parent=1 // pred_check
      _
    $region55: #{net4cnn_forward.2} parent=1 // pred_check_branch
      %75 = sbr.rel (0) target = $region57
    $region56: #{net4cnn_forward.2} parent=1 // pred_region
      _
    $region57: #{net4cnn_forward.2} parent=1 // pred_fallthru
      _
    // Predicated region
    $region58: #{net4cnn_forward.2} parent=1 // pred_check
      _
    $region59: #{net4cnn_forward.2} parent=1 // pred_check_branch
      %77 = sbr.rel (0) target = $region61
    $region60: #{net4cnn_forward.2} parent=1 // pred_region
      _
    $region61: #{net4cnn_forward.2} parent=1 // pred_fallthru
      _
    %s78 = scalar_lea.vmem %s11, 4294967104
    %s79 = scalar_lea.vmem %s13, 4294967168
    %s80 = scalar_lea.vmem %s14, 4294967232
    %s81 = scalar_lea.vmem %s11, 4294967104
    %s82 = scalar_lea.vmem %s13, 4294967168
    %s83 = scalar_lea.vmem %s14, 4294967232
    %s85 = sand.u32 0, 85
    %s86 = sshrl.u32 %s85, 1
    %s87 = sor.u32 %s85, %s86
    %s88 = sand.u32 51, %s87
    %s89 = sshrl.u32 %s88, 2
    %s90 = sor.u32 %s88, %s89
    %s91 = sand.u32 15, %s90
    %v92 = vld [vmem:[%s81] sm:%s91]
    %v93 = vunpack.c.l.bf16 %v92
    %v94 = vunpack.c.h.bf16 %v92
    %s96 = sand.u32 0, 85
    %s97 = sshrl.u32 %s96, 1
    %s98 = sor.u32 %s96, %s97
    %s99 = sand.u32 51, %s98
    %s100 = sshrl.u32 %s99, 2
    %s101 = sor.u32 %s99, %s100
    %s102 = sand.u32 15, %s101
    %v103 = vld [vmem:[%s82] sm:%s102]
    %v104 = vunpack.c.l.bf16 %v103
    %v105 = vunpack.c.h.bf16 %v103
    %s107 = sand.u32 0, 85
    %s108 = sshrl.u32 %s107, 1
    %s109 = sor.u32 %s107, %s108
    %s110 = sand.u32 51, %s109
    %s111 = sshrl.u32 %s110, 2
    %s112 = sor.u32 %s110, %s111
    %s113 = sand.u32 15, %s112
    %v114 = vld [vmem:[%s83] sm:%s113]
    %v115 = vunpack.c.l.bf16 %v114
    %v116 = vunpack.c.h.bf16 %v114
    %s118 = sor.u32 255, 127
    %s119 = sand.u32 %s118, 85
    %s120 = sshrl.u32 %s119, 1
    %s121 = sor.u32 %s119, %s120
    %s122 = sand.u32 51, %s121
    %s123 = sshrl.u32 %s122, 2
    %s124 = sor.u32 %s122, %s123
    %s125 = sand.u32 15, %s124
    %v126 = vld [vmem:[%s15] sm:%s125]
    %v127 = vunpack.c.l.bf16 %v126
    %v128 = vunpack.c.h.bf16 %v126
    %v129 = vlaneseq
    %v130 = vand.u32 %v129, 127
    %vm132 = vcmp.lt.s32.totalorder %v130, 27
    %v133 = vsel %vm132, %v127, %v39
    %134 = xla_tuple %v133, %v34
    %135 = xla_tuple %134
    %v136 = vmax.f32 %v133, %v34
    %137 = xla_tuple %v136
    %138 = xla_tuple %v136, %v29
    %139 = xla_tuple %138
    %v140 = vmax.f32 %v136, %v29
    %141 = xla_tuple %v140
    %142 = xla_tuple %v140, %v24
    %143 = xla_tuple %142
    %v144 = vmax.f32 %v140, %v24
    %145 = xla_tuple %v144
    %v146 = vpack.c.bf16 0.0, %v144
    %148 = vst [vmem:[#allocation26] sm:$0xf] %v146
    %s149 = scalar_lea.vmem %s81, 4
    %s151 = sand.u32 0, 85
    %s152 = sshrl.u32 %s151, 1
    %s153 = sor.u32 %s151, %s152
    %s154 = sand.u32 51, %s153
    %s155 = sshrl.u32 %s154, 2
    %s156 = sor.u32 %s154, %s155
    %s157 = sand.u32 15, %s156
    %v158 = vld [vmem:[%s149] sm:%s157]
    %v159 = vunpack.c.l.bf16 %v158
    %v160 = vunpack.c.h.bf16 %v158
    %s161 = scalar_lea.vmem %s82, 4
    %s163 = sand.u32 0, 85
    %s164 = sshrl.u32 %s163, 1
    %s165 = sor.u32 %s163, %s164
    %s166 = sand.u32 51, %s165
    %s167 = sshrl.u32 %s166, 2
    %s168 = sor.u32 %s166, %s167
    %s169 = sand.u32 15, %s168
    %v170 = vld [vmem:[%s161] sm:%s169]
    %v171 = vunpack.c.l.bf16 %v170
    %v172 = vunpack.c.h.bf16 %v170
    %s173 = scalar_lea.vmem %s83, 4
    %s175 = sand.u32 0, 85
    %s176 = sshrl.u32 %s175, 1
    %s177 = sor.u32 %s175, %s176
    %s178 = sand.u32 51, %s177
    %s179 = sshrl.u32 %s178, 2
    %s180 = sor.u32 %s178, %s179
    %s181 = sand.u32 15, %s180
    %v182 = vld [vmem:[%s173] sm:%s181]
    %v183 = vunpack.c.l.bf16 %v182
    %v184 = vunpack.c.h.bf16 %v182
    %s185 = scalar_lea.vmem %s15, 4
    %s187 = sor.u32 255, 127
    %s188 = sand.u32 %s187, 85
    %s189 = sshrl.u32 %s188, 1
    %s190 = sor.u32 %s188, %s189
    %s191 = sand.u32 51, %s190
    %s192 = sshrl.u32 %s191, 2
    %s193 = sor.u32 %s191, %s192
    %s194 = sand.u32 15, %s193
    %v195 = vld [vmem:[%s185] sm:%s194]
    %v196 = vunpack.c.l.bf16 %v195
    %v197 = vunpack.c.h.bf16 %v195
    %v198 = vlaneseq
    %v199 = vand.u32 %v198, 127
    %vm201 = vcmp.lt.s32.totalorder %v199, 27
    %v202 = vsel %vm201, %v196, %v39
    %203 = xla_tuple %v202, %v34
    %204 = xla_tuple %203
    %v205 = vmax.f32 %v202, %v34
    %206 = xla_tuple %v205
    %207 = xla_tuple %v205, %v29
    %208 = xla_tuple %207
    %v209 = vmax.f32 %v205, %v29
    %210 = xla_tuple %v209
    %211 = xla_tuple %v209, %v24
    %212 = xla_tuple %211
    %v213 = vmax.f32 %v209, %v24
    %214 = xla_tuple %v213
    %s215 = scalar_lea.vmem [#allocation26], 4
    %v216 = vpack.c.bf16 0.0, %v213
    %218 = vst [vmem:[%s215] sm:$0xf] %v216
    %s219 = scalar_lea.vmem %s81, 8
    %s221 = sand.u32 0, 85
    %s222 = sshrl.u32 %s221, 1
    %s223 = sor.u32 %s221, %s222
    %s224 = sand.u32 51, %s223
    %s225 = sshrl.u32 %s224, 2
    %s226 = sor.u32 %s224, %s225
    %s227 = sand.u32 15, %s226
    %v228 = vld [vmem:[%s219] sm:%s227]
    %v229 = vunpack.c.l.bf16 %v228
    %v230 = vunpack.c.h.bf16 %v228
    %s231 = scalar_lea.vmem %s82, 8
    %s233 = sand.u32 0, 85
    %s234 = sshrl.u32 %s233, 1
    %s235 = sor.u32 %s233, %s234
    %s236 = sand.u32 51, %s235
    %s237 = sshrl.u32 %s236, 2
    %s238 = sor.u32 %s236, %s237
    %s239 = sand.u32 15, %s238
    %v240 = vld [vmem:[%s231] sm:%s239]
    %v241 = vunpack.c.l.bf16 %v240
    %v242 = vunpack.c.h.bf16 %v240
    %s243 = scalar_lea.vmem %s83, 8
    %s245 = sand.u32 0, 85
    %s246 = sshrl.u32 %s245, 1
    %s247 = sor.u32 %s245, %s246
    %s248 = sand.u32 51, %s247
    %s249 = sshrl.u32 %s248, 2
    %s250 = sor.u32 %s248, %s249
    %s251 = sand.u32 15, %s250
    %v252 = vld [vmem:[%s243] sm:%s251]
    %v253 = vunpack.c.l.bf16 %v252
    %v254 = vunpack.c.h.bf16 %v252
    %s255 = scalar_lea.vmem %s15, 8
    %s257 = sor.u32 255, 127
    %s258 = sand.u32 %s257, 85
    %s259 = sshrl.u32 %s258, 1
    %s260 = sor.u32 %s258, %s259
    %s261 = sand.u32 51, %s260
    %s262 = sshrl.u32 %s261, 2
    %s263 = sor.u32 %s261, %s262
    %s264 = sand.u32 15, %s263
    %v265 = vld [vmem:[%s255] sm:%s264]
    %v266 = vunpack.c.l.bf16 %v265
    %v267 = vunpack.c.h.bf16 %v265
    %v268 = vlaneseq
    %v269 = vand.u32 %v268, 127
    %vm271 = vcmp.lt.s32.totalorder %v269, 27
    %v272 = vsel %vm271, %v266, %v39
    %273 = xla_tuple %v272, %v34
    %274 = xla_tuple %273
    %v275 = vmax.f32 %v272, %v34
    %276 = xla_tuple %v275
    %277 = xla_tuple %v275, %v29
    %278 = xla_tuple %277
    %v279 = vmax.f32 %v275, %v29
    %280 = xla_tuple %v279
    %281 = xla_tuple %v279, %v24
    %282 = xla_tuple %281
    %v283 = vmax.f32 %v279, %v24
    %284 = xla_tuple %v283
    %s285 = scalar_lea.vmem [#allocation26], 8
    %v286 = vpack.c.bf16 0.0, %v283
    %288 = vst [vmem:[%s285] sm:$0xf] %v286
    %s289 = scalar_lea.vmem %s81, 12
    %s291 = sand.u32 0, 85
    %s292 = sshrl.u32 %s291, 1
    %s293 = sor.u32 %s291, %s292
    %s294 = sand.u32 51, %s293
    %s295 = sshrl.u32 %s294, 2
    %s296 = sor.u32 %s294, %s295
    %s297 = sand.u32 15, %s296
    %v298 = vld [vmem:[%s289] sm:%s297]
    %v299 = vunpack.c.l.bf16 %v298
    %v300 = vunpack.c.h.bf16 %v298
    %s301 = scalar_lea.vmem %s82, 12
    %s303 = sand.u32 0, 85
    %s304 = sshrl.u32 %s303, 1
    %s305 = sor.u32 %s303, %s304
    %s306 = sand.u32 51, %s305
    %s307 = sshrl.u32 %s306, 2
    %s308 = sor.u32 %s306, %s307
    %s309 = sand.u32 15, %s308
    %v310 = vld [vmem:[%s301] sm:%s309]
    %v311 = vunpack.c.l.bf16 %v310
    %v312 = vunpack.c.h.bf16 %v310
    %s313 = scalar_lea.vmem %s83, 12
    %s315 = sand.u32 0, 85
    %s316 = sshrl.u32 %s315, 1
    %s317 = sor.u32 %s315, %s316
    %s318 = sand.u32 51, %s317
    %s319 = sshrl.u32 %s318, 2
    %s320 = sor.u32 %s318, %s319
    %s321 = sand.u32 15, %s320
    %v322 = vld [vmem:[%s313] sm:%s321]
    %v323 = vunpack.c.l.bf16 %v322
    %v324 = vunpack.c.h.bf16 %v322
    %s325 = scalar_lea.vmem %s15, 12
    %s327 = sor.u32 255, 127
    %s328 = sand.u32 %s327, 85
    %s329 = sshrl.u32 %s328, 1
    %s330 = sor.u32 %s328, %s329
    %s331 = sand.u32 51, %s330
    %s332 = sshrl.u32 %s331, 2
    %s333 = sor.u32 %s331, %s332
    %s334 = sand.u32 15, %s333
    %v335 = vld [vmem:[%s325] sm:%s334]
    %v336 = vunpack.c.l.bf16 %v335
    %v337 = vunpack.c.h.bf16 %v335
    %v338 = vlaneseq
    %v339 = vand.u32 %v338, 127
    %vm341 = vcmp.lt.s32.totalorder %v339, 27
    %v342 = vsel %vm341, %v336, %v39
    %343 = xla_tuple %v342, %v34
    %344 = xla_tuple %343
    %v345 = vmax.f32 %v342, %v34
    %346 = xla_tuple %v345
    %347 = xla_tuple %v345, %v29
    %348 = xla_tuple %347
    %v349 = vmax.f32 %v345, %v29
    %350 = xla_tuple %v349
    %351 = xla_tuple %v349, %v24
    %352 = xla_tuple %351
    %v353 = vmax.f32 %v349, %v24
    %354 = xla_tuple %v353
    %s355 = scalar_lea.vmem [#allocation26], 12
    %v356 = vpack.c.bf16 0.0, %v353
    %358 = vst [vmem:[%s355] sm:$0xf] %v356
    %s359 = scalar_lea.vmem %s81, 16
    %s361 = sand.u32 0, 85
    %s362 = sshrl.u32 %s361, 1
    %s363 = sor.u32 %s361, %s362
    %s364 = sand.u32 51, %s363
    %s365 = sshrl.u32 %s364, 2
    %s366 = sor.u32 %s364, %s365
    %s367 = sand.u32 15, %s366
    %v368 = vld [vmem:[%s359] sm:%s367]
    %v369 = vunpack.c.l.bf16 %v368
    %v370 = vunpack.c.h.bf16 %v368
    %s371 = scalar_lea.vmem %s82, 16
    %s373 = sand.u32 0, 85
    %s374 = sshrl.u32 %s373, 1
    %s375 = sor.u32 %s373, %s374
    %s376 = sand.u32 51, %s375
    %s377 = sshrl.u32 %s376, 2
    %s378 = sor.u32 %s376, %s377
    %s379 = sand.u32 15, %s378
    %v380 = vld [vmem:[%s371] sm:%s379]
    %v381 = vunpack.c.l.bf16 %v380
    %v382 = vunpack.c.h.bf16 %v380
    %s383 = scalar_lea.vmem %s83, 16
    %s385 = sand.u32 0, 85
    %s386 = sshrl.u32 %s385, 1
    %s387 = sor.u32 %s385, %s386
    %s388 = sand.u32 51, %s387
    %s389 = sshrl.u32 %s388, 2
    %s390 = sor.u32 %s388, %s389
    %s391 = sand.u32 15, %s390
    %v392 = vld [vmem:[%s383] sm:%s391]
    %v393 = vunpack.c.l.bf16 %v392
    %v394 = vunpack.c.h.bf16 %v392
    %s395 = scalar_lea.vmem %s15, 16
    %s397 = sor.u32 255, 127
    %s398 = sand.u32 %s397, 85
    %s399 = sshrl.u32 %s398, 1
    %s400 = sor.u32 %s398, %s399
    %s401 = sand.u32 51, %s400
    %s402 = sshrl.u32 %s401, 2
    %s403 = sor.u32 %s401, %s402
    %s404 = sand.u32 15, %s403
    %v405 = vld [vmem:[%s395] sm:%s404]
    %v406 = vunpack.c.l.bf16 %v405
    %v407 = vunpack.c.h.bf16 %v405
    %v408 = vlaneseq
    %v409 = vand.u32 %v408, 127
    %vm411 = vcmp.lt.s32.totalorder %v409, 27
    %v412 = vsel %vm411, %v406, %v39
    %413 = xla_tuple %v412, %v34
    %414 = xla_tuple %413
    %v415 = vmax.f32 %v412, %v34
    %416 = xla_tuple %v415
    %417 = xla_tuple %v415, %v29
    %418 = xla_tuple %417
    %v419 = vmax.f32 %v415, %v29
    %420 = xla_tuple %v419
    %421 = xla_tuple %v419, %v24
    %422 = xla_tuple %421
    %v423 = vmax.f32 %v419, %v24
    %424 = xla_tuple %v423
    %s425 = scalar_lea.vmem [#allocation26], 16
    %v426 = vpack.c.bf16 0.0, %v423
    %428 = vst [vmem:[%s425] sm:$0xf] %v426
    %s429 = scalar_lea.vmem %s81, 20
    %s431 = sand.u32 0, 85
    %s432 = sshrl.u32 %s431, 1
    %s433 = sor.u32 %s431, %s432
    %s434 = sand.u32 51, %s433
    %s435 = sshrl.u32 %s434, 2
    %s436 = sor.u32 %s434, %s435
    %s437 = sand.u32 15, %s436
    %v438 = vld [vmem:[%s429] sm:%s437]
    %v439 = vunpack.c.l.bf16 %v438
    %v440 = vunpack.c.h.bf16 %v438
    %s441 = scalar_lea.vmem %s82, 20
    %s443 = sand.u32 0, 85
    %s444 = sshrl.u32 %s443, 1
    %s445 = sor.u32 %s443, %s444
    %s446 = sand.u32 51, %s445
    %s447 = sshrl.u32 %s446, 2
    %s448 = sor.u32 %s446, %s447
    %s449 = sand.u32 15, %s448
    %v450 = vld [vmem:[%s441] sm:%s449]
    %v451 = vunpack.c.l.bf16 %v450
    %v452 = vunpack.c.h.bf16 %v450
    %s453 = scalar_lea.vmem %s83, 20
    %s455 = sand.u32 0, 85
    %s456 = sshrl.u32 %s455, 1
    %s457 = sor.u32 %s455, %s456
    %s458 = sand.u32 51, %s457
    %s459 = sshrl.u32 %s458, 2
    %s460 = sor.u32 %s458, %s459
    %s461 = sand.u32 15, %s460
    %v462 = vld [vmem:[%s453] sm:%s461]
    %v463 = vunpack.c.l.bf16 %v462
    %v464 = vunpack.c.h.bf16 %v462
    %s465 = scalar_lea.vmem %s15, 20
    %s467 = sor.u32 255, 127
    %s468 = sand.u32 %s467, 85
    %s469 = sshrl.u32 %s468, 1
    %s470 = sor.u32 %s468, %s469
    %s471 = sand.u32 51, %s470
    %s472 = sshrl.u32 %s471, 2
    %s473 = sor.u32 %s471, %s472
    %s474 = sand.u32 15, %s473
    %v475 = vld [vmem:[%s465] sm:%s474]
    %v476 = vunpack.c.l.bf16 %v475
    %v477 = vunpack.c.h.bf16 %v475
    %v478 = vlaneseq
    %v479 = vand.u32 %v478, 127
    %vm481 = vcmp.lt.s32.totalorder %v479, 27
    %v482 = vsel %vm481, %v476, %v39
    %483 = xla_tuple %v482, %v34
    %484 = xla_tuple %483
    %v485 = vmax.f32 %v482, %v34
    %486 = xla_tuple %v485
    %487 = xla_tuple %v485, %v29
    %488 = xla_tuple %487
    %v489 = vmax.f32 %v485, %v29
    %490 = xla_tuple %v489
    %491 = xla_tuple %v489, %v24
    %492 = xla_tuple %491
    %v493 = vmax.f32 %v489, %v24
    %494 = xla_tuple %v493
    %s495 = scalar_lea.vmem [#allocation26], 20
    %v496 = vpack.c.bf16 0.0, %v493
    %498 = vst [vmem:[%s495] sm:$0xf] %v496
    %s499 = scalar_lea.vmem %s81, 24
    %s501 = sand.u32 0, 85
    %s502 = sshrl.u32 %s501, 1
    %s503 = sor.u32 %s501, %s502
    %s504 = sand.u32 51, %s503
    %s505 = sshrl.u32 %s504, 2
    %s506 = sor.u32 %s504, %s505
    %s507 = sand.u32 15, %s506
    %v508 = vld [vmem:[%s499] sm:%s507]
    %v509 = vunpack.c.l.bf16 %v508
    %v510 = vunpack.c.h.bf16 %v508
    %s511 = scalar_lea.vmem %s82, 24
    %s513 = sand.u32 0, 85
    %s514 = sshrl.u32 %s513, 1
    %s515 = sor.u32 %s513, %s514
    %s516 = sand.u32 51, %s515
    %s517 = sshrl.u32 %s516, 2
    %s518 = sor.u32 %s516, %s517
    %s519 = sand.u32 15, %s518
    %v520 = vld [vmem:[%s511] sm:%s519]
    %v521 = vunpack.c.l.bf16 %v520
    %v522 = vunpack.c.h.bf16 %v520
    %s523 = scalar_lea.vmem %s83, 24
    %s525 = sand.u32 0, 85
    %s526 = sshrl.u32 %s525, 1
    %s527 = sor.u32 %s525, %s526
    %s528 = sand.u32 51, %s527
    %s529 = sshrl.u32 %s528, 2
    %s530 = sor.u32 %s528, %s529
    %s531 = sand.u32 15, %s530
    %v532 = vld [vmem:[%s523] sm:%s531]
    %v533 = vunpack.c.l.bf16 %v532
    %v534 = vunpack.c.h.bf16 %v532
    %s535 = scalar_lea.vmem %s15, 24
    %s537 = sor.u32 255, 127
    %s538 = sand.u32 %s537, 85
    %s539 = sshrl.u32 %s538, 1
    %s540 = sor.u32 %s538, %s539
    %s541 = sand.u32 51, %s540
    %s542 = sshrl.u32 %s541, 2
    %s543 = sor.u32 %s541, %s542
    %s544 = sand.u32 15, %s543
    %v545 = vld [vmem:[%s535] sm:%s544]
    %v546 = vunpack.c.l.bf16 %v545
    %v547 = vunpack.c.h.bf16 %v545
    %v548 = vlaneseq
    %v549 = vand.u32 %v548, 127
    %vm551 = vcmp.lt.s32.totalorder %v549, 27
    %v552 = vsel %vm551, %v546, %v39
    %553 = xla_tuple %v552, %v34
    %554 = xla_tuple %553
    %v555 = vmax.f32 %v552, %v34
    %556 = xla_tuple %v555
    %557 = xla_tuple %v555, %v29
    %558 = xla_tuple %557
    %v559 = vmax.f32 %v555, %v29
    %560 = xla_tuple %v559
    %561 = xla_tuple %v559, %v24
    %562 = xla_tuple %561
    %v563 = vmax.f32 %v559, %v24
    %564 = xla_tuple %v563
    %s565 = scalar_lea.vmem [#allocation26], 24
    %v566 = vpack.c.bf16 0.0, %v563
    %568 = vst [vmem:[%s565] sm:$0xf] %v566
    %s569 = scalar_lea.vmem %s81, 28
    %s571 = sand.u32 0, 85
    %s572 = sshrl.u32 %s571, 1
    %s573 = sor.u32 %s571, %s572
    %s574 = sand.u32 51, %s573
    %s575 = sshrl.u32 %s574, 2
    %s576 = sor.u32 %s574, %s575
    %s577 = sand.u32 15, %s576
    %v578 = vld [vmem:[%s569] sm:%s577]
    %v579 = vunpack.c.l.bf16 %v578
    %v580 = vunpack.c.h.bf16 %v578
    %s581 = scalar_lea.vmem %s82, 28
    %s583 = sand.u32 0, 85
    %s584 = sshrl.u32 %s583, 1
    %s585 = sor.u32 %s583, %s584
    %s586 = sand.u32 51, %s585
    %s587 = sshrl.u32 %s586, 2
    %s588 = sor.u32 %s586, %s587
    %s589 = sand.u32 15, %s588
    %v590 = vld [vmem:[%s581] sm:%s589]
    %v591 = vunpack.c.l.bf16 %v590
    %v592 = vunpack.c.h.bf16 %v590
    %s593 = scalar_lea.vmem %s83, 28
    %s595 = sand.u32 0, 85
    %s596 = sshrl.u32 %s595, 1
    %s597 = sor.u32 %s595, %s596
    %s598 = sand.u32 51, %s597
    %s599 = sshrl.u32 %s598, 2
    %s600 = sor.u32 %s598, %s599
    %s601 = sand.u32 15, %s600
    %v602 = vld [vmem:[%s593] sm:%s601]
    %v603 = vunpack.c.l.bf16 %v602
    %v604 = vunpack.c.h.bf16 %v602
    %s605 = scalar_lea.vmem %s15, 28
    %s607 = sor.u32 255, 127
    %s608 = sand.u32 %s607, 85
    %s609 = sshrl.u32 %s608, 1
    %s610 = sor.u32 %s608, %s609
    %s611 = sand.u32 51, %s610
    %s612 = sshrl.u32 %s611, 2
    %s613 = sor.u32 %s611, %s612
    %s614 = sand.u32 15, %s613
    %v615 = vld [vmem:[%s605] sm:%s614]
    %v616 = vunpack.c.l.bf16 %v615
    %v617 = vunpack.c.h.bf16 %v615
    %v618 = vlaneseq
    %v619 = vand.u32 %v618, 127
    %vm621 = vcmp.lt.s32.totalorder %v619, 27
    %v622 = vsel %vm621, %v616, %v39
    %623 = xla_tuple %v622, %v34
    %624 = xla_tuple %623
    %v625 = vmax.f32 %v622, %v34
    %626 = xla_tuple %v625
    %627 = xla_tuple %v625, %v29
    %628 = xla_tuple %627
    %v629 = vmax.f32 %v625, %v29
    %630 = xla_tuple %v629
    %631 = xla_tuple %v629, %v24
    %632 = xla_tuple %631
    %v633 = vmax.f32 %v629, %v24
    %634 = xla_tuple %v633
    %s635 = scalar_lea.vmem [#allocation26], 28
    %v636 = vpack.c.bf16 0.0, %v633
    %638 = vst [vmem:[%s635] sm:$0xf] %v636
    %s639 = scalar_lea.vmem %s81, 32
    %s641 = sand.u32 0, 85
    %s642 = sshrl.u32 %s641, 1
    %s643 = sor.u32 %s641, %s642
    %s644 = sand.u32 51, %s643
    %s645 = sshrl.u32 %s644, 2
    %s646 = sor.u32 %s644, %s645
    %s647 = sand.u32 15, %s646
    %v648 = vld [vmem:[%s639] sm:%s647]
    %v649 = vunpack.c.l.bf16 %v648
    %v650 = vunpack.c.h.bf16 %v648
    %s651 = scalar_lea.vmem %s82, 32
    %s653 = sand.u32 0, 85
    %s654 = sshrl.u32 %s653, 1
    %s655 = sor.u32 %s653, %s654
    %s656 = sand.u32 51, %s655
    %s657 = sshrl.u32 %s656, 2
    %s658 = sor.u32 %s656, %s657
    %s659 = sand.u32 15, %s658
    %v660 = vld [vmem:[%s651] sm:%s659]
    %v661 = vunpack.c.l.bf16 %v660
    %v662 = vunpack.c.h.bf16 %v660
    %s663 = scalar_lea.vmem %s83, 32
    %s665 = sand.u32 0, 85
    %s666 = sshrl.u32 %s665, 1
    %s667 = sor.u32 %s665, %s666
    %s668 = sand.u32 51, %s667
    %s669 = sshrl.u32 %s668, 2
    %s670 = sor.u32 %s668, %s669
    %s671 = sand.u32 15, %s670
    %v672 = vld [vmem:[%s663] sm:%s671]
    %v673 = vunpack.c.l.bf16 %v672
    %v674 = vunpack.c.h.bf16 %v672
    %s675 = scalar_lea.vmem %s15, 32
    %s677 = sor.u32 255, 127
    %s678 = sand.u32 %s677, 85
    %s679 = sshrl.u32 %s678, 1
    %s680 = sor.u32 %s678, %s679
    %s681 = sand.u32 51, %s680
    %s682 = sshrl.u32 %s681, 2
    %s683 = sor.u32 %s681, %s682
    %s684 = sand.u32 15, %s683
    %v685 = vld [vmem:[%s675] sm:%s684]
    %v686 = vunpack.c.l.bf16 %v685
    %v687 = vunpack.c.h.bf16 %v685
    %v688 = vlaneseq
    %v689 = vand.u32 %v688, 127
    %vm691 = vcmp.lt.s32.totalorder %v689, 27
    %v692 = vsel %vm691, %v686, %v39
    %693 = xla_tuple %v692, %v34
    %694 = xla_tuple %693
    %v695 = vmax.f32 %v692, %v34
    %696 = xla_tuple %v695
    %697 = xla_tuple %v695, %v29
    %698 = xla_tuple %697
    %v699 = vmax.f32 %v695, %v29
    %700 = xla_tuple %v699
    %701 = xla_tuple %v699, %v24
    %702 = xla_tuple %701
    %v703 = vmax.f32 %v699, %v24
    %704 = xla_tuple %v703
    %s705 = scalar_lea.vmem [#allocation26], 32
    %v706 = vpack.c.bf16 0.0, %v703
    %708 = vst [vmem:[%s705] sm:$0xf] %v706
    %s709 = scalar_lea.vmem %s81, 36
    %s711 = sand.u32 0, 85
    %s712 = sshrl.u32 %s711, 1
    %s713 = sor.u32 %s711, %s712
    %s714 = sand.u32 51, %s713
    %s715 = sshrl.u32 %s714, 2
    %s716 = sor.u32 %s714, %s715
    %s717 = sand.u32 15, %s716
    %v718 = vld [vmem:[%s709] sm:%s717]
    %v719 = vunpack.c.l.bf16 %v718
    %v720 = vunpack.c.h.bf16 %v718
    %s721 = scalar_lea.vmem %s82, 36
    %s723 = sand.u32 0, 85
    %s724 = sshrl.u32 %s723, 1
    %s725 = sor.u32 %s723, %s724
    %s726 = sand.u32 51, %s725
    %s727 = sshrl.u32 %s726, 2
    %s728 = sor.u32 %s726, %s727
    %s729 = sand.u32 15, %s728
    %v730 = vld [vmem:[%s721] sm:%s729]
    %v731 = vunpack.c.l.bf16 %v730
    %v732 = vunpack.c.h.bf16 %v730
    %s733 = scalar_lea.vmem %s83, 36
    %s735 = sand.u32 0, 85
    %s736 = sshrl.u32 %s735, 1
    %s737 = sor.u32 %s735, %s736
    %s738 = sand.u32 51, %s737
    %s739 = sshrl.u32 %s738, 2
    %s740 = sor.u32 %s738, %s739
    %s741 = sand.u32 15, %s740
    %v742 = vld [vmem:[%s733] sm:%s741]
    %v743 = vunpack.c.l.bf16 %v742
    %v744 = vunpack.c.h.bf16 %v742
    %s745 = scalar_lea.vmem %s15, 36
    %s747 = sor.u32 255, 127
    %s748 = sand.u32 %s747, 85
    %s749 = sshrl.u32 %s748, 1
    %s750 = sor.u32 %s748, %s749
    %s751 = sand.u32 51, %s750
    %s752 = sshrl.u32 %s751, 2
    %s753 = sor.u32 %s751, %s752
    %s754 = sand.u32 15, %s753
    %v755 = vld [vmem:[%s745] sm:%s754]
    %v756 = vunpack.c.l.bf16 %v755
    %v757 = vunpack.c.h.bf16 %v755
    %v758 = vlaneseq
    %v759 = vand.u32 %v758, 127
    %vm761 = vcmp.lt.s32.totalorder %v759, 27
    %v762 = vsel %vm761, %v756, %v39
    %763 = xla_tuple %v762, %v34
    %764 = xla_tuple %763
    %v765 = vmax.f32 %v762, %v34
    %766 = xla_tuple %v765
    %767 = xla_tuple %v765, %v29
    %768 = xla_tuple %767
    %v769 = vmax.f32 %v765, %v29
    %770 = xla_tuple %v769
    %771 = xla_tuple %v769, %v24
    %772 = xla_tuple %771
    %v773 = vmax.f32 %v769, %v24
    %774 = xla_tuple %v773
    %s775 = scalar_lea.vmem [#allocation26], 36
    %v776 = vpack.c.bf16 0.0, %v773
    %778 = vst [vmem:[%s775] sm:$0xf] %v776
    %s779 = scalar_lea.vmem %s81, 40
    %s781 = sand.u32 0, 85
    %s782 = sshrl.u32 %s781, 1
    %s783 = sor.u32 %s781, %s782
    %s784 = sand.u32 51, %s783
    %s785 = sshrl.u32 %s784, 2
    %s786 = sor.u32 %s784, %s785
    %s787 = sand.u32 15, %s786
    %v788 = vld [vmem:[%s779] sm:%s787]
    %v789 = vunpack.c.l.bf16 %v788
    %v790 = vunpack.c.h.bf16 %v788
    %s791 = scalar_lea.vmem %s82, 40
    %s793 = sand.u32 0, 85
    %s794 = sshrl.u32 %s793, 1
    %s795 = sor.u32 %s793, %s794
    %s796 = sand.u32 51, %s795
    %s797 = sshrl.u32 %s796, 2
    %s798 = sor.u32 %s796, %s797
    %s799 = sand.u32 15, %s798
    %v800 = vld [vmem:[%s791] sm:%s799]
    %v801 = vunpack.c.l.bf16 %v800
    %v802 = vunpack.c.h.bf16 %v800
    %s803 = scalar_lea.vmem %s83, 40
    %s805 = sand.u32 0, 85
    %s806 = sshrl.u32 %s805, 1
    %s807 = sor.u32 %s805, %s806
    %s808 = sand.u32 51, %s807
    %s809 = sshrl.u32 %s808, 2
    %s810 = sor.u32 %s808, %s809
    %s811 = sand.u32 15, %s810
    %v812 = vld [vmem:[%s803] sm:%s811]
    %v813 = vunpack.c.l.bf16 %v812
    %v814 = vunpack.c.h.bf16 %v812
    %s815 = scalar_lea.vmem %s15, 40
    %s817 = sor.u32 255, 127
    %s818 = sand.u32 %s817, 85
    %s819 = sshrl.u32 %s818, 1
    %s820 = sor.u32 %s818, %s819
    %s821 = sand.u32 51, %s820
    %s822 = sshrl.u32 %s821, 2
    %s823 = sor.u32 %s821, %s822
    %s824 = sand.u32 15, %s823
    %v825 = vld [vmem:[%s815] sm:%s824]
    %v826 = vunpack.c.l.bf16 %v825
    %v827 = vunpack.c.h.bf16 %v825
    %v828 = vlaneseq
    %v829 = vand.u32 %v828, 127
    %vm831 = vcmp.lt.s32.totalorder %v829, 27
    %v832 = vsel %vm831, %v826, %v39
    %833 = xla_tuple %v832, %v34
    %834 = xla_tuple %833
    %v835 = vmax.f32 %v832, %v34
    %836 = xla_tuple %v835
    %837 = xla_tuple %v835, %v29
    %838 = xla_tuple %837
    %v839 = vmax.f32 %v835, %v29
    %840 = xla_tuple %v839
    %841 = xla_tuple %v839, %v24
    %842 = xla_tuple %841
    %v843 = vmax.f32 %v839, %v24
    %844 = xla_tuple %v843
    %s845 = scalar_lea.vmem [#allocation26], 40
    %v846 = vpack.c.bf16 0.0, %v843
    %848 = vst [vmem:[%s845] sm:$0xf] %v846
    %s849 = scalar_lea.vmem %s81, 44
    %s851 = sand.u32 0, 85
    %s852 = sshrl.u32 %s851, 1
    %s853 = sor.u32 %s851, %s852
    %s854 = sand.u32 51, %s853
    %s855 = sshrl.u32 %s854, 2
    %s856 = sor.u32 %s854, %s855
    %s857 = sand.u32 15, %s856
    %v858 = vld [vmem:[%s849] sm:%s857]
    %v859 = vunpack.c.l.bf16 %v858
    %v860 = vunpack.c.h.bf16 %v858
    %s861 = scalar_lea.vmem %s82, 44
    %s863 = sand.u32 0, 85
    %s864 = sshrl.u32 %s863, 1
    %s865 = sor.u32 %s863, %s864
    %s866 = sand.u32 51, %s865
    %s867 = sshrl.u32 %s866, 2
    %s868 = sor.u32 %s866, %s867
    %s869 = sand.u32 15, %s868
    %v870 = vld [vmem:[%s861] sm:%s869]
    %v871 = vunpack.c.l.bf16 %v870
    %v872 = vunpack.c.h.bf16 %v870
    %s873 = scalar_lea.vmem %s83, 44
    %s875 = sand.u32 0, 85
    %s876 = sshrl.u32 %s875, 1
    %s877 = sor.u32 %s875, %s876
    %s878 = sand.u32 51, %s877
    %s879 = sshrl.u32 %s878, 2
    %s880 = sor.u32 %s878, %s879
    %s881 = sand.u32 15, %s880
    %v882 = vld [vmem:[%s873] sm:%s881]
    %v883 = vunpack.c.l.bf16 %v882
    %v884 = vunpack.c.h.bf16 %v882
    %s885 = scalar_lea.vmem %s15, 44
    %s887 = sor.u32 255, 127
    %s888 = sand.u32 %s887, 85
    %s889 = sshrl.u32 %s888, 1
    %s890 = sor.u32 %s888, %s889
    %s891 = sand.u32 51, %s890
    %s892 = sshrl.u32 %s891, 2
    %s893 = sor.u32 %s891, %s892
    %s894 = sand.u32 15, %s893
    %v895 = vld [vmem:[%s885] sm:%s894]
    %v896 = vunpack.c.l.bf16 %v895
    %v897 = vunpack.c.h.bf16 %v895
    %v898 = vlaneseq
    %v899 = vand.u32 %v898, 127
    %vm901 = vcmp.lt.s32.totalorder %v899, 27
    %v902 = vsel %vm901, %v896, %v39
    %903 = xla_tuple %v902, %v34
    %904 = xla_tuple %903
    %v905 = vmax.f32 %v902, %v34
    %906 = xla_tuple %v905
    %907 = xla_tuple %v905, %v29
    %908 = xla_tuple %907
    %v909 = vmax.f32 %v905, %v29
    %910 = xla_tuple %v909
    %911 = xla_tuple %v909, %v24
    %912 = xla_tuple %911
    %v913 = vmax.f32 %v909, %v24
    %914 = xla_tuple %v913
    %s915 = scalar_lea.vmem [#allocation26], 44
    %v916 = vpack.c.bf16 0.0, %v913
    %918 = vst [vmem:[%s915] sm:$0xf] %v916
    %s919 = scalar_lea.vmem %s81, 48
    %s921 = sand.u32 0, 85
    %s922 = sshrl.u32 %s921, 1
    %s923 = sor.u32 %s921, %s922
    %s924 = sand.u32 51, %s923
    %s925 = sshrl.u32 %s924, 2
    %s926 = sor.u32 %s924, %s925
    %s927 = sand.u32 15, %s926
    %v928 = vld [vmem:[%s919] sm:%s927]
    %v929 = vunpack.c.l.bf16 %v928
    %v930 = vunpack.c.h.bf16 %v928
    %s931 = scalar_lea.vmem %s82, 48
    %s933 = sand.u32 0, 85
    %s934 = sshrl.u32 %s933, 1
    %s935 = sor.u32 %s933, %s934
    %s936 = sand.u32 51, %s935
    %s937 = sshrl.u32 %s936, 2
    %s938 = sor.u32 %s936, %s937
    %s939 = sand.u32 15, %s938
    %v940 = vld [vmem:[%s931] sm:%s939]
    %v941 = vunpack.c.l.bf16 %v940
    %v942 = vunpack.c.h.bf16 %v940
    %s943 = scalar_lea.vmem %s83, 48
    %s945 = sand.u32 0, 85
    %s946 = sshrl.u32 %s945, 1
    %s947 = sor.u32 %s945, %s946
    %s948 = sand.u32 51, %s947
    %s949 = sshrl.u32 %s948, 2
    %s950 = sor.u32 %s948, %s949
    %s951 = sand.u32 15, %s950
    %v952 = vld [vmem:[%s943] sm:%s951]
    %v953 = vunpack.c.l.bf16 %v952
    %v954 = vunpack.c.h.bf16 %v952
    %s955 = scalar_lea.vmem %s15, 48
    %s957 = sor.u32 255, 127
    %s958 = sand.u32 %s957, 85
    %s959 = sshrl.u32 %s958, 1
    %s960 = sor.u32 %s958, %s959
    %s961 = sand.u32 51, %s960
    %s962 = sshrl.u32 %s961, 2
    %s963 = sor.u32 %s961, %s962
    %s964 = sand.u32 15, %s963
    %v965 = vld [vmem:[%s955] sm:%s964]
    %v966 = vunpack.c.l.bf16 %v965
    %v967 = vunpack.c.h.bf16 %v965
    %v968 = vlaneseq
    %v969 = vand.u32 %v968, 127
    %vm971 = vcmp.lt.s32.totalorder %v969, 27
    %v972 = vsel %vm971, %v966, %v39
    %973 = xla_tuple %v972, %v34
    %974 = xla_tuple %973
    %v975 = vmax.f32 %v972, %v34
    %976 = xla_tuple %v975
    %977 = xla_tuple %v975, %v29
    %978 = xla_tuple %977
    %v979 = vmax.f32 %v975, %v29
    %980 = xla_tuple %v979
    %981 = xla_tuple %v979, %v24
    %982 = xla_tuple %981
    %v983 = vmax.f32 %v979, %v24
    %984 = xla_tuple %v983
    %s985 = scalar_lea.vmem [#allocation26], 48
    %v986 = vpack.c.bf16 0.0, %v983
    %988 = vst [vmem:[%s985] sm:$0xf] %v986
    %s989 = scalar_lea.vmem %s81, 52
    %s991 = sand.u32 0, 85
    %s992 = sshrl.u32 %s991, 1
    %s993 = sor.u32 %s991, %s992
    %s994 = sand.u32 51, %s993
    %s995 = sshrl.u32 %s994, 2
    %s996 = sor.u32 %s994, %s995
    %s997 = sand.u32 15, %s996
    %v998 = vld [vmem:[%s989] sm:%s997]
    %v999 = vunpack.c.l.bf16 %v998
    %v1000 = vunpack.c.h.bf16 %v998
    %s1001 = scalar_lea.vmem %s82, 52
    %s1003 = sand.u32 0, 85
    %s1004 = sshrl.u32 %s1003, 1
    %s1005 = sor.u32 %s1003, %s1004
    %s1006 = sand.u32 51, %s1005
    %s1007 = sshrl.u32 %s1006, 2
    %s1008 = sor.u32 %s1006, %s1007
    %s1009 = sand.u32 15, %s1008
    %v1010 = vld [vmem:[%s1001] sm:%s1009]
    %v1011 = vunpack.c.l.bf16 %v1010
    %v1012 = vunpack.c.h.bf16 %v1010
    %s1013 = scalar_lea.vmem %s83, 52
    %s1015 = sand.u32 0, 85
    %s1016 = sshrl.u32 %s1015, 1
    %s1017 = sor.u32 %s1015, %s1016
    %s1018 = sand.u32 51, %s1017
    %s1019 = sshrl.u32 %s1018, 2
    %s1020 = sor.u32 %s1018, %s1019
    %s1021 = sand.u32 15, %s1020
    %v1022 = vld [vmem:[%s1013] sm:%s1021]
    %v1023 = vunpack.c.l.bf16 %v1022
    %v1024 = vunpack.c.h.bf16 %v1022
    %s1025 = scalar_lea.vmem %s15, 52
    %s1027 = sor.u32 255, 127
    %s1028 = sand.u32 %s1027, 85
    %s1029 = sshrl.u32 %s1028, 1
    %s1030 = sor.u32 %s1028, %s1029
    %s1031 = sand.u32 51, %s1030
    %s1032 = sshrl.u32 %s1031, 2
    %s1033 = sor.u32 %s1031, %s1032
    %s1034 = sand.u32 15, %s1033
    %v1035 = vld [vmem:[%s1025] sm:%s1034]
    %v1036 = vunpack.c.l.bf16 %v1035
    %v1037 = vunpack.c.h.bf16 %v1035
    %v1038 = vlaneseq
    %v1039 = vand.u32 %v1038, 127
    %vm1041 = vcmp.lt.s32.totalorder %v1039, 27
    %v1042 = vsel %vm1041, %v1036, %v39
    %1043 = xla_tuple %v1042, %v34
    %1044 = xla_tuple %1043
    %v1045 = vmax.f32 %v1042, %v34
    %1046 = xla_tuple %v1045
    %1047 = xla_tuple %v1045, %v29
    %1048 = xla_tuple %1047
    %v1049 = vmax.f32 %v1045, %v29
    %1050 = xla_tuple %v1049
    %1051 = xla_tuple %v1049, %v24
    %1052 = xla_tuple %1051
    %v1053 = vmax.f32 %v1049, %v24
    %1054 = xla_tuple %v1053
    %s1055 = scalar_lea.vmem [#allocation26], 52
    %v1056 = vpack.c.bf16 0.0, %v1053
    %1058 = vst [vmem:[%s1055] sm:$0xf] %v1056
    %s1059 = scalar_lea.vmem %s81, 56
    %s1061 = sand.u32 0, 85
    %s1062 = sshrl.u32 %s1061, 1
    %s1063 = sor.u32 %s1061, %s1062
    %s1064 = sand.u32 51, %s1063
    %s1065 = sshrl.u32 %s1064, 2
    %s1066 = sor.u32 %s1064, %s1065
    %s1067 = sand.u32 15, %s1066
    %v1068 = vld [vmem:[%s1059] sm:%s1067]
    %v1069 = vunpack.c.l.bf16 %v1068
    %v1070 = vunpack.c.h.bf16 %v1068
    %s1071 = scalar_lea.vmem %s82, 56
    %s1073 = sand.u32 0, 85
    %s1074 = sshrl.u32 %s1073, 1
    %s1075 = sor.u32 %s1073, %s1074
    %s1076 = sand.u32 51, %s1075
    %s1077 = sshrl.u32 %s1076, 2
    %s1078 = sor.u32 %s1076, %s1077
    %s1079 = sand.u32 15, %s1078
    %v1080 = vld [vmem:[%s1071] sm:%s1079]
    %v1081 = vunpack.c.l.bf16 %v1080
    %v1082 = vunpack.c.h.bf16 %v1080
    %s1083 = scalar_lea.vmem %s83, 56
    %s1085 = sand.u32 0, 85
    %s1086 = sshrl.u32 %s1085, 1
    %s1087 = sor.u32 %s1085, %s1086
    %s1088 = sand.u32 51, %s1087
    %s1089 = sshrl.u32 %s1088, 2
    %s1090 = sor.u32 %s1088, %s1089
    %s1091 = sand.u32 15, %s1090
    %v1092 = vld [vmem:[%s1083] sm:%s1091]
    %v1093 = vunpack.c.l.bf16 %v1092
    %v1094 = vunpack.c.h.bf16 %v1092
    %s1095 = scalar_lea.vmem %s15, 56
    %s1097 = sor.u32 255, 127
    %s1098 = sand.u32 %s1097, 85
    %s1099 = sshrl.u32 %s1098, 1
    %s1100 = sor.u32 %s1098, %s1099
    %s1101 = sand.u32 51, %s1100
    %s1102 = sshrl.u32 %s1101, 2
    %s1103 = sor.u32 %s1101, %s1102
    %s1104 = sand.u32 15, %s1103
    %v1105 = vld [vmem:[%s1095] sm:%s1104]
    %v1106 = vunpack.c.l.bf16 %v1105
    %v1107 = vunpack.c.h.bf16 %v1105
    %v1108 = vlaneseq
    %v1109 = vand.u32 %v1108, 127
    %vm1111 = vcmp.lt.s32.totalorder %v1109, 27
    %v1112 = vsel %vm1111, %v1106, %v39
    %1113 = xla_tuple %v1112, %v34
    %1114 = xla_tuple %1113
    %v1115 = vmax.f32 %v1112, %v34
    %1116 = xla_tuple %v1115
    %1117 = xla_tuple %v1115, %v29
    %1118 = xla_tuple %1117
    %v1119 = vmax.f32 %v1115, %v29
    %1120 = xla_tuple %v1119
    %1121 = xla_tuple %v1119, %v24
    %1122 = xla_tuple %1121
    %v1123 = vmax.f32 %v1119, %v24
    %1124 = xla_tuple %v1123
    %s1125 = scalar_lea.vmem [#allocation26], 56
    %v1126 = vpack.c.bf16 0.0, %v1123
    %1128 = vst [vmem:[%s1125] sm:$0xf] %v1126
    %s1129 = scalar_lea.vmem %s81, 60
    %s1131 = sand.u32 0, 85
    %s1132 = sshrl.u32 %s1131, 1
    %s1133 = sor.u32 %s1131, %s1132
    %s1134 = sand.u32 51, %s1133
    %s1135 = sshrl.u32 %s1134, 2
    %s1136 = sor.u32 %s1134, %s1135
    %s1137 = sand.u32 15, %s1136
    %v1138 = vld [vmem:[%s1129] sm:%s1137]
    %v1139 = vunpack.c.l.bf16 %v1138
    %v1140 = vunpack.c.h.bf16 %v1138
    %s1141 = scalar_lea.vmem %s82, 60
    %s1143 = sand.u32 0, 85
    %s1144 = sshrl.u32 %s1143, 1
    %s1145 = sor.u32 %s1143, %s1144
    %s1146 = sand.u32 51, %s1145
    %s1147 = sshrl.u32 %s1146, 2
    %s1148 = sor.u32 %s1146, %s1147
    %s1149 = sand.u32 15, %s1148
    %v1150 = vld [vmem:[%s1141] sm:%s1149]
    %v1151 = vunpack.c.l.bf16 %v1150
    %v1152 = vunpack.c.h.bf16 %v1150
    %s1153 = scalar_lea.vmem %s83, 60
    %s1155 = sand.u32 0, 85
    %s1156 = sshrl.u32 %s1155, 1
    %s1157 = sor.u32 %s1155, %s1156
    %s1158 = sand.u32 51, %s1157
    %s1159 = sshrl.u32 %s1158, 2
    %s1160 = sor.u32 %s1158, %s1159
    %s1161 = sand.u32 15, %s1160
    %v1162 = vld [vmem:[%s1153] sm:%s1161]
    %v1163 = vunpack.c.l.bf16 %v1162
    %v1164 = vunpack.c.h.bf16 %v1162
    %s1165 = scalar_lea.vmem %s15, 60
    %s1167 = sor.u32 255, 127
    %s1168 = sand.u32 %s1167, 85
    %s1169 = sshrl.u32 %s1168, 1
    %s1170 = sor.u32 %s1168, %s1169
    %s1171 = sand.u32 51, %s1170
    %s1172 = sshrl.u32 %s1171, 2
    %s1173 = sor.u32 %s1171, %s1172
    %s1174 = sand.u32 15, %s1173
    %v1175 = vld [vmem:[%s1165] sm:%s1174]
    %v1176 = vunpack.c.l.bf16 %v1175
    %v1177 = vunpack.c.h.bf16 %v1175
    %v1178 = vlaneseq
    %v1179 = vand.u32 %v1178, 127
    %vm1181 = vcmp.lt.s32.totalorder %v1179, 27
    %v1182 = vsel %vm1181, %v1176, %v39
    %1183 = xla_tuple %v1182, %v34
    %1184 = xla_tuple %1183
    %v1185 = vmax.f32 %v1182, %v34
    %1186 = xla_tuple %v1185
    %1187 = xla_tuple %v1185, %v29
    %1188 = xla_tuple %1187
    %v1189 = vmax.f32 %v1185, %v29
    %1190 = xla_tuple %v1189
    %1191 = xla_tuple %v1189, %v24
    %1192 = xla_tuple %1191
    %v1193 = vmax.f32 %v1189, %v24
    %1194 = xla_tuple %v1193
    %s1195 = scalar_lea.vmem [#allocation26], 60
    %v1196 = vpack.c.bf16 0.0, %v1193
    %1198 = vst [vmem:[%s1195] sm:$0xf] %v1196
    %s1199 = scalar_lea.vmem %s81, 64
    %s1201 = sand.u32 0, 85
    %s1202 = sshrl.u32 %s1201, 1
    %s1203 = sor.u32 %s1201, %s1202
    %s1204 = sand.u32 51, %s1203
    %s1205 = sshrl.u32 %s1204, 2
    %s1206 = sor.u32 %s1204, %s1205
    %s1207 = sand.u32 15, %s1206
    %v1208 = vld [vmem:[%s1199] sm:%s1207]
    %v1209 = vunpack.c.l.bf16 %v1208
    %v1210 = vunpack.c.h.bf16 %v1208
    %s1211 = scalar_lea.vmem %s82, 64
    %s1213 = sand.u32 0, 85
    %s1214 = sshrl.u32 %s1213, 1
    %s1215 = sor.u32 %s1213, %s1214
    %s1216 = sand.u32 51, %s1215
    %s1217 = sshrl.u32 %s1216, 2
    %s1218 = sor.u32 %s1216, %s1217
    %s1219 = sand.u32 15, %s1218
    %v1220 = vld [vmem:[%s1211] sm:%s1219]
    %v1221 = vunpack.c.l.bf16 %v1220
    %v1222 = vunpack.c.h.bf16 %v1220
    %s1223 = scalar_lea.vmem %s83, 64
    %s1225 = sor.u32 255, 127
    %s1226 = sand.u32 %s1225, 85
    %s1227 = sshrl.u32 %s1226, 1
    %s1228 = sor.u32 %s1226, %s1227
    %s1229 = sand.u32 51, %s1228
    %s1230 = sshrl.u32 %s1229, 2
    %s1231 = sor.u32 %s1229, %s1230
    %s1232 = sand.u32 15, %s1231
    %v1233 = vld [vmem:[%s1223] sm:%s1232]
    %v1234 = vunpack.c.l.bf16 %v1233
    %v1235 = vunpack.c.h.bf16 %v1233
    %v1236 = vlaneseq
    %v1237 = vand.u32 %v1236, 127
    %vm1239 = vcmp.lt.s32.totalorder %v1237, 27
    %v1240 = vsel %vm1239, %v1234, %v34
    %1241 = xla_tuple %v39, %v1240
    %1242 = xla_tuple %1241
    %v1243 = vmax.f32 %v39, %v1240
    %1244 = xla_tuple %v1243
    %1245 = xla_tuple %v1243, %v29
    %1246 = xla_tuple %1245
    %v1247 = vmax.f32 %v1243, %v29
    %1248 = xla_tuple %v1247
    %1249 = xla_tuple %v1247, %v24
    %1250 = xla_tuple %1249
    %v1251 = vmax.f32 %v1247, %v24
    %1252 = xla_tuple %v1251
    %s1253 = scalar_lea.vmem [#allocation26], 64
    %v1254 = vpack.c.bf16 0.0, %v1251
    %1256 = vst [vmem:[%s1253] sm:$0xf] %v1254
    %s1257 = scalar_lea.vmem %s81, 68
    %s1259 = sand.u32 0, 85
    %s1260 = sshrl.u32 %s1259, 1
    %s1261 = sor.u32 %s1259, %s1260
    %s1262 = sand.u32 51, %s1261
    %s1263 = sshrl.u32 %s1262, 2
    %s1264 = sor.u32 %s1262, %s1263
    %s1265 = sand.u32 15, %s1264
    %v1266 = vld [vmem:[%s1257] sm:%s1265]
    %v1267 = vunpack.c.l.bf16 %v1266
    %v1268 = vunpack.c.h.bf16 %v1266
    %s1269 = scalar_lea.vmem %s82, 68
    %s1271 = sand.u32 0, 85
    %s1272 = sshrl.u32 %s1271, 1
    %s1273 = sor.u32 %s1271, %s1272
    %s1274 = sand.u32 51, %s1273
    %s1275 = sshrl.u32 %s1274, 2
    %s1276 = sor.u32 %s1274, %s1275
    %s1277 = sand.u32 15, %s1276
    %v1278 = vld [vmem:[%s1269] sm:%s1277]
    %v1279 = vunpack.c.l.bf16 %v1278
    %v1280 = vunpack.c.h.bf16 %v1278
    %s1281 = scalar_lea.vmem %s83, 68
    %s1283 = sor.u32 255, 127
    %s1284 = sand.u32 %s1283, 85
    %s1285 = sshrl.u32 %s1284, 1
    %s1286 = sor.u32 %s1284, %s1285
    %s1287 = sand.u32 51, %s1286
    %s1288 = sshrl.u32 %s1287, 2
    %s1289 = sor.u32 %s1287, %s1288
    %s1290 = sand.u32 15, %s1289
    %v1291 = vld [vmem:[%s1281] sm:%s1290]
    %v1292 = vunpack.c.l.bf16 %v1291
    %v1293 = vunpack.c.h.bf16 %v1291
    %v1294 = vlaneseq
    %v1295 = vand.u32 %v1294, 127
    %vm1297 = vcmp.lt.s32.totalorder %v1295, 27
    %v1298 = vsel %vm1297, %v1292, %v34
    %1299 = xla_tuple %v39, %v1298
    %1300 = xla_tuple %1299
    %v1301 = vmax.f32 %v39, %v1298
    %1302 = xla_tuple %v1301
    %1303 = xla_tuple %v1301, %v29
    %1304 = xla_tuple %1303
    %v1305 = vmax.f32 %v1301, %v29
    %1306 = xla_tuple %v1305
    %1307 = xla_tuple %v1305, %v24
    %1308 = xla_tuple %1307
    %v1309 = vmax.f32 %v1305, %v24
    %1310 = xla_tuple %v1309
    %s1311 = scalar_lea.vmem [#allocation26], 68
    %v1312 = vpack.c.bf16 0.0, %v1309
    %1314 = vst [vmem:[%s1311] sm:$0xf] %v1312
    %s1315 = scalar_lea.vmem %s81, 72
    %s1317 = sand.u32 0, 85
    %s1318 = sshrl.u32 %s1317, 1
    %s1319 = sor.u32 %s1317, %s1318
    %s1320 = sand.u32 51, %s1319
    %s1321 = sshrl.u32 %s1320, 2
    %s1322 = sor.u32 %s1320, %s1321
    %s1323 = sand.u32 15, %s1322
    %v1324 = vld [vmem:[%s1315] sm:%s1323]
    %v1325 = vunpack.c.l.bf16 %v1324
    %v1326 = vunpack.c.h.bf16 %v1324
    %s1327 = scalar_lea.vmem %s82, 72
    %s1329 = sand.u32 0, 85
    %s1330 = sshrl.u32 %s1329, 1
    %s1331 = sor.u32 %s1329, %s1330
    %s1332 = sand.u32 51, %s1331
    %s1333 = sshrl.u32 %s1332, 2
    %s1334 = sor.u32 %s1332, %s1333
    %s1335 = sand.u32 15, %s1334
    %v1336 = vld [vmem:[%s1327] sm:%s1335]
    %v1337 = vunpack.c.l.bf16 %v1336
    %v1338 = vunpack.c.h.bf16 %v1336
    %s1339 = scalar_lea.vmem %s83, 72
    %s1341 = sor.u32 255, 127
    %s1342 = sand.u32 %s1341, 85
    %s1343 = sshrl.u32 %s1342, 1
    %s1344 = sor.u32 %s1342, %s1343
    %s1345 = sand.u32 51, %s1344
    %s1346 = sshrl.u32 %s1345, 2
    %s1347 = sor.u32 %s1345, %s1346
    %s1348 = sand.u32 15, %s1347
    %v1349 = vld [vmem:[%s1339] sm:%s1348]
    %v1350 = vunpack.c.l.bf16 %v1349
    %v1351 = vunpack.c.h.bf16 %v1349
    %v1352 = vlaneseq
    %v1353 = vand.u32 %v1352, 127
    %vm1355 = vcmp.lt.s32.totalorder %v1353, 27
    %v1356 = vsel %vm1355, %v1350, %v34
    %1357 = xla_tuple %v39, %v1356
    %1358 = xla_tuple %1357
    %v1359 = vmax.f32 %v39, %v1356
    %1360 = xla_tuple %v1359
    %1361 = xla_tuple %v1359, %v29
    %1362 = xla_tuple %1361
    %v1363 = vmax.f32 %v1359, %v29
    %1364 = xla_tuple %v1363
    %1365 = xla_tuple %v1363, %v24
    %1366 = xla_tuple %1365
    %v1367 = vmax.f32 %v1363, %v24
    %1368 = xla_tuple %v1367
    %s1369 = scalar_lea.vmem [#allocation26], 72
    %v1370 = vpack.c.bf16 0.0, %v1367
    %1372 = vst [vmem:[%s1369] sm:$0xf] %v1370
    %s1373 = scalar_lea.vmem %s81, 76
    %s1375 = sand.u32 0, 85
    %s1376 = sshrl.u32 %s1375, 1
    %s1377 = sor.u32 %s1375, %s1376
    %s1378 = sand.u32 51, %s1377
    %s1379 = sshrl.u32 %s1378, 2
    %s1380 = sor.u32 %s1378, %s1379
    %s1381 = sand.u32 15, %s1380
    %v1382 = vld [vmem:[%s1373] sm:%s1381]
    %v1383 = vunpack.c.l.bf16 %v1382
    %v1384 = vunpack.c.h.bf16 %v1382
    %s1385 = scalar_lea.vmem %s82, 76
    %s1387 = sand.u32 0, 85
    %s1388 = sshrl.u32 %s1387, 1
    %s1389 = sor.u32 %s1387, %s1388
    %s1390 = sand.u32 51, %s1389
    %s1391 = sshrl.u32 %s1390, 2
    %s1392 = sor.u32 %s1390, %s1391
    %s1393 = sand.u32 15, %s1392
    %v1394 = vld [vmem:[%s1385] sm:%s1393]
    %v1395 = vunpack.c.l.bf16 %v1394
    %v1396 = vunpack.c.h.bf16 %v1394
    %s1397 = scalar_lea.vmem %s83, 76
    %s1399 = sor.u32 255, 127
    %s1400 = sand.u32 %s1399, 85
    %s1401 = sshrl.u32 %s1400, 1
    %s1402 = sor.u32 %s1400, %s1401
    %s1403 = sand.u32 51, %s1402
    %s1404 = sshrl.u32 %s1403, 2
    %s1405 = sor.u32 %s1403, %s1404
    %s1406 = sand.u32 15, %s1405
    %v1407 = vld [vmem:[%s1397] sm:%s1406]
    %v1408 = vunpack.c.l.bf16 %v1407
    %v1409 = vunpack.c.h.bf16 %v1407
    %v1410 = vlaneseq
    %v1411 = vand.u32 %v1410, 127
    %vm1413 = vcmp.lt.s32.totalorder %v1411, 27
    %v1414 = vsel %vm1413, %v1408, %v34
    %1415 = xla_tuple %v39, %v1414
    %1416 = xla_tuple %1415
    %v1417 = vmax.f32 %v39, %v1414
    %1418 = xla_tuple %v1417
    %1419 = xla_tuple %v1417, %v29
    %1420 = xla_tuple %1419
    %v1421 = vmax.f32 %v1417, %v29
    %1422 = xla_tuple %v1421
    %1423 = xla_tuple %v1421, %v24
    %1424 = xla_tuple %1423
    %v1425 = vmax.f32 %v1421, %v24
    %1426 = xla_tuple %v1425
    %s1427 = scalar_lea.vmem [#allocation26], 76
    %v1428 = vpack.c.bf16 0.0, %v1425
    %1430 = vst [vmem:[%s1427] sm:$0xf] %v1428
    %s1431 = scalar_lea.vmem %s81, 80
    %s1433 = sand.u32 0, 85
    %s1434 = sshrl.u32 %s1433, 1
    %s1435 = sor.u32 %s1433, %s1434
    %s1436 = sand.u32 51, %s1435
    %s1437 = sshrl.u32 %s1436, 2
    %s1438 = sor.u32 %s1436, %s1437
    %s1439 = sand.u32 15, %s1438
    %v1440 = vld [vmem:[%s1431] sm:%s1439]
    %v1441 = vunpack.c.l.bf16 %v1440
    %v1442 = vunpack.c.h.bf16 %v1440
    %s1443 = scalar_lea.vmem %s82, 80
    %s1445 = sand.u32 0, 85
    %s1446 = sshrl.u32 %s1445, 1
    %s1447 = sor.u32 %s1445, %s1446
    %s1448 = sand.u32 51, %s1447
    %s1449 = sshrl.u32 %s1448, 2
    %s1450 = sor.u32 %s1448, %s1449
    %s1451 = sand.u32 15, %s1450
    %v1452 = vld [vmem:[%s1443] sm:%s1451]
    %v1453 = vunpack.c.l.bf16 %v1452
    %v1454 = vunpack.c.h.bf16 %v1452
    %s1455 = scalar_lea.vmem %s83, 80
    %s1457 = sor.u32 255, 127
    %s1458 = sand.u32 %s1457, 85
    %s1459 = sshrl.u32 %s1458, 1
    %s1460 = sor.u32 %s1458, %s1459
    %s1461 = sand.u32 51, %s1460
    %s1462 = sshrl.u32 %s1461, 2
    %s1463 = sor.u32 %s1461, %s1462
    %s1464 = sand.u32 15, %s1463
    %v1465 = vld [vmem:[%s1455] sm:%s1464]
    %v1466 = vunpack.c.l.bf16 %v1465
    %v1467 = vunpack.c.h.bf16 %v1465
    %v1468 = vlaneseq
    %v1469 = vand.u32 %v1468, 127
    %vm1471 = vcmp.lt.s32.totalorder %v1469, 27
    %v1472 = vsel %vm1471, %v1466, %v34
    %1473 = xla_tuple %v39, %v1472
    %1474 = xla_tuple %1473
    %v1475 = vmax.f32 %v39, %v1472
    %1476 = xla_tuple %v1475
    %1477 = xla_tuple %v1475, %v29
    %1478 = xla_tuple %1477
    %v1479 = vmax.f32 %v1475, %v29
    %1480 = xla_tuple %v1479
    %1481 = xla_tuple %v1479, %v24
    %1482 = xla_tuple %1481
    %v1483 = vmax.f32 %v1479, %v24
    %1484 = xla_tuple %v1483
    %s1485 = scalar_lea.vmem [#allocation26], 80
    %v1486 = vpack.c.bf16 0.0, %v1483
    %1488 = vst [vmem:[%s1485] sm:$0xf] %v1486
    %s1489 = scalar_lea.vmem %s81, 84
    %s1491 = sand.u32 0, 85
    %s1492 = sshrl.u32 %s1491, 1
    %s1493 = sor.u32 %s1491, %s1492
    %s1494 = sand.u32 51, %s1493
    %s1495 = sshrl.u32 %s1494, 2
    %s1496 = sor.u32 %s1494, %s1495
    %s1497 = sand.u32 15, %s1496
    %v1498 = vld [vmem:[%s1489] sm:%s1497]
    %v1499 = vunpack.c.l.bf16 %v1498
    %v1500 = vunpack.c.h.bf16 %v1498
    %s1501 = scalar_lea.vmem %s82, 84
    %s1503 = sand.u32 0, 85
    %s1504 = sshrl.u32 %s1503, 1
    %s1505 = sor.u32 %s1503, %s1504
    %s1506 = sand.u32 51, %s1505
    %s1507 = sshrl.u32 %s1506, 2
    %s1508 = sor.u32 %s1506, %s1507
    %s1509 = sand.u32 15, %s1508
    %v1510 = vld [vmem:[%s1501] sm:%s1509]
    %v1511 = vunpack.c.l.bf16 %v1510
    %v1512 = vunpack.c.h.bf16 %v1510
    %s1513 = scalar_lea.vmem %s83, 84
    %s1515 = sor.u32 255, 127
    %s1516 = sand.u32 %s1515, 85
    %s1517 = sshrl.u32 %s1516, 1
    %s1518 = sor.u32 %s1516, %s1517
    %s1519 = sand.u32 51, %s1518
    %s1520 = sshrl.u32 %s1519, 2
    %s1521 = sor.u32 %s1519, %s1520
    %s1522 = sand.u32 15, %s1521
    %v1523 = vld [vmem:[%s1513] sm:%s1522]
    %v1524 = vunpack.c.l.bf16 %v1523
    %v1525 = vunpack.c.h.bf16 %v1523
    %v1526 = vlaneseq
    %v1527 = vand.u32 %v1526, 127
    %vm1529 = vcmp.lt.s32.totalorder %v1527, 27
    %v1530 = vsel %vm1529, %v1524, %v34
    %1531 = xla_tuple %v39, %v1530
    %1532 = xla_tuple %1531
    %v1533 = vmax.f32 %v39, %v1530
    %1534 = xla_tuple %v1533
    %1535 = xla_tuple %v1533, %v29
    %1536 = xla_tuple %1535
    %v1537 = vmax.f32 %v1533, %v29
    %1538 = xla_tuple %v1537
    %1539 = xla_tuple %v1537, %v24
    %1540 = xla_tuple %1539
    %v1541 = vmax.f32 %v1537, %v24
    %1542 = xla_tuple %v1541
    %s1543 = scalar_lea.vmem [#allocation26], 84
    %v1544 = vpack.c.bf16 0.0, %v1541
    %1546 = vst [vmem:[%s1543] sm:$0xf] %v1544
    %s1547 = scalar_lea.vmem %s81, 88
    %s1549 = sand.u32 0, 85
    %s1550 = sshrl.u32 %s1549, 1
    %s1551 = sor.u32 %s1549, %s1550
    %s1552 = sand.u32 51, %s1551
    %s1553 = sshrl.u32 %s1552, 2
    %s1554 = sor.u32 %s1552, %s1553
    %s1555 = sand.u32 15, %s1554
    %v1556 = vld [vmem:[%s1547] sm:%s1555]
    %v1557 = vunpack.c.l.bf16 %v1556
    %v1558 = vunpack.c.h.bf16 %v1556
    %s1559 = scalar_lea.vmem %s82, 88
    %s1561 = sand.u32 0, 85
    %s1562 = sshrl.u32 %s1561, 1
    %s1563 = sor.u32 %s1561, %s1562
    %s1564 = sand.u32 51, %s1563
    %s1565 = sshrl.u32 %s1564, 2
    %s1566 = sor.u32 %s1564, %s1565
    %s1567 = sand.u32 15, %s1566
    %v1568 = vld [vmem:[%s1559] sm:%s1567]
    %v1569 = vunpack.c.l.bf16 %v1568
    %v1570 = vunpack.c.h.bf16 %v1568
    %s1571 = scalar_lea.vmem %s83, 88
    %s1573 = sor.u32 255, 127
    %s1574 = sand.u32 %s1573, 85
    %s1575 = sshrl.u32 %s1574, 1
    %s1576 = sor.u32 %s1574, %s1575
    %s1577 = sand.u32 51, %s1576
    %s1578 = sshrl.u32 %s1577, 2
    %s1579 = sor.u32 %s1577, %s1578
    %s1580 = sand.u32 15, %s1579
    %v1581 = vld [vmem:[%s1571] sm:%s1580]
    %v1582 = vunpack.c.l.bf16 %v1581
    %v1583 = vunpack.c.h.bf16 %v1581
    %v1584 = vlaneseq
    %v1585 = vand.u32 %v1584, 127
    %vm1587 = vcmp.lt.s32.totalorder %v1585, 27
    %v1588 = vsel %vm1587, %v1582, %v34
    %1589 = xla_tuple %v39, %v1588
    %1590 = xla_tuple %1589
    %v1591 = vmax.f32 %v39, %v1588
    %1592 = xla_tuple %v1591
    %1593 = xla_tuple %v1591, %v29
    %1594 = xla_tuple %1593
    %v1595 = vmax.f32 %v1591, %v29
    %1596 = xla_tuple %v1595
    %1597 = xla_tuple %v1595, %v24
    %1598 = xla_tuple %1597
    %v1599 = vmax.f32 %v1595, %v24
    %1600 = xla_tuple %v1599
    %s1601 = scalar_lea.vmem [#allocation26], 88
    %v1602 = vpack.c.bf16 0.0, %v1599
    %1604 = vst [vmem:[%s1601] sm:$0xf] %v1602
    %s1605 = scalar_lea.vmem %s81, 92
    %s1607 = sand.u32 0, 85
    %s1608 = sshrl.u32 %s1607, 1
    %s1609 = sor.u32 %s1607, %s1608
    %s1610 = sand.u32 51, %s1609
    %s1611 = sshrl.u32 %s1610, 2
    %s1612 = sor.u32 %s1610, %s1611
    %s1613 = sand.u32 15, %s1612
    %v1614 = vld [vmem:[%s1605] sm:%s1613]
    %v1615 = vunpack.c.l.bf16 %v1614
    %v1616 = vunpack.c.h.bf16 %v1614
    %s1617 = scalar_lea.vmem %s82, 92
    %s1619 = sand.u32 0, 85
    %s1620 = sshrl.u32 %s1619, 1
    %s1621 = sor.u32 %s1619, %s1620
    %s1622 = sand.u32 51, %s1621
    %s1623 = sshrl.u32 %s1622, 2
    %s1624 = sor.u32 %s1622, %s1623
    %s1625 = sand.u32 15, %s1624
    %v1626 = vld [vmem:[%s1617] sm:%s1625]
    %v1627 = vunpack.c.l.bf16 %v1626
    %v1628 = vunpack.c.h.bf16 %v1626
    %s1629 = scalar_lea.vmem %s83, 92
    %s1631 = sor.u32 255, 127
    %s1632 = sand.u32 %s1631, 85
    %s1633 = sshrl.u32 %s1632, 1
    %s1634 = sor.u32 %s1632, %s1633
    %s1635 = sand.u32 51, %s1634
    %s1636 = sshrl.u32 %s1635, 2
    %s1637 = sor.u32 %s1635, %s1636
    %s1638 = sand.u32 15, %s1637
    %v1639 = vld [vmem:[%s1629] sm:%s1638]
    %v1640 = vunpack.c.l.bf16 %v1639
    %v1641 = vunpack.c.h.bf16 %v1639
    %v1642 = vlaneseq
    %v1643 = vand.u32 %v1642, 127
    %vm1645 = vcmp.lt.s32.totalorder %v1643, 27
    %v1646 = vsel %vm1645, %v1640, %v34
    %1647 = xla_tuple %v39, %v1646
    %1648 = xla_tuple %1647
    %v1649 = vmax.f32 %v39, %v1646
    %1650 = xla_tuple %v1649
    %1651 = xla_tuple %v1649, %v29
    %1652 = xla_tuple %1651
    %v1653 = vmax.f32 %v1649, %v29
    %1654 = xla_tuple %v1653
    %1655 = xla_tuple %v1653, %v24
    %1656 = xla_tuple %1655
    %v1657 = vmax.f32 %v1653, %v24
    %1658 = xla_tuple %v1657
    %s1659 = scalar_lea.vmem [#allocation26], 92
    %v1660 = vpack.c.bf16 0.0, %v1657
    %1662 = vst [vmem:[%s1659] sm:$0xf] %v1660
    %s1663 = scalar_lea.vmem %s81, 96
    %s1665 = sand.u32 0, 85
    %s1666 = sshrl.u32 %s1665, 1
    %s1667 = sor.u32 %s1665, %s1666
    %s1668 = sand.u32 51, %s1667
    %s1669 = sshrl.u32 %s1668, 2
    %s1670 = sor.u32 %s1668, %s1669
    %s1671 = sand.u32 15, %s1670
    %v1672 = vld [vmem:[%s1663] sm:%s1671]
    %v1673 = vunpack.c.l.bf16 %v1672
    %v1674 = vunpack.c.h.bf16 %v1672
    %s1675 = scalar_lea.vmem %s82, 96
    %s1677 = sand.u32 0, 85
    %s1678 = sshrl.u32 %s1677, 1
    %s1679 = sor.u32 %s1677, %s1678
    %s1680 = sand.u32 51, %s1679
    %s1681 = sshrl.u32 %s1680, 2
    %s1682 = sor.u32 %s1680, %s1681
    %s1683 = sand.u32 15, %s1682
    %v1684 = vld [vmem:[%s1675] sm:%s1683]
    %v1685 = vunpack.c.l.bf16 %v1684
    %v1686 = vunpack.c.h.bf16 %v1684
    %s1687 = scalar_lea.vmem %s83, 96
    %s1689 = sor.u32 255, 127
    %s1690 = sand.u32 %s1689, 85
    %s1691 = sshrl.u32 %s1690, 1
    %s1692 = sor.u32 %s1690, %s1691
    %s1693 = sand.u32 51, %s1692
    %s1694 = sshrl.u32 %s1693, 2
    %s1695 = sor.u32 %s1693, %s1694
    %s1696 = sand.u32 15, %s1695
    %v1697 = vld [vmem:[%s1687] sm:%s1696]
    %v1698 = vunpack.c.l.bf16 %v1697
    %v1699 = vunpack.c.h.bf16 %v1697
    %v1700 = vlaneseq
    %v1701 = vand.u32 %v1700, 127
    %vm1703 = vcmp.lt.s32.totalorder %v1701, 27
    %v1704 = vsel %vm1703, %v1698, %v34
    %1705 = xla_tuple %v39, %v1704
    %1706 = xla_tuple %1705
    %v1707 = vmax.f32 %v39, %v1704
    %1708 = xla_tuple %v1707
    %1709 = xla_tuple %v1707, %v29
    %1710 = xla_tuple %1709
    %v1711 = vmax.f32 %v1707, %v29
    %1712 = xla_tuple %v1711
    %1713 = xla_tuple %v1711, %v24
    %1714 = xla_tuple %1713
    %v1715 = vmax.f32 %v1711, %v24
    %1716 = xla_tuple %v1715
    %s1717 = scalar_lea.vmem [#allocation26], 96
    %v1718 = vpack.c.bf16 0.0, %v1715
    %1720 = vst [vmem:[%s1717] sm:$0xf] %v1718
    %s1721 = scalar_lea.vmem %s81, 100
    %s1723 = sand.u32 0, 85
    %s1724 = sshrl.u32 %s1723, 1
    %s1725 = sor.u32 %s1723, %s1724
    %s1726 = sand.u32 51, %s1725
    %s1727 = sshrl.u32 %s1726, 2
    %s1728 = sor.u32 %s1726, %s1727
    %s1729 = sand.u32 15, %s1728
    %v1730 = vld [vmem:[%s1721] sm:%s1729]
    %v1731 = vunpack.c.l.bf16 %v1730
    %v1732 = vunpack.c.h.bf16 %v1730
    %s1733 = scalar_lea.vmem %s82, 100
    %s1735 = sand.u32 0, 85
    %s1736 = sshrl.u32 %s1735, 1
    %s1737 = sor.u32 %s1735, %s1736
    %s1738 = sand.u32 51, %s1737
    %s1739 = sshrl.u32 %s1738, 2
    %s1740 = sor.u32 %s1738, %s1739
    %s1741 = sand.u32 15, %s1740
    %v1742 = vld [vmem:[%s1733] sm:%s1741]
    %v1743 = vunpack.c.l.bf16 %v1742
    %v1744 = vunpack.c.h.bf16 %v1742
    %s1745 = scalar_lea.vmem %s83, 100
    %s1747 = sor.u32 255, 127
    %s1748 = sand.u32 %s1747, 85
    %s1749 = sshrl.u32 %s1748, 1
    %s1750 = sor.u32 %s1748, %s1749
    %s1751 = sand.u32 51, %s1750
    %s1752 = sshrl.u32 %s1751, 2
    %s1753 = sor.u32 %s1751, %s1752
    %s1754 = sand.u32 15, %s1753
    %v1755 = vld [vmem:[%s1745] sm:%s1754]
    %v1756 = vunpack.c.l.bf16 %v1755
    %v1757 = vunpack.c.h.bf16 %v1755
    %v1758 = vlaneseq
    %v1759 = vand.u32 %v1758, 127
    %vm1761 = vcmp.lt.s32.totalorder %v1759, 27
    %v1762 = vsel %vm1761, %v1756, %v34
    %1763 = xla_tuple %v39, %v1762
    %1764 = xla_tuple %1763
    %v1765 = vmax.f32 %v39, %v1762
    %1766 = xla_tuple %v1765
    %1767 = xla_tuple %v1765, %v29
    %1768 = xla_tuple %1767
    %v1769 = vmax.f32 %v1765, %v29
    %1770 = xla_tuple %v1769
    %1771 = xla_tuple %v1769, %v24
    %1772 = xla_tuple %1771
    %v1773 = vmax.f32 %v1769, %v24
    %1774 = xla_tuple %v1773
    %s1775 = scalar_lea.vmem [#allocation26], 100
    %v1776 = vpack.c.bf16 0.0, %v1773
    %1778 = vst [vmem:[%s1775] sm:$0xf] %v1776
    %s1779 = scalar_lea.vmem %s81, 104
    %s1781 = sand.u32 0, 85
    %s1782 = sshrl.u32 %s1781, 1
    %s1783 = sor.u32 %s1781, %s1782
    %s1784 = sand.u32 51, %s1783
    %s1785 = sshrl.u32 %s1784, 2
    %s1786 = sor.u32 %s1784, %s1785
    %s1787 = sand.u32 15, %s1786
    %v1788 = vld [vmem:[%s1779] sm:%s1787]
    %v1789 = vunpack.c.l.bf16 %v1788
    %v1790 = vunpack.c.h.bf16 %v1788
    %s1791 = scalar_lea.vmem %s82, 104
    %s1793 = sand.u32 0, 85
    %s1794 = sshrl.u32 %s1793, 1
    %s1795 = sor.u32 %s1793, %s1794
    %s1796 = sand.u32 51, %s1795
    %s1797 = sshrl.u32 %s1796, 2
    %s1798 = sor.u32 %s1796, %s1797
    %s1799 = sand.u32 15, %s1798
    %v1800 = vld [vmem:[%s1791] sm:%s1799]
    %v1801 = vunpack.c.l.bf16 %v1800
    %v1802 = vunpack.c.h.bf16 %v1800
    %s1803 = scalar_lea.vmem %s83, 104
    %s1805 = sor.u32 255, 127
    %s1806 = sand.u32 %s1805, 85
    %s1807 = sshrl.u32 %s1806, 1
    %s1808 = sor.u32 %s1806, %s1807
    %s1809 = sand.u32 51, %s1808
    %s1810 = sshrl.u32 %s1809, 2
    %s1811 = sor.u32 %s1809, %s1810
    %s1812 = sand.u32 15, %s1811
    %v1813 = vld [vmem:[%s1803] sm:%s1812]
    %v1814 = vunpack.c.l.bf16 %v1813
    %v1815 = vunpack.c.h.bf16 %v1813
    %v1816 = vlaneseq
    %v1817 = vand.u32 %v1816, 127
    %vm1819 = vcmp.lt.s32.totalorder %v1817, 27
    %v1820 = vsel %vm1819, %v1814, %v34
    %1821 = xla_tuple %v39, %v1820
    %1822 = xla_tuple %1821
    %v1823 = vmax.f32 %v39, %v1820
    %1824 = xla_tuple %v1823
    %1825 = xla_tuple %v1823, %v29
    %1826 = xla_tuple %1825
    %v1827 = vmax.f32 %v1823, %v29
    %1828 = xla_tuple %v1827
    %1829 = xla_tuple %v1827, %v24
    %1830 = xla_tuple %1829
    %v1831 = vmax.f32 %v1827, %v24
    %1832 = xla_tuple %v1831
    %s1833 = scalar_lea.vmem [#allocation26], 104
    %v1834 = vpack.c.bf16 0.0, %v1831
    %1836 = vst [vmem:[%s1833] sm:$0xf] %v1834
    %s1837 = scalar_lea.vmem %s81, 108
    %s1839 = sand.u32 0, 85
    %s1840 = sshrl.u32 %s1839, 1
    %s1841 = sor.u32 %s1839, %s1840
    %s1842 = sand.u32 51, %s1841
    %s1843 = sshrl.u32 %s1842, 2
    %s1844 = sor.u32 %s1842, %s1843
    %s1845 = sand.u32 15, %s1844
    %v1846 = vld [vmem:[%s1837] sm:%s1845]
    %v1847 = vunpack.c.l.bf16 %v1846
    %v1848 = vunpack.c.h.bf16 %v1846
    %s1849 = scalar_lea.vmem %s82, 108
    %s1851 = sand.u32 0, 85
    %s1852 = sshrl.u32 %s1851, 1
    %s1853 = sor.u32 %s1851, %s1852
    %s1854 = sand.u32 51, %s1853
    %s1855 = sshrl.u32 %s1854, 2
    %s1856 = sor.u32 %s1854, %s1855
    %s1857 = sand.u32 15, %s1856
    %v1858 = vld [vmem:[%s1849] sm:%s1857]
    %v1859 = vunpack.c.l.bf16 %v1858
    %v1860 = vunpack.c.h.bf16 %v1858
    %s1861 = scalar_lea.vmem %s83, 108
    %s1863 = sor.u32 255, 127
    %s1864 = sand.u32 %s1863, 85
    %s1865 = sshrl.u32 %s1864, 1
    %s1866 = sor.u32 %s1864, %s1865
    %s1867 = sand.u32 51, %s1866
    %s1868 = sshrl.u32 %s1867, 2
    %s1869 = sor.u32 %s1867, %s1868
    %s1870 = sand.u32 15, %s1869
    %v1871 = vld [vmem:[%s1861] sm:%s1870]
    %v1872 = vunpack.c.l.bf16 %v1871
    %v1873 = vunpack.c.h.bf16 %v1871
    %v1874 = vlaneseq
    %v1875 = vand.u32 %v1874, 127
    %vm1877 = vcmp.lt.s32.totalorder %v1875, 27
    %v1878 = vsel %vm1877, %v1872, %v34
    %1879 = xla_tuple %v39, %v1878
    %1880 = xla_tuple %1879
    %v1881 = vmax.f32 %v39, %v1878
    %1882 = xla_tuple %v1881
    %1883 = xla_tuple %v1881, %v29
    %1884 = xla_tuple %1883
    %v1885 = vmax.f32 %v1881, %v29
    %1886 = xla_tuple %v1885
    %1887 = xla_tuple %v1885, %v24
    %1888 = xla_tuple %1887
    %v1889 = vmax.f32 %v1885, %v24
    %1890 = xla_tuple %v1889
    %s1891 = scalar_lea.vmem [#allocation26], 108
    %v1892 = vpack.c.bf16 0.0, %v1889
    %1894 = vst [vmem:[%s1891] sm:$0xf] %v1892
    %s1895 = scalar_lea.vmem %s81, 112
    %s1897 = sand.u32 0, 85
    %s1898 = sshrl.u32 %s1897, 1
    %s1899 = sor.u32 %s1897, %s1898
    %s1900 = sand.u32 51, %s1899
    %s1901 = sshrl.u32 %s1900, 2
    %s1902 = sor.u32 %s1900, %s1901
    %s1903 = sand.u32 15, %s1902
    %v1904 = vld [vmem:[%s1895] sm:%s1903]
    %v1905 = vunpack.c.l.bf16 %v1904
    %v1906 = vunpack.c.h.bf16 %v1904
    %s1907 = scalar_lea.vmem %s82, 112
    %s1909 = sand.u32 0, 85
    %s1910 = sshrl.u32 %s1909, 1
    %s1911 = sor.u32 %s1909, %s1910
    %s1912 = sand.u32 51, %s1911
    %s1913 = sshrl.u32 %s1912, 2
    %s1914 = sor.u32 %s1912, %s1913
    %s1915 = sand.u32 15, %s1914
    %v1916 = vld [vmem:[%s1907] sm:%s1915]
    %v1917 = vunpack.c.l.bf16 %v1916
    %v1918 = vunpack.c.h.bf16 %v1916
    %s1919 = scalar_lea.vmem %s83, 112
    %s1921 = sor.u32 255, 127
    %s1922 = sand.u32 %s1921, 85
    %s1923 = sshrl.u32 %s1922, 1
    %s1924 = sor.u32 %s1922, %s1923
    %s1925 = sand.u32 51, %s1924
    %s1926 = sshrl.u32 %s1925, 2
    %s1927 = sor.u32 %s1925, %s1926
    %s1928 = sand.u32 15, %s1927
    %v1929 = vld [vmem:[%s1919] sm:%s1928]
    %v1930 = vunpack.c.l.bf16 %v1929
    %v1931 = vunpack.c.h.bf16 %v1929
    %v1932 = vlaneseq
    %v1933 = vand.u32 %v1932, 127
    %vm1935 = vcmp.lt.s32.totalorder %v1933, 27
    %v1936 = vsel %vm1935, %v1930, %v34
    %1937 = xla_tuple %v39, %v1936
    %1938 = xla_tuple %1937
    %v1939 = vmax.f32 %v39, %v1936
    %1940 = xla_tuple %v1939
    %1941 = xla_tuple %v1939, %v29
    %1942 = xla_tuple %1941
    %v1943 = vmax.f32 %v1939, %v29
    %1944 = xla_tuple %v1943
    %1945 = xla_tuple %v1943, %v24
    %1946 = xla_tuple %1945
    %v1947 = vmax.f32 %v1943, %v24
    %1948 = xla_tuple %v1947
    %s1949 = scalar_lea.vmem [#allocation26], 112
    %v1950 = vpack.c.bf16 0.0, %v1947
    %1952 = vst [vmem:[%s1949] sm:$0xf] %v1950
    %s1953 = scalar_lea.vmem %s81, 116
    %s1955 = sand.u32 0, 85
    %s1956 = sshrl.u32 %s1955, 1
    %s1957 = sor.u32 %s1955, %s1956
    %s1958 = sand.u32 51, %s1957
    %s1959 = sshrl.u32 %s1958, 2
    %s1960 = sor.u32 %s1958, %s1959
    %s1961 = sand.u32 15, %s1960
    %v1962 = vld [vmem:[%s1953] sm:%s1961]
    %v1963 = vunpack.c.l.bf16 %v1962
    %v1964 = vunpack.c.h.bf16 %v1962
    %s1965 = scalar_lea.vmem %s82, 116
    %s1967 = sand.u32 0, 85
    %s1968 = sshrl.u32 %s1967, 1
    %s1969 = sor.u32 %s1967, %s1968
    %s1970 = sand.u32 51, %s1969
    %s1971 = sshrl.u32 %s1970, 2
    %s1972 = sor.u32 %s1970, %s1971
    %s1973 = sand.u32 15, %s1972
    %v1974 = vld [vmem:[%s1965] sm:%s1973]
    %v1975 = vunpack.c.l.bf16 %v1974
    %v1976 = vunpack.c.h.bf16 %v1974
    %s1977 = scalar_lea.vmem %s83, 116
    %s1979 = sor.u32 255, 127
    %s1980 = sand.u32 %s1979, 85
    %s1981 = sshrl.u32 %s1980, 1
    %s1982 = sor.u32 %s1980, %s1981
    %s1983 = sand.u32 51, %s1982
    %s1984 = sshrl.u32 %s1983, 2
    %s1985 = sor.u32 %s1983, %s1984
    %s1986 = sand.u32 15, %s1985
    %v1987 = vld [vmem:[%s1977] sm:%s1986]
    %v1988 = vunpack.c.l.bf16 %v1987
    %v1989 = vunpack.c.h.bf16 %v1987
    %v1990 = vlaneseq
    %v1991 = vand.u32 %v1990, 127
    %vm1993 = vcmp.lt.s32.totalorder %v1991, 27
    %v1994 = vsel %vm1993, %v1988, %v34
    %1995 = xla_tuple %v39, %v1994
    %1996 = xla_tuple %1995
    %v1997 = vmax.f32 %v39, %v1994
    %1998 = xla_tuple %v1997
    %1999 = xla_tuple %v1997, %v29
    %2000 = xla_tuple %1999
    %v2001 = vmax.f32 %v1997, %v29
    %2002 = xla_tuple %v2001
    %2003 = xla_tuple %v2001, %v24
    %2004 = xla_tuple %2003
    %v2005 = vmax.f32 %v2001, %v24
    %2006 = xla_tuple %v2005
    %s2007 = scalar_lea.vmem [#allocation26], 116
    %v2008 = vpack.c.bf16 0.0, %v2005
    %2010 = vst [vmem:[%s2007] sm:$0xf] %v2008
    %s2011 = scalar_lea.vmem %s81, 120
    %s2013 = sand.u32 0, 85
    %s2014 = sshrl.u32 %s2013, 1
    %s2015 = sor.u32 %s2013, %s2014
    %s2016 = sand.u32 51, %s2015
    %s2017 = sshrl.u32 %s2016, 2
    %s2018 = sor.u32 %s2016, %s2017
    %s2019 = sand.u32 15, %s2018
    %v2020 = vld [vmem:[%s2011] sm:%s2019]
    %v2021 = vunpack.c.l.bf16 %v2020
    %v2022 = vunpack.c.h.bf16 %v2020
    %s2023 = scalar_lea.vmem %s82, 120
    %s2025 = sand.u32 0, 85
    %s2026 = sshrl.u32 %s2025, 1
    %s2027 = sor.u32 %s2025, %s2026
    %s2028 = sand.u32 51, %s2027
    %s2029 = sshrl.u32 %s2028, 2
    %s2030 = sor.u32 %s2028, %s2029
    %s2031 = sand.u32 15, %s2030
    %v2032 = vld [vmem:[%s2023] sm:%s2031]
    %v2033 = vunpack.c.l.bf16 %v2032
    %v2034 = vunpack.c.h.bf16 %v2032
    %s2035 = scalar_lea.vmem %s83, 120
    %s2037 = sor.u32 255, 127
    %s2038 = sand.u32 %s2037, 85
    %s2039 = sshrl.u32 %s2038, 1
    %s2040 = sor.u32 %s2038, %s2039
    %s2041 = sand.u32 51, %s2040
    %s2042 = sshrl.u32 %s2041, 2
    %s2043 = sor.u32 %s2041, %s2042
    %s2044 = sand.u32 15, %s2043
    %v2045 = vld [vmem:[%s2035] sm:%s2044]
    %v2046 = vunpack.c.l.bf16 %v2045
    %v2047 = vunpack.c.h.bf16 %v2045
    %v2048 = vlaneseq
    %v2049 = vand.u32 %v2048, 127
    %vm2051 = vcmp.lt.s32.totalorder %v2049, 27
    %v2052 = vsel %vm2051, %v2046, %v34
    %2053 = xla_tuple %v39, %v2052
    %2054 = xla_tuple %2053
    %v2055 = vmax.f32 %v39, %v2052
    %2056 = xla_tuple %v2055
    %2057 = xla_tuple %v2055, %v29
    %2058 = xla_tuple %2057
    %v2059 = vmax.f32 %v2055, %v29
    %2060 = xla_tuple %v2059
    %2061 = xla_tuple %v2059, %v24
    %2062 = xla_tuple %2061
    %v2063 = vmax.f32 %v2059, %v24
    %2064 = xla_tuple %v2063
    %s2065 = scalar_lea.vmem [#allocation26], 120
    %v2066 = vpack.c.bf16 0.0, %v2063
    %2068 = vst [vmem:[%s2065] sm:$0xf] %v2066
    %s2069 = scalar_lea.vmem %s81, 124
    %s2071 = sand.u32 0, 85
    %s2072 = sshrl.u32 %s2071, 1
    %s2073 = sor.u32 %s2071, %s2072
    %s2074 = sand.u32 51, %s2073
    %s2075 = sshrl.u32 %s2074, 2
    %s2076 = sor.u32 %s2074, %s2075
    %s2077 = sand.u32 15, %s2076
    %v2078 = vld [vmem:[%s2069] sm:%s2077]
    %v2079 = vunpack.c.l.bf16 %v2078
    %v2080 = vunpack.c.h.bf16 %v2078
    %s2081 = scalar_lea.vmem %s82, 124
    %s2083 = sand.u32 0, 85
    %s2084 = sshrl.u32 %s2083, 1
    %s2085 = sor.u32 %s2083, %s2084
    %s2086 = sand.u32 51, %s2085
    %s2087 = sshrl.u32 %s2086, 2
    %s2088 = sor.u32 %s2086, %s2087
    %s2089 = sand.u32 15, %s2088
    %v2090 = vld [vmem:[%s2081] sm:%s2089]
    %v2091 = vunpack.c.l.bf16 %v2090
    %v2092 = vunpack.c.h.bf16 %v2090
    %s2093 = scalar_lea.vmem %s83, 124
    %s2095 = sor.u32 255, 127
    %s2096 = sand.u32 %s2095, 85
    %s2097 = sshrl.u32 %s2096, 1
    %s2098 = sor.u32 %s2096, %s2097
    %s2099 = sand.u32 51, %s2098
    %s2100 = sshrl.u32 %s2099, 2
    %s2101 = sor.u32 %s2099, %s2100
    %s2102 = sand.u32 15, %s2101
    %v2103 = vld [vmem:[%s2093] sm:%s2102]
    %v2104 = vunpack.c.l.bf16 %v2103
    %v2105 = vunpack.c.h.bf16 %v2103
    %v2106 = vlaneseq
    %v2107 = vand.u32 %v2106, 127
    %vm2109 = vcmp.lt.s32.totalorder %v2107, 27
    %v2110 = vsel %vm2109, %v2104, %v34
    %2111 = xla_tuple %v39, %v2110
    %2112 = xla_tuple %2111
    %v2113 = vmax.f32 %v39, %v2110
    %2114 = xla_tuple %v2113
    %2115 = xla_tuple %v2113, %v29
    %2116 = xla_tuple %2115
    %v2117 = vmax.f32 %v2113, %v29
    %2118 = xla_tuple %v2117
    %2119 = xla_tuple %v2117, %v24
    %2120 = xla_tuple %2119
    %v2121 = vmax.f32 %v2117, %v24
    %2122 = xla_tuple %v2121
    %s2123 = scalar_lea.vmem [#allocation26], 124
    %v2124 = vpack.c.bf16 0.0, %v2121
    %2126 = vst [vmem:[%s2123] sm:$0xf] %v2124
    %s2127 = scalar_lea.vmem %s81, 128
    %s2129 = sand.u32 0, 85
    %s2130 = sshrl.u32 %s2129, 1
    %s2131 = sor.u32 %s2129, %s2130
    %s2132 = sand.u32 51, %s2131
    %s2133 = sshrl.u32 %s2132, 2
    %s2134 = sor.u32 %s2132, %s2133
    %s2135 = sand.u32 15, %s2134
    %v2136 = vld [vmem:[%s2127] sm:%s2135]
    %v2137 = vunpack.c.l.bf16 %v2136
    %v2138 = vunpack.c.h.bf16 %v2136
    %s2139 = scalar_lea.vmem %s82, 128
    %s2141 = sor.u32 255, 127
    %s2142 = sand.u32 %s2141, 85
    %s2143 = sshrl.u32 %s2142, 1
    %s2144 = sor.u32 %s2142, %s2143
    %s2145 = sand.u32 51, %s2144
    %s2146 = sshrl.u32 %s2145, 2
    %s2147 = sor.u32 %s2145, %s2146
    %s2148 = sand.u32 15, %s2147
    %v2149 = vld [vmem:[%s2139] sm:%s2148]
    %v2150 = vunpack.c.l.bf16 %v2149
    %v2151 = vunpack.c.h.bf16 %v2149
    %v2152 = vlaneseq
    %v2153 = vand.u32 %v2152, 127
    %vm2155 = vcmp.lt.s32.totalorder %v2153, 27
    %v2156 = vsel %vm2155, %v2150, %v29
    %2157 = xla_tuple %v39, %v34
    %2158 = xla_tuple %2157
    %v2159 = vmax.f32 %v39, %v34
    %2160 = xla_tuple %v2159
    %2161 = xla_tuple %v2159, %v2156
    %2162 = xla_tuple %2161
    %v2163 = vmax.f32 %v2159, %v2156
    %2164 = xla_tuple %v2163
    %2165 = xla_tuple %v2163, %v24
    %2166 = xla_tuple %2165
    %v2167 = vmax.f32 %v2163, %v24
    %2168 = xla_tuple %v2167
    %s2169 = scalar_lea.vmem [#allocation26], 128
    %v2170 = vpack.c.bf16 0.0, %v2167
    %2172 = vst [vmem:[%s2169] sm:$0xf] %v2170
    %s2173 = scalar_lea.vmem %s81, 132
    %s2175 = sand.u32 0, 85
    %s2176 = sshrl.u32 %s2175, 1
    %s2177 = sor.u32 %s2175, %s2176
    %s2178 = sand.u32 51, %s2177
    %s2179 = sshrl.u32 %s2178, 2
    %s2180 = sor.u32 %s2178, %s2179
    %s2181 = sand.u32 15, %s2180
    %v2182 = vld [vmem:[%s2173] sm:%s2181]
    %v2183 = vunpack.c.l.bf16 %v2182
    %v2184 = vunpack.c.h.bf16 %v2182
    %s2185 = scalar_lea.vmem %s82, 132
    %s2187 = sor.u32 255, 127
    %s2188 = sand.u32 %s2187, 85
    %s2189 = sshrl.u32 %s2188, 1
    %s2190 = sor.u32 %s2188, %s2189
    %s2191 = sand.u32 51, %s2190
    %s2192 = sshrl.u32 %s2191, 2
    %s2193 = sor.u32 %s2191, %s2192
    %s2194 = sand.u32 15, %s2193
    %v2195 = vld [vmem:[%s2185] sm:%s2194]
    %v2196 = vunpack.c.l.bf16 %v2195
    %v2197 = vunpack.c.h.bf16 %v2195
    %v2198 = vlaneseq
    %v2199 = vand.u32 %v2198, 127
    %vm2201 = vcmp.lt.s32.totalorder %v2199, 27
    %v2202 = vsel %vm2201, %v2196, %v29
    %2203 = xla_tuple %v39, %v34
    %2204 = xla_tuple %2203
    %v2205 = vmax.f32 %v39, %v34
    %2206 = xla_tuple %v2205
    %2207 = xla_tuple %v2205, %v2202
    %2208 = xla_tuple %2207
    %v2209 = vmax.f32 %v2205, %v2202
    %2210 = xla_tuple %v2209
    %2211 = xla_tuple %v2209, %v24
    %2212 = xla_tuple %2211
    %v2213 = vmax.f32 %v2209, %v24
    %2214 = xla_tuple %v2213
    %s2215 = scalar_lea.vmem [#allocation26], 132
    %v2216 = vpack.c.bf16 0.0, %v2213
    %2218 = vst [vmem:[%s2215] sm:$0xf] %v2216
    %s2219 = scalar_lea.vmem %s81, 136
    %s2221 = sand.u32 0, 85
    %s2222 = sshrl.u32 %s2221, 1
    %s2223 = sor.u32 %s2221, %s2222
    %s2224 = sand.u32 51, %s2223
    %s2225 = sshrl.u32 %s2224, 2
    %s2226 = sor.u32 %s2224, %s2225
    %s2227 = sand.u32 15, %s2226
    %v2228 = vld [vmem:[%s2219] sm:%s2227]
    %v2229 = vunpack.c.l.bf16 %v2228
    %v2230 = vunpack.c.h.bf16 %v2228
    %s2231 = scalar_lea.vmem %s82, 136
    %s2233 = sor.u32 255, 127
    %s2234 = sand.u32 %s2233, 85
    %s2235 = sshrl.u32 %s2234, 1
    %s2236 = sor.u32 %s2234, %s2235
    %s2237 = sand.u32 51, %s2236
    %s2238 = sshrl.u32 %s2237, 2
    %s2239 = sor.u32 %s2237, %s2238
    %s2240 = sand.u32 15, %s2239
    %v2241 = vld [vmem:[%s2231] sm:%s2240]
    %v2242 = vunpack.c.l.bf16 %v2241
    %v2243 = vunpack.c.h.bf16 %v2241
    %v2244 = vlaneseq
    %v2245 = vand.u32 %v2244, 127
    %vm2247 = vcmp.lt.s32.totalorder %v2245, 27
    %v2248 = vsel %vm2247, %v2242, %v29
    %2249 = xla_tuple %v39, %v34
    %2250 = xla_tuple %2249
    %v2251 = vmax.f32 %v39, %v34
    %2252 = xla_tuple %v2251
    %2253 = xla_tuple %v2251, %v2248
    %2254 = xla_tuple %2253
    %v2255 = vmax.f32 %v2251, %v2248
    %2256 = xla_tuple %v2255
    %2257 = xla_tuple %v2255, %v24
    %2258 = xla_tuple %2257
    %v2259 = vmax.f32 %v2255, %v24
    %2260 = xla_tuple %v2259
    %s2261 = scalar_lea.vmem [#allocation26], 136
    %v2262 = vpack.c.bf16 0.0, %v2259
    %2264 = vst [vmem:[%s2261] sm:$0xf] %v2262
    %s2265 = scalar_lea.vmem %s81, 140
    %s2267 = sand.u32 0, 85
    %s2268 = sshrl.u32 %s2267, 1
    %s2269 = sor.u32 %s2267, %s2268
    %s2270 = sand.u32 51, %s2269
    %s2271 = sshrl.u32 %s2270, 2
    %s2272 = sor.u32 %s2270, %s2271
    %s2273 = sand.u32 15, %s2272
    %v2274 = vld [vmem:[%s2265] sm:%s2273]
    %v2275 = vunpack.c.l.bf16 %v2274
    %v2276 = vunpack.c.h.bf16 %v2274
    %s2277 = scalar_lea.vmem %s82, 140
    %s2279 = sor.u32 255, 127
    %s2280 = sand.u32 %s2279, 85
    %s2281 = sshrl.u32 %s2280, 1
    %s2282 = sor.u32 %s2280, %s2281
    %s2283 = sand.u32 51, %s2282
    %s2284 = sshrl.u32 %s2283, 2
    %s2285 = sor.u32 %s2283, %s2284
    %s2286 = sand.u32 15, %s2285
    %v2287 = vld [vmem:[%s2277] sm:%s2286]
    %v2288 = vunpack.c.l.bf16 %v2287
    %v2289 = vunpack.c.h.bf16 %v2287
    %v2290 = vlaneseq
    %v2291 = vand.u32 %v2290, 127
    %vm2293 = vcmp.lt.s32.totalorder %v2291, 27
    %v2294 = vsel %vm2293, %v2288, %v29
    %2295 = xla_tuple %v39, %v34
    %2296 = xla_tuple %2295
    %v2297 = vmax.f32 %v39, %v34
    %2298 = xla_tuple %v2297
    %2299 = xla_tuple %v2297, %v2294
    %2300 = xla_tuple %2299
    %v2301 = vmax.f32 %v2297, %v2294
    %2302 = xla_tuple %v2301
    %2303 = xla_tuple %v2301, %v24
    %2304 = xla_tuple %2303
    %v2305 = vmax.f32 %v2301, %v24
    %2306 = xla_tuple %v2305
    %s2307 = scalar_lea.vmem [#allocation26], 140
    %v2308 = vpack.c.bf16 0.0, %v2305
    %2310 = vst [vmem:[%s2307] sm:$0xf] %v2308
    %s2311 = scalar_lea.vmem %s81, 144
    %s2313 = sand.u32 0, 85
    %s2314 = sshrl.u32 %s2313, 1
    %s2315 = sor.u32 %s2313, %s2314
    %s2316 = sand.u32 51, %s2315
    %s2317 = sshrl.u32 %s2316, 2
    %s2318 = sor.u32 %s2316, %s2317
    %s2319 = sand.u32 15, %s2318
    %v2320 = vld [vmem:[%s2311] sm:%s2319]
    %v2321 = vunpack.c.l.bf16 %v2320
    %v2322 = vunpack.c.h.bf16 %v2320
    %s2323 = scalar_lea.vmem %s82, 144
    %s2325 = sor.u32 255, 127
    %s2326 = sand.u32 %s2325, 85
    %s2327 = sshrl.u32 %s2326, 1
    %s2328 = sor.u32 %s2326, %s2327
    %s2329 = sand.u32 51, %s2328
    %s2330 = sshrl.u32 %s2329, 2
    %s2331 = sor.u32 %s2329, %s2330
    %s2332 = sand.u32 15, %s2331
    %v2333 = vld [vmem:[%s2323] sm:%s2332]
    %v2334 = vunpack.c.l.bf16 %v2333
    %v2335 = vunpack.c.h.bf16 %v2333
    %v2336 = vlaneseq
    %v2337 = vand.u32 %v2336, 127
    %vm2339 = vcmp.lt.s32.totalorder %v2337, 27
    %v2340 = vsel %vm2339, %v2334, %v29
    %2341 = xla_tuple %v39, %v34
    %2342 = xla_tuple %2341
    %v2343 = vmax.f32 %v39, %v34
    %2344 = xla_tuple %v2343
    %2345 = xla_tuple %v2343, %v2340
    %2346 = xla_tuple %2345
    %v2347 = vmax.f32 %v2343, %v2340
    %2348 = xla_tuple %v2347
    %2349 = xla_tuple %v2347, %v24
    %2350 = xla_tuple %2349
    %v2351 = vmax.f32 %v2347, %v24
    %2352 = xla_tuple %v2351
    %s2353 = scalar_lea.vmem [#allocation26], 144
    %v2354 = vpack.c.bf16 0.0, %v2351
    %2356 = vst [vmem:[%s2353] sm:$0xf] %v2354
    %s2357 = scalar_lea.vmem %s81, 148
    %s2359 = sand.u32 0, 85
    %s2360 = sshrl.u32 %s2359, 1
    %s2361 = sor.u32 %s2359, %s2360
    %s2362 = sand.u32 51, %s2361
    %s2363 = sshrl.u32 %s2362, 2
    %s2364 = sor.u32 %s2362, %s2363
    %s2365 = sand.u32 15, %s2364
    %v2366 = vld [vmem:[%s2357] sm:%s2365]
    %v2367 = vunpack.c.l.bf16 %v2366
    %v2368 = vunpack.c.h.bf16 %v2366
    %s2369 = scalar_lea.vmem %s82, 148
    %s2371 = sor.u32 255, 127
    %s2372 = sand.u32 %s2371, 85
    %s2373 = sshrl.u32 %s2372, 1
    %s2374 = sor.u32 %s2372, %s2373
    %s2375 = sand.u32 51, %s2374
    %s2376 = sshrl.u32 %s2375, 2
    %s2377 = sor.u32 %s2375, %s2376
    %s2378 = sand.u32 15, %s2377
    %v2379 = vld [vmem:[%s2369] sm:%s2378]
    %v2380 = vunpack.c.l.bf16 %v2379
    %v2381 = vunpack.c.h.bf16 %v2379
    %v2382 = vlaneseq
    %v2383 = vand.u32 %v2382, 127
    %vm2385 = vcmp.lt.s32.totalorder %v2383, 27
    %v2386 = vsel %vm2385, %v2380, %v29
    %2387 = xla_tuple %v39, %v34
    %2388 = xla_tuple %2387
    %v2389 = vmax.f32 %v39, %v34
    %2390 = xla_tuple %v2389
    %2391 = xla_tuple %v2389, %v2386
    %2392 = xla_tuple %2391
    %v2393 = vmax.f32 %v2389, %v2386
    %2394 = xla_tuple %v2393
    %2395 = xla_tuple %v2393, %v24
    %2396 = xla_tuple %2395
    %v2397 = vmax.f32 %v2393, %v24
    %2398 = xla_tuple %v2397
    %s2399 = scalar_lea.vmem [#allocation26], 148
    %v2400 = vpack.c.bf16 0.0, %v2397
    %2402 = vst [vmem:[%s2399] sm:$0xf] %v2400
    %s2403 = scalar_lea.vmem %s81, 152
    %s2405 = sand.u32 0, 85
    %s2406 = sshrl.u32 %s2405, 1
    %s2407 = sor.u32 %s2405, %s2406
    %s2408 = sand.u32 51, %s2407
    %s2409 = sshrl.u32 %s2408, 2
    %s2410 = sor.u32 %s2408, %s2409
    %s2411 = sand.u32 15, %s2410
    %v2412 = vld [vmem:[%s2403] sm:%s2411]
    %v2413 = vunpack.c.l.bf16 %v2412
    %v2414 = vunpack.c.h.bf16 %v2412
    %s2415 = scalar_lea.vmem %s82, 152
    %s2417 = sor.u32 255, 127
    %s2418 = sand.u32 %s2417, 85
    %s2419 = sshrl.u32 %s2418, 1
    %s2420 = sor.u32 %s2418, %s2419
    %s2421 = sand.u32 51, %s2420
    %s2422 = sshrl.u32 %s2421, 2
    %s2423 = sor.u32 %s2421, %s2422
    %s2424 = sand.u32 15, %s2423
    %v2425 = vld [vmem:[%s2415] sm:%s2424]
    %v2426 = vunpack.c.l.bf16 %v2425
    %v2427 = vunpack.c.h.bf16 %v2425
    %v2428 = vlaneseq
    %v2429 = vand.u32 %v2428, 127
    %vm2431 = vcmp.lt.s32.totalorder %v2429, 27
    %v2432 = vsel %vm2431, %v2426, %v29
    %2433 = xla_tuple %v39, %v34
    %2434 = xla_tuple %2433
    %v2435 = vmax.f32 %v39, %v34
    %2436 = xla_tuple %v2435
    %2437 = xla_tuple %v2435, %v2432
    %2438 = xla_tuple %2437
    %v2439 = vmax.f32 %v2435, %v2432
    %2440 = xla_tuple %v2439
    %2441 = xla_tuple %v2439, %v24
    %2442 = xla_tuple %2441
    %v2443 = vmax.f32 %v2439, %v24
    %2444 = xla_tuple %v2443
    %s2445 = scalar_lea.vmem [#allocation26], 152
    %v2446 = vpack.c.bf16 0.0, %v2443
    %2448 = vst [vmem:[%s2445] sm:$0xf] %v2446
    %s2449 = scalar_lea.vmem %s81, 156
    %s2451 = sand.u32 0, 85
    %s2452 = sshrl.u32 %s2451, 1
    %s2453 = sor.u32 %s2451, %s2452
    %s2454 = sand.u32 51, %s2453
    %s2455 = sshrl.u32 %s2454, 2
    %s2456 = sor.u32 %s2454, %s2455
    %s2457 = sand.u32 15, %s2456
    %v2458 = vld [vmem:[%s2449] sm:%s2457]
    %v2459 = vunpack.c.l.bf16 %v2458
    %v2460 = vunpack.c.h.bf16 %v2458
    %s2461 = scalar_lea.vmem %s82, 156
    %s2463 = sor.u32 255, 127
    %s2464 = sand.u32 %s2463, 85
    %s2465 = sshrl.u32 %s2464, 1
    %s2466 = sor.u32 %s2464, %s2465
    %s2467 = sand.u32 51, %s2466
    %s2468 = sshrl.u32 %s2467, 2
    %s2469 = sor.u32 %s2467, %s2468
    %s2470 = sand.u32 15, %s2469
    %v2471 = vld [vmem:[%s2461] sm:%s2470]
    %v2472 = vunpack.c.l.bf16 %v2471
    %v2473 = vunpack.c.h.bf16 %v2471
    %v2474 = vlaneseq
    %v2475 = vand.u32 %v2474, 127
    %vm2477 = vcmp.lt.s32.totalorder %v2475, 27
    %v2478 = vsel %vm2477, %v2472, %v29
    %2479 = xla_tuple %v39, %v34
    %2480 = xla_tuple %2479
    %v2481 = vmax.f32 %v39, %v34
    %2482 = xla_tuple %v2481
    %2483 = xla_tuple %v2481, %v2478
    %2484 = xla_tuple %2483
    %v2485 = vmax.f32 %v2481, %v2478
    %2486 = xla_tuple %v2485
    %2487 = xla_tuple %v2485, %v24
    %2488 = xla_tuple %2487
    %v2489 = vmax.f32 %v2485, %v24
    %2490 = xla_tuple %v2489
    %s2491 = scalar_lea.vmem [#allocation26], 156
    %v2492 = vpack.c.bf16 0.0, %v2489
    %2494 = vst [vmem:[%s2491] sm:$0xf] %v2492
    %s2495 = scalar_lea.vmem %s81, 160
    %s2497 = sand.u32 0, 85
    %s2498 = sshrl.u32 %s2497, 1
    %s2499 = sor.u32 %s2497, %s2498
    %s2500 = sand.u32 51, %s2499
    %s2501 = sshrl.u32 %s2500, 2
    %s2502 = sor.u32 %s2500, %s2501
    %s2503 = sand.u32 15, %s2502
    %v2504 = vld [vmem:[%s2495] sm:%s2503]
    %v2505 = vunpack.c.l.bf16 %v2504
    %v2506 = vunpack.c.h.bf16 %v2504
    %s2507 = scalar_lea.vmem %s82, 160
    %s2509 = sor.u32 255, 127
    %s2510 = sand.u32 %s2509, 85
    %s2511 = sshrl.u32 %s2510, 1
    %s2512 = sor.u32 %s2510, %s2511
    %s2513 = sand.u32 51, %s2512
    %s2514 = sshrl.u32 %s2513, 2
    %s2515 = sor.u32 %s2513, %s2514
    %s2516 = sand.u32 15, %s2515
    %v2517 = vld [vmem:[%s2507] sm:%s2516]
    %v2518 = vunpack.c.l.bf16 %v2517
    %v2519 = vunpack.c.h.bf16 %v2517
    %v2520 = vlaneseq
    %v2521 = vand.u32 %v2520, 127
    %vm2523 = vcmp.lt.s32.totalorder %v2521, 27
    %v2524 = vsel %vm2523, %v2518, %v29
    %2525 = xla_tuple %v39, %v34
    %2526 = xla_tuple %2525
    %v2527 = vmax.f32 %v39, %v34
    %2528 = xla_tuple %v2527
    %2529 = xla_tuple %v2527, %v2524
    %2530 = xla_tuple %2529
    %v2531 = vmax.f32 %v2527, %v2524
    %2532 = xla_tuple %v2531
    %2533 = xla_tuple %v2531, %v24
    %2534 = xla_tuple %2533
    %v2535 = vmax.f32 %v2531, %v24
    %2536 = xla_tuple %v2535
    %s2537 = scalar_lea.vmem [#allocation26], 160
    %v2538 = vpack.c.bf16 0.0, %v2535
    %2540 = vst [vmem:[%s2537] sm:$0xf] %v2538
    %s2541 = scalar_lea.vmem %s81, 164
    %s2543 = sand.u32 0, 85
    %s2544 = sshrl.u32 %s2543, 1
    %s2545 = sor.u32 %s2543, %s2544
    %s2546 = sand.u32 51, %s2545
    %s2547 = sshrl.u32 %s2546, 2
    %s2548 = sor.u32 %s2546, %s2547
    %s2549 = sand.u32 15, %s2548
    %v2550 = vld [vmem:[%s2541] sm:%s2549]
    %v2551 = vunpack.c.l.bf16 %v2550
    %v2552 = vunpack.c.h.bf16 %v2550
    %s2553 = scalar_lea.vmem %s82, 164
    %s2555 = sor.u32 255, 127
    %s2556 = sand.u32 %s2555, 85
    %s2557 = sshrl.u32 %s2556, 1
    %s2558 = sor.u32 %s2556, %s2557
    %s2559 = sand.u32 51, %s2558
    %s2560 = sshrl.u32 %s2559, 2
    %s2561 = sor.u32 %s2559, %s2560
    %s2562 = sand.u32 15, %s2561
    %v2563 = vld [vmem:[%s2553] sm:%s2562]
    %v2564 = vunpack.c.l.bf16 %v2563
    %v2565 = vunpack.c.h.bf16 %v2563
    %v2566 = vlaneseq
    %v2567 = vand.u32 %v2566, 127
    %vm2569 = vcmp.lt.s32.totalorder %v2567, 27
    %v2570 = vsel %vm2569, %v2564, %v29
    %2571 = xla_tuple %v39, %v34
    %2572 = xla_tuple %2571
    %v2573 = vmax.f32 %v39, %v34
    %2574 = xla_tuple %v2573
    %2575 = xla_tuple %v2573, %v2570
    %2576 = xla_tuple %2575
    %v2577 = vmax.f32 %v2573, %v2570
    %2578 = xla_tuple %v2577
    %2579 = xla_tuple %v2577, %v24
    %2580 = xla_tuple %2579
    %v2581 = vmax.f32 %v2577, %v24
    %2582 = xla_tuple %v2581
    %s2583 = scalar_lea.vmem [#allocation26], 164
    %v2584 = vpack.c.bf16 0.0, %v2581
    %2586 = vst [vmem:[%s2583] sm:$0xf] %v2584
    %s2587 = scalar_lea.vmem %s81, 168
    %s2589 = sand.u32 0, 85
    %s2590 = sshrl.u32 %s2589, 1
    %s2591 = sor.u32 %s2589, %s2590
    %s2592 = sand.u32 51, %s2591
    %s2593 = sshrl.u32 %s2592, 2
    %s2594 = sor.u32 %s2592, %s2593
    %s2595 = sand.u32 15, %s2594
    %v2596 = vld [vmem:[%s2587] sm:%s2595]
    %v2597 = vunpack.c.l.bf16 %v2596
    %v2598 = vunpack.c.h.bf16 %v2596
    %s2599 = scalar_lea.vmem %s82, 168
    %s2601 = sor.u32 255, 127
    %s2602 = sand.u32 %s2601, 85
    %s2603 = sshrl.u32 %s2602, 1
    %s2604 = sor.u32 %s2602, %s2603
    %s2605 = sand.u32 51, %s2604
    %s2606 = sshrl.u32 %s2605, 2
    %s2607 = sor.u32 %s2605, %s2606
    %s2608 = sand.u32 15, %s2607
    %v2609 = vld [vmem:[%s2599] sm:%s2608]
    %v2610 = vunpack.c.l.bf16 %v2609
    %v2611 = vunpack.c.h.bf16 %v2609
    %v2612 = vlaneseq
    %v2613 = vand.u32 %v2612, 127
    %vm2615 = vcmp.lt.s32.totalorder %v2613, 27
    %v2616 = vsel %vm2615, %v2610, %v29
    %2617 = xla_tuple %v39, %v34
    %2618 = xla_tuple %2617
    %v2619 = vmax.f32 %v39, %v34
    %2620 = xla_tuple %v2619
    %2621 = xla_tuple %v2619, %v2616
    %2622 = xla_tuple %2621
    %v2623 = vmax.f32 %v2619, %v2616
    %2624 = xla_tuple %v2623
    %2625 = xla_tuple %v2623, %v24
    %2626 = xla_tuple %2625
    %v2627 = vmax.f32 %v2623, %v24
    %2628 = xla_tuple %v2627
    %s2629 = scalar_lea.vmem [#allocation26], 168
    %v2630 = vpack.c.bf16 0.0, %v2627
    %2632 = vst [vmem:[%s2629] sm:$0xf] %v2630
    %s2633 = scalar_lea.vmem %s81, 172
    %s2635 = sand.u32 0, 85
    %s2636 = sshrl.u32 %s2635, 1
    %s2637 = sor.u32 %s2635, %s2636
    %s2638 = sand.u32 51, %s2637
    %s2639 = sshrl.u32 %s2638, 2
    %s2640 = sor.u32 %s2638, %s2639
    %s2641 = sand.u32 15, %s2640
    %v2642 = vld [vmem:[%s2633] sm:%s2641]
    %v2643 = vunpack.c.l.bf16 %v2642
    %v2644 = vunpack.c.h.bf16 %v2642
    %s2645 = scalar_lea.vmem %s82, 172
    %s2647 = sor.u32 255, 127
    %s2648 = sand.u32 %s2647, 85
    %s2649 = sshrl.u32 %s2648, 1
    %s2650 = sor.u32 %s2648, %s2649
    %s2651 = sand.u32 51, %s2650
    %s2652 = sshrl.u32 %s2651, 2
    %s2653 = sor.u32 %s2651, %s2652
    %s2654 = sand.u32 15, %s2653
    %v2655 = vld [vmem:[%s2645] sm:%s2654]
    %v2656 = vunpack.c.l.bf16 %v2655
    %v2657 = vunpack.c.h.bf16 %v2655
    %v2658 = vlaneseq
    %v2659 = vand.u32 %v2658, 127
    %vm2661 = vcmp.lt.s32.totalorder %v2659, 27
    %v2662 = vsel %vm2661, %v2656, %v29
    %2663 = xla_tuple %v39, %v34
    %2664 = xla_tuple %2663
    %v2665 = vmax.f32 %v39, %v34
    %2666 = xla_tuple %v2665
    %2667 = xla_tuple %v2665, %v2662
    %2668 = xla_tuple %2667
    %v2669 = vmax.f32 %v2665, %v2662
    %2670 = xla_tuple %v2669
    %2671 = xla_tuple %v2669, %v24
    %2672 = xla_tuple %2671
    %v2673 = vmax.f32 %v2669, %v24
    %2674 = xla_tuple %v2673
    %s2675 = scalar_lea.vmem [#allocation26], 172
    %v2676 = vpack.c.bf16 0.0, %v2673
    %2678 = vst [vmem:[%s2675] sm:$0xf] %v2676
    %s2679 = scalar_lea.vmem %s81, 176
    %s2681 = sand.u32 0, 85
    %s2682 = sshrl.u32 %s2681, 1
    %s2683 = sor.u32 %s2681, %s2682
    %s2684 = sand.u32 51, %s2683
    %s2685 = sshrl.u32 %s2684, 2
    %s2686 = sor.u32 %s2684, %s2685
    %s2687 = sand.u32 15, %s2686
    %v2688 = vld [vmem:[%s2679] sm:%s2687]
    %v2689 = vunpack.c.l.bf16 %v2688
    %v2690 = vunpack.c.h.bf16 %v2688
    %s2691 = scalar_lea.vmem %s82, 176
    %s2693 = sor.u32 255, 127
    %s2694 = sand.u32 %s2693, 85
    %s2695 = sshrl.u32 %s2694, 1
    %s2696 = sor.u32 %s2694, %s2695
    %s2697 = sand.u32 51, %s2696
    %s2698 = sshrl.u32 %s2697, 2
    %s2699 = sor.u32 %s2697, %s2698
    %s2700 = sand.u32 15, %s2699
    %v2701 = vld [vmem:[%s2691] sm:%s2700]
    %v2702 = vunpack.c.l.bf16 %v2701
    %v2703 = vunpack.c.h.bf16 %v2701
    %v2704 = vlaneseq
    %v2705 = vand.u32 %v2704, 127
    %vm2707 = vcmp.lt.s32.totalorder %v2705, 27
    %v2708 = vsel %vm2707, %v2702, %v29
    %2709 = xla_tuple %v39, %v34
    %2710 = xla_tuple %2709
    %v2711 = vmax.f32 %v39, %v34
    %2712 = xla_tuple %v2711
    %2713 = xla_tuple %v2711, %v2708
    %2714 = xla_tuple %2713
    %v2715 = vmax.f32 %v2711, %v2708
    %2716 = xla_tuple %v2715
    %2717 = xla_tuple %v2715, %v24
    %2718 = xla_tuple %2717
    %v2719 = vmax.f32 %v2715, %v24
    %2720 = xla_tuple %v2719
    %s2721 = scalar_lea.vmem [#allocation26], 176
    %v2722 = vpack.c.bf16 0.0, %v2719
    %2724 = vst [vmem:[%s2721] sm:$0xf] %v2722
    %s2725 = scalar_lea.vmem %s81, 180
    %s2727 = sand.u32 0, 85
    %s2728 = sshrl.u32 %s2727, 1
    %s2729 = sor.u32 %s2727, %s2728
    %s2730 = sand.u32 51, %s2729
    %s2731 = sshrl.u32 %s2730, 2
    %s2732 = sor.u32 %s2730, %s2731
    %s2733 = sand.u32 15, %s2732
    %v2734 = vld [vmem:[%s2725] sm:%s2733]
    %v2735 = vunpack.c.l.bf16 %v2734
    %v2736 = vunpack.c.h.bf16 %v2734
    %s2737 = scalar_lea.vmem %s82, 180
    %s2739 = sor.u32 255, 127
    %s2740 = sand.u32 %s2739, 85
    %s2741 = sshrl.u32 %s2740, 1
    %s2742 = sor.u32 %s2740, %s2741
    %s2743 = sand.u32 51, %s2742
    %s2744 = sshrl.u32 %s2743, 2
    %s2745 = sor.u32 %s2743, %s2744
    %s2746 = sand.u32 15, %s2745
    %v2747 = vld [vmem:[%s2737] sm:%s2746]
    %v2748 = vunpack.c.l.bf16 %v2747
    %v2749 = vunpack.c.h.bf16 %v2747
    %v2750 = vlaneseq
    %v2751 = vand.u32 %v2750, 127
    %vm2753 = vcmp.lt.s32.totalorder %v2751, 27
    %v2754 = vsel %vm2753, %v2748, %v29
    %2755 = xla_tuple %v39, %v34
    %2756 = xla_tuple %2755
    %v2757 = vmax.f32 %v39, %v34
    %2758 = xla_tuple %v2757
    %2759 = xla_tuple %v2757, %v2754
    %2760 = xla_tuple %2759
    %v2761 = vmax.f32 %v2757, %v2754
    %2762 = xla_tuple %v2761
    %2763 = xla_tuple %v2761, %v24
    %2764 = xla_tuple %2763
    %v2765 = vmax.f32 %v2761, %v24
    %2766 = xla_tuple %v2765
    %s2767 = scalar_lea.vmem [#allocation26], 180
    %v2768 = vpack.c.bf16 0.0, %v2765
    %2770 = vst [vmem:[%s2767] sm:$0xf] %v2768
    %s2771 = scalar_lea.vmem %s81, 184
    %s2773 = sand.u32 0, 85
    %s2774 = sshrl.u32 %s2773, 1
    %s2775 = sor.u32 %s2773, %s2774
    %s2776 = sand.u32 51, %s2775
    %s2777 = sshrl.u32 %s2776, 2
    %s2778 = sor.u32 %s2776, %s2777
    %s2779 = sand.u32 15, %s2778
    %v2780 = vld [vmem:[%s2771] sm:%s2779]
    %v2781 = vunpack.c.l.bf16 %v2780
    %v2782 = vunpack.c.h.bf16 %v2780
    %s2783 = scalar_lea.vmem %s82, 184
    %s2785 = sor.u32 255, 127
    %s2786 = sand.u32 %s2785, 85
    %s2787 = sshrl.u32 %s2786, 1
    %s2788 = sor.u32 %s2786, %s2787
    %s2789 = sand.u32 51, %s2788
    %s2790 = sshrl.u32 %s2789, 2
    %s2791 = sor.u32 %s2789, %s2790
    %s2792 = sand.u32 15, %s2791
    %v2793 = vld [vmem:[%s2783] sm:%s2792]
    %v2794 = vunpack.c.l.bf16 %v2793
    %v2795 = vunpack.c.h.bf16 %v2793
    %v2796 = vlaneseq
    %v2797 = vand.u32 %v2796, 127
    %vm2799 = vcmp.lt.s32.totalorder %v2797, 27
    %v2800 = vsel %vm2799, %v2794, %v29
    %2801 = xla_tuple %v39, %v34
    %2802 = xla_tuple %2801
    %v2803 = vmax.f32 %v39, %v34
    %2804 = xla_tuple %v2803
    %2805 = xla_tuple %v2803, %v2800
    %2806 = xla_tuple %2805
    %v2807 = vmax.f32 %v2803, %v2800
    %2808 = xla_tuple %v2807
    %2809 = xla_tuple %v2807, %v24
    %2810 = xla_tuple %2809
    %v2811 = vmax.f32 %v2807, %v24
    %2812 = xla_tuple %v2811
    %s2813 = scalar_lea.vmem [#allocation26], 184
    %v2814 = vpack.c.bf16 0.0, %v2811
    %2816 = vst [vmem:[%s2813] sm:$0xf] %v2814
    %s2817 = scalar_lea.vmem %s81, 188
    %s2819 = sand.u32 0, 85
    %s2820 = sshrl.u32 %s2819, 1
    %s2821 = sor.u32 %s2819, %s2820
    %s2822 = sand.u32 51, %s2821
    %s2823 = sshrl.u32 %s2822, 2
    %s2824 = sor.u32 %s2822, %s2823
    %s2825 = sand.u32 15, %s2824
    %v2826 = vld [vmem:[%s2817] sm:%s2825]
    %v2827 = vunpack.c.l.bf16 %v2826
    %v2828 = vunpack.c.h.bf16 %v2826
    %s2829 = scalar_lea.vmem %s82, 188
    %s2831 = sor.u32 255, 127
    %s2832 = sand.u32 %s2831, 85
    %s2833 = sshrl.u32 %s2832, 1
    %s2834 = sor.u32 %s2832, %s2833
    %s2835 = sand.u32 51, %s2834
    %s2836 = sshrl.u32 %s2835, 2
    %s2837 = sor.u32 %s2835, %s2836
    %s2838 = sand.u32 15, %s2837
    %v2839 = vld [vmem:[%s2829] sm:%s2838]
    %v2840 = vunpack.c.l.bf16 %v2839
    %v2841 = vunpack.c.h.bf16 %v2839
    %v2842 = vlaneseq
    %v2843 = vand.u32 %v2842, 127
    %vm2845 = vcmp.lt.s32.totalorder %v2843, 27
    %v2846 = vsel %vm2845, %v2840, %v29
    %2847 = xla_tuple %v39, %v34
    %2848 = xla_tuple %2847
    %v2849 = vmax.f32 %v39, %v34
    %2850 = xla_tuple %v2849
    %2851 = xla_tuple %v2849, %v2846
    %2852 = xla_tuple %2851
    %v2853 = vmax.f32 %v2849, %v2846
    %2854 = xla_tuple %v2853
    %2855 = xla_tuple %v2853, %v24
    %2856 = xla_tuple %2855
    %v2857 = vmax.f32 %v2853, %v24
    %2858 = xla_tuple %v2857
    %s2859 = scalar_lea.vmem [#allocation26], 188
    %v2860 = vpack.c.bf16 0.0, %v2857
    %2862 = vst [vmem:[%s2859] sm:$0xf] %v2860
    %s2863 = scalar_lea.vmem %s81, 192
    %v2864 = vld [vmem:[%s2863] sm:$0xf]
    %v2865 = vunpack.c.l.bf16 %v2864
    %v2866 = vunpack.c.h.bf16 %v2864
    %v2867 = vlaneseq
    %v2868 = vand.u32 %v2867, 127
    %vm2870 = vcmp.lt.s32.totalorder %v2868, 27
    %v2871 = vsel %vm2870, %v2865, %v24
    %2872 = xla_tuple %v39, %v34
    %2873 = xla_tuple %2872
    %v2874 = vmax.f32 %v39, %v34
    %2875 = xla_tuple %v2874
    %2876 = xla_tuple %v2874, %v29
    %2877 = xla_tuple %2876
    %v2878 = vmax.f32 %v2874, %v29
    %2879 = xla_tuple %v2878
    %2880 = xla_tuple %v2878, %v2871
    %2881 = xla_tuple %2880
    %v2882 = vmax.f32 %v2878, %v2871
    %2883 = xla_tuple %v2882
    %s2884 = scalar_lea.vmem [#allocation26], 192
    %v2885 = vpack.c.bf16 0.0, %v2882
    %2887 = vst [vmem:[%s2884] sm:$0xf] %v2885
    %s2888 = scalar_lea.vmem %s81, 196
    %v2889 = vld [vmem:[%s2888] sm:$0xf]
    %v2890 = vunpack.c.l.bf16 %v2889
    %v2891 = vunpack.c.h.bf16 %v2889
    %v2892 = vlaneseq
    %v2893 = vand.u32 %v2892, 127
    %vm2895 = vcmp.lt.s32.totalorder %v2893, 27
    %v2896 = vsel %vm2895, %v2890, %v24
    %2897 = xla_tuple %v39, %v34
    %2898 = xla_tuple %2897
    %v2899 = vmax.f32 %v39, %v34
    %2900 = xla_tuple %v2899
    %2901 = xla_tuple %v2899, %v29
    %2902 = xla_tuple %2901
    %v2903 = vmax.f32 %v2899, %v29
    %2904 = xla_tuple %v2903
    %2905 = xla_tuple %v2903, %v2896
    %2906 = xla_tuple %2905
    %v2907 = vmax.f32 %v2903, %v2896
    %2908 = xla_tuple %v2907
    %s2909 = scalar_lea.vmem [#allocation26], 196
    %v2910 = vpack.c.bf16 0.0, %v2907
    %2912 = vst [vmem:[%s2909] sm:$0xf] %v2910
    %s2913 = scalar_lea.vmem %s81, 200
    %v2914 = vld [vmem:[%s2913] sm:$0xf]
    %v2915 = vunpack.c.l.bf16 %v2914
    %v2916 = vunpack.c.h.bf16 %v2914
    %v2917 = vlaneseq
    %v2918 = vand.u32 %v2917, 127
    %vm2920 = vcmp.lt.s32.totalorder %v2918, 27
    %v2921 = vsel %vm2920, %v2915, %v24
    %2922 = xla_tuple %v39, %v34
    %2923 = xla_tuple %2922
    %v2924 = vmax.f32 %v39, %v34
    %2925 = xla_tuple %v2924
    %2926 = xla_tuple %v2924, %v29
    %2927 = xla_tuple %2926
    %v2928 = vmax.f32 %v2924, %v29
    %2929 = xla_tuple %v2928
    %2930 = xla_tuple %v2928, %v2921
    %2931 = xla_tuple %2930
    %v2932 = vmax.f32 %v2928, %v2921
    %2933 = xla_tuple %v2932
    %s2934 = scalar_lea.vmem [#allocation26], 200
    %v2935 = vpack.c.bf16 0.0, %v2932
    %2937 = vst [vmem:[%s2934] sm:$0xf] %v2935
    %s2938 = scalar_lea.vmem %s81, 204
    %v2939 = vld [vmem:[%s2938] sm:$0xf]
    %v2940 = vunpack.c.l.bf16 %v2939
    %v2941 = vunpack.c.h.bf16 %v2939
    %v2942 = vlaneseq
    %v2943 = vand.u32 %v2942, 127
    %vm2945 = vcmp.lt.s32.totalorder %v2943, 27
    %v2946 = vsel %vm2945, %v2940, %v24
    %2947 = xla_tuple %v39, %v34
    %2948 = xla_tuple %2947
    %v2949 = vmax.f32 %v39, %v34
    %2950 = xla_tuple %v2949
    %2951 = xla_tuple %v2949, %v29
    %2952 = xla_tuple %2951
    %v2953 = vmax.f32 %v2949, %v29
    %2954 = xla_tuple %v2953
    %2955 = xla_tuple %v2953, %v2946
    %2956 = xla_tuple %2955
    %v2957 = vmax.f32 %v2953, %v2946
    %2958 = xla_tuple %v2957
    %s2959 = scalar_lea.vmem [#allocation26], 204
    %v2960 = vpack.c.bf16 0.0, %v2957
    %2962 = vst [vmem:[%s2959] sm:$0xf] %v2960
    %s2963 = scalar_lea.vmem %s81, 208
    %v2964 = vld [vmem:[%s2963] sm:$0xf]
    %v2965 = vunpack.c.l.bf16 %v2964
    %v2966 = vunpack.c.h.bf16 %v2964
    %v2967 = vlaneseq
    %v2968 = vand.u32 %v2967, 127
    %vm2970 = vcmp.lt.s32.totalorder %v2968, 27
    %v2971 = vsel %vm2970, %v2965, %v24
    %2972 = xla_tuple %v39, %v34
    %2973 = xla_tuple %2972
    %v2974 = vmax.f32 %v39, %v34
    %2975 = xla_tuple %v2974
    %2976 = xla_tuple %v2974, %v29
    %2977 = xla_tuple %2976
    %v2978 = vmax.f32 %v2974, %v29
    %2979 = xla_tuple %v2978
    %2980 = xla_tuple %v2978, %v2971
    %2981 = xla_tuple %2980
    %v2982 = vmax.f32 %v2978, %v2971
    %2983 = xla_tuple %v2982
    %s2984 = scalar_lea.vmem [#allocation26], 208
    %v2985 = vpack.c.bf16 0.0, %v2982
    %2987 = vst [vmem:[%s2984] sm:$0xf] %v2985
    %s2988 = scalar_lea.vmem %s81, 212
    %v2989 = vld [vmem:[%s2988] sm:$0xf]
    %v2990 = vunpack.c.l.bf16 %v2989
    %v2991 = vunpack.c.h.bf16 %v2989
    %v2992 = vlaneseq
    %v2993 = vand.u32 %v2992, 127
    %vm2995 = vcmp.lt.s32.totalorder %v2993, 27
    %v2996 = vsel %vm2995, %v2990, %v24
    %2997 = xla_tuple %v39, %v34
    %2998 = xla_tuple %2997
    %v2999 = vmax.f32 %v39, %v34
    %3000 = xla_tuple %v2999
    %3001 = xla_tuple %v2999, %v29
    %3002 = xla_tuple %3001
    %v3003 = vmax.f32 %v2999, %v29
    %3004 = xla_tuple %v3003
    %3005 = xla_tuple %v3003, %v2996
    %3006 = xla_tuple %3005
    %v3007 = vmax.f32 %v3003, %v2996
    %3008 = xla_tuple %v3007
    %s3009 = scalar_lea.vmem [#allocation26], 212
    %v3010 = vpack.c.bf16 0.0, %v3007
    %3012 = vst [vmem:[%s3009] sm:$0xf] %v3010
    %s3013 = scalar_lea.vmem %s81, 216
    %v3014 = vld [vmem:[%s3013] sm:$0xf]
    %v3015 = vunpack.c.l.bf16 %v3014
    %v3016 = vunpack.c.h.bf16 %v3014
    %v3017 = vlaneseq
    %v3018 = vand.u32 %v3017, 127
    %vm3020 = vcmp.lt.s32.totalorder %v3018, 27
    %v3021 = vsel %vm3020, %v3015, %v24
    %3022 = xla_tuple %v39, %v34
    %3023 = xla_tuple %3022
    %v3024 = vmax.f32 %v39, %v34
    %3025 = xla_tuple %v3024
    %3026 = xla_tuple %v3024, %v29
    %3027 = xla_tuple %3026
    %v3028 = vmax.f32 %v3024, %v29
    %3029 = xla_tuple %v3028
    %3030 = xla_tuple %v3028, %v3021
    %3031 = xla_tuple %3030
    %v3032 = vmax.f32 %v3028, %v3021
    %3033 = xla_tuple %v3032
    %s3034 = scalar_lea.vmem [#allocation26], 216
    %v3035 = vpack.c.bf16 0.0, %v3032
    %3037 = vst [vmem:[%s3034] sm:$0xf] %v3035
    %s3038 = scalar_lea.vmem %s81, 220
    %v3039 = vld [vmem:[%s3038] sm:$0xf]
    %v3040 = vunpack.c.l.bf16 %v3039
    %v3041 = vunpack.c.h.bf16 %v3039
    %v3042 = vlaneseq
    %v3043 = vand.u32 %v3042, 127
    %vm3045 = vcmp.lt.s32.totalorder %v3043, 27
    %v3046 = vsel %vm3045, %v3040, %v24
    %3047 = xla_tuple %v39, %v34
    %3048 = xla_tuple %3047
    %v3049 = vmax.f32 %v39, %v34
    %3050 = xla_tuple %v3049
    %3051 = xla_tuple %v3049, %v29
    %3052 = xla_tuple %3051
    %v3053 = vmax.f32 %v3049, %v29
    %3054 = xla_tuple %v3053
    %3055 = xla_tuple %v3053, %v3046
    %3056 = xla_tuple %3055
    %v3057 = vmax.f32 %v3053, %v3046
    %3058 = xla_tuple %v3057
    %s3059 = scalar_lea.vmem [#allocation26], 220
    %v3060 = vpack.c.bf16 0.0, %v3057
    %3062 = vst [vmem:[%s3059] sm:$0xf] %v3060
    %s3063 = scalar_lea.vmem %s81, 224
    %v3064 = vld [vmem:[%s3063] sm:$0xf]
    %v3065 = vunpack.c.l.bf16 %v3064
    %v3066 = vunpack.c.h.bf16 %v3064
    %v3067 = vlaneseq
    %v3068 = vand.u32 %v3067, 127
    %vm3070 = vcmp.lt.s32.totalorder %v3068, 27
    %v3071 = vsel %vm3070, %v3065, %v24
    %3072 = xla_tuple %v39, %v34
    %3073 = xla_tuple %3072
    %v3074 = vmax.f32 %v39, %v34
    %3075 = xla_tuple %v3074
    %3076 = xla_tuple %v3074, %v29
    %3077 = xla_tuple %3076
    %v3078 = vmax.f32 %v3074, %v29
    %3079 = xla_tuple %v3078
    %3080 = xla_tuple %v3078, %v3071
    %3081 = xla_tuple %3080
    %v3082 = vmax.f32 %v3078, %v3071
    %3083 = xla_tuple %v3082
    %s3084 = scalar_lea.vmem [#allocation26], 224
    %v3085 = vpack.c.bf16 0.0, %v3082
    %3087 = vst [vmem:[%s3084] sm:$0xf] %v3085
    %s3088 = scalar_lea.vmem %s81, 228
    %v3089 = vld [vmem:[%s3088] sm:$0xf]
    %v3090 = vunpack.c.l.bf16 %v3089
    %v3091 = vunpack.c.h.bf16 %v3089
    %v3092 = vlaneseq
    %v3093 = vand.u32 %v3092, 127
    %vm3095 = vcmp.lt.s32.totalorder %v3093, 27
    %v3096 = vsel %vm3095, %v3090, %v24
    %3097 = xla_tuple %v39, %v34
    %3098 = xla_tuple %3097
    %v3099 = vmax.f32 %v39, %v34
    %3100 = xla_tuple %v3099
    %3101 = xla_tuple %v3099, %v29
    %3102 = xla_tuple %3101
    %v3103 = vmax.f32 %v3099, %v29
    %3104 = xla_tuple %v3103
    %3105 = xla_tuple %v3103, %v3096
    %3106 = xla_tuple %3105
    %v3107 = vmax.f32 %v3103, %v3096
    %3108 = xla_tuple %v3107
    %s3109 = scalar_lea.vmem [#allocation26], 228
    %v3110 = vpack.c.bf16 0.0, %v3107
    %3112 = vst [vmem:[%s3109] sm:$0xf] %v3110
    %s3113 = scalar_lea.vmem %s81, 232
    %v3114 = vld [vmem:[%s3113] sm:$0xf]
    %v3115 = vunpack.c.l.bf16 %v3114
    %v3116 = vunpack.c.h.bf16 %v3114
    %v3117 = vlaneseq
    %v3118 = vand.u32 %v3117, 127
    %vm3120 = vcmp.lt.s32.totalorder %v3118, 27
    %v3121 = vsel %vm3120, %v3115, %v24
    %3122 = xla_tuple %v39, %v34
    %3123 = xla_tuple %3122
    %v3124 = vmax.f32 %v39, %v34
    %3125 = xla_tuple %v3124
    %3126 = xla_tuple %v3124, %v29
    %3127 = xla_tuple %3126
    %v3128 = vmax.f32 %v3124, %v29
    %3129 = xla_tuple %v3128
    %3130 = xla_tuple %v3128, %v3121
    %3131 = xla_tuple %3130
    %v3132 = vmax.f32 %v3128, %v3121
    %3133 = xla_tuple %v3132
    %s3134 = scalar_lea.vmem [#allocation26], 232
    %v3135 = vpack.c.bf16 0.0, %v3132
    %3137 = vst [vmem:[%s3134] sm:$0xf] %v3135
    %s3138 = scalar_lea.vmem %s81, 236
    %v3139 = vld [vmem:[%s3138] sm:$0xf]
    %v3140 = vunpack.c.l.bf16 %v3139
    %v3141 = vunpack.c.h.bf16 %v3139
    %v3142 = vlaneseq
    %v3143 = vand.u32 %v3142, 127
    %vm3145 = vcmp.lt.s32.totalorder %v3143, 27
    %v3146 = vsel %vm3145, %v3140, %v24
    %3147 = xla_tuple %v39, %v34
    %3148 = xla_tuple %3147
    %v3149 = vmax.f32 %v39, %v34
    %3150 = xla_tuple %v3149
    %3151 = xla_tuple %v3149, %v29
    %3152 = xla_tuple %3151
    %v3153 = vmax.f32 %v3149, %v29
    %3154 = xla_tuple %v3153
    %3155 = xla_tuple %v3153, %v3146
    %3156 = xla_tuple %3155
    %v3157 = vmax.f32 %v3153, %v3146
    %3158 = xla_tuple %v3157
    %s3159 = scalar_lea.vmem [#allocation26], 236
    %v3160 = vpack.c.bf16 0.0, %v3157
    %3162 = vst [vmem:[%s3159] sm:$0xf] %v3160
    %s3163 = scalar_lea.vmem %s81, 240
    %v3164 = vld [vmem:[%s3163] sm:$0xf]
    %v3165 = vunpack.c.l.bf16 %v3164
    %v3166 = vunpack.c.h.bf16 %v3164
    %v3167 = vlaneseq
    %v3168 = vand.u32 %v3167, 127
    %vm3170 = vcmp.lt.s32.totalorder %v3168, 27
    %v3171 = vsel %vm3170, %v3165, %v24
    %3172 = xla_tuple %v39, %v34
    %3173 = xla_tuple %3172
    %v3174 = vmax.f32 %v39, %v34
    %3175 = xla_tuple %v3174
    %3176 = xla_tuple %v3174, %v29
    %3177 = xla_tuple %3176
    %v3178 = vmax.f32 %v3174, %v29
    %3179 = xla_tuple %v3178
    %3180 = xla_tuple %v3178, %v3171
    %3181 = xla_tuple %3180
    %v3182 = vmax.f32 %v3178, %v3171
    %3183 = xla_tuple %v3182
    %s3184 = scalar_lea.vmem [#allocation26], 240
    %v3185 = vpack.c.bf16 0.0, %v3182
    %3187 = vst [vmem:[%s3184] sm:$0xf] %v3185
    %s3188 = scalar_lea.vmem %s81, 244
    %v3189 = vld [vmem:[%s3188] sm:$0xf]
    %v3190 = vunpack.c.l.bf16 %v3189
    %v3191 = vunpack.c.h.bf16 %v3189
    %v3192 = vlaneseq
    %v3193 = vand.u32 %v3192, 127
    %vm3195 = vcmp.lt.s32.totalorder %v3193, 27
    %v3196 = vsel %vm3195, %v3190, %v24
    %3197 = xla_tuple %v39, %v34
    %3198 = xla_tuple %3197
    %v3199 = vmax.f32 %v39, %v34
    %3200 = xla_tuple %v3199
    %3201 = xla_tuple %v3199, %v29
    %3202 = xla_tuple %3201
    %v3203 = vmax.f32 %v3199, %v29
    %3204 = xla_tuple %v3203
    %3205 = xla_tuple %v3203, %v3196
    %3206 = xla_tuple %3205
    %v3207 = vmax.f32 %v3203, %v3196
    %3208 = xla_tuple %v3207
    %s3209 = scalar_lea.vmem [#allocation26], 244
    %v3210 = vpack.c.bf16 0.0, %v3207
    %3212 = vst [vmem:[%s3209] sm:$0xf] %v3210
    %s3213 = scalar_lea.vmem %s81, 248
    %v3214 = vld [vmem:[%s3213] sm:$0xf]
    %v3215 = vunpack.c.l.bf16 %v3214
    %v3216 = vunpack.c.h.bf16 %v3214
    %v3217 = vlaneseq
    %v3218 = vand.u32 %v3217, 127
    %vm3220 = vcmp.lt.s32.totalorder %v3218, 27
    %v3221 = vsel %vm3220, %v3215, %v24
    %3222 = xla_tuple %v39, %v34
    %3223 = xla_tuple %3222
    %v3224 = vmax.f32 %v39, %v34
    %3225 = xla_tuple %v3224
    %3226 = xla_tuple %v3224, %v29
    %3227 = xla_tuple %3226
    %v3228 = vmax.f32 %v3224, %v29
    %3229 = xla_tuple %v3228
    %3230 = xla_tuple %v3228, %v3221
    %3231 = xla_tuple %3230
    %v3232 = vmax.f32 %v3228, %v3221
    %3233 = xla_tuple %v3232
    %s3234 = scalar_lea.vmem [#allocation26], 248
    %v3235 = vpack.c.bf16 0.0, %v3232
    %3237 = vst [vmem:[%s3234] sm:$0xf] %v3235
    %s3238 = scalar_lea.vmem %s81, 252
    %v3239 = vld [vmem:[%s3238] sm:$0xf]
    %v3240 = vunpack.c.l.bf16 %v3239
    %v3241 = vunpack.c.h.bf16 %v3239
    %v3242 = vlaneseq
    %v3243 = vand.u32 %v3242, 127
    %vm3245 = vcmp.lt.s32.totalorder %v3243, 27
    %v3246 = vsel %vm3245, %v3240, %v24
    %3247 = xla_tuple %v39, %v34
    %3248 = xla_tuple %3247
    %v3249 = vmax.f32 %v39, %v34
    %3250 = xla_tuple %v3249
    %3251 = xla_tuple %v3249, %v29
    %3252 = xla_tuple %3251
    %v3253 = vmax.f32 %v3249, %v29
    %3254 = xla_tuple %v3253
    %3255 = xla_tuple %v3253, %v3246
    %3256 = xla_tuple %3255
    %v3257 = vmax.f32 %v3253, %v3246
    %3258 = xla_tuple %v3257
    %s3259 = scalar_lea.vmem [#allocation26], 252
    %v3260 = vpack.c.bf16 0.0, %v3257
    %3262 = vst [vmem:[%s3259] sm:$0xf] %v3260
    %v3264 = vld [vmem:[%s4] sm:$0xf]
    %v3265 = vld [vmem:[%s5] sm:$0xf]
    %v3266 = vld [vmem:[#allocation26] sm:$0xf]
    %v3267 = vld [vmem:[#allocation26 + $0x4] sm:$0xf]
    %v3268 = vld [vmem:[#allocation26 + $0x8] sm:$0xf]
    %v3269 = vld [vmem:[#allocation26 + $0xc] sm:$0xf]
    %v3270 = vld [vmem:[#allocation26 + $0x10] sm:$0xf]
    %v3271 = vld [vmem:[#allocation26 + $0x14] sm:$0xf]
    %v3272 = vld [vmem:[#allocation26 + $0x18] sm:$0xf]
    %v3273 = vld [vmem:[#allocation26 + $0x1c] sm:$0xf]
    %v3274 = vld [vmem:[#allocation26 + $0x20] sm:$0xf]
    %v3275 = vld [vmem:[#allocation26 + $0x24] sm:$0xf]
    %v3276 = vld [vmem:[#allocation26 + $0x28] sm:$0xf]
    %v3277 = vld [vmem:[#allocation26 + $0x2c] sm:$0xf]
    %v3278 = vld [vmem:[#allocation26 + $0x30] sm:$0xf]
    %v3279 = vld [vmem:[#allocation26 + $0x34] sm:$0xf]
    %v3280 = vld [vmem:[#allocation26 + $0x38] sm:$0xf]
    %v3281 = vld [vmem:[#allocation26 + $0x3c] sm:$0xf]
    %v3282 = vld [vmem:[#allocation26 + $0x40] sm:$0xf]
    %v3283 = vld [vmem:[#allocation26 + $0x44] sm:$0xf]
    %v3284 = vld [vmem:[#allocation26 + $0x48] sm:$0xf]
    %v3285 = vld [vmem:[#allocation26 + $0x4c] sm:$0xf]
    %v3286 = vld [vmem:[#allocation26 + $0x50] sm:$0xf]
    %v3287 = vld [vmem:[#allocation26 + $0x54] sm:$0xf]
    %v3288 = vld [vmem:[#allocation26 + $0x58] sm:$0xf]
    %v3289 = vld [vmem:[#allocation26 + $0x5c] sm:$0xf]
    %v3290 = vld [vmem:[#allocation26 + $0x60] sm:$0xf]
    %v3291 = vld [vmem:[#allocation26 + $0x64] sm:$0xf]
    %v3292 = vld [vmem:[#allocation26 + $0x68] sm:$0xf]
    %v3293 = vld [vmem:[#allocation26 + $0x6c] sm:$0xf]
    %v3294 = vld [vmem:[#allocation26 + $0x70] sm:$0xf]
    %v3295 = vld [vmem:[#allocation26 + $0x74] sm:$0xf]
    %v3296 = vld [vmem:[#allocation26 + $0x78] sm:$0xf]
    %v3297 = vld [vmem:[#allocation26 + $0x7c] sm:$0xf]
    %v3298 = vld [vmem:[#allocation26 + $0x80] sm:$0xf]
    %v3299 = vld [vmem:[#allocation26 + $0x84] sm:$0xf]
    %v3300 = vld [vmem:[#allocation26 + $0x88] sm:$0xf]
    %v3301 = vld [vmem:[#allocation26 + $0x8c] sm:$0xf]
    %v3302 = vld [vmem:[#allocation26 + $0x90] sm:$0xf]
    %v3303 = vld [vmem:[#allocation26 + $0x94] sm:$0xf]
    %v3304 = vld [vmem:[#allocation26 + $0x98] sm:$0xf]
    %v3305 = vld [vmem:[#allocation26 + $0x9c] sm:$0xf]
    %v3306 = vld [vmem:[#allocation26 + $0xa0] sm:$0xf]
    %v3307 = vld [vmem:[#allocation26 + $0xa4] sm:$0xf]
    %v3308 = vld [vmem:[#allocation26 + $0xa8] sm:$0xf]
    %v3309 = vld [vmem:[#allocation26 + $0xac] sm:$0xf]
    %v3310 = vld [vmem:[#allocation26 + $0xb0] sm:$0xf]
    %v3311 = vld [vmem:[#allocation26 + $0xb4] sm:$0xf]
    %v3312 = vld [vmem:[#allocation26 + $0xb8] sm:$0xf]
    %v3313 = vld [vmem:[#allocation26 + $0xbc] sm:$0xf]
    %v3314 = vld [vmem:[#allocation26 + $0xc0] sm:$0xf]
    %v3315 = vld [vmem:[#allocation26 + $0xc4] sm:$0xf]
    %v3316 = vld [vmem:[#allocation26 + $0xc8] sm:$0xf]
    %v3317 = vld [vmem:[#allocation26 + $0xcc] sm:$0xf]
    %v3318 = vld [vmem:[#allocation26 + $0xd0] sm:$0xf]
    %v3319 = vld [vmem:[#allocation26 + $0xd4] sm:$0xf]
    %v3320 = vld [vmem:[#allocation26 + $0xd8] sm:$0xf]
    %v3321 = vld [vmem:[#allocation26 + $0xdc] sm:$0xf]
    %v3322 = vld [vmem:[#allocation26 + $0xe0] sm:$0xf]
    %v3323 = vld [vmem:[#allocation26 + $0xe4] sm:$0xf]
    %v3324 = vld [vmem:[#allocation26 + $0xe8] sm:$0xf]
    %v3325 = vld [vmem:[#allocation26 + $0xec] sm:$0xf]
    %v3326 = vld [vmem:[#allocation26 + $0xf0] sm:$0xf]
    %v3327 = vld [vmem:[#allocation26 + $0xf4] sm:$0xf]
    %v3328 = vld [vmem:[#allocation26 + $0xf8] sm:$0xf]
    %v3329 = vld [vmem:[#allocation26 + $0xfc] sm:$0xf]
    %v3330 = vld [vmem:[%s0] sm:$0xf]
    %v3331 = vld [vmem:[%s0 + $0x4] sm:$0xf]
    %v3332 = vld [vmem:[%s0 + $0x8] sm:$0xf]
    %v3333 = vld [vmem:[%s0 + $0xc] sm:$0x3]
    %v3398 = vunpack.c.l.b16 %v3266
    %v3399 = vunpack.c.l.b16 %v3267
    %v3400 = vunpack.c.l.b16 %v3268
    %v3401 = vunpack.c.l.b16 %v3269
    %v3402 = vunpack.c.l.b16 %v3270
    %v3403 = vunpack.c.l.b16 %v3271
    %v3404 = vunpack.c.l.b16 %v3272
    %v3405 = vunpack.c.l.b16 %v3273
    %v3406 = vunpack.c.l.b16 %v3274
    %v3407 = vunpack.c.l.b16 %v3275
    %v3408 = vunpack.c.l.b16 %v3276
    %v3409 = vunpack.c.l.b16 %v3277
    %v3410 = vunpack.c.l.b16 %v3278
    %v3411 = vunpack.c.l.b16 %v3279
    %v3412 = vunpack.c.l.b16 %v3280
    %v3413 = vunpack.c.l.b16 %v3281
    %v3414 = vunpack.c.l.b16 %v3282
    %v3415 = vunpack.c.l.b16 %v3283
    %v3416 = vunpack.c.l.b16 %v3284
    %v3417 = vunpack.c.l.b16 %v3285
    %v3418 = vunpack.c.l.b16 %v3286
    %v3419 = vunpack.c.l.b16 %v3287
    %v3420 = vunpack.c.l.b16 %v3288
    %v3421 = vunpack.c.l.b16 %v3289
    %v3422 = vunpack.c.l.b16 %v3290
    %v3423 = vunpack.c.l.b16 %v3291
    %v3424 = vunpack.c.l.b16 %v3292
    %v3425 = vunpack.c.l.b16 %v3293
    %v3426 = vunpack.c.l.b16 %v3294
    %v3427 = vunpack.c.l.b16 %v3295
    %v3428 = vunpack.c.l.b16 %v3296
    %v3429 = vunpack.c.l.b16 %v3297
    %v3430 = vunpack.c.l.b16 %v3298
    %v3431 = vunpack.c.l.b16 %v3299
    %v3432 = vunpack.c.l.b16 %v3300
    %v3433 = vunpack.c.l.b16 %v3301
    %v3434 = vunpack.c.l.b16 %v3302
    %v3435 = vunpack.c.l.b16 %v3303
    %v3436 = vunpack.c.l.b16 %v3304
    %v3437 = vunpack.c.l.b16 %v3305
    %v3438 = vunpack.c.l.b16 %v3306
    %v3439 = vunpack.c.l.b16 %v3307
    %v3440 = vunpack.c.l.b16 %v3308
    %v3441 = vunpack.c.l.b16 %v3309
    %v3442 = vunpack.c.l.b16 %v3310
    %v3443 = vunpack.c.l.b16 %v3311
    %v3444 = vunpack.c.l.b16 %v3312
    %v3445 = vunpack.c.l.b16 %v3313
    %v3446 = vunpack.c.l.b16 %v3314
    %v3447 = vunpack.c.l.b16 %v3315
    %v3448 = vunpack.c.l.b16 %v3316
    %v3449 = vunpack.c.l.b16 %v3317
    %v3450 = vunpack.c.l.b16 %v3318
    %v3451 = vunpack.c.l.b16 %v3319
    %v3452 = vunpack.c.l.b16 %v3320
    %v3453 = vunpack.c.l.b16 %v3321
    %v3454 = vunpack.c.l.b16 %v3322
    %v3455 = vunpack.c.l.b16 %v3323
    %v3456 = vunpack.c.l.b16 %v3324
    %v3457 = vunpack.c.l.b16 %v3325
    %v3458 = vunpack.c.l.b16 %v3326
    %v3459 = vunpack.c.l.b16 %v3327
    %v3460 = vunpack.c.l.b16 %v3328
    %v3461 = vunpack.c.l.b16 %v3329
    %v3462 = vpack.c.b16 %v3399, %v3398
    %v3463 = vpack.c.b16 %v3401, %v3400
    %v3464 = vpack.c.b16 %v3403, %v3402
    %v3465 = vpack.c.b16 %v3405, %v3404
    %v3466 = vpack.c.b16 %v3407, %v3406
    %v3467 = vpack.c.b16 %v3409, %v3408
    %v3468 = vpack.c.b16 %v3411, %v3410
    %v3469 = vpack.c.b16 %v3413, %v3412
    %v3470 = vpack.c.b16 %v3415, %v3414
    %v3471 = vpack.c.b16 %v3417, %v3416
    %v3472 = vpack.c.b16 %v3419, %v3418
    %v3473 = vpack.c.b16 %v3421, %v3420
    %v3474 = vpack.c.b16 %v3423, %v3422
    %v3475 = vpack.c.b16 %v3425, %v3424
    %v3476 = vpack.c.b16 %v3427, %v3426
    %v3477 = vpack.c.b16 %v3429, %v3428
    %v3478 = vpack.c.b16 %v3431, %v3430
    %v3479 = vpack.c.b16 %v3433, %v3432
    %v3480 = vpack.c.b16 %v3435, %v3434
    %v3481 = vpack.c.b16 %v3437, %v3436
    %v3482 = vpack.c.b16 %v3439, %v3438
    %v3483 = vpack.c.b16 %v3441, %v3440
    %v3484 = vpack.c.b16 %v3443, %v3442
    %v3485 = vpack.c.b16 %v3445, %v3444
    %v3486 = vpack.c.b16 %v3447, %v3446
    %v3487 = vpack.c.b16 %v3449, %v3448
    %v3488 = vpack.c.b16 %v3451, %v3450
    %v3489 = vpack.c.b16 %v3453, %v3452
    %v3490 = vpack.c.b16 %v3455, %v3454
    %v3491 = vpack.c.b16 %v3457, %v3456
    %v3492 = vpack.c.b16 %v3459, %v3458
    %v3493 = vpack.c.b16 %v3461, %v3460
    %v3498 = vunpack.c.l.b16 %v3330
    %v3499 = vunpack.c.l.b16 %v3331
    %v3500 = vunpack.c.l.b16 %v3332
    %v3501 = vunpack.c.l.b16 %v3333
    %v3502 = vpack.c.b16 %v3499, %v3498
    %v3503 = vpack.c.b16 %v3501, %v3500
    %vm3505 = vcmask 220160
    %v3507 = vsel %vm3505, %v3462, 0
    %v3510 = vsel %vm3505, %v3463, 0
    %v3513 = vsel %vm3505, %v3464, 0
    %v3516 = vsel %vm3505, %v3465, 0
    %v3519 = vsel %vm3505, %v3466, 0
    %v3522 = vsel %vm3505, %v3467, 0
    %v3525 = vsel %vm3505, %v3468, 0
    %v3528 = vsel %vm3505, %v3469, 0
    %v3531 = vsel %vm3505, %v3470, 0
    %v3534 = vsel %vm3505, %v3471, 0
    %v3537 = vsel %vm3505, %v3472, 0
    %v3540 = vsel %vm3505, %v3473, 0
    %v3543 = vsel %vm3505, %v3474, 0
    %v3546 = vsel %vm3505, %v3475, 0
    %v3549 = vsel %vm3505, %v3476, 0
    %v3552 = vsel %vm3505, %v3477, 0
    %v3555 = vsel %vm3505, %v3478, 0
    %v3558 = vsel %vm3505, %v3479, 0
    %v3561 = vsel %vm3505, %v3480, 0
    %v3564 = vsel %vm3505, %v3481, 0
    %v3567 = vsel %vm3505, %v3482, 0
    %v3570 = vsel %vm3505, %v3483, 0
    %v3573 = vsel %vm3505, %v3484, 0
    %v3576 = vsel %vm3505, %v3485, 0
    %v3579 = vsel %vm3505, %v3486, 0
    %v3582 = vsel %vm3505, %v3487, 0
    %v3585 = vsel %vm3505, %v3488, 0
    %v3588 = vsel %vm3505, %v3489, 0
    %v3591 = vsel %vm3505, %v3490, 0
    %v3594 = vsel %vm3505, %v3491, 0
    %v3597 = vsel %vm3505, %v3492, 0
    %v3600 = vsel %vm3505, %v3493, 0
    %vm3602 = vcmask 1044480
    %vm3603 = vcmask 1045504
    %v3604 = vsel %vm3602, 4294967295, 65535
    %v3605 = vsel %vm3603, %v3604, 0
    %v3607 = vand.u32 %v3503, %v3605
    %3609 = vmatprep.subr.bf16.mxu0 0
    %3610 = vmatpush1.bf16.msra.mxu0 %v3502
    %3611 = vmatprep.subr.bf16.mxu0 0
    %3612 = vmatpush1.bf16.msra.mxu0 %v3607
    %3613 = vmatprep.subr.bf16.mxu0 0
    %3614 = vmatpush1.bf16.msra.mxu0 0
    %3615 = vmatprep.subr.bf16.mxu0 0
    %3616 = vmatpush1.bf16.msra.mxu0 0
    %3617 = vmatprep.subr.bf16.mxu0 0
    %3618 = vmatpush1.bf16.msra.mxu0 0
    %3619 = vmatprep.subr.bf16.mxu0 0
    %3620 = vmatpush1.bf16.msra.mxu0 0
    %3621 = vmatprep.subr.bf16.mxu0 0
    %3622 = vmatpush1.bf16.msra.mxu0 0
    %3623 = vmatprep.subr.bf16.mxu0 0
    %3624 = vmatpush1.bf16.msra.mxu0 0
    %3625 = vmatprep.subr.bf16.mxu0 0
    %3626 = vmatpush1.bf16.msra.mxu0 0
    %3627 = vmatprep.subr.bf16.mxu0 0
    %3628 = vmatpush1.bf16.msra.mxu0 0
    %3629 = vmatprep.subr.bf16.mxu0 0
    %3630 = vmatpush1.bf16.msra.mxu0 0
    %3631 = vmatprep.subr.bf16.mxu0 0
    %3632 = vmatpush1.bf16.msra.mxu0 0
    %3633 = vmatprep.subr.bf16.mxu0 0
    %3634 = vmatpush1.bf16.msra.mxu0 0
    %3635 = vmatprep.subr.bf16.mxu0 0
    %3636 = vmatpush1.bf16.msra.mxu0 0
    %3637 = vmatprep.subr.bf16.mxu0 0
    %3638 = vmatpush1.bf16.msra.mxu0 0
    %3639 = vmatprep.subr.bf16.mxu0 0
    %3640 = vmatpush1.bf16.msra.mxu0 0
    %3641 = vmatprep.mubr.bf16.mxu0 0
    %3642 = vmatmul.mubr.bf16.gmra.mrb[0].mxu0 %v3507
    %v3643 = vpop.f32.mrb[0].mxu0
    %v3644 = vadd.f32 0.0, %v3643
    %v3645 = vpop.f32.mrb[0].mxu0
    %v3646 = vpop.f32.mrb[0].mxu0
    %v3647 = vadd.f32 0.0, %v3646
    %v3648 = vpop.f32.mrb[0].mxu0
    %3649 = vmatprep.mubr.bf16.mxu0 0
    %3650 = vmatmul.mubr.bf16.gmra.mrb[0].mxu0 %v3510
    %v3651 = vpop.f32.mrb[0].mxu0
    %v3652 = vadd.f32 0.0, %v3651
    %v3653 = vpop.f32.mrb[0].mxu0
    %v3654 = vpop.f32.mrb[0].mxu0
    %v3655 = vadd.f32 0.0, %v3654
    %v3656 = vpop.f32.mrb[0].mxu0
    %3657 = vmatprep.mubr.bf16.mxu0 0
    %3658 = vmatmul.mubr.bf16.gmra.mrb[0].mxu0 %v3513
    %v3659 = vpop.f32.mrb[0].mxu0
    %v3660 = vadd.f32 0.0, %v3659
    %v3661 = vpop.f32.mrb[0].mxu0
    %v3662 = vpop.f32.mrb[0].mxu0
    %v3663 = vadd.f32 0.0, %v3662
    %v3664 = vpop.f32.mrb[0].mxu0
    %3665 = vmatprep.mubr.bf16.mxu0 0
    %3666 = vmatmul.mubr.bf16.gmra.mrb[0].mxu0 %v3516
    %v3667 = vpop.f32.mrb[0].mxu0
    %v3668 = vadd.f32 0.0, %v3667
    %v3669 = vpop.f32.mrb[0].mxu0
    %v3670 = vpop.f32.mrb[0].mxu0
    %v3671 = vadd.f32 0.0, %v3670
    %v3672 = vpop.f32.mrb[0].mxu0
    %3673 = vmatprep.mubr.bf16.mxu0 0
    %3674 = vmatmul.mubr.bf16.gmra.mrb[0].mxu0 %v3519
    %v3675 = vpop.f32.mrb[0].mxu0
    %v3676 = vadd.f32 0.0, %v3675
    %v3677 = vpop.f32.mrb[0].mxu0
    %v3678 = vpop.f32.mrb[0].mxu0
    %v3679 = vadd.f32 0.0, %v3678
    %v3680 = vpop.f32.mrb[0].mxu0
    %3681 = vmatprep.mubr.bf16.mxu0 0
    %3682 = vmatmul.mubr.bf16.gmra.mrb[0].mxu0 %v3522
    %v3683 = vpop.f32.mrb[0].mxu0
    %v3684 = vadd.f32 0.0, %v3683
    %v3685 = vpop.f32.mrb[0].mxu0
    %v3686 = vpop.f32.mrb[0].mxu0
    %v3687 = vadd.f32 0.0, %v3686
    %v3688 = vpop.f32.mrb[0].mxu0
    %3689 = vmatprep.mubr.bf16.mxu0 0
    %3690 = vmatmul.mubr.bf16.gmra.mrb[0].mxu0 %v3525
    %v3691 = vpop.f32.mrb[0].mxu0
    %v3692 = vadd.f32 0.0, %v3691
    %v3693 = vpop.f32.mrb[0].mxu0
    %v3694 = vpop.f32.mrb[0].mxu0
    %v3695 = vadd.f32 0.0, %v3694
    %v3696 = vpop.f32.mrb[0].mxu0
    %3697 = vmatprep.mubr.bf16.mxu0 0
    %3698 = vmatmul.mubr.bf16.gmra.mrb[0].mxu0 %v3528
    %v3699 = vpop.f32.mrb[0].mxu0
    %v3700 = vadd.f32 0.0, %v3699
    %v3701 = vpop.f32.mrb[0].mxu0
    %v3702 = vpop.f32.mrb[0].mxu0
    %v3703 = vadd.f32 0.0, %v3702
    %v3704 = vpop.f32.mrb[0].mxu0
    %3705 = vmatprep.mubr.bf16.mxu0 0
    %3706 = vmatmul.mubr.bf16.gmra.mrb[0].mxu0 %v3531
    %v3707 = vpop.f32.mrb[0].mxu0
    %v3708 = vadd.f32 0.0, %v3707
    %v3709 = vpop.f32.mrb[0].mxu0
    %v3710 = vpop.f32.mrb[0].mxu0
    %v3711 = vadd.f32 0.0, %v3710
    %v3712 = vpop.f32.mrb[0].mxu0
    %3713 = vmatprep.mubr.bf16.mxu0 0
    %3714 = vmatmul.mubr.bf16.gmra.mrb[0].mxu0 %v3534
    %v3715 = vpop.f32.mrb[0].mxu0
    %v3716 = vadd.f32 0.0, %v3715
    %v3717 = vpop.f32.mrb[0].mxu0
    %v3718 = vpop.f32.mrb[0].mxu0
    %v3719 = vadd.f32 0.0, %v3718
    %v3720 = vpop.f32.mrb[0].mxu0
    %3721 = vmatprep.mubr.bf16.mxu0 0
    %3722 = vmatmul.mubr.bf16.gmra.mrb[0].mxu0 %v3537
    %v3723 = vpop.f32.mrb[0].mxu0
    %v3724 = vadd.f32 0.0, %v3723
    %v3725 = vpop.f32.mrb[0].mxu0
    %v3726 = vpop.f32.mrb[0].mxu0
    %v3727 = vadd.f32 0.0, %v3726
    %v3728 = vpop.f32.mrb[0].mxu0
    %3729 = vmatprep.mubr.bf16.mxu0 0
    %3730 = vmatmul.mubr.bf16.gmra.mrb[0].mxu0 %v3540
    %v3731 = vpop.f32.mrb[0].mxu0
    %v3732 = vadd.f32 0.0, %v3731
    %v3733 = vpop.f32.mrb[0].mxu0
    %v3734 = vpop.f32.mrb[0].mxu0
    %v3735 = vadd.f32 0.0, %v3734
    %v3736 = vpop.f32.mrb[0].mxu0
    %3737 = vmatprep.mubr.bf16.mxu0 0
    %3738 = vmatmul.mubr.bf16.gmra.mrb[0].mxu0 %v3543
    %v3739 = vpop.f32.mrb[0].mxu0
    %v3740 = vadd.f32 0.0, %v3739
    %v3741 = vpop.f32.mrb[0].mxu0
    %v3742 = vpop.f32.mrb[0].mxu0
    %v3743 = vadd.f32 0.0, %v3742
    %v3744 = vpop.f32.mrb[0].mxu0
    %3745 = vmatprep.mubr.bf16.mxu0 0
    %3746 = vmatmul.mubr.bf16.gmra.mrb[0].mxu0 %v3546
    %v3747 = vpop.f32.mrb[0].mxu0
    %v3748 = vadd.f32 0.0, %v3747
    %v3749 = vpop.f32.mrb[0].mxu0
    %v3750 = vpop.f32.mrb[0].mxu0
    %v3751 = vadd.f32 0.0, %v3750
    %v3752 = vpop.f32.mrb[0].mxu0
    %3753 = vmatprep.mubr.bf16.mxu0 0
    %3754 = vmatmul.mubr.bf16.gmra.mrb[0].mxu0 %v3549
    %v3755 = vpop.f32.mrb[0].mxu0
    %v3756 = vadd.f32 0.0, %v3755
    %v3757 = vpop.f32.mrb[0].mxu0
    %v3758 = vpop.f32.mrb[0].mxu0
    %v3759 = vadd.f32 0.0, %v3758
    %v3760 = vpop.f32.mrb[0].mxu0
    %3761 = vmatprep.mubr.bf16.mxu0 0
    %3762 = vmatmul.mubr.bf16.gmra.mrb[0].mxu0 %v3552
    %v3763 = vpop.f32.mrb[0].mxu0
    %v3764 = vadd.f32 0.0, %v3763
    %v3765 = vpop.f32.mrb[0].mxu0
    %v3766 = vpop.f32.mrb[0].mxu0
    %v3767 = vadd.f32 0.0, %v3766
    %v3768 = vpop.f32.mrb[0].mxu0
    %3769 = vmatprep.mubr.bf16.mxu0 0
    %3770 = vmatmul.mubr.bf16.gmra.mrb[0].mxu0 %v3555
    %v3771 = vpop.f32.mrb[0].mxu0
    %v3772 = vadd.f32 0.0, %v3771
    %v3773 = vpop.f32.mrb[0].mxu0
    %v3774 = vpop.f32.mrb[0].mxu0
    %v3775 = vadd.f32 0.0, %v3774
    %v3776 = vpop.f32.mrb[0].mxu0
    %3777 = vmatprep.mubr.bf16.mxu0 0
    %3778 = vmatmul.mubr.bf16.gmra.mrb[0].mxu0 %v3558
    %v3779 = vpop.f32.mrb[0].mxu0
    %v3780 = vadd.f32 0.0, %v3779
    %v3781 = vpop.f32.mrb[0].mxu0
    %v3782 = vpop.f32.mrb[0].mxu0
    %v3783 = vadd.f32 0.0, %v3782
    %v3784 = vpop.f32.mrb[0].mxu0
    %3785 = vmatprep.mubr.bf16.mxu0 0
    %3786 = vmatmul.mubr.bf16.gmra.mrb[0].mxu0 %v3561
    %v3787 = vpop.f32.mrb[0].mxu0
    %v3788 = vadd.f32 0.0, %v3787
    %v3789 = vpop.f32.mrb[0].mxu0
    %v3790 = vpop.f32.mrb[0].mxu0
    %v3791 = vadd.f32 0.0, %v3790
    %v3792 = vpop.f32.mrb[0].mxu0
    %3793 = vmatprep.mubr.bf16.mxu0 0
    %3794 = vmatmul.mubr.bf16.gmra.mrb[0].mxu0 %v3564
    %v3795 = vpop.f32.mrb[0].mxu0
    %v3796 = vadd.f32 0.0, %v3795
    %v3797 = vpop.f32.mrb[0].mxu0
    %v3798 = vpop.f32.mrb[0].mxu0
    %v3799 = vadd.f32 0.0, %v3798
    %v3800 = vpop.f32.mrb[0].mxu0
    %3801 = vmatprep.mubr.bf16.mxu0 0
    %3802 = vmatmul.mubr.bf16.gmra.mrb[0].mxu0 %v3567
    %v3803 = vpop.f32.mrb[0].mxu0
    %v3804 = vadd.f32 0.0, %v3803
    %v3805 = vpop.f32.mrb[0].mxu0
    %v3806 = vpop.f32.mrb[0].mxu0
    %v3807 = vadd.f32 0.0, %v3806
    %v3808 = vpop.f32.mrb[0].mxu0
    %3809 = vmatprep.mubr.bf16.mxu0 0
    %3810 = vmatmul.mubr.bf16.gmra.mrb[0].mxu0 %v3570
    %v3811 = vpop.f32.mrb[0].mxu0
    %v3812 = vadd.f32 0.0, %v3811
    %v3813 = vpop.f32.mrb[0].mxu0
    %v3814 = vpop.f32.mrb[0].mxu0
    %v3815 = vadd.f32 0.0, %v3814
    %v3816 = vpop.f32.mrb[0].mxu0
    %3817 = vmatprep.mubr.bf16.mxu0 0
    %3818 = vmatmul.mubr.bf16.gmra.mrb[0].mxu0 %v3573
    %v3819 = vpop.f32.mrb[0].mxu0
    %v3820 = vadd.f32 0.0, %v3819
    %v3821 = vpop.f32.mrb[0].mxu0
    %v3822 = vpop.f32.mrb[0].mxu0
    %v3823 = vadd.f32 0.0, %v3822
    %v3824 = vpop.f32.mrb[0].mxu0
    %3825 = vmatprep.mubr.bf16.mxu0 0
    %3826 = vmatmul.mubr.bf16.gmra.mrb[0].mxu0 %v3576
    %v3827 = vpop.f32.mrb[0].mxu0
    %v3828 = vadd.f32 0.0, %v3827
    %v3829 = vpop.f32.mrb[0].mxu0
    %v3830 = vpop.f32.mrb[0].mxu0
    %v3831 = vadd.f32 0.0, %v3830
    %v3832 = vpop.f32.mrb[0].mxu0
    %3833 = vmatprep.mubr.bf16.mxu0 0
    %3834 = vmatmul.mubr.bf16.gmra.mrb[0].mxu0 %v3579
    %v3835 = vpop.f32.mrb[0].mxu0
    %v3836 = vadd.f32 0.0, %v3835
    %v3837 = vpop.f32.mrb[0].mxu0
    %v3838 = vpop.f32.mrb[0].mxu0
    %v3839 = vadd.f32 0.0, %v3838
    %v3840 = vpop.f32.mrb[0].mxu0
    %3841 = vmatprep.mubr.bf16.mxu0 0
    %3842 = vmatmul.mubr.bf16.gmra.mrb[0].mxu0 %v3582
    %v3843 = vpop.f32.mrb[0].mxu0
    %v3844 = vadd.f32 0.0, %v3843
    %v3845 = vpop.f32.mrb[0].mxu0
    %v3846 = vpop.f32.mrb[0].mxu0
    %v3847 = vadd.f32 0.0, %v3846
    %v3848 = vpop.f32.mrb[0].mxu0
    %3849 = vmatprep.mubr.bf16.mxu0 0
    %3850 = vmatmul.mubr.bf16.gmra.mrb[0].mxu0 %v3585
    %v3851 = vpop.f32.mrb[0].mxu0
    %v3852 = vadd.f32 0.0, %v3851
    %v3853 = vpop.f32.mrb[0].mxu0
    %v3854 = vpop.f32.mrb[0].mxu0
    %v3855 = vadd.f32 0.0, %v3854
    %v3856 = vpop.f32.mrb[0].mxu0
    %3857 = vmatprep.mubr.bf16.mxu0 0
    %3858 = vmatmul.mubr.bf16.gmra.mrb[0].mxu0 %v3588
    %v3859 = vpop.f32.mrb[0].mxu0
    %v3860 = vadd.f32 0.0, %v3859
    %v3861 = vpop.f32.mrb[0].mxu0
    %v3862 = vpop.f32.mrb[0].mxu0
    %v3863 = vadd.f32 0.0, %v3862
    %v3864 = vpop.f32.mrb[0].mxu0
    %3865 = vmatprep.mubr.bf16.mxu0 0
    %3866 = vmatmul.mubr.bf16.gmra.mrb[0].mxu0 %v3591
    %v3867 = vpop.f32.mrb[0].mxu0
    %v3868 = vadd.f32 0.0, %v3867
    %v3869 = vpop.f32.mrb[0].mxu0
    %v3870 = vpop.f32.mrb[0].mxu0
    %v3871 = vadd.f32 0.0, %v3870
    %v3872 = vpop.f32.mrb[0].mxu0
    %3873 = vmatprep.mubr.bf16.mxu0 0
    %3874 = vmatmul.mubr.bf16.gmra.mrb[0].mxu0 %v3594
    %v3875 = vpop.f32.mrb[0].mxu0
    %v3876 = vadd.f32 0.0, %v3875
    %v3877 = vpop.f32.mrb[0].mxu0
    %v3878 = vpop.f32.mrb[0].mxu0
    %v3879 = vadd.f32 0.0, %v3878
    %v3880 = vpop.f32.mrb[0].mxu0
    %3881 = vmatprep.mubr.bf16.mxu0 0
    %3882 = vmatmul.mubr.bf16.gmra.mrb[0].mxu0 %v3597
    %v3883 = vpop.f32.mrb[0].mxu0
    %v3884 = vadd.f32 0.0, %v3883
    %v3885 = vpop.f32.mrb[0].mxu0
    %v3886 = vpop.f32.mrb[0].mxu0
    %v3887 = vadd.f32 0.0, %v3886
    %v3888 = vpop.f32.mrb[0].mxu0
    %3889 = vmatprep.mubr.bf16.mxu0 0
    %3890 = vmatmul.mubr.bf16.gmra.mrb[0].mxu0 %v3600
    %v3891 = vpop.f32.mrb[0].mxu0
    %v3892 = vadd.f32 0.0, %v3891
    %v3893 = vpop.f32.mrb[0].mxu0
    %v3894 = vpop.f32.mrb[0].mxu0
    %v3895 = vadd.f32 0.0, %v3894
    %v3896 = vpop.f32.mrb[0].mxu0
    %3897 = vdwg.mxu0
    %vm3898 = vcmask 261120
    %v3899 = vsel %vm3898, %v3644, 0.0
    %v3900 = vsel %vm3898, %v3647, 0.0
    %v3901 = vadd.f32 %v3899, %v3900
    %v3902 = vsel %vm3898, %v3652, 0.0
    %v3903 = vadd.f32 %v3901, %v3902
    %v3904 = vsel %vm3898, %v3655, 0.0
    %v3905 = vadd.f32 %v3903, %v3904
    %v3906 = vsel %vm3898, %v3660, 0.0
    %v3907 = vadd.f32 %v3905, %v3906
    %v3908 = vsel %vm3898, %v3663, 0.0
    %v3909 = vadd.f32 %v3907, %v3908
    %v3910 = vsel %vm3898, %v3668, 0.0
    %v3911 = vadd.f32 %v3909, %v3910
    %v3912 = vsel %vm3898, %v3671, 0.0
    %v3913 = vadd.f32 %v3911, %v3912
    %v3914 = vsel %vm3898, %v3676, 0.0
    %v3915 = vadd.f32 %v3913, %v3914
    %v3916 = vsel %vm3898, %v3679, 0.0
    %v3917 = vadd.f32 %v3915, %v3916
    %v3918 = vsel %vm3898, %v3684, 0.0
    %v3919 = vadd.f32 %v3917, %v3918
    %v3920 = vsel %vm3898, %v3687, 0.0
    %v3921 = vadd.f32 %v3919, %v3920
    %v3922 = vsel %vm3898, %v3692, 0.0
    %v3923 = vadd.f32 %v3921, %v3922
    %v3924 = vsel %vm3898, %v3695, 0.0
    %v3925 = vadd.f32 %v3923, %v3924
    %v3926 = vsel %vm3898, %v3700, 0.0
    %v3927 = vadd.f32 %v3925, %v3926
    %v3928 = vsel %vm3898, %v3703, 0.0
    %v3929 = vadd.f32 %v3927, %v3928
    %v3930 = vsel %vm3898, %v3708, 0.0
    %v3931 = vadd.f32 %v3929, %v3930
    %v3932 = vsel %vm3898, %v3711, 0.0
    %v3933 = vadd.f32 %v3931, %v3932
    %v3934 = vsel %vm3898, %v3716, 0.0
    %v3935 = vadd.f32 %v3933, %v3934
    %v3936 = vsel %vm3898, %v3719, 0.0
    %v3937 = vadd.f32 %v3935, %v3936
    %v3938 = vsel %vm3898, %v3724, 0.0
    %v3939 = vadd.f32 %v3937, %v3938
    %v3940 = vsel %vm3898, %v3727, 0.0
    %v3941 = vadd.f32 %v3939, %v3940
    %v3942 = vsel %vm3898, %v3732, 0.0
    %v3943 = vadd.f32 %v3941, %v3942
    %v3944 = vsel %vm3898, %v3735, 0.0
    %v3945 = vadd.f32 %v3943, %v3944
    %v3946 = vsel %vm3898, %v3740, 0.0
    %v3947 = vadd.f32 %v3945, %v3946
    %v3948 = vsel %vm3898, %v3743, 0.0
    %v3949 = vadd.f32 %v3947, %v3948
    %v3950 = vsel %vm3898, %v3748, 0.0
    %v3951 = vadd.f32 %v3949, %v3950
    %v3952 = vsel %vm3898, %v3751, 0.0
    %v3953 = vadd.f32 %v3951, %v3952
    %v3954 = vsel %vm3898, %v3756, 0.0
    %v3955 = vadd.f32 %v3953, %v3954
    %v3956 = vsel %vm3898, %v3759, 0.0
    %v3957 = vadd.f32 %v3955, %v3956
    %v3958 = vsel %vm3898, %v3764, 0.0
    %v3959 = vadd.f32 %v3957, %v3958
    %v3960 = vsel %vm3898, %v3767, 0.0
    %v3961 = vadd.f32 %v3959, %v3960
    %v3962 = vsel %vm3898, %v3772, 0.0
    %v3963 = vadd.f32 %v3961, %v3962
    %v3964 = vsel %vm3898, %v3775, 0.0
    %v3965 = vadd.f32 %v3963, %v3964
    %v3966 = vsel %vm3898, %v3780, 0.0
    %v3967 = vadd.f32 %v3965, %v3966
    %v3968 = vsel %vm3898, %v3783, 0.0
    %v3969 = vadd.f32 %v3967, %v3968
    %v3970 = vsel %vm3898, %v3788, 0.0
    %v3971 = vadd.f32 %v3969, %v3970
    %v3972 = vsel %vm3898, %v3791, 0.0
    %v3973 = vadd.f32 %v3971, %v3972
    %v3974 = vsel %vm3898, %v3796, 0.0
    %v3975 = vadd.f32 %v3973, %v3974
    %v3976 = vsel %vm3898, %v3799, 0.0
    %v3977 = vadd.f32 %v3975, %v3976
    %v3978 = vsel %vm3898, %v3804, 0.0
    %v3979 = vadd.f32 %v3977, %v3978
    %v3980 = vsel %vm3898, %v3807, 0.0
    %v3981 = vadd.f32 %v3979, %v3980
    %v3982 = vsel %vm3898, %v3812, 0.0
    %v3983 = vadd.f32 %v3981, %v3982
    %v3984 = vsel %vm3898, %v3815, 0.0
    %v3985 = vadd.f32 %v3983, %v3984
    %v3986 = vsel %vm3898, %v3820, 0.0
    %v3987 = vadd.f32 %v3985, %v3986
    %v3988 = vsel %vm3898, %v3823, 0.0
    %v3989 = vadd.f32 %v3987, %v3988
    %v3990 = vsel %vm3898, %v3828, 0.0
    %v3991 = vadd.f32 %v3989, %v3990
    %v3992 = vsel %vm3898, %v3831, 0.0
    %v3993 = vadd.f32 %v3991, %v3992
    %v3994 = vsel %vm3898, %v3836, 0.0
    %v3995 = vadd.f32 %v3993, %v3994
    %v3996 = vsel %vm3898, %v3839, 0.0
    %v3997 = vadd.f32 %v3995, %v3996
    %v3998 = vsel %vm3898, %v3844, 0.0
    %v3999 = vadd.f32 %v3997, %v3998
    %v4000 = vsel %vm3898, %v3847, 0.0
    %v4001 = vadd.f32 %v3999, %v4000
    %v4002 = vsel %vm3898, %v3852, 0.0
    %v4003 = vadd.f32 %v4001, %v4002
    %v4004 = vsel %vm3898, %v3855, 0.0
    %v4005 = vadd.f32 %v4003, %v4004
    %v4006 = vsel %vm3898, %v3860, 0.0
    %v4007 = vadd.f32 %v4005, %v4006
    %v4008 = vsel %vm3898, %v3863, 0.0
    %v4009 = vadd.f32 %v4007, %v4008
    %v4010 = vsel %vm3898, %v3868, 0.0
    %v4011 = vadd.f32 %v4009, %v4010
    %v4012 = vsel %vm3898, %v3871, 0.0
    %v4013 = vadd.f32 %v4011, %v4012
    %v4014 = vsel %vm3898, %v3876, 0.0
    %v4015 = vadd.f32 %v4013, %v4014
    %v4016 = vsel %vm3898, %v3879, 0.0
    %v4017 = vadd.f32 %v4015, %v4016
    %v4018 = vsel %vm3898, %v3884, 0.0
    %v4019 = vadd.f32 %v4017, %v4018
    %v4020 = vsel %vm3898, %v3887, 0.0
    %v4021 = vadd.f32 %v4019, %v4020
    %v4022 = vsel %vm3898, %v3892, 0.0
    %v4023 = vadd.f32 %v4021, %v4022
    %v4024 = vsel %vm3898, %v3895, 0.0
    %v4025 = vadd.f32 %v4023, %v4024
    %v4026 = vrot.slane %v4025, 4
    %v4027 = vadd.f32 %v4025, %v4026
    %v4028 = vrot.slane %v4027, 2
    %v4029 = vadd.f32 %v4027, %v4028
    %v4030 = vrot.slane %v4029, 1
    %v4031 = vadd.f32 %v4029, %v4030
    %v4032 = vrcp.pop 512.0
    %v4033 = vmul.f32 %v4031, %v4032
    %v4034 = vsub.f32 %v3644, %v4033
    %v4035 = vsub.f32 %v3647, %v4033
    %v4036 = vsub.f32 %v3652, %v4033
    %v4037 = vsub.f32 %v3655, %v4033
    %v4038 = vsub.f32 %v3660, %v4033
    %v4039 = vsub.f32 %v3663, %v4033
    %v4040 = vsub.f32 %v3668, %v4033
    %v4041 = vsub.f32 %v3671, %v4033
    %v4042 = vsub.f32 %v3676, %v4033
    %v4043 = vsub.f32 %v3679, %v4033
    %v4044 = vsub.f32 %v3684, %v4033
    %v4045 = vsub.f32 %v3687, %v4033
    %v4046 = vsub.f32 %v3692, %v4033
    %v4047 = vsub.f32 %v3695, %v4033
    %v4048 = vsub.f32 %v3700, %v4033
    %v4049 = vsub.f32 %v3703, %v4033
    %v4050 = vsub.f32 %v3708, %v4033
    %v4051 = vsub.f32 %v3711, %v4033
    %v4052 = vsub.f32 %v3716, %v4033
    %v4053 = vsub.f32 %v3719, %v4033
    %v4054 = vsub.f32 %v3724, %v4033
    %v4055 = vsub.f32 %v3727, %v4033
    %v4056 = vsub.f32 %v3732, %v4033
    %v4057 = vsub.f32 %v3735, %v4033
    %v4058 = vsub.f32 %v3740, %v4033
    %v4059 = vsub.f32 %v3743, %v4033
    %v4060 = vsub.f32 %v3748, %v4033
    %v4061 = vsub.f32 %v3751, %v4033
    %v4062 = vsub.f32 %v3756, %v4033
    %v4063 = vsub.f32 %v3759, %v4033
    %v4064 = vsub.f32 %v3764, %v4033
    %v4065 = vsub.f32 %v3767, %v4033
    %v4066 = vsub.f32 %v3772, %v4033
    %v4067 = vsub.f32 %v3775, %v4033
    %v4068 = vsub.f32 %v3780, %v4033
    %v4069 = vsub.f32 %v3783, %v4033
    %v4070 = vsub.f32 %v3788, %v4033
    %v4071 = vsub.f32 %v3791, %v4033
    %v4072 = vsub.f32 %v3796, %v4033
    %v4073 = vsub.f32 %v3799, %v4033
    %v4074 = vsub.f32 %v3804, %v4033
    %v4075 = vsub.f32 %v3807, %v4033
    %v4076 = vsub.f32 %v3812, %v4033
    %v4077 = vsub.f32 %v3815, %v4033
    %v4078 = vsub.f32 %v3820, %v4033
    %v4079 = vsub.f32 %v3823, %v4033
    %v4080 = vsub.f32 %v3828, %v4033
    %v4081 = vsub.f32 %v3831, %v4033
    %v4082 = vsub.f32 %v3836, %v4033
    %v4083 = vsub.f32 %v3839, %v4033
    %v4084 = vsub.f32 %v3844, %v4033
    %v4085 = vsub.f32 %v3847, %v4033
    %v4086 = vsub.f32 %v3852, %v4033
    %v4087 = vsub.f32 %v3855, %v4033
    %v4088 = vsub.f32 %v3860, %v4033
    %v4089 = vsub.f32 %v3863, %v4033
    %v4090 = vsub.f32 %v3868, %v4033
    %v4091 = vsub.f32 %v3871, %v4033
    %v4092 = vsub.f32 %v3876, %v4033
    %v4093 = vsub.f32 %v3879, %v4033
    %v4094 = vsub.f32 %v3884, %v4033
    %v4095 = vsub.f32 %v3887, %v4033
    %v4096 = vsub.f32 %v3892, %v4033
    %v4097 = vsub.f32 %v3895, %v4033
    %v4098 = vmul.f32 %v4034, %v4034
    %v4099 = vmul.f32 %v4035, %v4035
    %v4100 = vmul.f32 %v4036, %v4036
    %v4101 = vmul.f32 %v4037, %v4037
    %v4102 = vmul.f32 %v4038, %v4038
    %v4103 = vmul.f32 %v4039, %v4039
    %v4104 = vmul.f32 %v4040, %v4040
    %v4105 = vmul.f32 %v4041, %v4041
    %v4106 = vmul.f32 %v4042, %v4042
    %v4107 = vmul.f32 %v4043, %v4043
    %v4108 = vmul.f32 %v4044, %v4044
    %v4109 = vmul.f32 %v4045, %v4045
    %v4110 = vmul.f32 %v4046, %v4046
    %v4111 = vmul.f32 %v4047, %v4047
    %v4112 = vmul.f32 %v4048, %v4048
    %v4113 = vmul.f32 %v4049, %v4049
    %v4114 = vmul.f32 %v4050, %v4050
    %v4115 = vmul.f32 %v4051, %v4051
    %v4116 = vmul.f32 %v4052, %v4052
    %v4117 = vmul.f32 %v4053, %v4053
    %v4118 = vmul.f32 %v4054, %v4054
    %v4119 = vmul.f32 %v4055, %v4055
    %v4120 = vmul.f32 %v4056, %v4056
    %v4121 = vmul.f32 %v4057, %v4057
    %v4122 = vmul.f32 %v4058, %v4058
    %v4123 = vmul.f32 %v4059, %v4059
    %v4124 = vmul.f32 %v4060, %v4060
    %v4125 = vmul.f32 %v4061, %v4061
    %v4126 = vmul.f32 %v4062, %v4062
    %v4127 = vmul.f32 %v4063, %v4063
    %v4128 = vmul.f32 %v4064, %v4064
    %v4129 = vmul.f32 %v4065, %v4065
    %v4130 = vmul.f32 %v4066, %v4066
    %v4131 = vmul.f32 %v4067, %v4067
    %v4132 = vmul.f32 %v4068, %v4068
    %v4133 = vmul.f32 %v4069, %v4069
    %v4134 = vmul.f32 %v4070, %v4070
    %v4135 = vmul.f32 %v4071, %v4071
    %v4136 = vmul.f32 %v4072, %v4072
    %v4137 = vmul.f32 %v4073, %v4073
    %v4138 = vmul.f32 %v4074, %v4074
    %v4139 = vmul.f32 %v4075, %v4075
    %v4140 = vmul.f32 %v4076, %v4076
    %v4141 = vmul.f32 %v4077, %v4077
    %v4142 = vmul.f32 %v4078, %v4078
    %v4143 = vmul.f32 %v4079, %v4079
    %v4144 = vmul.f32 %v4080, %v4080
    %v4145 = vmul.f32 %v4081, %v4081
    %v4146 = vmul.f32 %v4082, %v4082
    %v4147 = vmul.f32 %v4083, %v4083
    %v4148 = vmul.f32 %v4084, %v4084
    %v4149 = vmul.f32 %v4085, %v4085
    %v4150 = vmul.f32 %v4086, %v4086
    %v4151 = vmul.f32 %v4087, %v4087
    %v4152 = vmul.f32 %v4088, %v4088
    %v4153 = vmul.f32 %v4089, %v4089
    %v4154 = vmul.f32 %v4090, %v4090
    %v4155 = vmul.f32 %v4091, %v4091
    %v4156 = vmul.f32 %v4092, %v4092
    %v4157 = vmul.f32 %v4093, %v4093
    %v4158 = vmul.f32 %v4094, %v4094
    %v4159 = vmul.f32 %v4095, %v4095
    %v4160 = vmul.f32 %v4096, %v4096
    %v4161 = vmul.f32 %v4097, %v4097
    %v4162 = vsel %vm3898, %v4098, 0.0
    %v4163 = vsel %vm3898, %v4099, 0.0
    %v4164 = vadd.f32 %v4162, %v4163
    %v4165 = vsel %vm3898, %v4100, 0.0
    %v4166 = vadd.f32 %v4164, %v4165
    %v4167 = vsel %vm3898, %v4101, 0.0
    %v4168 = vadd.f32 %v4166, %v4167
    %v4169 = vsel %vm3898, %v4102, 0.0
    %v4170 = vadd.f32 %v4168, %v4169
    %v4171 = vsel %vm3898, %v4103, 0.0
    %v4172 = vadd.f32 %v4170, %v4171
    %v4173 = vsel %vm3898, %v4104, 0.0
    %v4174 = vadd.f32 %v4172, %v4173
    %v4175 = vsel %vm3898, %v4105, 0.0
    %v4176 = vadd.f32 %v4174, %v4175
    %v4177 = vsel %vm3898, %v4106, 0.0
    %v4178 = vadd.f32 %v4176, %v4177
    %v4179 = vsel %vm3898, %v4107, 0.0
    %v4180 = vadd.f32 %v4178, %v4179
    %v4181 = vsel %vm3898, %v4108, 0.0
    %v4182 = vadd.f32 %v4180, %v4181
    %v4183 = vsel %vm3898, %v4109, 0.0
    %v4184 = vadd.f32 %v4182, %v4183
    %v4185 = vsel %vm3898, %v4110, 0.0
    %v4186 = vadd.f32 %v4184, %v4185
    %v4187 = vsel %vm3898, %v4111, 0.0
    %v4188 = vadd.f32 %v4186, %v4187
    %v4189 = vsel %vm3898, %v4112, 0.0
    %v4190 = vadd.f32 %v4188, %v4189
    %v4191 = vsel %vm3898, %v4113, 0.0
    %v4192 = vadd.f32 %v4190, %v4191
    %v4193 = vsel %vm3898, %v4114, 0.0
    %v4194 = vadd.f32 %v4192, %v4193
    %v4195 = vsel %vm3898, %v4115, 0.0
    %v4196 = vadd.f32 %v4194, %v4195
    %v4197 = vsel %vm3898, %v4116, 0.0
    %v4198 = vadd.f32 %v4196, %v4197
    %v4199 = vsel %vm3898, %v4117, 0.0
    %v4200 = vadd.f32 %v4198, %v4199
    %v4201 = vsel %vm3898, %v4118, 0.0
    %v4202 = vadd.f32 %v4200, %v4201
    %v4203 = vsel %vm3898, %v4119, 0.0
    %v4204 = vadd.f32 %v4202, %v4203
    %v4205 = vsel %vm3898, %v4120, 0.0
    %v4206 = vadd.f32 %v4204, %v4205
    %v4207 = vsel %vm3898, %v4121, 0.0
    %v4208 = vadd.f32 %v4206, %v4207
    %v4209 = vsel %vm3898, %v4122, 0.0
    %v4210 = vadd.f32 %v4208, %v4209
    %v4211 = vsel %vm3898, %v4123, 0.0
    %v4212 = vadd.f32 %v4210, %v4211
    %v4213 = vsel %vm3898, %v4124, 0.0
    %v4214 = vadd.f32 %v4212, %v4213
    %v4215 = vsel %vm3898, %v4125, 0.0
    %v4216 = vadd.f32 %v4214, %v4215
    %v4217 = vsel %vm3898, %v4126, 0.0
    %v4218 = vadd.f32 %v4216, %v4217
    %v4219 = vsel %vm3898, %v4127, 0.0
    %v4220 = vadd.f32 %v4218, %v4219
    %v4221 = vsel %vm3898, %v4128, 0.0
    %v4222 = vadd.f32 %v4220, %v4221
    %v4223 = vsel %vm3898, %v4129, 0.0
    %v4224 = vadd.f32 %v4222, %v4223
    %v4225 = vsel %vm3898, %v4130, 0.0
    %v4226 = vadd.f32 %v4224, %v4225
    %v4227 = vsel %vm3898, %v4131, 0.0
    %v4228 = vadd.f32 %v4226, %v4227
    %v4229 = vsel %vm3898, %v4132, 0.0
    %v4230 = vadd.f32 %v4228, %v4229
    %v4231 = vsel %vm3898, %v4133, 0.0
    %v4232 = vadd.f32 %v4230, %v4231
    %v4233 = vsel %vm3898, %v4134, 0.0
    %v4234 = vadd.f32 %v4232, %v4233
    %v4235 = vsel %vm3898, %v4135, 0.0
    %v4236 = vadd.f32 %v4234, %v4235
    %v4237 = vsel %vm3898, %v4136, 0.0
    %v4238 = vadd.f32 %v4236, %v4237
    %v4239 = vsel %vm3898, %v4137, 0.0
    %v4240 = vadd.f32 %v4238, %v4239
    %v4241 = vsel %vm3898, %v4138, 0.0
    %v4242 = vadd.f32 %v4240, %v4241
    %v4243 = vsel %vm3898, %v4139, 0.0
    %v4244 = vadd.f32 %v4242, %v4243
    %v4245 = vsel %vm3898, %v4140, 0.0
    %v4246 = vadd.f32 %v4244, %v4245
    %v4247 = vsel %vm3898, %v4141, 0.0
    %v4248 = vadd.f32 %v4246, %v4247
    %v4249 = vsel %vm3898, %v4142, 0.0
    %v4250 = vadd.f32 %v4248, %v4249
    %v4251 = vsel %vm3898, %v4143, 0.0
    %v4252 = vadd.f32 %v4250, %v4251
    %v4253 = vsel %vm3898, %v4144, 0.0
    %v4254 = vadd.f32 %v4252, %v4253
    %v4255 = vsel %vm3898, %v4145, 0.0
    %v4256 = vadd.f32 %v4254, %v4255
    %v4257 = vsel %vm3898, %v4146, 0.0
    %v4258 = vadd.f32 %v4256, %v4257
    %v4259 = vsel %vm3898, %v4147, 0.0
    %v4260 = vadd.f32 %v4258, %v4259
    %v4261 = vsel %vm3898, %v4148, 0.0
    %v4262 = vadd.f32 %v4260, %v4261
    %v4263 = vsel %vm3898, %v4149, 0.0
    %v4264 = vadd.f32 %v4262, %v4263
    %v4265 = vsel %vm3898, %v4150, 0.0
    %v4266 = vadd.f32 %v4264, %v4265
    %v4267 = vsel %vm3898, %v4151, 0.0
    %v4268 = vadd.f32 %v4266, %v4267
    %v4269 = vsel %vm3898, %v4152, 0.0
    %v4270 = vadd.f32 %v4268, %v4269
    %v4271 = vsel %vm3898, %v4153, 0.0
    %v4272 = vadd.f32 %v4270, %v4271
    %v4273 = vsel %vm3898, %v4154, 0.0
    %v4274 = vadd.f32 %v4272, %v4273
    %v4275 = vsel %vm3898, %v4155, 0.0
    %v4276 = vadd.f32 %v4274, %v4275
    %v4277 = vsel %vm3898, %v4156, 0.0
    %v4278 = vadd.f32 %v4276, %v4277
    %v4279 = vsel %vm3898, %v4157, 0.0
    %v4280 = vadd.f32 %v4278, %v4279
    %v4281 = vsel %vm3898, %v4158, 0.0
    %v4282 = vadd.f32 %v4280, %v4281
    %v4283 = vsel %vm3898, %v4159, 0.0
    %v4284 = vadd.f32 %v4282, %v4283
    %v4285 = vsel %vm3898, %v4160, 0.0
    %v4286 = vadd.f32 %v4284, %v4285
    %v4287 = vsel %vm3898, %v4161, 0.0
    %v4288 = vadd.f32 %v4286, %v4287
    %v4289 = vrot.slane %v4288, 4
    %v4290 = vadd.f32 %v4288, %v4289
    %v4291 = vrot.slane %v4290, 2
    %v4292 = vadd.f32 %v4290, %v4291
    %v4293 = vrot.slane %v4292, 1
    %v4294 = vadd.f32 %v4292, %v4293
    %v4295 = vmul.f32 %v4294, %v4032
    %v4296 = vadd.f32 %v4295, 1e-05
    %v4297 = vrsqrt.pop %v4296
    %v4298 = vmul.f32 %v3264, %v4297
    %v4299 = vmul.f32 %v4033, %v4298
    %v4300 = vsub.f32 %v3265, %v4299
    %v4301 = vlaneseq
    %v4302 = vshrl.u32 %v4301, 7
    %v4303 = vsub.s32 0, %v4302
    %v4304 = vrot.slane %v4298, %v4303
    %v4305 = vmul.f32 %v3644, %v4304
    %v4306 = vmul.f32 %v3647, %v4304
    %v4307 = vmul.f32 %v3652, %v4304
    %v4308 = vmul.f32 %v3655, %v4304
    %v4309 = vmul.f32 %v3660, %v4304
    %v4310 = vmul.f32 %v3663, %v4304
    %v4311 = vmul.f32 %v3668, %v4304
    %v4312 = vmul.f32 %v3671, %v4304
    %v4313 = vmul.f32 %v3676, %v4304
    %v4314 = vmul.f32 %v3679, %v4304
    %v4315 = vmul.f32 %v3684, %v4304
    %v4316 = vmul.f32 %v3687, %v4304
    %v4317 = vmul.f32 %v3692, %v4304
    %v4318 = vmul.f32 %v3695, %v4304
    %v4319 = vmul.f32 %v3700, %v4304
    %v4320 = vmul.f32 %v3703, %v4304
    %v4321 = vmul.f32 %v3708, %v4304
    %v4322 = vmul.f32 %v3711, %v4304
    %v4323 = vmul.f32 %v3716, %v4304
    %v4324 = vmul.f32 %v3719, %v4304
    %v4325 = vmul.f32 %v3724, %v4304
    %v4326 = vmul.f32 %v3727, %v4304
    %v4327 = vmul.f32 %v3732, %v4304
    %v4328 = vmul.f32 %v3735, %v4304
    %v4329 = vmul.f32 %v3740, %v4304
    %v4330 = vmul.f32 %v3743, %v4304
    %v4331 = vmul.f32 %v3748, %v4304
    %v4332 = vmul.f32 %v3751, %v4304
    %v4333 = vmul.f32 %v3756, %v4304
    %v4334 = vmul.f32 %v3759, %v4304
    %v4335 = vmul.f32 %v3764, %v4304
    %v4336 = vmul.f32 %v3767, %v4304
    %v4337 = vmul.f32 %v3772, %v4304
    %v4338 = vmul.f32 %v3775, %v4304
    %v4339 = vmul.f32 %v3780, %v4304
    %v4340 = vmul.f32 %v3783, %v4304
    %v4341 = vmul.f32 %v3788, %v4304
    %v4342 = vmul.f32 %v3791, %v4304
    %v4343 = vmul.f32 %v3796, %v4304
    %v4344 = vmul.f32 %v3799, %v4304
    %v4345 = vmul.f32 %v3804, %v4304
    %v4346 = vmul.f32 %v3807, %v4304
    %v4347 = vmul.f32 %v3812, %v4304
    %v4348 = vmul.f32 %v3815, %v4304
    %v4349 = vmul.f32 %v3820, %v4304
    %v4350 = vmul.f32 %v3823, %v4304
    %v4351 = vmul.f32 %v3828, %v4304
    %v4352 = vmul.f32 %v3831, %v4304
    %v4353 = vmul.f32 %v3836, %v4304
    %v4354 = vmul.f32 %v3839, %v4304
    %v4355 = vmul.f32 %v3844, %v4304
    %v4356 = vmul.f32 %v3847, %v4304
    %v4357 = vmul.f32 %v3852, %v4304
    %v4358 = vmul.f32 %v3855, %v4304
    %v4359 = vmul.f32 %v3860, %v4304
    %v4360 = vmul.f32 %v3863, %v4304
    %v4361 = vmul.f32 %v3868, %v4304
    %v4362 = vmul.f32 %v3871, %v4304
    %v4363 = vmul.f32 %v3876, %v4304
    %v4364 = vmul.f32 %v3879, %v4304
    %v4365 = vmul.f32 %v3884, %v4304
    %v4366 = vmul.f32 %v3887, %v4304
    %v4367 = vmul.f32 %v3892, %v4304
    %v4368 = vmul.f32 %v3895, %v4304
    %v4369 = vlaneseq
    %v4370 = vshrl.u32 %v4369, 7
    %v4371 = vsub.s32 0, %v4370
    %v4372 = vrot.slane %v4300, %v4371
    %v4373 = vadd.f32 %v4305, %v4372
    %v4374 = vadd.f32 %v4306, %v4372
    %v4375 = vadd.f32 %v4307, %v4372
    %v4376 = vadd.f32 %v4308, %v4372
    %v4377 = vadd.f32 %v4309, %v4372
    %v4378 = vadd.f32 %v4310, %v4372
    %v4379 = vadd.f32 %v4311, %v4372
    %v4380 = vadd.f32 %v4312, %v4372
    %v4381 = vadd.f32 %v4313, %v4372
    %v4382 = vadd.f32 %v4314, %v4372
    %v4383 = vadd.f32 %v4315, %v4372
    %v4384 = vadd.f32 %v4316, %v4372
    %v4385 = vadd.f32 %v4317, %v4372
    %v4386 = vadd.f32 %v4318, %v4372
    %v4387 = vadd.f32 %v4319, %v4372
    %v4388 = vadd.f32 %v4320, %v4372
    %v4389 = vadd.f32 %v4321, %v4372
    %v4390 = vadd.f32 %v4322, %v4372
    %v4391 = vadd.f32 %v4323, %v4372
    %v4392 = vadd.f32 %v4324, %v4372
    %v4393 = vadd.f32 %v4325, %v4372
    %v4394 = vadd.f32 %v4326, %v4372
    %v4395 = vadd.f32 %v4327, %v4372
    %v4396 = vadd.f32 %v4328, %v4372
    %v4397 = vadd.f32 %v4329, %v4372
    %v4398 = vadd.f32 %v4330, %v4372
    %v4399 = vadd.f32 %v4331, %v4372
    %v4400 = vadd.f32 %v4332, %v4372
    %v4401 = vadd.f32 %v4333, %v4372
    %v4402 = vadd.f32 %v4334, %v4372
    %v4403 = vadd.f32 %v4335, %v4372
    %v4404 = vadd.f32 %v4336, %v4372
    %v4405 = vadd.f32 %v4337, %v4372
    %v4406 = vadd.f32 %v4338, %v4372
    %v4407 = vadd.f32 %v4339, %v4372
    %v4408 = vadd.f32 %v4340, %v4372
    %v4409 = vadd.f32 %v4341, %v4372
    %v4410 = vadd.f32 %v4342, %v4372
    %v4411 = vadd.f32 %v4343, %v4372
    %v4412 = vadd.f32 %v4344, %v4372
    %v4413 = vadd.f32 %v4345, %v4372
    %v4414 = vadd.f32 %v4346, %v4372
    %v4415 = vadd.f32 %v4347, %v4372
    %v4416 = vadd.f32 %v4348, %v4372
    %v4417 = vadd.f32 %v4349, %v4372
    %v4418 = vadd.f32 %v4350, %v4372
    %v4419 = vadd.f32 %v4351, %v4372
    %v4420 = vadd.f32 %v4352, %v4372
    %v4421 = vadd.f32 %v4353, %v4372
    %v4422 = vadd.f32 %v4354, %v4372
    %v4423 = vadd.f32 %v4355, %v4372
    %v4424 = vadd.f32 %v4356, %v4372
    %v4425 = vadd.f32 %v4357, %v4372
    %v4426 = vadd.f32 %v4358, %v4372
    %v4427 = vadd.f32 %v4359, %v4372
    %v4428 = vadd.f32 %v4360, %v4372
    %v4429 = vadd.f32 %v4361, %v4372
    %v4430 = vadd.f32 %v4362, %v4372
    %v4431 = vadd.f32 %v4363, %v4372
    %v4432 = vadd.f32 %v4364, %v4372
    %v4433 = vadd.f32 %v4365, %v4372
    %v4434 = vadd.f32 %v4366, %v4372
    %v4435 = vadd.f32 %v4367, %v4372
    %v4436 = vadd.f32 %v4368, %v4372
    %v4437 = vmax.f32 %v4373, %v4389
    %v4438 = vmax.f32 %v4374, %v4390
    %v4439 = vmax.f32 %v4375, %v4391
    %v4440 = vmax.f32 %v4376, %v4392
    %v4441 = vmax.f32 %v4377, %v4393
    %v4442 = vmax.f32 %v4378, %v4394
    %v4443 = vmax.f32 %v4379, %v4395
    %v4444 = vmax.f32 %v4380, %v4396
    %v4445 = vmax.f32 %v4381, %v4397
    %v4446 = vmax.f32 %v4382, %v4398
    %v4447 = vmax.f32 %v4383, %v4399
    %v4448 = vmax.f32 %v4384, %v4400
    %v4449 = vmax.f32 %v4385, %v4401
    %v4450 = vmax.f32 %v4386, %v4402
    %v4451 = vmax.f32 %v4387, %v4403
    %v4452 = vmax.f32 %v4388, %v4404
    %v4453 = vmax.f32 %v4405, %v4421
    %v4454 = vmax.f32 %v4406, %v4422
    %v4455 = vmax.f32 %v4407, %v4423
    %v4456 = vmax.f32 %v4408, %v4424
    %v4457 = vmax.f32 %v4409, %v4425
    %v4458 = vmax.f32 %v4410, %v4426
    %v4459 = vmax.f32 %v4411, %v4427
    %v4460 = vmax.f32 %v4412, %v4428
    %v4461 = vmax.f32 %v4413, %v4429
    %v4462 = vmax.f32 %v4414, %v4430
    %v4463 = vmax.f32 %v4415, %v4431
    %v4464 = vmax.f32 %v4416, %v4432
    %v4465 = vmax.f32 %v4417, %v4433
    %v4466 = vmax.f32 %v4418, %v4434
    %v4467 = vmax.f32 %v4419, %v4435
    %v4468 = vmax.f32 %v4420, %v4436
    %v4469 = vmax.f32 %v4437, %v4453
    %v4470 = vmax.f32 %v4438, %v4454
    %v4471 = vmax.f32 %v4439, %v4455
    %v4472 = vmax.f32 %v4440, %v4456
    %v4473 = vmax.f32 %v4441, %v4457
    %v4474 = vmax.f32 %v4442, %v4458
    %v4475 = vmax.f32 %v4443, %v4459
    %v4476 = vmax.f32 %v4444, %v4460
    %v4477 = vmax.f32 %v4445, %v4461
    %v4478 = vmax.f32 %v4446, %v4462
    %v4479 = vmax.f32 %v4447, %v4463
    %v4480 = vmax.f32 %v4448, %v4464
    %v4481 = vmax.f32 %v4449, %v4465
    %v4482 = vmax.f32 %v4450, %v4466
    %v4483 = vmax.f32 %v4451, %v4467
    %v4484 = vmax.f32 %v4452, %v4468
    %v4485 = vmax.f32 %v4469, 0.0
    %v4486 = vmax.f32 %v4470, 0.0
    %v4487 = vmax.f32 %v4471, 0.0
    %v4488 = vmax.f32 %v4472, 0.0
    %v4489 = vmax.f32 %v4473, 0.0
    %v4490 = vmax.f32 %v4474, 0.0
    %v4491 = vmax.f32 %v4475, 0.0
    %v4492 = vmax.f32 %v4476, 0.0
    %v4493 = vmax.f32 %v4477, 0.0
    %v4494 = vmax.f32 %v4478, 0.0
    %v4495 = vmax.f32 %v4479, 0.0
    %v4496 = vmax.f32 %v4480, 0.0
    %v4497 = vmax.f32 %v4481, 0.0
    %v4498 = vmax.f32 %v4482, 0.0
    %v4499 = vmax.f32 %v4483, 0.0
    %v4500 = vmax.f32 %v4484, 0.0
    %v4501 = vld [vmem:[%s1] sm:$0xff]
    %v4502 = vld [vmem:[%s1 + $0x8] sm:$0xff]
    %v4503 = vld [vmem:[%s1 + $0x10] sm:$0xff]
    %v4504 = vld [vmem:[%s1 + $0x18] sm:$0xff]
    %v4505 = vld [vmem:[%s1 + $0x20] sm:$0xff]
    %v4506 = vld [vmem:[%s1 + $0x28] sm:$0xff]
    %v4507 = vld [vmem:[%s1 + $0x30] sm:$0xff]
    %v4508 = vld [vmem:[%s1 + $0x38] sm:$0xff]
    %v4509 = vld [vmem:[%s1 + $0x40] sm:$0xff]
    %v4510 = vld [vmem:[%s1 + $0x48] sm:$0xff]
    %v4511 = vld [vmem:[%s1 + $0x50] sm:$0xff]
    %v4512 = vld [vmem:[%s1 + $0x58] sm:$0xff]
    %v4513 = vld [vmem:[%s1 + $0x60] sm:$0xff]
    %v4514 = vld [vmem:[%s1 + $0x68] sm:$0xff]
    %v4515 = vld [vmem:[%s1 + $0x70] sm:$0xff]
    %v4516 = vld [vmem:[%s1 + $0x78] sm:$0xff]
    %v4517 = vld [vmem:[%s1 + $0x80] sm:$0xff]
    %v4518 = vld [vmem:[%s1 + $0x88] sm:$0xff]
    %v4519 = vpack.c.bf16 %v4486, %v4485
    %v4520 = vpack.c.bf16 %v4488, %v4487
    %v4521 = vpack.c.bf16 %v4490, %v4489
    %v4522 = vpack.c.bf16 %v4492, %v4491
    %v4523 = vpack.c.bf16 %v4494, %v4493
    %v4524 = vpack.c.bf16 %v4496, %v4495
    %v4525 = vpack.c.bf16 %v4498, %v4497
    %v4526 = vpack.c.bf16 %v4500, %v4499
    %v4527 = vld [vmem:[%s6] sm:$0xff]
    %v4528 = vld [vmem:[%s6 + $0x8] sm:$0xff]
    %v4529 = vld [vmem:[%s6 + $0x10] sm:$0xff]
    %v4530 = vld [vmem:[%s6 + $0x18] sm:$0xff]
    %v4531 = vld [vmem:[%s6 + $0x20] sm:$0xff]
    %v4532 = vld [vmem:[%s6 + $0x28] sm:$0xff]
    %v4533 = vld [vmem:[%s6 + $0x30] sm:$0xff]
    %v4534 = vld [vmem:[%s6 + $0x38] sm:$0xff]
    %4535 = vmatprep.subr.bf16.mxu0 0
    %4536 = vmatpush1.bf16.msra.mxu0 %v4519
    %4537 = vmatprep.subr.bf16.mxu0 0
    %4538 = vmatpush1.bf16.msra.mxu0 %v4520
    %4539 = vmatprep.subr.bf16.mxu0 0
    %4540 = vmatpush1.bf16.msra.mxu0 %v4521
    %4541 = vmatprep.subr.bf16.mxu0 0
    %4542 = vmatpush1.bf16.msra.mxu0 %v4522
    %4543 = vmatprep.subr.bf16.mxu0 0
    %4544 = vmatpush1.bf16.msra.mxu0 %v4523
    %4545 = vmatprep.subr.bf16.mxu0 0
    %4546 = vmatpush1.bf16.msra.mxu0 %v4524
    %4547 = vmatprep.subr.bf16.mxu0 0
    %4548 = vmatpush1.bf16.msra.mxu0 %v4525
    %4549 = vmatprep.subr.bf16.mxu0 0
    %4550 = vmatpush1.bf16.msra.mxu0 %v4526
    %4551 = vmatprep.subr.bf16.mxu0 0
    %4552 = vmatpush1.bf16.msra.mxu0 0
    %4553 = vmatprep.subr.bf16.mxu0 0
    %4554 = vmatpush1.bf16.msra.mxu0 0
    %4555 = vmatprep.subr.bf16.mxu0 0
    %4556 = vmatpush1.bf16.msra.mxu0 0
    %4557 = vmatprep.subr.bf16.mxu0 0
    %4558 = vmatpush1.bf16.msra.mxu0 0
    %4559 = vmatprep.subr.bf16.mxu0 0
    %4560 = vmatpush1.bf16.msra.mxu0 0
    %4561 = vmatprep.subr.bf16.mxu0 0
    %4562 = vmatpush1.bf16.msra.mxu0 0
    %4563 = vmatprep.subr.bf16.mxu0 0
    %4564 = vmatpush1.bf16.msra.mxu0 0
    %4565 = vmatprep.subr.bf16.mxu0 0
    %4566 = vmatpush1.bf16.msra.mxu0 0
    %4567 = vmatprep.mubr.bf16.mxu0 0
    %4568 = vmatmul.mubr.bf16.gmra.mrb[0].mxu0 %v4527
    %v4569 = vpop.f32.mrb[0].mxu0
    %v4570 = vadd.f32 0.0, %v4569
    %v4571 = vpop.f32.mrb[0].mxu0
    %v4572 = vpop.f32.mrb[0].mxu0
    %v4573 = vadd.f32 0.0, %v4572
    %v4574 = vpop.f32.mrb[0].mxu0
    %4575 = vmatprep.mubr.bf16.mxu0 0
    %4576 = vmatmul.mubr.bf16.gmra.mrb[0].mxu0 %v4528
    %v4577 = vpop.f32.mrb[0].mxu0
    %v4578 = vadd.f32 0.0, %v4577
    %v4579 = vpop.f32.mrb[0].mxu0
    %v4580 = vpop.f32.mrb[0].mxu0
    %v4581 = vadd.f32 0.0, %v4580
    %v4582 = vpop.f32.mrb[0].mxu0
    %4583 = vmatprep.mubr.bf16.mxu0 0
    %4584 = vmatmul.mubr.bf16.gmra.mrb[0].mxu0 %v4529
    %v4585 = vpop.f32.mrb[0].mxu0
    %v4586 = vadd.f32 0.0, %v4585
    %v4587 = vpop.f32.mrb[0].mxu0
    %v4588 = vpop.f32.mrb[0].mxu0
    %v4589 = vadd.f32 0.0, %v4588
    %v4590 = vpop.f32.mrb[0].mxu0
    %4591 = vmatprep.mubr.bf16.mxu0 0
    %4592 = vmatmul.mubr.bf16.gmra.mrb[0].mxu0 %v4530
    %v4593 = vpop.f32.mrb[0].mxu0
    %v4594 = vadd.f32 0.0, %v4593
    %v4595 = vpop.f32.mrb[0].mxu0
    %v4596 = vpop.f32.mrb[0].mxu0
    %v4597 = vadd.f32 0.0, %v4596
    %v4598 = vpop.f32.mrb[0].mxu0
    %4599 = vmatprep.mubr.bf16.mxu0 0
    %4600 = vmatmul.mubr.bf16.gmra.mrb[0].mxu0 %v4531
    %v4601 = vpop.f32.mrb[0].mxu0
    %v4602 = vadd.f32 0.0, %v4601
    %v4603 = vpop.f32.mrb[0].mxu0
    %v4604 = vpop.f32.mrb[0].mxu0
    %v4605 = vadd.f32 0.0, %v4604
    %v4606 = vpop.f32.mrb[0].mxu0
    %4607 = vmatprep.mubr.bf16.mxu0 0
    %4608 = vmatmul.mubr.bf16.gmra.mrb[0].mxu0 %v4532
    %v4609 = vpop.f32.mrb[0].mxu0
    %v4610 = vadd.f32 0.0, %v4609
    %v4611 = vpop.f32.mrb[0].mxu0
    %v4612 = vpop.f32.mrb[0].mxu0
    %v4613 = vadd.f32 0.0, %v4612
    %v4614 = vpop.f32.mrb[0].mxu0
    %4615 = vmatprep.mubr.bf16.mxu0 0
    %4616 = vmatmul.mubr.bf16.gmra.mrb[0].mxu0 %v4533
    %v4617 = vpop.f32.mrb[0].mxu0
    %v4618 = vadd.f32 0.0, %v4617
    %v4619 = vpop.f32.mrb[0].mxu0
    %v4620 = vpop.f32.mrb[0].mxu0
    %v4621 = vadd.f32 0.0, %v4620
    %v4622 = vpop.f32.mrb[0].mxu0
    %4623 = vmatprep.mubr.bf16.mxu0 0
    %4624 = vmatmul.mubr.bf16.gmra.mrb[0].mxu0 %v4534
    %v4625 = vpop.f32.mrb[0].mxu0
    %v4626 = vadd.f32 0.0, %v4625
    %v4627 = vpop.f32.mrb[0].mxu0
    %v4628 = vpop.f32.mrb[0].mxu0
    %v4629 = vadd.f32 0.0, %v4628
    %v4630 = vpop.f32.mrb[0].mxu0
    %4631 = vdwg.mxu0
    %v4632 = vpack.c.bf16 %v4573, %v4570
    %v4633 = vpack.c.bf16 %v4581, %v4578
    %v4634 = vpack.c.bf16 %v4589, %v4586
    %v4635 = vpack.c.bf16 %v4597, %v4594
    %v4636 = vpack.c.bf16 %v4605, %v4602
    %v4637 = vpack.c.bf16 %v4613, %v4610
    %v4638 = vpack.c.bf16 %v4621, %v4618
    %v4639 = vpack.c.bf16 %v4629, %v4626
    %s4640 = scalar_lea.vmem %s6, 64
    %v4641 = vld [vmem:[%s4640] sm:$0xff]
    %v4642 = vld [vmem:[%s4640 + $0x8] sm:$0xff]
    %v4643 = vld [vmem:[%s4640 + $0x10] sm:$0xff]
    %v4644 = vld [vmem:[%s4640 + $0x18] sm:$0xff]
    %v4645 = vld [vmem:[%s4640 + $0x20] sm:$0xff]
    %v4646 = vld [vmem:[%s4640 + $0x28] sm:$0xff]
    %v4647 = vld [vmem:[%s4640 + $0x30] sm:$0xff]
    %v4648 = vld [vmem:[%s4640 + $0x38] sm:$0xff]
    %4649 = vmatprep.subr.bf16.mxu0 0
    %4650 = vmatpush1.bf16.msra.mxu0 %v4519
    %4651 = vmatprep.subr.bf16.mxu0 0
    %4652 = vmatpush1.bf16.msra.mxu0 %v4520
    %4653 = vmatprep.subr.bf16.mxu0 0
    %4654 = vmatpush1.bf16.msra.mxu0 %v4521
    %4655 = vmatprep.subr.bf16.mxu0 0
    %4656 = vmatpush1.bf16.msra.mxu0 %v4522
    %4657 = vmatprep.subr.bf16.mxu0 0
    %4658 = vmatpush1.bf16.msra.mxu0 %v4523
    %4659 = vmatprep.subr.bf16.mxu0 0
    %4660 = vmatpush1.bf16.msra.mxu0 %v4524
    %4661 = vmatprep.subr.bf16.mxu0 0
    %4662 = vmatpush1.bf16.msra.mxu0 %v4525
    %4663 = vmatprep.subr.bf16.mxu0 0
    %4664 = vmatpush1.bf16.msra.mxu0 %v4526
    %4665 = vmatprep.subr.bf16.mxu0 0
    %4666 = vmatpush1.bf16.msra.mxu0 0
    %4667 = vmatprep.subr.bf16.mxu0 0
    %4668 = vmatpush1.bf16.msra.mxu0 0
    %4669 = vmatprep.subr.bf16.mxu0 0
    %4670 = vmatpush1.bf16.msra.mxu0 0
    %4671 = vmatprep.subr.bf16.mxu0 0
    %4672 = vmatpush1.bf16.msra.mxu0 0
    %4673 = vmatprep.subr.bf16.mxu0 0
    %4674 = vmatpush1.bf16.msra.mxu0 0
    %4675 = vmatprep.subr.bf16.mxu0 0
    %4676 = vmatpush1.bf16.msra.mxu0 0
    %4677 = vmatprep.subr.bf16.mxu0 0
    %4678 = vmatpush1.bf16.msra.mxu0 0
    %4679 = vmatprep.subr.bf16.mxu0 0
    %4680 = vmatpush1.bf16.msra.mxu0 0
    %4681 = vmatprep.mubr.bf16.mxu0 0
    %4682 = vmatmul.mubr.bf16.gmra.mrb[0].mxu0 %v4641
    %v4683 = vpop.f32.mrb[0].mxu0
    %v4684 = vadd.f32 0.0, %v4683
    %v4685 = vpop.f32.mrb[0].mxu0
    %v4686 = vpop.f32.mrb[0].mxu0
    %v4687 = vadd.f32 0.0, %v4686
    %v4688 = vpop.f32.mrb[0].mxu0
    %4689 = vmatprep.mubr.bf16.mxu0 0
    %4690 = vmatmul.mubr.bf16.gmra.mrb[0].mxu0 %v4642
    %v4691 = vpop.f32.mrb[0].mxu0
    %v4692 = vadd.f32 0.0, %v4691
    %v4693 = vpop.f32.mrb[0].mxu0
    %v4694 = vpop.f32.mrb[0].mxu0
    %v4695 = vadd.f32 0.0, %v4694
    %v4696 = vpop.f32.mrb[0].mxu0
    %4697 = vmatprep.mubr.bf16.mxu0 0
    %4698 = vmatmul.mubr.bf16.gmra.mrb[0].mxu0 %v4643
    %v4699 = vpop.f32.mrb[0].mxu0
    %v4700 = vadd.f32 0.0, %v4699
    %v4701 = vpop.f32.mrb[0].mxu0
    %v4702 = vpop.f32.mrb[0].mxu0
    %v4703 = vadd.f32 0.0, %v4702
    %v4704 = vpop.f32.mrb[0].mxu0
    %4705 = vmatprep.mubr.bf16.mxu0 0
    %4706 = vmatmul.mubr.bf16.gmra.mrb[0].mxu0 %v4644
    %v4707 = vpop.f32.mrb[0].mxu0
    %v4708 = vadd.f32 0.0, %v4707
    %v4709 = vpop.f32.mrb[0].mxu0
    %v4710 = vpop.f32.mrb[0].mxu0
    %v4711 = vadd.f32 0.0, %v4710
    %v4712 = vpop.f32.mrb[0].mxu0
    %4713 = vmatprep.mubr.bf16.mxu0 0
    %4714 = vmatmul.mubr.bf16.gmra.mrb[0].mxu0 %v4645
    %v4715 = vpop.f32.mrb[0].mxu0
    %v4716 = vadd.f32 0.0, %v4715
    %v4717 = vpop.f32.mrb[0].mxu0
    %v4718 = vpop.f32.mrb[0].mxu0
    %v4719 = vadd.f32 0.0, %v4718
    %v4720 = vpop.f32.mrb[0].mxu0
    %4721 = vmatprep.mubr.bf16.mxu0 0
    %4722 = vmatmul.mubr.bf16.gmra.mrb[0].mxu0 %v4646
    %v4723 = vpop.f32.mrb[0].mxu0
    %v4724 = vadd.f32 0.0, %v4723
    %v4725 = vpop.f32.mrb[0].mxu0
    %v4726 = vpop.f32.mrb[0].mxu0
    %v4727 = vadd.f32 0.0, %v4726
    %v4728 = vpop.f32.mrb[0].mxu0
    %4729 = vmatprep.mubr.bf16.mxu0 0
    %4730 = vmatmul.mubr.bf16.gmra.mrb[0].mxu0 %v4647
    %v4731 = vpop.f32.mrb[0].mxu0
    %v4732 = vadd.f32 0.0, %v4731
    %v4733 = vpop.f32.mrb[0].mxu0
    %v4734 = vpop.f32.mrb[0].mxu0
    %v4735 = vadd.f32 0.0, %v4734
    %v4736 = vpop.f32.mrb[0].mxu0
    %4737 = vmatprep.mubr.bf16.mxu0 0
    %4738 = vmatmul.mubr.bf16.gmra.mrb[0].mxu0 %v4648
    %v4739 = vpop.f32.mrb[0].mxu0
    %v4740 = vadd.f32 0.0, %v4739
    %v4741 = vpop.f32.mrb[0].mxu0
    %v4742 = vpop.f32.mrb[0].mxu0
    %v4743 = vadd.f32 0.0, %v4742
    %v4744 = vpop.f32.mrb[0].mxu0
    %4745 = vdwg.mxu0
    %v4746 = vpack.c.bf16 %v4687, %v4684
    %v4747 = vpack.c.bf16 %v4695, %v4692
    %v4748 = vpack.c.bf16 %v4703, %v4700
    %v4749 = vpack.c.bf16 %v4711, %v4708
    %v4750 = vpack.c.bf16 %v4719, %v4716
    %v4751 = vpack.c.bf16 %v4727, %v4724
    %v4752 = vpack.c.bf16 %v4735, %v4732
    %v4753 = vpack.c.bf16 %v4743, %v4740
    %v4755 = vsel %vm3898, %v4746, 0
    %v4758 = vsel %vm3898, %v4747, 0
    %v4761 = vsel %vm3898, %v4748, 0
    %v4764 = vsel %vm3898, %v4749, 0
    %v4767 = vsel %vm3898, %v4750, 0
    %v4770 = vsel %vm3898, %v4751, 0
    %v4773 = vsel %vm3898, %v4752, 0
    %v4776 = vsel %vm3898, %v4753, 0
    %4778 = vmatprep.subr.bf16.mxu0 0
    %4779 = vmatpush1.bf16.msra.mxu0 %v4503
    %4780 = vmatprep.subr.bf16.mxu0 0
    %4781 = vmatpush1.bf16.msra.mxu0 %v4504
    %4782 = vmatprep.subr.bf16.mxu0 0
    %4783 = vmatpush1.bf16.msra.mxu0 0
    %4784 = vmatprep.subr.bf16.mxu0 0
    %4785 = vmatpush1.bf16.msra.mxu0 0
    %4786 = vmatprep.subr.bf16.mxu0 0
    %4787 = vmatpush1.bf16.msra.mxu0 0
    %4788 = vmatprep.subr.bf16.mxu0 0
    %4789 = vmatpush1.bf16.msra.mxu0 0
    %4790 = vmatprep.subr.bf16.mxu0 0
    %4791 = vmatpush1.bf16.msra.mxu0 0
    %4792 = vmatprep.subr.bf16.mxu0 0
    %4793 = vmatpush1.bf16.msra.mxu0 0
    %4794 = vmatprep.subr.bf16.mxu0 0
    %4795 = vmatpush1.bf16.msra.mxu0 0
    %4796 = vmatprep.subr.bf16.mxu0 0
    %4797 = vmatpush1.bf16.msra.mxu0 0
    %4798 = vmatprep.subr.bf16.mxu0 0
    %4799 = vmatpush1.bf16.msra.mxu0 0
    %4800 = vmatprep.subr.bf16.mxu0 0
    %4801 = vmatpush1.bf16.msra.mxu0 0
    %4802 = vmatprep.subr.bf16.mxu0 0
    %4803 = vmatpush1.bf16.msra.mxu0 0
    %4804 = vmatprep.subr.bf16.mxu0 0
    %4805 = vmatpush1.bf16.msra.mxu0 0
    %4806 = vmatprep.subr.bf16.mxu0 0
    %4807 = vmatpush1.bf16.msra.mxu0 0
    %4808 = vmatprep.subr.bf16.mxu0 0
    %4809 = vmatpush1.bf16.msra.mxu0 0
    %4810 = vmatprep.mubr.bf16.mxu0 0
    %4811 = vmatmul.mubr.bf16.gmra.mrb[0].mxu0 %v4755
    %v4812 = vpop.f32.mrb[0].mxu0
    %v4813 = vadd.f32 0.0, %v4812
    %v4814 = vpop.f32.mrb[0].mxu0
    %v4815 = vpop.f32.mrb[0].mxu0
    %v4816 = vadd.f32 0.0, %v4815
    %v4817 = vpop.f32.mrb[0].mxu0
    %4818 = vmatprep.mubr.bf16.mxu0 0
    %4819 = vmatmul.mubr.bf16.gmra.mrb[0].mxu0 %v4758
    %v4820 = vpop.f32.mrb[0].mxu0
    %v4821 = vadd.f32 0.0, %v4820
    %v4822 = vpop.f32.mrb[0].mxu0
    %v4823 = vpop.f32.mrb[0].mxu0
    %v4824 = vadd.f32 0.0, %v4823
    %v4825 = vpop.f32.mrb[0].mxu0
    %4826 = vmatprep.mubr.bf16.mxu0 0
    %4827 = vmatmul.mubr.bf16.gmra.mrb[0].mxu0 %v4761
    %v4828 = vpop.f32.mrb[0].mxu0
    %v4829 = vadd.f32 0.0, %v4828
    %v4830 = vpop.f32.mrb[0].mxu0
    %v4831 = vpop.f32.mrb[0].mxu0
    %v4832 = vadd.f32 0.0, %v4831
    %v4833 = vpop.f32.mrb[0].mxu0
    %4834 = vmatprep.mubr.bf16.mxu0 0
    %4835 = vmatmul.mubr.bf16.gmra.mrb[0].mxu0 %v4764
    %v4836 = vpop.f32.mrb[0].mxu0
    %v4837 = vadd.f32 0.0, %v4836
    %v4838 = vpop.f32.mrb[0].mxu0
    %v4839 = vpop.f32.mrb[0].mxu0
    %v4840 = vadd.f32 0.0, %v4839
    %v4841 = vpop.f32.mrb[0].mxu0
    %4842 = vmatprep.mubr.bf16.mxu0 0
    %4843 = vmatmul.mubr.bf16.gmra.mrb[0].mxu0 %v4767
    %v4844 = vpop.f32.mrb[0].mxu0
    %v4845 = vadd.f32 0.0, %v4844
    %v4846 = vpop.f32.mrb[0].mxu0
    %v4847 = vpop.f32.mrb[0].mxu0
    %v4848 = vadd.f32 0.0, %v4847
    %v4849 = vpop.f32.mrb[0].mxu0
    %4850 = vmatprep.mubr.bf16.mxu0 0
    %4851 = vmatmul.mubr.bf16.gmra.mrb[0].mxu0 %v4770
    %v4852 = vpop.f32.mrb[0].mxu0
    %v4853 = vadd.f32 0.0, %v4852
    %v4854 = vpop.f32.mrb[0].mxu0
    %v4855 = vpop.f32.mrb[0].mxu0
    %v4856 = vadd.f32 0.0, %v4855
    %v4857 = vpop.f32.mrb[0].mxu0
    %4858 = vmatprep.mubr.bf16.mxu0 0
    %4859 = vmatmul.mubr.bf16.gmra.mrb[0].mxu0 %v4773
    %v4860 = vpop.f32.mrb[0].mxu0
    %v4861 = vadd.f32 0.0, %v4860
    %v4862 = vpop.f32.mrb[0].mxu0
    %v4863 = vpop.f32.mrb[0].mxu0
    %v4864 = vadd.f32 0.0, %v4863
    %v4865 = vpop.f32.mrb[0].mxu0
    %4866 = vmatprep.mubr.bf16.mxu0 0
    %4867 = vmatmul.mubr.bf16.gmra.mrb[0].mxu0 %v4776
    %v4868 = vpop.f32.mrb[0].mxu0
    %v4869 = vadd.f32 0.0, %v4868
    %v4870 = vpop.f32.mrb[0].mxu0
    %v4871 = vpop.f32.mrb[0].mxu0
    %v4872 = vadd.f32 0.0, %v4871
    %v4873 = vpop.f32.mrb[0].mxu0
    %4874 = vdwg.mxu0
    %v4876 = vsel %vm3898, %v4632, 0
    %v4879 = vsel %vm3898, %v4633, 0
    %v4882 = vsel %vm3898, %v4634, 0
    %v4885 = vsel %vm3898, %v4635, 0
    %v4888 = vsel %vm3898, %v4636, 0
    %v4891 = vsel %vm3898, %v4637, 0
    %v4894 = vsel %vm3898, %v4638, 0
    %v4897 = vsel %vm3898, %v4639, 0
    %4899 = vmatprep.subr.bf16.mxu0 0
    %4900 = vmatpush1.bf16.msra.mxu0 %v4501
    %4901 = vmatprep.subr.bf16.mxu0 0
    %4902 = vmatpush1.bf16.msra.mxu0 %v4502
    %4903 = vmatprep.subr.bf16.mxu0 0
    %4904 = vmatpush1.bf16.msra.mxu0 0
    %4905 = vmatprep.subr.bf16.mxu0 0
    %4906 = vmatpush1.bf16.msra.mxu0 0
    %4907 = vmatprep.subr.bf16.mxu0 0
    %4908 = vmatpush1.bf16.msra.mxu0 0
    %4909 = vmatprep.subr.bf16.mxu0 0
    %4910 = vmatpush1.bf16.msra.mxu0 0
    %4911 = vmatprep.subr.bf16.mxu0 0
    %4912 = vmatpush1.bf16.msra.mxu0 0
    %4913 = vmatprep.subr.bf16.mxu0 0
    %4914 = vmatpush1.bf16.msra.mxu0 0
    %4915 = vmatprep.subr.bf16.mxu0 0
    %4916 = vmatpush1.bf16.msra.mxu0 0
    %4917 = vmatprep.subr.bf16.mxu0 0
    %4918 = vmatpush1.bf16.msra.mxu0 0
    %4919 = vmatprep.subr.bf16.mxu0 0
    %4920 = vmatpush1.bf16.msra.mxu0 0
    %4921 = vmatprep.subr.bf16.mxu0 0
    %4922 = vmatpush1.bf16.msra.mxu0 0
    %4923 = vmatprep.subr.bf16.mxu0 0
    %4924 = vmatpush1.bf16.msra.mxu0 0
    %4925 = vmatprep.subr.bf16.mxu0 0
    %4926 = vmatpush1.bf16.msra.mxu0 0
    %4927 = vmatprep.subr.bf16.mxu0 0
    %4928 = vmatpush1.bf16.msra.mxu0 0
    %4929 = vmatprep.subr.bf16.mxu0 0
    %4930 = vmatpush1.bf16.msra.mxu0 0
    %4931 = vmatprep.mubr.bf16.mxu0 0
    %4932 = vmatmul.mubr.bf16.gmra.mrb[0].mxu0 %v4876
    %v4933 = vpop.f32.mrb[0].mxu0
    %v4934 = vadd.f32 %v4813, %v4933
    %v4935 = vpop.f32.mrb[0].mxu0
    %v4936 = vpop.f32.mrb[0].mxu0
    %v4937 = vadd.f32 %v4816, %v4936
    %v4938 = vpop.f32.mrb[0].mxu0
    %4939 = vmatprep.mubr.bf16.mxu0 0
    %4940 = vmatmul.mubr.bf16.gmra.mrb[0].mxu0 %v4879
    %v4941 = vpop.f32.mrb[0].mxu0
    %v4942 = vadd.f32 %v4821, %v4941
    %v4943 = vpop.f32.mrb[0].mxu0
    %v4944 = vpop.f32.mrb[0].mxu0
    %v4945 = vadd.f32 %v4824, %v4944
    %v4946 = vpop.f32.mrb[0].mxu0
    %4947 = vmatprep.mubr.bf16.mxu0 0
    %4948 = vmatmul.mubr.bf16.gmra.mrb[0].mxu0 %v4882
    %v4949 = vpop.f32.mrb[0].mxu0
    %v4950 = vadd.f32 %v4829, %v4949
    %v4951 = vpop.f32.mrb[0].mxu0
    %v4952 = vpop.f32.mrb[0].mxu0
    %v4953 = vadd.f32 %v4832, %v4952
    %v4954 = vpop.f32.mrb[0].mxu0
    %4955 = vmatprep.mubr.bf16.mxu0 0
    %4956 = vmatmul.mubr.bf16.gmra.mrb[0].mxu0 %v4885
    %v4957 = vpop.f32.mrb[0].mxu0
    %v4958 = vadd.f32 %v4837, %v4957
    %v4959 = vpop.f32.mrb[0].mxu0
    %v4960 = vpop.f32.mrb[0].mxu0
    %v4961 = vadd.f32 %v4840, %v4960
    %v4962 = vpop.f32.mrb[0].mxu0
    %4963 = vmatprep.mubr.bf16.mxu0 0
    %4964 = vmatmul.mubr.bf16.gmra.mrb[0].mxu0 %v4888
    %v4965 = vpop.f32.mrb[0].mxu0
    %v4966 = vadd.f32 %v4845, %v4965
    %v4967 = vpop.f32.mrb[0].mxu0
    %v4968 = vpop.f32.mrb[0].mxu0
    %v4969 = vadd.f32 %v4848, %v4968
    %v4970 = vpop.f32.mrb[0].mxu0
    %4971 = vmatprep.mubr.bf16.mxu0 0
    %4972 = vmatmul.mubr.bf16.gmra.mrb[0].mxu0 %v4891
    %v4973 = vpop.f32.mrb[0].mxu0
    %v4974 = vadd.f32 %v4853, %v4973
    %v4975 = vpop.f32.mrb[0].mxu0
    %v4976 = vpop.f32.mrb[0].mxu0
    %v4977 = vadd.f32 %v4856, %v4976
    %v4978 = vpop.f32.mrb[0].mxu0
    %4979 = vmatprep.mubr.bf16.mxu0 0
    %4980 = vmatmul.mubr.bf16.gmra.mrb[0].mxu0 %v4894
    %v4981 = vpop.f32.mrb[0].mxu0
    %v4982 = vadd.f32 %v4861, %v4981
    %v4983 = vpop.f32.mrb[0].mxu0
    %v4984 = vpop.f32.mrb[0].mxu0
    %v4985 = vadd.f32 %v4864, %v4984
    %v4986 = vpop.f32.mrb[0].mxu0
    %4987 = vmatprep.mubr.bf16.mxu0 0
    %4988 = vmatmul.mubr.bf16.gmra.mrb[0].mxu0 %v4897
    %v4989 = vpop.f32.mrb[0].mxu0
    %v4990 = vadd.f32 %v4869, %v4989
    %v4991 = vpop.f32.mrb[0].mxu0
    %v4992 = vpop.f32.mrb[0].mxu0
    %v4993 = vadd.f32 %v4872, %v4992
    %v4994 = vpop.f32.mrb[0].mxu0
    %4995 = vdwg.mxu0
    %s4996 = scalar_lea.vmem %s6, 128
    %v4997 = vld [vmem:[%s4996] sm:$0xff]
    %v4998 = vld [vmem:[%s4996 + $0x8] sm:$0xff]
    %v4999 = vld [vmem:[%s4996 + $0x10] sm:$0xff]
    %v5000 = vld [vmem:[%s4996 + $0x18] sm:$0xff]
    %v5001 = vld [vmem:[%s4996 + $0x20] sm:$0xff]
    %v5002 = vld [vmem:[%s4996 + $0x28] sm:$0xff]
    %v5003 = vld [vmem:[%s4996 + $0x30] sm:$0xff]
    %v5004 = vld [vmem:[%s4996 + $0x38] sm:$0xff]
    %5005 = vmatprep.subr.bf16.mxu0 0
    %5006 = vmatpush1.bf16.msra.mxu0 %v4519
    %5007 = vmatprep.subr.bf16.mxu0 0
    %5008 = vmatpush1.bf16.msra.mxu0 %v4520
    %5009 = vmatprep.subr.bf16.mxu0 0
    %5010 = vmatpush1.bf16.msra.mxu0 %v4521
    %5011 = vmatprep.subr.bf16.mxu0 0
    %5012 = vmatpush1.bf16.msra.mxu0 %v4522
    %5013 = vmatprep.subr.bf16.mxu0 0
    %5014 = vmatpush1.bf16.msra.mxu0 %v4523
    %5015 = vmatprep.subr.bf16.mxu0 0
    %5016 = vmatpush1.bf16.msra.mxu0 %v4524
    %5017 = vmatprep.subr.bf16.mxu0 0
    %5018 = vmatpush1.bf16.msra.mxu0 %v4525
    %5019 = vmatprep.subr.bf16.mxu0 0
    %5020 = vmatpush1.bf16.msra.mxu0 %v4526
    %5021 = vmatprep.subr.bf16.mxu0 0
    %5022 = vmatpush1.bf16.msra.mxu0 0
    %5023 = vmatprep.subr.bf16.mxu0 0
    %5024 = vmatpush1.bf16.msra.mxu0 0
    %5025 = vmatprep.subr.bf16.mxu0 0
    %5026 = vmatpush1.bf16.msra.mxu0 0
    %5027 = vmatprep.subr.bf16.mxu0 0
    %5028 = vmatpush1.bf16.msra.mxu0 0
    %5029 = vmatprep.subr.bf16.mxu0 0
    %5030 = vmatpush1.bf16.msra.mxu0 0
    %5031 = vmatprep.subr.bf16.mxu0 0
    %5032 = vmatpush1.bf16.msra.mxu0 0
    %5033 = vmatprep.subr.bf16.mxu0 0
    %5034 = vmatpush1.bf16.msra.mxu0 0
    %5035 = vmatprep.subr.bf16.mxu0 0
    %5036 = vmatpush1.bf16.msra.mxu0 0
    %5037 = vmatprep.mubr.bf16.mxu0 0
    %5038 = vmatmul.mubr.bf16.gmra.mrb[0].mxu0 %v4997
    %v5039 = vpop.f32.mrb[0].mxu0
    %v5040 = vadd.f32 0.0, %v5039
    %v5041 = vpop.f32.mrb[0].mxu0
    %v5042 = vpop.f32.mrb[0].mxu0
    %v5043 = vadd.f32 0.0, %v5042
    %v5044 = vpop.f32.mrb[0].mxu0
    %5045 = vmatprep.mubr.bf16.mxu0 0
    %5046 = vmatmul.mubr.bf16.gmra.mrb[0].mxu0 %v4998
    %v5047 = vpop.f32.mrb[0].mxu0
    %v5048 = vadd.f32 0.0, %v5047
    %v5049 = vpop.f32.mrb[0].mxu0
    %v5050 = vpop.f32.mrb[0].mxu0
    %v5051 = vadd.f32 0.0, %v5050
    %v5052 = vpop.f32.mrb[0].mxu0
    %5053 = vmatprep.mubr.bf16.mxu0 0
    %5054 = vmatmul.mubr.bf16.gmra.mrb[0].mxu0 %v4999
    %v5055 = vpop.f32.mrb[0].mxu0
    %v5056 = vadd.f32 0.0, %v5055
    %v5057 = vpop.f32.mrb[0].mxu0
    %v5058 = vpop.f32.mrb[0].mxu0
    %v5059 = vadd.f32 0.0, %v5058
    %v5060 = vpop.f32.mrb[0].mxu0
    %5061 = vmatprep.mubr.bf16.mxu0 0
    %5062 = vmatmul.mubr.bf16.gmra.mrb[0].mxu0 %v5000
    %v5063 = vpop.f32.mrb[0].mxu0
    %v5064 = vadd.f32 0.0, %v5063
    %v5065 = vpop.f32.mrb[0].mxu0
    %v5066 = vpop.f32.mrb[0].mxu0
    %v5067 = vadd.f32 0.0, %v5066
    %v5068 = vpop.f32.mrb[0].mxu0
    %5069 = vmatprep.mubr.bf16.mxu0 0
    %5070 = vmatmul.mubr.bf16.gmra.mrb[0].mxu0 %v5001
    %v5071 = vpop.f32.mrb[0].mxu0
    %v5072 = vadd.f32 0.0, %v5071
    %v5073 = vpop.f32.mrb[0].mxu0
    %v5074 = vpop.f32.mrb[0].mxu0
    %v5075 = vadd.f32 0.0, %v5074
    %v5076 = vpop.f32.mrb[0].mxu0
    %5077 = vmatprep.mubr.bf16.mxu0 0
    %5078 = vmatmul.mubr.bf16.gmra.mrb[0].mxu0 %v5002
    %v5079 = vpop.f32.mrb[0].mxu0
    %v5080 = vadd.f32 0.0, %v5079
    %v5081 = vpop.f32.mrb[0].mxu0
    %v5082 = vpop.f32.mrb[0].mxu0
    %v5083 = vadd.f32 0.0, %v5082
    %v5084 = vpop.f32.mrb[0].mxu0
    %5085 = vmatprep.mubr.bf16.mxu0 0
    %5086 = vmatmul.mubr.bf16.gmra.mrb[0].mxu0 %v5003
    %v5087 = vpop.f32.mrb[0].mxu0
    %v5088 = vadd.f32 0.0, %v5087
    %v5089 = vpop.f32.mrb[0].mxu0
    %v5090 = vpop.f32.mrb[0].mxu0
    %v5091 = vadd.f32 0.0, %v5090
    %v5092 = vpop.f32.mrb[0].mxu0
    %5093 = vmatprep.mubr.bf16.mxu0 0
    %5094 = vmatmul.mubr.bf16.gmra.mrb[0].mxu0 %v5004
    %v5095 = vpop.f32.mrb[0].mxu0
    %v5096 = vadd.f32 0.0, %v5095
    %v5097 = vpop.f32.mrb[0].mxu0
    %v5098 = vpop.f32.mrb[0].mxu0
    %v5099 = vadd.f32 0.0, %v5098
    %v5100 = vpop.f32.mrb[0].mxu0
    %5101 = vdwg.mxu0
    %v5102 = vpack.c.bf16 %v5043, %v5040
    %v5103 = vpack.c.bf16 %v5051, %v5048
    %v5104 = vpack.c.bf16 %v5059, %v5056
    %v5105 = vpack.c.bf16 %v5067, %v5064
    %v5106 = vpack.c.bf16 %v5075, %v5072
    %v5107 = vpack.c.bf16 %v5083, %v5080
    %v5108 = vpack.c.bf16 %v5091, %v5088
    %v5109 = vpack.c.bf16 %v5099, %v5096
    %v5111 = vsel %vm3898, %v5102, 0
    %v5114 = vsel %vm3898, %v5103, 0
    %v5117 = vsel %vm3898, %v5104, 0
    %v5120 = vsel %vm3898, %v5105, 0
    %v5123 = vsel %vm3898, %v5106, 0
    %v5126 = vsel %vm3898, %v5107, 0
    %v5129 = vsel %vm3898, %v5108, 0
    %v5132 = vsel %vm3898, %v5109, 0
    %5134 = vmatprep.subr.bf16.mxu0 0
    %5135 = vmatpush1.bf16.msra.mxu0 %v4505
    %5136 = vmatprep.subr.bf16.mxu0 0
    %5137 = vmatpush1.bf16.msra.mxu0 %v4506
    %5138 = vmatprep.subr.bf16.mxu0 0
    %5139 = vmatpush1.bf16.msra.mxu0 0
    %5140 = vmatprep.subr.bf16.mxu0 0
    %5141 = vmatpush1.bf16.msra.mxu0 0
    %5142 = vmatprep.subr.bf16.mxu0 0
    %5143 = vmatpush1.bf16.msra.mxu0 0
    %5144 = vmatprep.subr.bf16.mxu0 0
    %5145 = vmatpush1.bf16.msra.mxu0 0
    %5146 = vmatprep.subr.bf16.mxu0 0
    %5147 = vmatpush1.bf16.msra.mxu0 0
    %5148 = vmatprep.subr.bf16.mxu0 0
    %5149 = vmatpush1.bf16.msra.mxu0 0
    %5150 = vmatprep.subr.bf16.mxu0 0
    %5151 = vmatpush1.bf16.msra.mxu0 0
    %5152 = vmatprep.subr.bf16.mxu0 0
    %5153 = vmatpush1.bf16.msra.mxu0 0
    %5154 = vmatprep.subr.bf16.mxu0 0
    %5155 = vmatpush1.bf16.msra.mxu0 0
    %5156 = vmatprep.subr.bf16.mxu0 0
    %5157 = vmatpush1.bf16.msra.mxu0 0
    %5158 = vmatprep.subr.bf16.mxu0 0
    %5159 = vmatpush1.bf16.msra.mxu0 0
    %5160 = vmatprep.subr.bf16.mxu0 0
    %5161 = vmatpush1.bf16.msra.mxu0 0
    %5162 = vmatprep.subr.bf16.mxu0 0
    %5163 = vmatpush1.bf16.msra.mxu0 0
    %5164 = vmatprep.subr.bf16.mxu0 0
    %5165 = vmatpush1.bf16.msra.mxu0 0
    %5166 = vmatprep.mubr.bf16.mxu0 0
    %5167 = vmatmul.mubr.bf16.gmra.mrb[0].mxu0 %v5111
    %v5168 = vpop.f32.mrb[0].mxu0
    %v5169 = vadd.f32 0.0, %v5168
    %v5170 = vpop.f32.mrb[0].mxu0
    %v5171 = vpop.f32.mrb[0].mxu0
    %v5172 = vadd.f32 0.0, %v5171
    %v5173 = vpop.f32.mrb[0].mxu0
    %5174 = vmatprep.mubr.bf16.mxu0 0
    %5175 = vmatmul.mubr.bf16.gmra.mrb[0].mxu0 %v5114
    %v5176 = vpop.f32.mrb[0].mxu0
    %v5177 = vadd.f32 0.0, %v5176
    %v5178 = vpop.f32.mrb[0].mxu0
    %v5179 = vpop.f32.mrb[0].mxu0
    %v5180 = vadd.f32 0.0, %v5179
    %v5181 = vpop.f32.mrb[0].mxu0
    %5182 = vmatprep.mubr.bf16.mxu0 0
    %5183 = vmatmul.mubr.bf16.gmra.mrb[0].mxu0 %v5117
    %v5184 = vpop.f32.mrb[0].mxu0
    %v5185 = vadd.f32 0.0, %v5184
    %v5186 = vpop.f32.mrb[0].mxu0
    %v5187 = vpop.f32.mrb[0].mxu0
    %v5188 = vadd.f32 0.0, %v5187
    %v5189 = vpop.f32.mrb[0].mxu0
    %5190 = vmatprep.mubr.bf16.mxu0 0
    %5191 = vmatmul.mubr.bf16.gmra.mrb[0].mxu0 %v5120
    %v5192 = vpop.f32.mrb[0].mxu0
    %v5193 = vadd.f32 0.0, %v5192
    %v5194 = vpop.f32.mrb[0].mxu0
    %v5195 = vpop.f32.mrb[0].mxu0
    %v5196 = vadd.f32 0.0, %v5195
    %v5197 = vpop.f32.mrb[0].mxu0
    %5198 = vmatprep.mubr.bf16.mxu0 0
    %5199 = vmatmul.mubr.bf16.gmra.mrb[0].mxu0 %v5123
    %v5200 = vpop.f32.mrb[0].mxu0
    %v5201 = vadd.f32 0.0, %v5200
    %v5202 = vpop.f32.mrb[0].mxu0
    %v5203 = vpop.f32.mrb[0].mxu0
    %v5204 = vadd.f32 0.0, %v5203
    %v5205 = vpop.f32.mrb[0].mxu0
    %5206 = vmatprep.mubr.bf16.mxu0 0
    %5207 = vmatmul.mubr.bf16.gmra.mrb[0].mxu0 %v5126
    %v5208 = vpop.f32.mrb[0].mxu0
    %v5209 = vadd.f32 0.0, %v5208
    %v5210 = vpop.f32.mrb[0].mxu0
    %v5211 = vpop.f32.mrb[0].mxu0
    %v5212 = vadd.f32 0.0, %v5211
    %v5213 = vpop.f32.mrb[0].mxu0
    %5214 = vmatprep.mubr.bf16.mxu0 0
    %5215 = vmatmul.mubr.bf16.gmra.mrb[0].mxu0 %v5129
    %v5216 = vpop.f32.mrb[0].mxu0
    %v5217 = vadd.f32 0.0, %v5216
    %v5218 = vpop.f32.mrb[0].mxu0
    %v5219 = vpop.f32.mrb[0].mxu0
    %v5220 = vadd.f32 0.0, %v5219
    %v5221 = vpop.f32.mrb[0].mxu0
    %5222 = vmatprep.mubr.bf16.mxu0 0
    %5223 = vmatmul.mubr.bf16.gmra.mrb[0].mxu0 %v5132
    %v5224 = vpop.f32.mrb[0].mxu0
    %v5225 = vadd.f32 0.0, %v5224
    %v5226 = vpop.f32.mrb[0].mxu0
    %v5227 = vpop.f32.mrb[0].mxu0
    %v5228 = vadd.f32 0.0, %v5227
    %v5229 = vpop.f32.mrb[0].mxu0
    %5230 = vdwg.mxu0
    %v5231 = vadd.f32 %v4934, %v5169
    %v5232 = vadd.f32 %v4937, %v5172
    %v5233 = vadd.f32 %v4942, %v5177
    %v5234 = vadd.f32 %v4945, %v5180
    %v5235 = vadd.f32 %v4950, %v5185
    %v5236 = vadd.f32 %v4953, %v5188
    %v5237 = vadd.f32 %v4958, %v5193
    %v5238 = vadd.f32 %v4961, %v5196
    %v5239 = vadd.f32 %v4966, %v5201
    %v5240 = vadd.f32 %v4969, %v5204
    %v5241 = vadd.f32 %v4974, %v5209
    %v5242 = vadd.f32 %v4977, %v5212
    %v5243 = vadd.f32 %v4982, %v5217
    %v5244 = vadd.f32 %v4985, %v5220
    %v5245 = vadd.f32 %v4990, %v5225
    %v5246 = vadd.f32 %v4993, %v5228
    %s5247 = scalar_lea.vmem %s6, 192
    %v5248 = vld [vmem:[%s5247] sm:$0xff]
    %v5249 = vld [vmem:[%s5247 + $0x8] sm:$0xff]
    %v5250 = vld [vmem:[%s5247 + $0x10] sm:$0xff]
    %v5251 = vld [vmem:[%s5247 + $0x18] sm:$0xff]
    %v5252 = vld [vmem:[%s5247 + $0x20] sm:$0xff]
    %v5253 = vld [vmem:[%s5247 + $0x28] sm:$0xff]
    %v5254 = vld [vmem:[%s5247 + $0x30] sm:$0xff]
    %v5255 = vld [vmem:[%s5247 + $0x38] sm:$0xff]
    %5256 = vmatprep.subr.bf16.mxu0 0
    %5257 = vmatpush1.bf16.msra.mxu0 %v4519
    %5258 = vmatprep.subr.bf16.mxu0 0
    %5259 = vmatpush1.bf16.msra.mxu0 %v4520
    %5260 = vmatprep.subr.bf16.mxu0 0
    %5261 = vmatpush1.bf16.msra.mxu0 %v4521
    %5262 = vmatprep.subr.bf16.mxu0 0
    %5263 = vmatpush1.bf16.msra.mxu0 %v4522
    %5264 = vmatprep.subr.bf16.mxu0 0
    %5265 = vmatpush1.bf16.msra.mxu0 %v4523
    %5266 = vmatprep.subr.bf16.mxu0 0
    %5267 = vmatpush1.bf16.msra.mxu0 %v4524
    %5268 = vmatprep.subr.bf16.mxu0 0
    %5269 = vmatpush1.bf16.msra.mxu0 %v4525
    %5270 = vmatprep.subr.bf16.mxu0 0
    %5271 = vmatpush1.bf16.msra.mxu0 %v4526
    %5272 = vmatprep.subr.bf16.mxu0 0
    %5273 = vmatpush1.bf16.msra.mxu0 0
    %5274 = vmatprep.subr.bf16.mxu0 0
    %5275 = vmatpush1.bf16.msra.mxu0 0
    %5276 = vmatprep.subr.bf16.mxu0 0
    %5277 = vmatpush1.bf16.msra.mxu0 0
    %5278 = vmatprep.subr.bf16.mxu0 0
    %5279 = vmatpush1.bf16.msra.mxu0 0
    %5280 = vmatprep.subr.bf16.mxu0 0
    %5281 = vmatpush1.bf16.msra.mxu0 0
    %5282 = vmatprep.subr.bf16.mxu0 0
    %5283 = vmatpush1.bf16.msra.mxu0 0
    %5284 = vmatprep.subr.bf16.mxu0 0
    %5285 = vmatpush1.bf16.msra.mxu0 0
    %5286 = vmatprep.subr.bf16.mxu0 0
    %5287 = vmatpush1.bf16.msra.mxu0 0
    %5288 = vmatprep.mubr.bf16.mxu0 0
    %5289 = vmatmul.mubr.bf16.gmra.mrb[0].mxu0 %v5248
    %v5290 = vpop.f32.mrb[0].mxu0
    %v5291 = vadd.f32 0.0, %v5290
    %v5292 = vpop.f32.mrb[0].mxu0
    %v5293 = vpop.f32.mrb[0].mxu0
    %v5294 = vadd.f32 0.0, %v5293
    %v5295 = vpop.f32.mrb[0].mxu0
    %5296 = vmatprep.mubr.bf16.mxu0 0
    %5297 = vmatmul.mubr.bf16.gmra.mrb[0].mxu0 %v5249
    %v5298 = vpop.f32.mrb[0].mxu0
    %v5299 = vadd.f32 0.0, %v5298
    %v5300 = vpop.f32.mrb[0].mxu0
    %v5301 = vpop.f32.mrb[0].mxu0
    %v5302 = vadd.f32 0.0, %v5301
    %v5303 = vpop.f32.mrb[0].mxu0
    %5304 = vmatprep.mubr.bf16.mxu0 0
    %5305 = vmatmul.mubr.bf16.gmra.mrb[0].mxu0 %v5250
    %v5306 = vpop.f32.mrb[0].mxu0
    %v5307 = vadd.f32 0.0, %v5306
    %v5308 = vpop.f32.mrb[0].mxu0
    %v5309 = vpop.f32.mrb[0].mxu0
    %v5310 = vadd.f32 0.0, %v5309
    %v5311 = vpop.f32.mrb[0].mxu0
    %5312 = vmatprep.mubr.bf16.mxu0 0
    %5313 = vmatmul.mubr.bf16.gmra.mrb[0].mxu0 %v5251
    %v5314 = vpop.f32.mrb[0].mxu0
    %v5315 = vadd.f32 0.0, %v5314
    %v5316 = vpop.f32.mrb[0].mxu0
    %v5317 = vpop.f32.mrb[0].mxu0
    %v5318 = vadd.f32 0.0, %v5317
    %v5319 = vpop.f32.mrb[0].mxu0
    %5320 = vmatprep.mubr.bf16.mxu0 0
    %5321 = vmatmul.mubr.bf16.gmra.mrb[0].mxu0 %v5252
    %v5322 = vpop.f32.mrb[0].mxu0
    %v5323 = vadd.f32 0.0, %v5322
    %v5324 = vpop.f32.mrb[0].mxu0
    %v5325 = vpop.f32.mrb[0].mxu0
    %v5326 = vadd.f32 0.0, %v5325
    %v5327 = vpop.f32.mrb[0].mxu0
    %5328 = vmatprep.mubr.bf16.mxu0 0
    %5329 = vmatmul.mubr.bf16.gmra.mrb[0].mxu0 %v5253
    %v5330 = vpop.f32.mrb[0].mxu0
    %v5331 = vadd.f32 0.0, %v5330
    %v5332 = vpop.f32.mrb[0].mxu0
    %v5333 = vpop.f32.mrb[0].mxu0
    %v5334 = vadd.f32 0.0, %v5333
    %v5335 = vpop.f32.mrb[0].mxu0
    %5336 = vmatprep.mubr.bf16.mxu0 0
    %5337 = vmatmul.mubr.bf16.gmra.mrb[0].mxu0 %v5254
    %v5338 = vpop.f32.mrb[0].mxu0
    %v5339 = vadd.f32 0.0, %v5338
    %v5340 = vpop.f32.mrb[0].mxu0
    %v5341 = vpop.f32.mrb[0].mxu0
    %v5342 = vadd.f32 0.0, %v5341
    %v5343 = vpop.f32.mrb[0].mxu0
    %5344 = vmatprep.mubr.bf16.mxu0 0
    %5345 = vmatmul.mubr.bf16.gmra.mrb[0].mxu0 %v5255
    %v5346 = vpop.f32.mrb[0].mxu0
    %v5347 = vadd.f32 0.0, %v5346
    %v5348 = vpop.f32.mrb[0].mxu0
    %v5349 = vpop.f32.mrb[0].mxu0
    %v5350 = vadd.f32 0.0, %v5349
    %v5351 = vpop.f32.mrb[0].mxu0
    %5352 = vdwg.mxu0
    %v5353 = vpack.c.bf16 %v5294, %v5291
    %v5354 = vpack.c.bf16 %v5302, %v5299
    %v5355 = vpack.c.bf16 %v5310, %v5307
    %v5356 = vpack.c.bf16 %v5318, %v5315
    %v5357 = vpack.c.bf16 %v5326, %v5323
    %v5358 = vpack.c.bf16 %v5334, %v5331
    %v5359 = vpack.c.bf16 %v5342, %v5339
    %v5360 = vpack.c.bf16 %v5350, %v5347
    %v5362 = vsel %vm3898, %v5353, 0
    %v5365 = vsel %vm3898, %v5354, 0
    %v5368 = vsel %vm3898, %v5355, 0
    %v5371 = vsel %vm3898, %v5356, 0
    %v5374 = vsel %vm3898, %v5357, 0
    %v5377 = vsel %vm3898, %v5358, 0
    %v5380 = vsel %vm3898, %v5359, 0
    %v5383 = vsel %vm3898, %v5360, 0
    %5385 = vmatprep.subr.bf16.mxu0 0
    %5386 = vmatpush1.bf16.msra.mxu0 %v4507
    %5387 = vmatprep.subr.bf16.mxu0 0
    %5388 = vmatpush1.bf16.msra.mxu0 %v4508
    %5389 = vmatprep.subr.bf16.mxu0 0
    %5390 = vmatpush1.bf16.msra.mxu0 0
    %5391 = vmatprep.subr.bf16.mxu0 0
    %5392 = vmatpush1.bf16.msra.mxu0 0
    %5393 = vmatprep.subr.bf16.mxu0 0
    %5394 = vmatpush1.bf16.msra.mxu0 0
    %5395 = vmatprep.subr.bf16.mxu0 0
    %5396 = vmatpush1.bf16.msra.mxu0 0
    %5397 = vmatprep.subr.bf16.mxu0 0
    %5398 = vmatpush1.bf16.msra.mxu0 0
    %5399 = vmatprep.subr.bf16.mxu0 0
    %5400 = vmatpush1.bf16.msra.mxu0 0
    %5401 = vmatprep.subr.bf16.mxu0 0
    %5402 = vmatpush1.bf16.msra.mxu0 0
    %5403 = vmatprep.subr.bf16.mxu0 0
    %5404 = vmatpush1.bf16.msra.mxu0 0
    %5405 = vmatprep.subr.bf16.mxu0 0
    %5406 = vmatpush1.bf16.msra.mxu0 0
    %5407 = vmatprep.subr.bf16.mxu0 0
    %5408 = vmatpush1.bf16.msra.mxu0 0
    %5409 = vmatprep.subr.bf16.mxu0 0
    %5410 = vmatpush1.bf16.msra.mxu0 0
    %5411 = vmatprep.subr.bf16.mxu0 0
    %5412 = vmatpush1.bf16.msra.mxu0 0
    %5413 = vmatprep.subr.bf16.mxu0 0
    %5414 = vmatpush1.bf16.msra.mxu0 0
    %5415 = vmatprep.subr.bf16.mxu0 0
    %5416 = vmatpush1.bf16.msra.mxu0 0
    %5417 = vmatprep.mubr.bf16.mxu0 0
    %5418 = vmatmul.mubr.bf16.gmra.mrb[0].mxu0 %v5362
    %v5419 = vpop.f32.mrb[0].mxu0
    %v5420 = vadd.f32 0.0, %v5419
    %v5421 = vpop.f32.mrb[0].mxu0
    %v5422 = vpop.f32.mrb[0].mxu0
    %v5423 = vadd.f32 0.0, %v5422
    %v5424 = vpop.f32.mrb[0].mxu0
    %5425 = vmatprep.mubr.bf16.mxu0 0
    %5426 = vmatmul.mubr.bf16.gmra.mrb[0].mxu0 %v5365
    %v5427 = vpop.f32.mrb[0].mxu0
    %v5428 = vadd.f32 0.0, %v5427
    %v5429 = vpop.f32.mrb[0].mxu0
    %v5430 = vpop.f32.mrb[0].mxu0
    %v5431 = vadd.f32 0.0, %v5430
    %v5432 = vpop.f32.mrb[0].mxu0
    %5433 = vmatprep.mubr.bf16.mxu0 0
    %5434 = vmatmul.mubr.bf16.gmra.mrb[0].mxu0 %v5368
    %v5435 = vpop.f32.mrb[0].mxu0
    %v5436 = vadd.f32 0.0, %v5435
    %v5437 = vpop.f32.mrb[0].mxu0
    %v5438 = vpop.f32.mrb[0].mxu0
    %v5439 = vadd.f32 0.0, %v5438
    %v5440 = vpop.f32.mrb[0].mxu0
    %5441 = vmatprep.mubr.bf16.mxu0 0
    %5442 = vmatmul.mubr.bf16.gmra.mrb[0].mxu0 %v5371
    %v5443 = vpop.f32.mrb[0].mxu0
    %v5444 = vadd.f32 0.0, %v5443
    %v5445 = vpop.f32.mrb[0].mxu0
    %v5446 = vpop.f32.mrb[0].mxu0
    %v5447 = vadd.f32 0.0, %v5446
    %v5448 = vpop.f32.mrb[0].mxu0
    %5449 = vmatprep.mubr.bf16.mxu0 0
    %5450 = vmatmul.mubr.bf16.gmra.mrb[0].mxu0 %v5374
    %v5451 = vpop.f32.mrb[0].mxu0
    %v5452 = vadd.f32 0.0, %v5451
    %v5453 = vpop.f32.mrb[0].mxu0
    %v5454 = vpop.f32.mrb[0].mxu0
    %v5455 = vadd.f32 0.0, %v5454
    %v5456 = vpop.f32.mrb[0].mxu0
    %5457 = vmatprep.mubr.bf16.mxu0 0
    %5458 = vmatmul.mubr.bf16.gmra.mrb[0].mxu0 %v5377
    %v5459 = vpop.f32.mrb[0].mxu0
    %v5460 = vadd.f32 0.0, %v5459
    %v5461 = vpop.f32.mrb[0].mxu0
    %v5462 = vpop.f32.mrb[0].mxu0
    %v5463 = vadd.f32 0.0, %v5462
    %v5464 = vpop.f32.mrb[0].mxu0
    %5465 = vmatprep.mubr.bf16.mxu0 0
    %5466 = vmatmul.mubr.bf16.gmra.mrb[0].mxu0 %v5380
    %v5467 = vpop.f32.mrb[0].mxu0
    %v5468 = vadd.f32 0.0, %v5467
    %v5469 = vpop.f32.mrb[0].mxu0
    %v5470 = vpop.f32.mrb[0].mxu0
    %v5471 = vadd.f32 0.0, %v5470
    %v5472 = vpop.f32.mrb[0].mxu0
    %5473 = vmatprep.mubr.bf16.mxu0 0
    %5474 = vmatmul.mubr.bf16.gmra.mrb[0].mxu0 %v5383
    %v5475 = vpop.f32.mrb[0].mxu0
    %v5476 = vadd.f32 0.0, %v5475
    %v5477 = vpop.f32.mrb[0].mxu0
    %v5478 = vpop.f32.mrb[0].mxu0
    %v5479 = vadd.f32 0.0, %v5478
    %v5480 = vpop.f32.mrb[0].mxu0
    %5481 = vdwg.mxu0
    %v5482 = vadd.f32 %v5231, %v5420
    %v5483 = vadd.f32 %v5232, %v5423
    %v5484 = vadd.f32 %v5233, %v5428
    %v5485 = vadd.f32 %v5234, %v5431
    %v5486 = vadd.f32 %v5235, %v5436
    %v5487 = vadd.f32 %v5236, %v5439
    %v5488 = vadd.f32 %v5237, %v5444
    %v5489 = vadd.f32 %v5238, %v5447
    %v5490 = vadd.f32 %v5239, %v5452
    %v5491 = vadd.f32 %v5240, %v5455
    %v5492 = vadd.f32 %v5241, %v5460
    %v5493 = vadd.f32 %v5242, %v5463
    %v5494 = vadd.f32 %v5243, %v5468
    %v5495 = vadd.f32 %v5244, %v5471
    %v5496 = vadd.f32 %v5245, %v5476
    %v5497 = vadd.f32 %v5246, %v5479
    %s5498 = scalar_lea.vmem %s6, 256
    %v5499 = vld [vmem:[%s5498] sm:$0xff]
    %v5500 = vld [vmem:[%s5498 + $0x8] sm:$0xff]
    %v5501 = vld [vmem:[%s5498 + $0x10] sm:$0xff]
    %v5502 = vld [vmem:[%s5498 + $0x18] sm:$0xff]
    %v5503 = vld [vmem:[%s5498 + $0x20] sm:$0xff]
    %v5504 = vld [vmem:[%s5498 + $0x28] sm:$0xff]
    %v5505 = vld [vmem:[%s5498 + $0x30] sm:$0xff]
    %v5506 = vld [vmem:[%s5498 + $0x38] sm:$0xff]
    %5507 = vmatprep.subr.bf16.mxu0 0
    %5508 = vmatpush1.bf16.msra.mxu0 %v4519
    %5509 = vmatprep.subr.bf16.mxu0 0
    %5510 = vmatpush1.bf16.msra.mxu0 %v4520
    %5511 = vmatprep.subr.bf16.mxu0 0
    %5512 = vmatpush1.bf16.msra.mxu0 %v4521
    %5513 = vmatprep.subr.bf16.mxu0 0
    %5514 = vmatpush1.bf16.msra.mxu0 %v4522
    %5515 = vmatprep.subr.bf16.mxu0 0
    %5516 = vmatpush1.bf16.msra.mxu0 %v4523
    %5517 = vmatprep.subr.bf16.mxu0 0
    %5518 = vmatpush1.bf16.msra.mxu0 %v4524
    %5519 = vmatprep.subr.bf16.mxu0 0
    %5520 = vmatpush1.bf16.msra.mxu0 %v4525
    %5521 = vmatprep.subr.bf16.mxu0 0
    %5522 = vmatpush1.bf16.msra.mxu0 %v4526
    %5523 = vmatprep.subr.bf16.mxu0 0
    %5524 = vmatpush1.bf16.msra.mxu0 0
    %5525 = vmatprep.subr.bf16.mxu0 0
    %5526 = vmatpush1.bf16.msra.mxu0 0
    %5527 = vmatprep.subr.bf16.mxu0 0
    %5528 = vmatpush1.bf16.msra.mxu0 0
    %5529 = vmatprep.subr.bf16.mxu0 0
    %5530 = vmatpush1.bf16.msra.mxu0 0
    %5531 = vmatprep.subr.bf16.mxu0 0
    %5532 = vmatpush1.bf16.msra.mxu0 0
    %5533 = vmatprep.subr.bf16.mxu0 0
    %5534 = vmatpush1.bf16.msra.mxu0 0
    %5535 = vmatprep.subr.bf16.mxu0 0
    %5536 = vmatpush1.bf16.msra.mxu0 0
    %5537 = vmatprep.subr.bf16.mxu0 0
    %5538 = vmatpush1.bf16.msra.mxu0 0
    %5539 = vmatprep.mubr.bf16.mxu0 0
    %5540 = vmatmul.mubr.bf16.gmra.mrb[0].mxu0 %v5499
    %v5541 = vpop.f32.mrb[0].mxu0
    %v5542 = vadd.f32 0.0, %v5541
    %v5543 = vpop.f32.mrb[0].mxu0
    %v5544 = vpop.f32.mrb[0].mxu0
    %v5545 = vadd.f32 0.0, %v5544
    %v5546 = vpop.f32.mrb[0].mxu0
    %5547 = vmatprep.mubr.bf16.mxu0 0
    %5548 = vmatmul.mubr.bf16.gmra.mrb[0].mxu0 %v5500
    %v5549 = vpop.f32.mrb[0].mxu0
    %v5550 = vadd.f32 0.0, %v5549
    %v5551 = vpop.f32.mrb[0].mxu0
    %v5552 = vpop.f32.mrb[0].mxu0
    %v5553 = vadd.f32 0.0, %v5552
    %v5554 = vpop.f32.mrb[0].mxu0
    %5555 = vmatprep.mubr.bf16.mxu0 0
    %5556 = vmatmul.mubr.bf16.gmra.mrb[0].mxu0 %v5501
    %v5557 = vpop.f32.mrb[0].mxu0
    %v5558 = vadd.f32 0.0, %v5557
    %v5559 = vpop.f32.mrb[0].mxu0
    %v5560 = vpop.f32.mrb[0].mxu0
    %v5561 = vadd.f32 0.0, %v5560
    %v5562 = vpop.f32.mrb[0].mxu0
    %5563 = vmatprep.mubr.bf16.mxu0 0
    %5564 = vmatmul.mubr.bf16.gmra.mrb[0].mxu0 %v5502
    %v5565 = vpop.f32.mrb[0].mxu0
    %v5566 = vadd.f32 0.0, %v5565
    %v5567 = vpop.f32.mrb[0].mxu0
    %v5568 = vpop.f32.mrb[0].mxu0
    %v5569 = vadd.f32 0.0, %v5568
    %v5570 = vpop.f32.mrb[0].mxu0
    %5571 = vmatprep.mubr.bf16.mxu0 0
    %5572 = vmatmul.mubr.bf16.gmra.mrb[0].mxu0 %v5503
    %v5573 = vpop.f32.mrb[0].mxu0
    %v5574 = vadd.f32 0.0, %v5573
    %v5575 = vpop.f32.mrb[0].mxu0
    %v5576 = vpop.f32.mrb[0].mxu0
    %v5577 = vadd.f32 0.0, %v5576
    %v5578 = vpop.f32.mrb[0].mxu0
    %5579 = vmatprep.mubr.bf16.mxu0 0
    %5580 = vmatmul.mubr.bf16.gmra.mrb[0].mxu0 %v5504
    %v5581 = vpop.f32.mrb[0].mxu0
    %v5582 = vadd.f32 0.0, %v5581
    %v5583 = vpop.f32.mrb[0].mxu0
    %v5584 = vpop.f32.mrb[0].mxu0
    %v5585 = vadd.f32 0.0, %v5584
    %v5586 = vpop.f32.mrb[0].mxu0
    %5587 = vmatprep.mubr.bf16.mxu0 0
    %5588 = vmatmul.mubr.bf16.gmra.mrb[0].mxu0 %v5505
    %v5589 = vpop.f32.mrb[0].mxu0
    %v5590 = vadd.f32 0.0, %v5589
    %v5591 = vpop.f32.mrb[0].mxu0
    %v5592 = vpop.f32.mrb[0].mxu0
    %v5593 = vadd.f32 0.0, %v5592
    %v5594 = vpop.f32.mrb[0].mxu0
    %5595 = vmatprep.mubr.bf16.mxu0 0
    %5596 = vmatmul.mubr.bf16.gmra.mrb[0].mxu0 %v5506
    %v5597 = vpop.f32.mrb[0].mxu0
    %v5598 = vadd.f32 0.0, %v5597
    %v5599 = vpop.f32.mrb[0].mxu0
    %v5600 = vpop.f32.mrb[0].mxu0
    %v5601 = vadd.f32 0.0, %v5600
    %v5602 = vpop.f32.mrb[0].mxu0
    %5603 = vdwg.mxu0
    %v5604 = vpack.c.bf16 %v5545, %v5542
    %v5605 = vpack.c.bf16 %v5553, %v5550
    %v5606 = vpack.c.bf16 %v5561, %v5558
    %v5607 = vpack.c.bf16 %v5569, %v5566
    %v5608 = vpack.c.bf16 %v5577, %v5574
    %v5609 = vpack.c.bf16 %v5585, %v5582
    %v5610 = vpack.c.bf16 %v5593, %v5590
    %v5611 = vpack.c.bf16 %v5601, %v5598
    %v5613 = vsel %vm3898, %v5604, 0
    %v5616 = vsel %vm3898, %v5605, 0
    %v5619 = vsel %vm3898, %v5606, 0
    %v5622 = vsel %vm3898, %v5607, 0
    %v5625 = vsel %vm3898, %v5608, 0
    %v5628 = vsel %vm3898, %v5609, 0
    %v5631 = vsel %vm3898, %v5610, 0
    %v5634 = vsel %vm3898, %v5611, 0
    %5636 = vmatprep.subr.bf16.mxu0 0
    %5637 = vmatpush1.bf16.msra.mxu0 %v4509
    %5638 = vmatprep.subr.bf16.mxu0 0
    %5639 = vmatpush1.bf16.msra.mxu0 %v4510
    %5640 = vmatprep.subr.bf16.mxu0 0
    %5641 = vmatpush1.bf16.msra.mxu0 0
    %5642 = vmatprep.subr.bf16.mxu0 0
    %5643 = vmatpush1.bf16.msra.mxu0 0
    %5644 = vmatprep.subr.bf16.mxu0 0
    %5645 = vmatpush1.bf16.msra.mxu0 0
    %5646 = vmatprep.subr.bf16.mxu0 0
    %5647 = vmatpush1.bf16.msra.mxu0 0
    %5648 = vmatprep.subr.bf16.mxu0 0
    %5649 = vmatpush1.bf16.msra.mxu0 0
    %5650 = vmatprep.subr.bf16.mxu0 0
    %5651 = vmatpush1.bf16.msra.mxu0 0
    %5652 = vmatprep.subr.bf16.mxu0 0
    %5653 = vmatpush1.bf16.msra.mxu0 0
    %5654 = vmatprep.subr.bf16.mxu0 0
    %5655 = vmatpush1.bf16.msra.mxu0 0
    %5656 = vmatprep.subr.bf16.mxu0 0
    %5657 = vmatpush1.bf16.msra.mxu0 0
    %5658 = vmatprep.subr.bf16.mxu0 0
    %5659 = vmatpush1.bf16.msra.mxu0 0
    %5660 = vmatprep.subr.bf16.mxu0 0
    %5661 = vmatpush1.bf16.msra.mxu0 0
    %5662 = vmatprep.subr.bf16.mxu0 0
    %5663 = vmatpush1.bf16.msra.mxu0 0
    %5664 = vmatprep.subr.bf16.mxu0 0
    %5665 = vmatpush1.bf16.msra.mxu0 0
    %5666 = vmatprep.subr.bf16.mxu0 0
    %5667 = vmatpush1.bf16.msra.mxu0 0
    %5668 = vmatprep.mubr.bf16.mxu0 0
    %5669 = vmatmul.mubr.bf16.gmra.mrb[0].mxu0 %v5613
    %v5670 = vpop.f32.mrb[0].mxu0
    %v5671 = vadd.f32 0.0, %v5670
    %v5672 = vpop.f32.mrb[0].mxu0
    %v5673 = vpop.f32.mrb[0].mxu0
    %v5674 = vadd.f32 0.0, %v5673
    %v5675 = vpop.f32.mrb[0].mxu0
    %5676 = vmatprep.mubr.bf16.mxu0 0
    %5677 = vmatmul.mubr.bf16.gmra.mrb[0].mxu0 %v5616
    %v5678 = vpop.f32.mrb[0].mxu0
    %v5679 = vadd.f32 0.0, %v5678
    %v5680 = vpop.f32.mrb[0].mxu0
    %v5681 = vpop.f32.mrb[0].mxu0
    %v5682 = vadd.f32 0.0, %v5681
    %v5683 = vpop.f32.mrb[0].mxu0
    %5684 = vmatprep.mubr.bf16.mxu0 0
    %5685 = vmatmul.mubr.bf16.gmra.mrb[0].mxu0 %v5619
    %v5686 = vpop.f32.mrb[0].mxu0
    %v5687 = vadd.f32 0.0, %v5686
    %v5688 = vpop.f32.mrb[0].mxu0
    %v5689 = vpop.f32.mrb[0].mxu0
    %v5690 = vadd.f32 0.0, %v5689
    %v5691 = vpop.f32.mrb[0].mxu0
    %5692 = vmatprep.mubr.bf16.mxu0 0
    %5693 = vmatmul.mubr.bf16.gmra.mrb[0].mxu0 %v5622
    %v5694 = vpop.f32.mrb[0].mxu0
    %v5695 = vadd.f32 0.0, %v5694
    %v5696 = vpop.f32.mrb[0].mxu0
    %v5697 = vpop.f32.mrb[0].mxu0
    %v5698 = vadd.f32 0.0, %v5697
    %v5699 = vpop.f32.mrb[0].mxu0
    %5700 = vmatprep.mubr.bf16.mxu0 0
    %5701 = vmatmul.mubr.bf16.gmra.mrb[0].mxu0 %v5625
    %v5702 = vpop.f32.mrb[0].mxu0
    %v5703 = vadd.f32 0.0, %v5702
    %v5704 = vpop.f32.mrb[0].mxu0
    %v5705 = vpop.f32.mrb[0].mxu0
    %v5706 = vadd.f32 0.0, %v5705
    %v5707 = vpop.f32.mrb[0].mxu0
    %5708 = vmatprep.mubr.bf16.mxu0 0
    %5709 = vmatmul.mubr.bf16.gmra.mrb[0].mxu0 %v5628
    %v5710 = vpop.f32.mrb[0].mxu0
    %v5711 = vadd.f32 0.0, %v5710
    %v5712 = vpop.f32.mrb[0].mxu0
    %v5713 = vpop.f32.mrb[0].mxu0
    %v5714 = vadd.f32 0.0, %v5713
    %v5715 = vpop.f32.mrb[0].mxu0
    %5716 = vmatprep.mubr.bf16.mxu0 0
    %5717 = vmatmul.mubr.bf16.gmra.mrb[0].mxu0 %v5631
    %v5718 = vpop.f32.mrb[0].mxu0
    %v5719 = vadd.f32 0.0, %v5718
    %v5720 = vpop.f32.mrb[0].mxu0
    %v5721 = vpop.f32.mrb[0].mxu0
    %v5722 = vadd.f32 0.0, %v5721
    %v5723 = vpop.f32.mrb[0].mxu0
    %5724 = vmatprep.mubr.bf16.mxu0 0
    %5725 = vmatmul.mubr.bf16.gmra.mrb[0].mxu0 %v5634
    %v5726 = vpop.f32.mrb[0].mxu0
    %v5727 = vadd.f32 0.0, %v5726
    %v5728 = vpop.f32.mrb[0].mxu0
    %v5729 = vpop.f32.mrb[0].mxu0
    %v5730 = vadd.f32 0.0, %v5729
    %v5731 = vpop.f32.mrb[0].mxu0
    %5732 = vdwg.mxu0
    %v5733 = vadd.f32 %v5482, %v5671
    %v5734 = vadd.f32 %v5483, %v5674
    %v5735 = vadd.f32 %v5484, %v5679
    %v5736 = vadd.f32 %v5485, %v5682
    %v5737 = vadd.f32 %v5486, %v5687
    %v5738 = vadd.f32 %v5487, %v5690
    %v5739 = vadd.f32 %v5488, %v5695
    %v5740 = vadd.f32 %v5489, %v5698
    %v5741 = vadd.f32 %v5490, %v5703
    %v5742 = vadd.f32 %v5491, %v5706
    %v5743 = vadd.f32 %v5492, %v5711
    %v5744 = vadd.f32 %v5493, %v5714
    %v5745 = vadd.f32 %v5494, %v5719
    %v5746 = vadd.f32 %v5495, %v5722
    %v5747 = vadd.f32 %v5496, %v5727
    %v5748 = vadd.f32 %v5497, %v5730
    %s5749 = scalar_lea.vmem %s6, 320
    %v5750 = vld [vmem:[%s5749] sm:$0xff]
    %v5751 = vld [vmem:[%s5749 + $0x8] sm:$0xff]
    %v5752 = vld [vmem:[%s5749 + $0x10] sm:$0xff]
    %v5753 = vld [vmem:[%s5749 + $0x18] sm:$0xff]
    %v5754 = vld [vmem:[%s5749 + $0x20] sm:$0xff]
    %v5755 = vld [vmem:[%s5749 + $0x28] sm:$0xff]
    %v5756 = vld [vmem:[%s5749 + $0x30] sm:$0xff]
    %v5757 = vld [vmem:[%s5749 + $0x38] sm:$0xff]
    %5758 = vmatprep.subr.bf16.mxu0 0
    %5759 = vmatpush1.bf16.msra.mxu0 %v4519
    %5760 = vmatprep.subr.bf16.mxu0 0
    %5761 = vmatpush1.bf16.msra.mxu0 %v4520
    %5762 = vmatprep.subr.bf16.mxu0 0
    %5763 = vmatpush1.bf16.msra.mxu0 %v4521
    %5764 = vmatprep.subr.bf16.mxu0 0
    %5765 = vmatpush1.bf16.msra.mxu0 %v4522
    %5766 = vmatprep.subr.bf16.mxu0 0
    %5767 = vmatpush1.bf16.msra.mxu0 %v4523
    %5768 = vmatprep.subr.bf16.mxu0 0
    %5769 = vmatpush1.bf16.msra.mxu0 %v4524
    %5770 = vmatprep.subr.bf16.mxu0 0
    %5771 = vmatpush1.bf16.msra.mxu0 %v4525
    %5772 = vmatprep.subr.bf16.mxu0 0
    %5773 = vmatpush1.bf16.msra.mxu0 %v4526
    %5774 = vmatprep.subr.bf16.mxu0 0
    %5775 = vmatpush1.bf16.msra.mxu0 0
    %5776 = vmatprep.subr.bf16.mxu0 0
    %5777 = vmatpush1.bf16.msra.mxu0 0
    %5778 = vmatprep.subr.bf16.mxu0 0
    %5779 = vmatpush1.bf16.msra.mxu0 0
    %5780 = vmatprep.subr.bf16.mxu0 0
    %5781 = vmatpush1.bf16.msra.mxu0 0
    %5782 = vmatprep.subr.bf16.mxu0 0
    %5783 = vmatpush1.bf16.msra.mxu0 0
    %5784 = vmatprep.subr.bf16.mxu0 0
    %5785 = vmatpush1.bf16.msra.mxu0 0
    %5786 = vmatprep.subr.bf16.mxu0 0
    %5787 = vmatpush1.bf16.msra.mxu0 0
    %5788 = vmatprep.subr.bf16.mxu0 0
    %5789 = vmatpush1.bf16.msra.mxu0 0
    %5790 = vmatprep.mubr.bf16.mxu0 0
    %5791 = vmatmul.mubr.bf16.gmra.mrb[0].mxu0 %v5750
    %v5792 = vpop.f32.mrb[0].mxu0
    %v5793 = vadd.f32 0.0, %v5792
    %v5794 = vpop.f32.mrb[0].mxu0
    %v5795 = vpop.f32.mrb[0].mxu0
    %v5796 = vadd.f32 0.0, %v5795
    %v5797 = vpop.f32.mrb[0].mxu0
    %5798 = vmatprep.mubr.bf16.mxu0 0
    %5799 = vmatmul.mubr.bf16.gmra.mrb[0].mxu0 %v5751
    %v5800 = vpop.f32.mrb[0].mxu0
    %v5801 = vadd.f32 0.0, %v5800
    %v5802 = vpop.f32.mrb[0].mxu0
    %v5803 = vpop.f32.mrb[0].mxu0
    %v5804 = vadd.f32 0.0, %v5803
    %v5805 = vpop.f32.mrb[0].mxu0
    %5806 = vmatprep.mubr.bf16.mxu0 0
    %5807 = vmatmul.mubr.bf16.gmra.mrb[0].mxu0 %v5752
    %v5808 = vpop.f32.mrb[0].mxu0
    %v5809 = vadd.f32 0.0, %v5808
    %v5810 = vpop.f32.mrb[0].mxu0
    %v5811 = vpop.f32.mrb[0].mxu0
    %v5812 = vadd.f32 0.0, %v5811
    %v5813 = vpop.f32.mrb[0].mxu0
    %5814 = vmatprep.mubr.bf16.mxu0 0
    %5815 = vmatmul.mubr.bf16.gmra.mrb[0].mxu0 %v5753
    %v5816 = vpop.f32.mrb[0].mxu0
    %v5817 = vadd.f32 0.0, %v5816
    %v5818 = vpop.f32.mrb[0].mxu0
    %v5819 = vpop.f32.mrb[0].mxu0
    %v5820 = vadd.f32 0.0, %v5819
    %v5821 = vpop.f32.mrb[0].mxu0
    %5822 = vmatprep.mubr.bf16.mxu0 0
    %5823 = vmatmul.mubr.bf16.gmra.mrb[0].mxu0 %v5754
    %v5824 = vpop.f32.mrb[0].mxu0
    %v5825 = vadd.f32 0.0, %v5824
    %v5826 = vpop.f32.mrb[0].mxu0
    %v5827 = vpop.f32.mrb[0].mxu0
    %v5828 = vadd.f32 0.0, %v5827
    %v5829 = vpop.f32.mrb[0].mxu0
    %5830 = vmatprep.mubr.bf16.mxu0 0
    %5831 = vmatmul.mubr.bf16.gmra.mrb[0].mxu0 %v5755
    %v5832 = vpop.f32.mrb[0].mxu0
    %v5833 = vadd.f32 0.0, %v5832
    %v5834 = vpop.f32.mrb[0].mxu0
    %v5835 = vpop.f32.mrb[0].mxu0
    %v5836 = vadd.f32 0.0, %v5835
    %v5837 = vpop.f32.mrb[0].mxu0
    %5838 = vmatprep.mubr.bf16.mxu0 0
    %5839 = vmatmul.mubr.bf16.gmra.mrb[0].mxu0 %v5756
    %v5840 = vpop.f32.mrb[0].mxu0
    %v5841 = vadd.f32 0.0, %v5840
    %v5842 = vpop.f32.mrb[0].mxu0
    %v5843 = vpop.f32.mrb[0].mxu0
    %v5844 = vadd.f32 0.0, %v5843
    %v5845 = vpop.f32.mrb[0].mxu0
    %5846 = vmatprep.mubr.bf16.mxu0 0
    %5847 = vmatmul.mubr.bf16.gmra.mrb[0].mxu0 %v5757
    %v5848 = vpop.f32.mrb[0].mxu0
    %v5849 = vadd.f32 0.0, %v5848
    %v5850 = vpop.f32.mrb[0].mxu0
    %v5851 = vpop.f32.mrb[0].mxu0
    %v5852 = vadd.f32 0.0, %v5851
    %v5853 = vpop.f32.mrb[0].mxu0
    %5854 = vdwg.mxu0
    %v5855 = vpack.c.bf16 %v5796, %v5793
    %v5856 = vpack.c.bf16 %v5804, %v5801
    %v5857 = vpack.c.bf16 %v5812, %v5809
    %v5858 = vpack.c.bf16 %v5820, %v5817
    %v5859 = vpack.c.bf16 %v5828, %v5825
    %v5860 = vpack.c.bf16 %v5836, %v5833
    %v5861 = vpack.c.bf16 %v5844, %v5841
    %v5862 = vpack.c.bf16 %v5852, %v5849
    %v5864 = vsel %vm3898, %v5855, 0
    %v5867 = vsel %vm3898, %v5856, 0
    %v5870 = vsel %vm3898, %v5857, 0
    %v5873 = vsel %vm3898, %v5858, 0
    %v5876 = vsel %vm3898, %v5859, 0
    %v5879 = vsel %vm3898, %v5860, 0
    %v5882 = vsel %vm3898, %v5861, 0
    %v5885 = vsel %vm3898, %v5862, 0
    %5887 = vmatprep.subr.bf16.mxu0 0
    %5888 = vmatpush1.bf16.msra.mxu0 %v4511
    %5889 = vmatprep.subr.bf16.mxu0 0
    %5890 = vmatpush1.bf16.msra.mxu0 %v4512
    %5891 = vmatprep.subr.bf16.mxu0 0
    %5892 = vmatpush1.bf16.msra.mxu0 0
    %5893 = vmatprep.subr.bf16.mxu0 0
    %5894 = vmatpush1.bf16.msra.mxu0 0
    %5895 = vmatprep.subr.bf16.mxu0 0
    %5896 = vmatpush1.bf16.msra.mxu0 0
    %5897 = vmatprep.subr.bf16.mxu0 0
    %5898 = vmatpush1.bf16.msra.mxu0 0
    %5899 = vmatprep.subr.bf16.mxu0 0
    %5900 = vmatpush1.bf16.msra.mxu0 0
    %5901 = vmatprep.subr.bf16.mxu0 0
    %5902 = vmatpush1.bf16.msra.mxu0 0
    %5903 = vmatprep.subr.bf16.mxu0 0
    %5904 = vmatpush1.bf16.msra.mxu0 0
    %5905 = vmatprep.subr.bf16.mxu0 0
    %5906 = vmatpush1.bf16.msra.mxu0 0
    %5907 = vmatprep.subr.bf16.mxu0 0
    %5908 = vmatpush1.bf16.msra.mxu0 0
    %5909 = vmatprep.subr.bf16.mxu0 0
    %5910 = vmatpush1.bf16.msra.mxu0 0
    %5911 = vmatprep.subr.bf16.mxu0 0
    %5912 = vmatpush1.bf16.msra.mxu0 0
    %5913 = vmatprep.subr.bf16.mxu0 0
    %5914 = vmatpush1.bf16.msra.mxu0 0
    %5915 = vmatprep.subr.bf16.mxu0 0
    %5916 = vmatpush1.bf16.msra.mxu0 0
    %5917 = vmatprep.subr.bf16.mxu0 0
    %5918 = vmatpush1.bf16.msra.mxu0 0
    %5919 = vmatprep.mubr.bf16.mxu0 0
    %5920 = vmatmul.mubr.bf16.gmra.mrb[0].mxu0 %v5864
    %v5921 = vpop.f32.mrb[0].mxu0
    %v5922 = vadd.f32 0.0, %v5921
    %v5923 = vpop.f32.mrb[0].mxu0
    %v5924 = vpop.f32.mrb[0].mxu0
    %v5925 = vadd.f32 0.0, %v5924
    %v5926 = vpop.f32.mrb[0].mxu0
    %5927 = vmatprep.mubr.bf16.mxu0 0
    %5928 = vmatmul.mubr.bf16.gmra.mrb[0].mxu0 %v5867
    %v5929 = vpop.f32.mrb[0].mxu0
    %v5930 = vadd.f32 0.0, %v5929
    %v5931 = vpop.f32.mrb[0].mxu0
    %v5932 = vpop.f32.mrb[0].mxu0
    %v5933 = vadd.f32 0.0, %v5932
    %v5934 = vpop.f32.mrb[0].mxu0
    %5935 = vmatprep.mubr.bf16.mxu0 0
    %5936 = vmatmul.mubr.bf16.gmra.mrb[0].mxu0 %v5870
    %v5937 = vpop.f32.mrb[0].mxu0
    %v5938 = vadd.f32 0.0, %v5937
    %v5939 = vpop.f32.mrb[0].mxu0
    %v5940 = vpop.f32.mrb[0].mxu0
    %v5941 = vadd.f32 0.0, %v5940
    %v5942 = vpop.f32.mrb[0].mxu0
    %5943 = vmatprep.mubr.bf16.mxu0 0
    %5944 = vmatmul.mubr.bf16.gmra.mrb[0].mxu0 %v5873
    %v5945 = vpop.f32.mrb[0].mxu0
    %v5946 = vadd.f32 0.0, %v5945
    %v5947 = vpop.f32.mrb[0].mxu0
    %v5948 = vpop.f32.mrb[0].mxu0
    %v5949 = vadd.f32 0.0, %v5948
    %v5950 = vpop.f32.mrb[0].mxu0
    %5951 = vmatprep.mubr.bf16.mxu0 0
    %5952 = vmatmul.mubr.bf16.gmra.mrb[0].mxu0 %v5876
    %v5953 = vpop.f32.mrb[0].mxu0
    %v5954 = vadd.f32 0.0, %v5953
    %v5955 = vpop.f32.mrb[0].mxu0
    %v5956 = vpop.f32.mrb[0].mxu0
    %v5957 = vadd.f32 0.0, %v5956
    %v5958 = vpop.f32.mrb[0].mxu0
    %5959 = vmatprep.mubr.bf16.mxu0 0
    %5960 = vmatmul.mubr.bf16.gmra.mrb[0].mxu0 %v5879
    %v5961 = vpop.f32.mrb[0].mxu0
    %v5962 = vadd.f32 0.0, %v5961
    %v5963 = vpop.f32.mrb[0].mxu0
    %v5964 = vpop.f32.mrb[0].mxu0
    %v5965 = vadd.f32 0.0, %v5964
    %v5966 = vpop.f32.mrb[0].mxu0
    %5967 = vmatprep.mubr.bf16.mxu0 0
    %5968 = vmatmul.mubr.bf16.gmra.mrb[0].mxu0 %v5882
    %v5969 = vpop.f32.mrb[0].mxu0
    %v5970 = vadd.f32 0.0, %v5969
    %v5971 = vpop.f32.mrb[0].mxu0
    %v5972 = vpop.f32.mrb[0].mxu0
    %v5973 = vadd.f32 0.0, %v5972
    %v5974 = vpop.f32.mrb[0].mxu0
    %5975 = vmatprep.mubr.bf16.mxu0 0
    %5976 = vmatmul.mubr.bf16.gmra.mrb[0].mxu0 %v5885
    %v5977 = vpop.f32.mrb[0].mxu0
    %v5978 = vadd.f32 0.0, %v5977
    %v5979 = vpop.f32.mrb[0].mxu0
    %v5980 = vpop.f32.mrb[0].mxu0
    %v5981 = vadd.f32 0.0, %v5980
    %v5982 = vpop.f32.mrb[0].mxu0
    %5983 = vdwg.mxu0
    %v5984 = vadd.f32 %v5733, %v5922
    %v5985 = vadd.f32 %v5734, %v5925
    %v5986 = vadd.f32 %v5735, %v5930
    %v5987 = vadd.f32 %v5736, %v5933
    %v5988 = vadd.f32 %v5737, %v5938
    %v5989 = vadd.f32 %v5738, %v5941
    %v5990 = vadd.f32 %v5739, %v5946
    %v5991 = vadd.f32 %v5740, %v5949
    %v5992 = vadd.f32 %v5741, %v5954
    %v5993 = vadd.f32 %v5742, %v5957
    %v5994 = vadd.f32 %v5743, %v5962
    %v5995 = vadd.f32 %v5744, %v5965
    %v5996 = vadd.f32 %v5745, %v5970
    %v5997 = vadd.f32 %v5746, %v5973
    %v5998 = vadd.f32 %v5747, %v5978
    %v5999 = vadd.f32 %v5748, %v5981
    %s6000 = scalar_lea.vmem %s6, 384
    %v6001 = vld [vmem:[%s6000] sm:$0xff]
    %v6002 = vld [vmem:[%s6000 + $0x8] sm:$0xff]
    %v6003 = vld [vmem:[%s6000 + $0x10] sm:$0xff]
    %v6004 = vld [vmem:[%s6000 + $0x18] sm:$0xff]
    %v6005 = vld [vmem:[%s6000 + $0x20] sm:$0xff]
    %v6006 = vld [vmem:[%s6000 + $0x28] sm:$0xff]
    %v6007 = vld [vmem:[%s6000 + $0x30] sm:$0xff]
    %v6008 = vld [vmem:[%s6000 + $0x38] sm:$0xff]
    %6009 = vmatprep.subr.bf16.mxu0 0
    %6010 = vmatpush1.bf16.msra.mxu0 %v4519
    %6011 = vmatprep.subr.bf16.mxu0 0
    %6012 = vmatpush1.bf16.msra.mxu0 %v4520
    %6013 = vmatprep.subr.bf16.mxu0 0
    %6014 = vmatpush1.bf16.msra.mxu0 %v4521
    %6015 = vmatprep.subr.bf16.mxu0 0
    %6016 = vmatpush1.bf16.msra.mxu0 %v4522
    %6017 = vmatprep.subr.bf16.mxu0 0
    %6018 = vmatpush1.bf16.msra.mxu0 %v4523
    %6019 = vmatprep.subr.bf16.mxu0 0
    %6020 = vmatpush1.bf16.msra.mxu0 %v4524
    %6021 = vmatprep.subr.bf16.mxu0 0
    %6022 = vmatpush1.bf16.msra.mxu0 %v4525
    %6023 = vmatprep.subr.bf16.mxu0 0
    %6024 = vmatpush1.bf16.msra.mxu0 %v4526
    %6025 = vmatprep.subr.bf16.mxu0 0
    %6026 = vmatpush1.bf16.msra.mxu0 0
    %6027 = vmatprep.subr.bf16.mxu0 0
    %6028 = vmatpush1.bf16.msra.mxu0 0
    %6029 = vmatprep.subr.bf16.mxu0 0
    %6030 = vmatpush1.bf16.msra.mxu0 0
    %6031 = vmatprep.subr.bf16.mxu0 0
    %6032 = vmatpush1.bf16.msra.mxu0 0
    %6033 = vmatprep.subr.bf16.mxu0 0
    %6034 = vmatpush1.bf16.msra.mxu0 0
    %6035 = vmatprep.subr.bf16.mxu0 0
    %6036 = vmatpush1.bf16.msra.mxu0 0
    %6037 = vmatprep.subr.bf16.mxu0 0
    %6038 = vmatpush1.bf16.msra.mxu0 0
    %6039 = vmatprep.subr.bf16.mxu0 0
    %6040 = vmatpush1.bf16.msra.mxu0 0
    %6041 = vmatprep.mubr.bf16.mxu0 0
    %6042 = vmatmul.mubr.bf16.gmra.mrb[0].mxu0 %v6001
    %v6043 = vpop.f32.mrb[0].mxu0
    %v6044 = vadd.f32 0.0, %v6043
    %v6045 = vpop.f32.mrb[0].mxu0
    %v6046 = vpop.f32.mrb[0].mxu0
    %v6047 = vadd.f32 0.0, %v6046
    %v6048 = vpop.f32.mrb[0].mxu0
    %6049 = vmatprep.mubr.bf16.mxu0 0
    %6050 = vmatmul.mubr.bf16.gmra.mrb[0].mxu0 %v6002
    %v6051 = vpop.f32.mrb[0].mxu0
    %v6052 = vadd.f32 0.0, %v6051
    %v6053 = vpop.f32.mrb[0].mxu0
    %v6054 = vpop.f32.mrb[0].mxu0
    %v6055 = vadd.f32 0.0, %v6054
    %v6056 = vpop.f32.mrb[0].mxu0
    %6057 = vmatprep.mubr.bf16.mxu0 0
    %6058 = vmatmul.mubr.bf16.gmra.mrb[0].mxu0 %v6003
    %v6059 = vpop.f32.mrb[0].mxu0
    %v6060 = vadd.f32 0.0, %v6059
    %v6061 = vpop.f32.mrb[0].mxu0
    %v6062 = vpop.f32.mrb[0].mxu0
    %v6063 = vadd.f32 0.0, %v6062
    %v6064 = vpop.f32.mrb[0].mxu0
    %6065 = vmatprep.mubr.bf16.mxu0 0
    %6066 = vmatmul.mubr.bf16.gmra.mrb[0].mxu0 %v6004
    %v6067 = vpop.f32.mrb[0].mxu0
    %v6068 = vadd.f32 0.0, %v6067
    %v6069 = vpop.f32.mrb[0].mxu0
    %v6070 = vpop.f32.mrb[0].mxu0
    %v6071 = vadd.f32 0.0, %v6070
    %v6072 = vpop.f32.mrb[0].mxu0
    %6073 = vmatprep.mubr.bf16.mxu0 0
    %6074 = vmatmul.mubr.bf16.gmra.mrb[0].mxu0 %v6005
    %v6075 = vpop.f32.mrb[0].mxu0
    %v6076 = vadd.f32 0.0, %v6075
    %v6077 = vpop.f32.mrb[0].mxu0
    %v6078 = vpop.f32.mrb[0].mxu0
    %v6079 = vadd.f32 0.0, %v6078
    %v6080 = vpop.f32.mrb[0].mxu0
    %6081 = vmatprep.mubr.bf16.mxu0 0
    %6082 = vmatmul.mubr.bf16.gmra.mrb[0].mxu0 %v6006
    %v6083 = vpop.f32.mrb[0].mxu0
    %v6084 = vadd.f32 0.0, %v6083
    %v6085 = vpop.f32.mrb[0].mxu0
    %v6086 = vpop.f32.mrb[0].mxu0
    %v6087 = vadd.f32 0.0, %v6086
    %v6088 = vpop.f32.mrb[0].mxu0
    %6089 = vmatprep.mubr.bf16.mxu0 0
    %6090 = vmatmul.mubr.bf16.gmra.mrb[0].mxu0 %v6007
    %v6091 = vpop.f32.mrb[0].mxu0
    %v6092 = vadd.f32 0.0, %v6091
    %v6093 = vpop.f32.mrb[0].mxu0
    %v6094 = vpop.f32.mrb[0].mxu0
    %v6095 = vadd.f32 0.0, %v6094
    %v6096 = vpop.f32.mrb[0].mxu0
    %6097 = vmatprep.mubr.bf16.mxu0 0
    %6098 = vmatmul.mubr.bf16.gmra.mrb[0].mxu0 %v6008
    %v6099 = vpop.f32.mrb[0].mxu0
    %v6100 = vadd.f32 0.0, %v6099
    %v6101 = vpop.f32.mrb[0].mxu0
    %v6102 = vpop.f32.mrb[0].mxu0
    %v6103 = vadd.f32 0.0, %v6102
    %v6104 = vpop.f32.mrb[0].mxu0
    %6105 = vdwg.mxu0
    %v6106 = vpack.c.bf16 %v6047, %v6044
    %v6107 = vpack.c.bf16 %v6055, %v6052
    %v6108 = vpack.c.bf16 %v6063, %v6060
    %v6109 = vpack.c.bf16 %v6071, %v6068
    %v6110 = vpack.c.bf16 %v6079, %v6076
    %v6111 = vpack.c.bf16 %v6087, %v6084
    %v6112 = vpack.c.bf16 %v6095, %v6092
    %v6113 = vpack.c.bf16 %v6103, %v6100
    %v6115 = vsel %vm3898, %v6106, 0
    %v6118 = vsel %vm3898, %v6107, 0
    %v6121 = vsel %vm3898, %v6108, 0
    %v6124 = vsel %vm3898, %v6109, 0
    %v6127 = vsel %vm3898, %v6110, 0
    %v6130 = vsel %vm3898, %v6111, 0
    %v6133 = vsel %vm3898, %v6112, 0
    %v6136 = vsel %vm3898, %v6113, 0
    %6138 = vmatprep.subr.bf16.mxu0 0
    %6139 = vmatpush1.bf16.msra.mxu0 %v4513
    %6140 = vmatprep.subr.bf16.mxu0 0
    %6141 = vmatpush1.bf16.msra.mxu0 %v4514
    %6142 = vmatprep.subr.bf16.mxu0 0
    %6143 = vmatpush1.bf16.msra.mxu0 0
    %6144 = vmatprep.subr.bf16.mxu0 0
    %6145 = vmatpush1.bf16.msra.mxu0 0
    %6146 = vmatprep.subr.bf16.mxu0 0
    %6147 = vmatpush1.bf16.msra.mxu0 0
    %6148 = vmatprep.subr.bf16.mxu0 0
    %6149 = vmatpush1.bf16.msra.mxu0 0
    %6150 = vmatprep.subr.bf16.mxu0 0
    %6151 = vmatpush1.bf16.msra.mxu0 0
    %6152 = vmatprep.subr.bf16.mxu0 0
    %6153 = vmatpush1.bf16.msra.mxu0 0
    %6154 = vmatprep.subr.bf16.mxu0 0
    %6155 = vmatpush1.bf16.msra.mxu0 0
    %6156 = vmatprep.subr.bf16.mxu0 0
    %6157 = vmatpush1.bf16.msra.mxu0 0
    %6158 = vmatprep.subr.bf16.mxu0 0
    %6159 = vmatpush1.bf16.msra.mxu0 0
    %6160 = vmatprep.subr.bf16.mxu0 0
    %6161 = vmatpush1.bf16.msra.mxu0 0
    %6162 = vmatprep.subr.bf16.mxu0 0
    %6163 = vmatpush1.bf16.msra.mxu0 0
    %6164 = vmatprep.subr.bf16.mxu0 0
    %6165 = vmatpush1.bf16.msra.mxu0 0
    %6166 = vmatprep.subr.bf16.mxu0 0
    %6167 = vmatpush1.bf16.msra.mxu0 0
    %6168 = vmatprep.subr.bf16.mxu0 0
    %6169 = vmatpush1.bf16.msra.mxu0 0
    %6170 = vmatprep.mubr.bf16.mxu0 0
    %6171 = vmatmul.mubr.bf16.gmra.mrb[0].mxu0 %v6115
    %v6172 = vpop.f32.mrb[0].mxu0
    %v6173 = vadd.f32 0.0, %v6172
    %v6174 = vpop.f32.mrb[0].mxu0
    %v6175 = vpop.f32.mrb[0].mxu0
    %v6176 = vadd.f32 0.0, %v6175
    %v6177 = vpop.f32.mrb[0].mxu0
    %6178 = vmatprep.mubr.bf16.mxu0 0
    %6179 = vmatmul.mubr.bf16.gmra.mrb[0].mxu0 %v6118
    %v6180 = vpop.f32.mrb[0].mxu0
    %v6181 = vadd.f32 0.0, %v6180
    %v6182 = vpop.f32.mrb[0].mxu0
    %v6183 = vpop.f32.mrb[0].mxu0
    %v6184 = vadd.f32 0.0, %v6183
    %v6185 = vpop.f32.mrb[0].mxu0
    %6186 = vmatprep.mubr.bf16.mxu0 0
    %6187 = vmatmul.mubr.bf16.gmra.mrb[0].mxu0 %v6121
    %v6188 = vpop.f32.mrb[0].mxu0
    %v6189 = vadd.f32 0.0, %v6188
    %v6190 = vpop.f32.mrb[0].mxu0
    %v6191 = vpop.f32.mrb[0].mxu0
    %v6192 = vadd.f32 0.0, %v6191
    %v6193 = vpop.f32.mrb[0].mxu0
    %6194 = vmatprep.mubr.bf16.mxu0 0
    %6195 = vmatmul.mubr.bf16.gmra.mrb[0].mxu0 %v6124
    %v6196 = vpop.f32.mrb[0].mxu0
    %v6197 = vadd.f32 0.0, %v6196
    %v6198 = vpop.f32.mrb[0].mxu0
    %v6199 = vpop.f32.mrb[0].mxu0
    %v6200 = vadd.f32 0.0, %v6199
    %v6201 = vpop.f32.mrb[0].mxu0
    %6202 = vmatprep.mubr.bf16.mxu0 0
    %6203 = vmatmul.mubr.bf16.gmra.mrb[0].mxu0 %v6127
    %v6204 = vpop.f32.mrb[0].mxu0
    %v6205 = vadd.f32 0.0, %v6204
    %v6206 = vpop.f32.mrb[0].mxu0
    %v6207 = vpop.f32.mrb[0].mxu0
    %v6208 = vadd.f32 0.0, %v6207
    %v6209 = vpop.f32.mrb[0].mxu0
    %6210 = vmatprep.mubr.bf16.mxu0 0
    %6211 = vmatmul.mubr.bf16.gmra.mrb[0].mxu0 %v6130
    %v6212 = vpop.f32.mrb[0].mxu0
    %v6213 = vadd.f32 0.0, %v6212
    %v6214 = vpop.f32.mrb[0].mxu0
    %v6215 = vpop.f32.mrb[0].mxu0
    %v6216 = vadd.f32 0.0, %v6215
    %v6217 = vpop.f32.mrb[0].mxu0
    %6218 = vmatprep.mubr.bf16.mxu0 0
    %6219 = vmatmul.mubr.bf16.gmra.mrb[0].mxu0 %v6133
    %v6220 = vpop.f32.mrb[0].mxu0
    %v6221 = vadd.f32 0.0, %v6220
    %v6222 = vpop.f32.mrb[0].mxu0
    %v6223 = vpop.f32.mrb[0].mxu0
    %v6224 = vadd.f32 0.0, %v6223
    %v6225 = vpop.f32.mrb[0].mxu0
    %6226 = vmatprep.mubr.bf16.mxu0 0
    %6227 = vmatmul.mubr.bf16.gmra.mrb[0].mxu0 %v6136
    %v6228 = vpop.f32.mrb[0].mxu0
    %v6229 = vadd.f32 0.0, %v6228
    %v6230 = vpop.f32.mrb[0].mxu0
    %v6231 = vpop.f32.mrb[0].mxu0
    %v6232 = vadd.f32 0.0, %v6231
    %v6233 = vpop.f32.mrb[0].mxu0
    %6234 = vdwg.mxu0
    %v6235 = vadd.f32 %v5984, %v6173
    %v6236 = vadd.f32 %v5985, %v6176
    %v6237 = vadd.f32 %v5986, %v6181
    %v6238 = vadd.f32 %v5987, %v6184
    %v6239 = vadd.f32 %v5988, %v6189
    %v6240 = vadd.f32 %v5989, %v6192
    %v6241 = vadd.f32 %v5990, %v6197
    %v6242 = vadd.f32 %v5991, %v6200
    %v6243 = vadd.f32 %v5992, %v6205
    %v6244 = vadd.f32 %v5993, %v6208
    %v6245 = vadd.f32 %v5994, %v6213
    %v6246 = vadd.f32 %v5995, %v6216
    %v6247 = vadd.f32 %v5996, %v6221
    %v6248 = vadd.f32 %v5997, %v6224
    %v6249 = vadd.f32 %v5998, %v6229
    %v6250 = vadd.f32 %v5999, %v6232
    %s6251 = scalar_lea.vmem %s6, 448
    %v6252 = vld [vmem:[%s6251] sm:$0xff]
    %v6253 = vld [vmem:[%s6251 + $0x8] sm:$0xff]
    %v6254 = vld [vmem:[%s6251 + $0x10] sm:$0xff]
    %v6255 = vld [vmem:[%s6251 + $0x18] sm:$0xff]
    %v6256 = vld [vmem:[%s6251 + $0x20] sm:$0xff]
    %v6257 = vld [vmem:[%s6251 + $0x28] sm:$0xff]
    %v6258 = vld [vmem:[%s6251 + $0x30] sm:$0xff]
    %v6259 = vld [vmem:[%s6251 + $0x38] sm:$0xff]
    %6260 = vmatprep.subr.bf16.mxu0 0
    %6261 = vmatpush1.bf16.msra.mxu0 %v4519
    %6262 = vmatprep.subr.bf16.mxu0 0
    %6263 = vmatpush1.bf16.msra.mxu0 %v4520
    %6264 = vmatprep.subr.bf16.mxu0 0
    %6265 = vmatpush1.bf16.msra.mxu0 %v4521
    %6266 = vmatprep.subr.bf16.mxu0 0
    %6267 = vmatpush1.bf16.msra.mxu0 %v4522
    %6268 = vmatprep.subr.bf16.mxu0 0
    %6269 = vmatpush1.bf16.msra.mxu0 %v4523
    %6270 = vmatprep.subr.bf16.mxu0 0
    %6271 = vmatpush1.bf16.msra.mxu0 %v4524
    %6272 = vmatprep.subr.bf16.mxu0 0
    %6273 = vmatpush1.bf16.msra.mxu0 %v4525
    %6274 = vmatprep.subr.bf16.mxu0 0
    %6275 = vmatpush1.bf16.msra.mxu0 %v4526
    %6276 = vmatprep.subr.bf16.mxu0 0
    %6277 = vmatpush1.bf16.msra.mxu0 0
    %6278 = vmatprep.subr.bf16.mxu0 0
    %6279 = vmatpush1.bf16.msra.mxu0 0
    %6280 = vmatprep.subr.bf16.mxu0 0
    %6281 = vmatpush1.bf16.msra.mxu0 0
    %6282 = vmatprep.subr.bf16.mxu0 0
    %6283 = vmatpush1.bf16.msra.mxu0 0
    %6284 = vmatprep.subr.bf16.mxu0 0
    %6285 = vmatpush1.bf16.msra.mxu0 0
    %6286 = vmatprep.subr.bf16.mxu0 0
    %6287 = vmatpush1.bf16.msra.mxu0 0
    %6288 = vmatprep.subr.bf16.mxu0 0
    %6289 = vmatpush1.bf16.msra.mxu0 0
    %6290 = vmatprep.subr.bf16.mxu0 0
    %6291 = vmatpush1.bf16.msra.mxu0 0
    %6292 = vmatprep.mubr.bf16.mxu0 0
    %6293 = vmatmul.mubr.bf16.gmra.mrb[0].mxu0 %v6252
    %v6294 = vpop.f32.mrb[0].mxu0
    %v6295 = vadd.f32 0.0, %v6294
    %v6296 = vpop.f32.mrb[0].mxu0
    %v6297 = vpop.f32.mrb[0].mxu0
    %v6298 = vadd.f32 0.0, %v6297
    %v6299 = vpop.f32.mrb[0].mxu0
    %6300 = vmatprep.mubr.bf16.mxu0 0
    %6301 = vmatmul.mubr.bf16.gmra.mrb[0].mxu0 %v6253
    %v6302 = vpop.f32.mrb[0].mxu0
    %v6303 = vadd.f32 0.0, %v6302
    %v6304 = vpop.f32.mrb[0].mxu0
    %v6305 = vpop.f32.mrb[0].mxu0
    %v6306 = vadd.f32 0.0, %v6305
    %v6307 = vpop.f32.mrb[0].mxu0
    %6308 = vmatprep.mubr.bf16.mxu0 0
    %6309 = vmatmul.mubr.bf16.gmra.mrb[0].mxu0 %v6254
    %v6310 = vpop.f32.mrb[0].mxu0
    %v6311 = vadd.f32 0.0, %v6310
    %v6312 = vpop.f32.mrb[0].mxu0
    %v6313 = vpop.f32.mrb[0].mxu0
    %v6314 = vadd.f32 0.0, %v6313
    %v6315 = vpop.f32.mrb[0].mxu0
    %6316 = vmatprep.mubr.bf16.mxu0 0
    %6317 = vmatmul.mubr.bf16.gmra.mrb[0].mxu0 %v6255
    %v6318 = vpop.f32.mrb[0].mxu0
    %v6319 = vadd.f32 0.0, %v6318
    %v6320 = vpop.f32.mrb[0].mxu0
    %v6321 = vpop.f32.mrb[0].mxu0
    %v6322 = vadd.f32 0.0, %v6321
    %v6323 = vpop.f32.mrb[0].mxu0
    %6324 = vmatprep.mubr.bf16.mxu0 0
    %6325 = vmatmul.mubr.bf16.gmra.mrb[0].mxu0 %v6256
    %v6326 = vpop.f32.mrb[0].mxu0
    %v6327 = vadd.f32 0.0, %v6326
    %v6328 = vpop.f32.mrb[0].mxu0
    %v6329 = vpop.f32.mrb[0].mxu0
    %v6330 = vadd.f32 0.0, %v6329
    %v6331 = vpop.f32.mrb[0].mxu0
    %6332 = vmatprep.mubr.bf16.mxu0 0
    %6333 = vmatmul.mubr.bf16.gmra.mrb[0].mxu0 %v6257
    %v6334 = vpop.f32.mrb[0].mxu0
    %v6335 = vadd.f32 0.0, %v6334
    %v6336 = vpop.f32.mrb[0].mxu0
    %v6337 = vpop.f32.mrb[0].mxu0
    %v6338 = vadd.f32 0.0, %v6337
    %v6339 = vpop.f32.mrb[0].mxu0
    %6340 = vmatprep.mubr.bf16.mxu0 0
    %6341 = vmatmul.mubr.bf16.gmra.mrb[0].mxu0 %v6258
    %v6342 = vpop.f32.mrb[0].mxu0
    %v6343 = vadd.f32 0.0, %v6342
    %v6344 = vpop.f32.mrb[0].mxu0
    %v6345 = vpop.f32.mrb[0].mxu0
    %v6346 = vadd.f32 0.0, %v6345
    %v6347 = vpop.f32.mrb[0].mxu0
    %6348 = vmatprep.mubr.bf16.mxu0 0
    %6349 = vmatmul.mubr.bf16.gmra.mrb[0].mxu0 %v6259
    %v6350 = vpop.f32.mrb[0].mxu0
    %v6351 = vadd.f32 0.0, %v6350
    %v6352 = vpop.f32.mrb[0].mxu0
    %v6353 = vpop.f32.mrb[0].mxu0
    %v6354 = vadd.f32 0.0, %v6353
    %v6355 = vpop.f32.mrb[0].mxu0
    %6356 = vdwg.mxu0
    %v6357 = vpack.c.bf16 %v6298, %v6295
    %v6358 = vpack.c.bf16 %v6306, %v6303
    %v6359 = vpack.c.bf16 %v6314, %v6311
    %v6360 = vpack.c.bf16 %v6322, %v6319
    %v6361 = vpack.c.bf16 %v6330, %v6327
    %v6362 = vpack.c.bf16 %v6338, %v6335
    %v6363 = vpack.c.bf16 %v6346, %v6343
    %v6364 = vpack.c.bf16 %v6354, %v6351
    %v6366 = vsel %vm3898, %v6357, 0
    %v6369 = vsel %vm3898, %v6358, 0
    %v6372 = vsel %vm3898, %v6359, 0
    %v6375 = vsel %vm3898, %v6360, 0
    %v6378 = vsel %vm3898, %v6361, 0
    %v6381 = vsel %vm3898, %v6362, 0
    %v6384 = vsel %vm3898, %v6363, 0
    %v6387 = vsel %vm3898, %v6364, 0
    %6389 = vmatprep.subr.bf16.mxu0 0
    %6390 = vmatpush1.bf16.msra.mxu0 %v4515
    %6391 = vmatprep.subr.bf16.mxu0 0
    %6392 = vmatpush1.bf16.msra.mxu0 %v4516
    %6393 = vmatprep.subr.bf16.mxu0 0
    %6394 = vmatpush1.bf16.msra.mxu0 0
    %6395 = vmatprep.subr.bf16.mxu0 0
    %6396 = vmatpush1.bf16.msra.mxu0 0
    %6397 = vmatprep.subr.bf16.mxu0 0
    %6398 = vmatpush1.bf16.msra.mxu0 0
    %6399 = vmatprep.subr.bf16.mxu0 0
    %6400 = vmatpush1.bf16.msra.mxu0 0
    %6401 = vmatprep.subr.bf16.mxu0 0
    %6402 = vmatpush1.bf16.msra.mxu0 0
    %6403 = vmatprep.subr.bf16.mxu0 0
    %6404 = vmatpush1.bf16.msra.mxu0 0
    %6405 = vmatprep.subr.bf16.mxu0 0
    %6406 = vmatpush1.bf16.msra.mxu0 0
    %6407 = vmatprep.subr.bf16.mxu0 0
    %6408 = vmatpush1.bf16.msra.mxu0 0
    %6409 = vmatprep.subr.bf16.mxu0 0
    %6410 = vmatpush1.bf16.msra.mxu0 0
    %6411 = vmatprep.subr.bf16.mxu0 0
    %6412 = vmatpush1.bf16.msra.mxu0 0
    %6413 = vmatprep.subr.bf16.mxu0 0
    %6414 = vmatpush1.bf16.msra.mxu0 0
    %6415 = vmatprep.subr.bf16.mxu0 0
    %6416 = vmatpush1.bf16.msra.mxu0 0
    %6417 = vmatprep.subr.bf16.mxu0 0
    %6418 = vmatpush1.bf16.msra.mxu0 0
    %6419 = vmatprep.subr.bf16.mxu0 0
    %6420 = vmatpush1.bf16.msra.mxu0 0
    %6421 = vmatprep.mubr.bf16.mxu0 0
    %6422 = vmatmul.mubr.bf16.gmra.mrb[0].mxu0 %v6366
    %v6423 = vpop.f32.mrb[0].mxu0
    %v6424 = vadd.f32 0.0, %v6423
    %v6425 = vpop.f32.mrb[0].mxu0
    %v6426 = vpop.f32.mrb[0].mxu0
    %v6427 = vadd.f32 0.0, %v6426
    %v6428 = vpop.f32.mrb[0].mxu0
    %6429 = vmatprep.mubr.bf16.mxu0 0
    %6430 = vmatmul.mubr.bf16.gmra.mrb[0].mxu0 %v6369
    %v6431 = vpop.f32.mrb[0].mxu0
    %v6432 = vadd.f32 0.0, %v6431
    %v6433 = vpop.f32.mrb[0].mxu0
    %v6434 = vpop.f32.mrb[0].mxu0
    %v6435 = vadd.f32 0.0, %v6434
    %v6436 = vpop.f32.mrb[0].mxu0
    %6437 = vmatprep.mubr.bf16.mxu0 0
    %6438 = vmatmul.mubr.bf16.gmra.mrb[0].mxu0 %v6372
    %v6439 = vpop.f32.mrb[0].mxu0
    %v6440 = vadd.f32 0.0, %v6439
    %v6441 = vpop.f32.mrb[0].mxu0
    %v6442 = vpop.f32.mrb[0].mxu0
    %v6443 = vadd.f32 0.0, %v6442
    %v6444 = vpop.f32.mrb[0].mxu0
    %6445 = vmatprep.mubr.bf16.mxu0 0
    %6446 = vmatmul.mubr.bf16.gmra.mrb[0].mxu0 %v6375
    %v6447 = vpop.f32.mrb[0].mxu0
    %v6448 = vadd.f32 0.0, %v6447
    %v6449 = vpop.f32.mrb[0].mxu0
    %v6450 = vpop.f32.mrb[0].mxu0
    %v6451 = vadd.f32 0.0, %v6450
    %v6452 = vpop.f32.mrb[0].mxu0
    %6453 = vmatprep.mubr.bf16.mxu0 0
    %6454 = vmatmul.mubr.bf16.gmra.mrb[0].mxu0 %v6378
    %v6455 = vpop.f32.mrb[0].mxu0
    %v6456 = vadd.f32 0.0, %v6455
    %v6457 = vpop.f32.mrb[0].mxu0
    %v6458 = vpop.f32.mrb[0].mxu0
    %v6459 = vadd.f32 0.0, %v6458
    %v6460 = vpop.f32.mrb[0].mxu0
    %6461 = vmatprep.mubr.bf16.mxu0 0
    %6462 = vmatmul.mubr.bf16.gmra.mrb[0].mxu0 %v6381
    %v6463 = vpop.f32.mrb[0].mxu0
    %v6464 = vadd.f32 0.0, %v6463
    %v6465 = vpop.f32.mrb[0].mxu0
    %v6466 = vpop.f32.mrb[0].mxu0
    %v6467 = vadd.f32 0.0, %v6466
    %v6468 = vpop.f32.mrb[0].mxu0
    %6469 = vmatprep.mubr.bf16.mxu0 0
    %6470 = vmatmul.mubr.bf16.gmra.mrb[0].mxu0 %v6384
    %v6471 = vpop.f32.mrb[0].mxu0
    %v6472 = vadd.f32 0.0, %v6471
    %v6473 = vpop.f32.mrb[0].mxu0
    %v6474 = vpop.f32.mrb[0].mxu0
    %v6475 = vadd.f32 0.0, %v6474
    %v6476 = vpop.f32.mrb[0].mxu0
    %6477 = vmatprep.mubr.bf16.mxu0 0
    %6478 = vmatmul.mubr.bf16.gmra.mrb[0].mxu0 %v6387
    %v6479 = vpop.f32.mrb[0].mxu0
    %v6480 = vadd.f32 0.0, %v6479
    %v6481 = vpop.f32.mrb[0].mxu0
    %v6482 = vpop.f32.mrb[0].mxu0
    %v6483 = vadd.f32 0.0, %v6482
    %v6484 = vpop.f32.mrb[0].mxu0
    %6485 = vdwg.mxu0
    %v6486 = vadd.f32 %v6235, %v6424
    %v6487 = vadd.f32 %v6236, %v6427
    %v6488 = vadd.f32 %v6237, %v6432
    %v6489 = vadd.f32 %v6238, %v6435
    %v6490 = vadd.f32 %v6239, %v6440
    %v6491 = vadd.f32 %v6240, %v6443
    %v6492 = vadd.f32 %v6241, %v6448
    %v6493 = vadd.f32 %v6242, %v6451
    %v6494 = vadd.f32 %v6243, %v6456
    %v6495 = vadd.f32 %v6244, %v6459
    %v6496 = vadd.f32 %v6245, %v6464
    %v6497 = vadd.f32 %v6246, %v6467
    %v6498 = vadd.f32 %v6247, %v6472
    %v6499 = vadd.f32 %v6248, %v6475
    %v6500 = vadd.f32 %v6249, %v6480
    %v6501 = vadd.f32 %v6250, %v6483
    %s6502 = scalar_lea.vmem %s6, 512
    %v6503 = vld [vmem:[%s6502] sm:$0xff]
    %v6504 = vld [vmem:[%s6502 + $0x8] sm:$0xff]
    %v6505 = vld [vmem:[%s6502 + $0x10] sm:$0xff]
    %v6506 = vld [vmem:[%s6502 + $0x18] sm:$0xff]
    %v6507 = vld [vmem:[%s6502 + $0x20] sm:$0xff]
    %v6508 = vld [vmem:[%s6502 + $0x28] sm:$0xff]
    %v6509 = vld [vmem:[%s6502 + $0x30] sm:$0xff]
    %v6510 = vld [vmem:[%s6502 + $0x38] sm:$0xff]
    %6511 = vmatprep.subr.bf16.mxu0 0
    %6512 = vmatpush1.bf16.msra.mxu0 %v4519
    %6513 = vmatprep.subr.bf16.mxu0 0
    %6514 = vmatpush1.bf16.msra.mxu0 %v4520
    %6515 = vmatprep.subr.bf16.mxu0 0
    %6516 = vmatpush1.bf16.msra.mxu0 %v4521
    %6517 = vmatprep.subr.bf16.mxu0 0
    %6518 = vmatpush1.bf16.msra.mxu0 %v4522
    %6519 = vmatprep.subr.bf16.mxu0 0
    %6520 = vmatpush1.bf16.msra.mxu0 %v4523
    %6521 = vmatprep.subr.bf16.mxu0 0
    %6522 = vmatpush1.bf16.msra.mxu0 %v4524
    %6523 = vmatprep.subr.bf16.mxu0 0
    %6524 = vmatpush1.bf16.msra.mxu0 %v4525
    %6525 = vmatprep.subr.bf16.mxu0 0
    %6526 = vmatpush1.bf16.msra.mxu0 %v4526
    %6527 = vmatprep.subr.bf16.mxu0 0
    %6528 = vmatpush1.bf16.msra.mxu0 0
    %6529 = vmatprep.subr.bf16.mxu0 0
    %6530 = vmatpush1.bf16.msra.mxu0 0
    %6531 = vmatprep.subr.bf16.mxu0 0
    %6532 = vmatpush1.bf16.msra.mxu0 0
    %6533 = vmatprep.subr.bf16.mxu0 0
    %6534 = vmatpush1.bf16.msra.mxu0 0
    %6535 = vmatprep.subr.bf16.mxu0 0
    %6536 = vmatpush1.bf16.msra.mxu0 0
    %6537 = vmatprep.subr.bf16.mxu0 0
    %6538 = vmatpush1.bf16.msra.mxu0 0
    %6539 = vmatprep.subr.bf16.mxu0 0
    %6540 = vmatpush1.bf16.msra.mxu0 0
    %6541 = vmatprep.subr.bf16.mxu0 0
    %6542 = vmatpush1.bf16.msra.mxu0 0
    %6543 = vmatprep.mubr.bf16.mxu0 0
    %6544 = vmatmul.mubr.bf16.gmra.mrb[0].mxu0 %v6503
    %v6545 = vpop.f32.mrb[0].mxu0
    %v6546 = vadd.f32 0.0, %v6545
    %v6547 = vpop.f32.mrb[0].mxu0
    %v6548 = vpop.f32.mrb[0].mxu0
    %v6549 = vadd.f32 0.0, %v6548
    %v6550 = vpop.f32.mrb[0].mxu0
    %6551 = vmatprep.mubr.bf16.mxu0 0
    %6552 = vmatmul.mubr.bf16.gmra.mrb[0].mxu0 %v6504
    %v6553 = vpop.f32.mrb[0].mxu0
    %v6554 = vadd.f32 0.0, %v6553
    %v6555 = vpop.f32.mrb[0].mxu0
    %v6556 = vpop.f32.mrb[0].mxu0
    %v6557 = vadd.f32 0.0, %v6556
    %v6558 = vpop.f32.mrb[0].mxu0
    %6559 = vmatprep.mubr.bf16.mxu0 0
    %6560 = vmatmul.mubr.bf16.gmra.mrb[0].mxu0 %v6505
    %v6561 = vpop.f32.mrb[0].mxu0
    %v6562 = vadd.f32 0.0, %v6561
    %v6563 = vpop.f32.mrb[0].mxu0
    %v6564 = vpop.f32.mrb[0].mxu0
    %v6565 = vadd.f32 0.0, %v6564
    %v6566 = vpop.f32.mrb[0].mxu0
    %6567 = vmatprep.mubr.bf16.mxu0 0
    %6568 = vmatmul.mubr.bf16.gmra.mrb[0].mxu0 %v6506
    %v6569 = vpop.f32.mrb[0].mxu0
    %v6570 = vadd.f32 0.0, %v6569
    %v6571 = vpop.f32.mrb[0].mxu0
    %v6572 = vpop.f32.mrb[0].mxu0
    %v6573 = vadd.f32 0.0, %v6572
    %v6574 = vpop.f32.mrb[0].mxu0
    %6575 = vmatprep.mubr.bf16.mxu0 0
    %6576 = vmatmul.mubr.bf16.gmra.mrb[0].mxu0 %v6507
    %v6577 = vpop.f32.mrb[0].mxu0
    %v6578 = vadd.f32 0.0, %v6577
    %v6579 = vpop.f32.mrb[0].mxu0
    %v6580 = vpop.f32.mrb[0].mxu0
    %v6581 = vadd.f32 0.0, %v6580
    %v6582 = vpop.f32.mrb[0].mxu0
    %6583 = vmatprep.mubr.bf16.mxu0 0
    %6584 = vmatmul.mubr.bf16.gmra.mrb[0].mxu0 %v6508
    %v6585 = vpop.f32.mrb[0].mxu0
    %v6586 = vadd.f32 0.0, %v6585
    %v6587 = vpop.f32.mrb[0].mxu0
    %v6588 = vpop.f32.mrb[0].mxu0
    %v6589 = vadd.f32 0.0, %v6588
    %v6590 = vpop.f32.mrb[0].mxu0
    %6591 = vmatprep.mubr.bf16.mxu0 0
    %6592 = vmatmul.mubr.bf16.gmra.mrb[0].mxu0 %v6509
    %v6593 = vpop.f32.mrb[0].mxu0
    %v6594 = vadd.f32 0.0, %v6593
    %v6595 = vpop.f32.mrb[0].mxu0
    %v6596 = vpop.f32.mrb[0].mxu0
    %v6597 = vadd.f32 0.0, %v6596
    %v6598 = vpop.f32.mrb[0].mxu0
    %6599 = vmatprep.mubr.bf16.mxu0 0
    %6600 = vmatmul.mubr.bf16.gmra.mrb[0].mxu0 %v6510
    %v6601 = vpop.f32.mrb[0].mxu0
    %v6602 = vadd.f32 0.0, %v6601
    %v6603 = vpop.f32.mrb[0].mxu0
    %v6604 = vpop.f32.mrb[0].mxu0
    %v6605 = vadd.f32 0.0, %v6604
    %v6606 = vpop.f32.mrb[0].mxu0
    %6607 = vdwg.mxu0
    %v6608 = vpack.c.bf16 %v6549, %v6546
    %v6609 = vpack.c.bf16 %v6557, %v6554
    %v6610 = vpack.c.bf16 %v6565, %v6562
    %v6611 = vpack.c.bf16 %v6573, %v6570
    %v6612 = vpack.c.bf16 %v6581, %v6578
    %v6613 = vpack.c.bf16 %v6589, %v6586
    %v6614 = vpack.c.bf16 %v6597, %v6594
    %v6615 = vpack.c.bf16 %v6605, %v6602
    %v6617 = vsel %vm3898, %v6608, 0
    %v6620 = vsel %vm3898, %v6609, 0
    %v6623 = vsel %vm3898, %v6610, 0
    %v6626 = vsel %vm3898, %v6611, 0
    %v6629 = vsel %vm3898, %v6612, 0
    %v6632 = vsel %vm3898, %v6613, 0
    %v6635 = vsel %vm3898, %v6614, 0
    %v6638 = vsel %vm3898, %v6615, 0
    %6640 = vmatprep.subr.bf16.mxu0 0
    %6641 = vmatpush1.bf16.msra.mxu0 %v4517
    %6642 = vmatprep.subr.bf16.mxu0 0
    %6643 = vmatpush1.bf16.msra.mxu0 %v4518
    %6644 = vmatprep.subr.bf16.mxu0 0
    %6645 = vmatpush1.bf16.msra.mxu0 0
    %6646 = vmatprep.subr.bf16.mxu0 0
    %6647 = vmatpush1.bf16.msra.mxu0 0
    %6648 = vmatprep.subr.bf16.mxu0 0
    %6649 = vmatpush1.bf16.msra.mxu0 0
    %6650 = vmatprep.subr.bf16.mxu0 0
    %6651 = vmatpush1.bf16.msra.mxu0 0
    %6652 = vmatprep.subr.bf16.mxu0 0
    %6653 = vmatpush1.bf16.msra.mxu0 0
    %6654 = vmatprep.subr.bf16.mxu0 0
    %6655 = vmatpush1.bf16.msra.mxu0 0
    %6656 = vmatprep.subr.bf16.mxu0 0
    %6657 = vmatpush1.bf16.msra.mxu0 0
    %6658 = vmatprep.subr.bf16.mxu0 0
    %6659 = vmatpush1.bf16.msra.mxu0 0
    %6660 = vmatprep.subr.bf16.mxu0 0
    %6661 = vmatpush1.bf16.msra.mxu0 0
    %6662 = vmatprep.subr.bf16.mxu0 0
    %6663 = vmatpush1.bf16.msra.mxu0 0
    %6664 = vmatprep.subr.bf16.mxu0 0
    %6665 = vmatpush1.bf16.msra.mxu0 0
    %6666 = vmatprep.subr.bf16.mxu0 0
    %6667 = vmatpush1.bf16.msra.mxu0 0
    %6668 = vmatprep.subr.bf16.mxu0 0
    %6669 = vmatpush1.bf16.msra.mxu0 0
    %6670 = vmatprep.subr.bf16.mxu0 0
    %6671 = vmatpush1.bf16.msra.mxu0 0
    %6672 = vmatprep.mubr.bf16.mxu0 0
    %6673 = vmatmul.mubr.bf16.gmra.mrb[0].mxu0 %v6617
    %v6674 = vpop.f32.mrb[0].mxu0
    %v6675 = vadd.f32 0.0, %v6674
    %v6676 = vpop.f32.mrb[0].mxu0
    %v6677 = vpop.f32.mrb[0].mxu0
    %v6678 = vadd.f32 0.0, %v6677
    %v6679 = vpop.f32.mrb[0].mxu0
    %6680 = vmatprep.mubr.bf16.mxu0 0
    %6681 = vmatmul.mubr.bf16.gmra.mrb[0].mxu0 %v6620
    %v6682 = vpop.f32.mrb[0].mxu0
    %v6683 = vadd.f32 0.0, %v6682
    %v6684 = vpop.f32.mrb[0].mxu0
    %v6685 = vpop.f32.mrb[0].mxu0
    %v6686 = vadd.f32 0.0, %v6685
    %v6687 = vpop.f32.mrb[0].mxu0
    %6688 = vmatprep.mubr.bf16.mxu0 0
    %6689 = vmatmul.mubr.bf16.gmra.mrb[0].mxu0 %v6623
    %v6690 = vpop.f32.mrb[0].mxu0
    %v6691 = vadd.f32 0.0, %v6690
    %v6692 = vpop.f32.mrb[0].mxu0
    %v6693 = vpop.f32.mrb[0].mxu0
    %v6694 = vadd.f32 0.0, %v6693
    %v6695 = vpop.f32.mrb[0].mxu0
    %6696 = vmatprep.mubr.bf16.mxu0 0
    %6697 = vmatmul.mubr.bf16.gmra.mrb[0].mxu0 %v6626
    %v6698 = vpop.f32.mrb[0].mxu0
    %v6699 = vadd.f32 0.0, %v6698
    %v6700 = vpop.f32.mrb[0].mxu0
    %v6701 = vpop.f32.mrb[0].mxu0
    %v6702 = vadd.f32 0.0, %v6701
    %v6703 = vpop.f32.mrb[0].mxu0
    %6704 = vmatprep.mubr.bf16.mxu0 0
    %6705 = vmatmul.mubr.bf16.gmra.mrb[0].mxu0 %v6629
    %v6706 = vpop.f32.mrb[0].mxu0
    %v6707 = vadd.f32 0.0, %v6706
    %v6708 = vpop.f32.mrb[0].mxu0
    %v6709 = vpop.f32.mrb[0].mxu0
    %v6710 = vadd.f32 0.0, %v6709
    %v6711 = vpop.f32.mrb[0].mxu0
    %6712 = vmatprep.mubr.bf16.mxu0 0
    %6713 = vmatmul.mubr.bf16.gmra.mrb[0].mxu0 %v6632
    %v6714 = vpop.f32.mrb[0].mxu0
    %v6715 = vadd.f32 0.0, %v6714
    %v6716 = vpop.f32.mrb[0].mxu0
    %v6717 = vpop.f32.mrb[0].mxu0
    %v6718 = vadd.f32 0.0, %v6717
    %v6719 = vpop.f32.mrb[0].mxu0
    %6720 = vmatprep.mubr.bf16.mxu0 0
    %6721 = vmatmul.mubr.bf16.gmra.mrb[0].mxu0 %v6635
    %v6722 = vpop.f32.mrb[0].mxu0
    %v6723 = vadd.f32 0.0, %v6722
    %v6724 = vpop.f32.mrb[0].mxu0
    %v6725 = vpop.f32.mrb[0].mxu0
    %v6726 = vadd.f32 0.0, %v6725
    %v6727 = vpop.f32.mrb[0].mxu0
    %6728 = vmatprep.mubr.bf16.mxu0 0
    %6729 = vmatmul.mubr.bf16.gmra.mrb[0].mxu0 %v6638
    %v6730 = vpop.f32.mrb[0].mxu0
    %v6731 = vadd.f32 0.0, %v6730
    %v6732 = vpop.f32.mrb[0].mxu0
    %v6733 = vpop.f32.mrb[0].mxu0
    %v6734 = vadd.f32 0.0, %v6733
    %v6735 = vpop.f32.mrb[0].mxu0
    %6736 = vdwg.mxu0
    %v6737 = vadd.f32 %v6486, %v6675
    %v6738 = vadd.f32 %v6487, %v6678
    %v6739 = vadd.f32 %v6488, %v6683
    %v6740 = vadd.f32 %v6489, %v6686
    %v6741 = vadd.f32 %v6490, %v6691
    %v6742 = vadd.f32 %v6491, %v6694
    %v6743 = vadd.f32 %v6492, %v6699
    %v6744 = vadd.f32 %v6493, %v6702
    %v6745 = vadd.f32 %v6494, %v6707
    %v6746 = vadd.f32 %v6495, %v6710
    %v6747 = vadd.f32 %v6496, %v6715
    %v6748 = vadd.f32 %v6497, %v6718
    %v6749 = vadd.f32 %v6498, %v6723
    %v6750 = vadd.f32 %v6499, %v6726
    %v6751 = vadd.f32 %v6500, %v6731
    %v6752 = vadd.f32 %v6501, %v6734
    %v6753 = vsel %vm3898, %v6737, 0.0
    %v6754 = vsel %vm3898, %v6738, 0.0
    %v6755 = vadd.f32 %v6753, %v6754
    %v6756 = vsel %vm3898, %v6739, 0.0
    %v6757 = vadd.f32 %v6755, %v6756
    %v6758 = vsel %vm3898, %v6740, 0.0
    %v6759 = vadd.f32 %v6757, %v6758
    %v6760 = vsel %vm3898, %v6741, 0.0
    %v6761 = vadd.f32 %v6759, %v6760
    %v6762 = vsel %vm3898, %v6742, 0.0
    %v6763 = vadd.f32 %v6761, %v6762
    %v6764 = vsel %vm3898, %v6743, 0.0
    %v6765 = vadd.f32 %v6763, %v6764
    %v6766 = vsel %vm3898, %v6744, 0.0
    %v6767 = vadd.f32 %v6765, %v6766
    %v6768 = vsel %vm3898, %v6745, 0.0
    %v6769 = vadd.f32 %v6767, %v6768
    %v6770 = vsel %vm3898, %v6746, 0.0
    %v6771 = vadd.f32 %v6769, %v6770
    %v6772 = vsel %vm3898, %v6747, 0.0
    %v6773 = vadd.f32 %v6771, %v6772
    %v6774 = vsel %vm3898, %v6748, 0.0
    %v6775 = vadd.f32 %v6773, %v6774
    %v6776 = vsel %vm3898, %v6749, 0.0
    %v6777 = vadd.f32 %v6775, %v6776
    %v6778 = vsel %vm3898, %v6750, 0.0
    %v6779 = vadd.f32 %v6777, %v6778
    %v6780 = vsel %vm3898, %v6751, 0.0
    %v6781 = vadd.f32 %v6779, %v6780
    %v6782 = vsel %vm3898, %v6752, 0.0
    %v6783 = vadd.f32 %v6781, %v6782
    %v6784 = vrot.slane %v6783, 4
    %v6785 = vadd.f32 %v6783, %v6784
    %v6786 = vrot.slane %v6785, 2
    %v6787 = vadd.f32 %v6785, %v6786
    %v6788 = vrot.slane %v6787, 1
    %v6789 = vadd.f32 %v6787, %v6788
    %v6790 = vrcp.pop 128.0
    %v6791 = vmul.f32 %v6789, %v6790
    %v6792 = vsub.f32 %v6737, %v6791
    %v6793 = vsub.f32 %v6738, %v6791
    %v6794 = vsub.f32 %v6739, %v6791
    %v6795 = vsub.f32 %v6740, %v6791
    %v6796 = vsub.f32 %v6741, %v6791
    %v6797 = vsub.f32 %v6742, %v6791
    %v6798 = vsub.f32 %v6743, %v6791
    %v6799 = vsub.f32 %v6744, %v6791
    %v6800 = vsub.f32 %v6745, %v6791
    %v6801 = vsub.f32 %v6746, %v6791
    %v6802 = vsub.f32 %v6747, %v6791
    %v6803 = vsub.f32 %v6748, %v6791
    %v6804 = vsub.f32 %v6749, %v6791
    %v6805 = vsub.f32 %v6750, %v6791
    %v6806 = vsub.f32 %v6751, %v6791
    %v6807 = vsub.f32 %v6752, %v6791
    %v6808 = vmul.f32 %v6792, %v6792
    %v6809 = vmul.f32 %v6793, %v6793
    %v6810 = vmul.f32 %v6794, %v6794
    %v6811 = vmul.f32 %v6795, %v6795
    %v6812 = vmul.f32 %v6796, %v6796
    %v6813 = vmul.f32 %v6797, %v6797
    %v6814 = vmul.f32 %v6798, %v6798
    %v6815 = vmul.f32 %v6799, %v6799
    %v6816 = vmul.f32 %v6800, %v6800
    %v6817 = vmul.f32 %v6801, %v6801
    %v6818 = vmul.f32 %v6802, %v6802
    %v6819 = vmul.f32 %v6803, %v6803
    %v6820 = vmul.f32 %v6804, %v6804
    %v6821 = vmul.f32 %v6805, %v6805
    %v6822 = vmul.f32 %v6806, %v6806
    %v6823 = vmul.f32 %v6807, %v6807
    %v6824 = vsel %vm3898, %v6808, 0.0
    %v6825 = vsel %vm3898, %v6809, 0.0
    %v6826 = vadd.f32 %v6824, %v6825
    %v6827 = vsel %vm3898, %v6810, 0.0
    %v6828 = vadd.f32 %v6826, %v6827
    %v6829 = vsel %vm3898, %v6811, 0.0
    %v6830 = vadd.f32 %v6828, %v6829
    %v6831 = vsel %vm3898, %v6812, 0.0
    %v6832 = vadd.f32 %v6830, %v6831
    %v6833 = vsel %vm3898, %v6813, 0.0
    %v6834 = vadd.f32 %v6832, %v6833
    %v6835 = vsel %vm3898, %v6814, 0.0
    %v6836 = vadd.f32 %v6834, %v6835
    %v6837 = vsel %vm3898, %v6815, 0.0
    %v6838 = vadd.f32 %v6836, %v6837
    %v6839 = vsel %vm3898, %v6816, 0.0
    %v6840 = vadd.f32 %v6838, %v6839
    %v6841 = vsel %vm3898, %v6817, 0.0
    %v6842 = vadd.f32 %v6840, %v6841
    %v6843 = vsel %vm3898, %v6818, 0.0
    %v6844 = vadd.f32 %v6842, %v6843
    %v6845 = vsel %vm3898, %v6819, 0.0
    %v6846 = vadd.f32 %v6844, %v6845
    %v6847 = vsel %vm3898, %v6820, 0.0
    %v6848 = vadd.f32 %v6846, %v6847
    %v6849 = vsel %vm3898, %v6821, 0.0
    %v6850 = vadd.f32 %v6848, %v6849
    %v6851 = vsel %vm3898, %v6822, 0.0
    %v6852 = vadd.f32 %v6850, %v6851
    %v6853 = vsel %vm3898, %v6823, 0.0
    %v6854 = vadd.f32 %v6852, %v6853
    %v6855 = vrot.slane %v6854, 4
    %v6856 = vadd.f32 %v6854, %v6855
    %v6857 = vrot.slane %v6856, 2
    %v6858 = vadd.f32 %v6856, %v6857
    %v6859 = vrot.slane %v6858, 1
    %v6860 = vadd.f32 %v6858, %v6859
    %v6861 = vmul.f32 %v6860, %v6790
    %v6862 = vadd.f32 %v6861, 1e-05
    %v6863 = vrsqrt.pop %v6862
    %v6864 = vmul.f32 %v3264, %v6863
    %v6865 = vmul.f32 %v6791, %v6864
    %v6866 = vsub.f32 %v3265, %v6865
    %v6867 = vlaneseq
    %v6868 = vshrl.u32 %v6867, 7
    %v6869 = vsub.s32 1, %v6868
    %v6870 = vrot.slane %v6864, %v6869
    %v6871 = vmul.f32 %v6737, %v6870
    %v6872 = vmul.f32 %v6738, %v6870
    %v6873 = vmul.f32 %v6739, %v6870
    %v6874 = vmul.f32 %v6740, %v6870
    %v6875 = vmul.f32 %v6741, %v6870
    %v6876 = vmul.f32 %v6742, %v6870
    %v6877 = vmul.f32 %v6743, %v6870
    %v6878 = vmul.f32 %v6744, %v6870
    %v6879 = vmul.f32 %v6745, %v6870
    %v6880 = vmul.f32 %v6746, %v6870
    %v6881 = vmul.f32 %v6747, %v6870
    %v6882 = vmul.f32 %v6748, %v6870
    %v6883 = vmul.f32 %v6749, %v6870
    %v6884 = vmul.f32 %v6750, %v6870
    %v6885 = vmul.f32 %v6751, %v6870
    %v6886 = vmul.f32 %v6752, %v6870
    %v6887 = vlaneseq
    %v6888 = vshrl.u32 %v6887, 7
    %v6889 = vsub.s32 1, %v6888
    %v6890 = vrot.slane %v6866, %v6889
    %v6891 = vadd.f32 %v6871, %v6890
    %v6892 = vadd.f32 %v6872, %v6890
    %v6893 = vadd.f32 %v6873, %v6890
    %v6894 = vadd.f32 %v6874, %v6890
    %v6895 = vadd.f32 %v6875, %v6890
    %v6896 = vadd.f32 %v6876, %v6890
    %v6897 = vadd.f32 %v6877, %v6890
    %v6898 = vadd.f32 %v6878, %v6890
    %v6899 = vadd.f32 %v6879, %v6890
    %v6900 = vadd.f32 %v6880, %v6890
    %v6901 = vadd.f32 %v6881, %v6890
    %v6902 = vadd.f32 %v6882, %v6890
    %v6903 = vadd.f32 %v6883, %v6890
    %v6904 = vadd.f32 %v6884, %v6890
    %v6905 = vadd.f32 %v6885, %v6890
    %v6906 = vadd.f32 %v6886, %v6890
    %v6907 = vmax.f32 %v6891, %v6895
    %v6908 = vmax.f32 %v6892, %v6896
    %v6909 = vmax.f32 %v6893, %v6897
    %v6910 = vmax.f32 %v6894, %v6898
    %v6911 = vmax.f32 %v6899, %v6903
    %v6912 = vmax.f32 %v6900, %v6904
    %v6913 = vmax.f32 %v6901, %v6905
    %v6914 = vmax.f32 %v6902, %v6906
    %v6915 = vmax.f32 %v6907, %v6911
    %v6916 = vmax.f32 %v6908, %v6912
    %v6917 = vmax.f32 %v6909, %v6913
    %v6918 = vmax.f32 %v6910, %v6914
    %v6919 = vmax.f32 %v6915, 0.0
    %v6920 = vmax.f32 %v6916, 0.0
    %v6921 = vmax.f32 %v6917, 0.0
    %v6922 = vmax.f32 %v6918, 0.0
    %v6923 = vld [vmem:[%s2] sm:$0xff]
    %v6924 = vld [vmem:[%s2 + $0x8] sm:$0xff]
    %v6925 = vld [vmem:[%s2 + $0x10] sm:$0xff]
    %v6926 = vld [vmem:[%s2 + $0x18] sm:$0xff]
    %v6927 = vld [vmem:[%s2 + $0x20] sm:$0xff]
    %v6928 = vld [vmem:[%s2 + $0x28] sm:$0xff]
    %v6929 = vld [vmem:[%s2 + $0x30] sm:$0xff]
    %v6930 = vld [vmem:[%s2 + $0x38] sm:$0xff]
    %v6931 = vld [vmem:[%s2 + $0x40] sm:$0xff]
    %v6932 = vld [vmem:[%s2 + $0x48] sm:$0xff]
    %v6933 = vld [vmem:[%s2 + $0x50] sm:$0xff]
    %v6934 = vld [vmem:[%s2 + $0x58] sm:$0xff]
    %v6935 = vld [vmem:[%s2 + $0x60] sm:$0xff]
    %v6936 = vld [vmem:[%s2 + $0x68] sm:$0xff]
    %v6937 = vld [vmem:[%s2 + $0x70] sm:$0xff]
    %v6938 = vld [vmem:[%s2 + $0x78] sm:$0xff]
    %v6939 = vld [vmem:[%s2 + $0x80] sm:$0xff]
    %v6940 = vld [vmem:[%s2 + $0x88] sm:$0xff]
    %v6941 = vpack.c.bf16 %v6920, %v6919
    %v6942 = vpack.c.bf16 %v6922, %v6921
    %v6943 = vld [vmem:[%s7] sm:$0xff]
    %v6944 = vld [vmem:[%s7 + $0x8] sm:$0xff]
    %v6946 = vsel %vm3898, %v6943, 0
    %v6949 = vsel %vm3898, %v6944, 0
    %6951 = vmatprep.subr.bf16.mxu0 0
    %6952 = vmatpush1.bf16.msra.mxu0 %v6941
    %6953 = vmatprep.subr.bf16.mxu0 0
    %6954 = vmatpush1.bf16.msra.mxu0 %v6942
    %6955 = vmatprep.subr.bf16.mxu0 0
    %6956 = vmatpush1.bf16.msra.mxu0 0
    %6957 = vmatprep.subr.bf16.mxu0 0
    %6958 = vmatpush1.bf16.msra.mxu0 0
    %6959 = vmatprep.subr.bf16.mxu0 0
    %6960 = vmatpush1.bf16.msra.mxu0 0
    %6961 = vmatprep.subr.bf16.mxu0 0
    %6962 = vmatpush1.bf16.msra.mxu0 0
    %6963 = vmatprep.subr.bf16.mxu0 0
    %6964 = vmatpush1.bf16.msra.mxu0 0
    %6965 = vmatprep.subr.bf16.mxu0 0
    %6966 = vmatpush1.bf16.msra.mxu0 0
    %6967 = vmatprep.subr.bf16.mxu0 0
    %6968 = vmatpush1.bf16.msra.mxu0 0
    %6969 = vmatprep.subr.bf16.mxu0 0
    %6970 = vmatpush1.bf16.msra.mxu0 0
    %6971 = vmatprep.subr.bf16.mxu0 0
    %6972 = vmatpush1.bf16.msra.mxu0 0
    %6973 = vmatprep.subr.bf16.mxu0 0
    %6974 = vmatpush1.bf16.msra.mxu0 0
    %6975 = vmatprep.subr.bf16.mxu0 0
    %6976 = vmatpush1.bf16.msra.mxu0 0
    %6977 = vmatprep.subr.bf16.mxu0 0
    %6978 = vmatpush1.bf16.msra.mxu0 0
    %6979 = vmatprep.subr.bf16.mxu0 0
    %6980 = vmatpush1.bf16.msra.mxu0 0
    %6981 = vmatprep.subr.bf16.mxu0 0
    %6982 = vmatpush1.bf16.msra.mxu0 0
    %6983 = vmatprep.mubr.bf16.mxu0 0
    %6984 = vmatmul.mubr.bf16.gmra.mrb[0].mxu0 %v6946
    %v6985 = vpop.f32.mrb[0].mxu0
    %v6986 = vadd.f32 0.0, %v6985
    %v6987 = vpop.f32.mrb[0].mxu0
    %v6988 = vpop.f32.mrb[0].mxu0
    %v6989 = vadd.f32 0.0, %v6988
    %v6990 = vpop.f32.mrb[0].mxu0
    %6991 = vmatprep.mubr.bf16.mxu0 0
    %6992 = vmatmul.mubr.bf16.gmra.mrb[0].mxu0 %v6949
    %v6993 = vpop.f32.mrb[0].mxu0
    %v6994 = vadd.f32 0.0, %v6993
    %v6995 = vpop.f32.mrb[0].mxu0
    %v6996 = vpop.f32.mrb[0].mxu0
    %v6997 = vadd.f32 0.0, %v6996
    %v6998 = vpop.f32.mrb[0].mxu0
    %6999 = vdwg.mxu0
    %v7000 = vpack.c.bf16 %v6989, %v6986
    %v7001 = vpack.c.bf16 %v6997, %v6994
    %s7002 = scalar_lea.vmem %s7, 16
    %v7003 = vld [vmem:[%s7002] sm:$0xff]
    %v7004 = vld [vmem:[%s7002 + $0x8] sm:$0xff]
    %v7006 = vsel %vm3898, %v7003, 0
    %v7009 = vsel %vm3898, %v7004, 0
    %7011 = vmatprep.subr.bf16.mxu0 0
    %7012 = vmatpush1.bf16.msra.mxu0 %v6941
    %7013 = vmatprep.subr.bf16.mxu0 0
    %7014 = vmatpush1.bf16.msra.mxu0 %v6942
    %7015 = vmatprep.subr.bf16.mxu0 0
    %7016 = vmatpush1.bf16.msra.mxu0 0
    %7017 = vmatprep.subr.bf16.mxu0 0
    %7018 = vmatpush1.bf16.msra.mxu0 0
    %7019 = vmatprep.subr.bf16.mxu0 0
    %7020 = vmatpush1.bf16.msra.mxu0 0
    %7021 = vmatprep.subr.bf16.mxu0 0
    %7022 = vmatpush1.bf16.msra.mxu0 0
    %7023 = vmatprep.subr.bf16.mxu0 0
    %7024 = vmatpush1.bf16.msra.mxu0 0
    %7025 = vmatprep.subr.bf16.mxu0 0
    %7026 = vmatpush1.bf16.msra.mxu0 0
    %7027 = vmatprep.subr.bf16.mxu0 0
    %7028 = vmatpush1.bf16.msra.mxu0 0
    %7029 = vmatprep.subr.bf16.mxu0 0
    %7030 = vmatpush1.bf16.msra.mxu0 0
    %7031 = vmatprep.subr.bf16.mxu0 0
    %7032 = vmatpush1.bf16.msra.mxu0 0
    %7033 = vmatprep.subr.bf16.mxu0 0
    %7034 = vmatpush1.bf16.msra.mxu0 0
    %7035 = vmatprep.subr.bf16.mxu0 0
    %7036 = vmatpush1.bf16.msra.mxu0 0
    %7037 = vmatprep.subr.bf16.mxu0 0
    %7038 = vmatpush1.bf16.msra.mxu0 0
    %7039 = vmatprep.subr.bf16.mxu0 0
    %7040 = vmatpush1.bf16.msra.mxu0 0
    %7041 = vmatprep.subr.bf16.mxu0 0
    %7042 = vmatpush1.bf16.msra.mxu0 0
    %7043 = vmatprep.mubr.bf16.mxu0 0
    %7044 = vmatmul.mubr.bf16.gmra.mrb[0].mxu0 %v7006
    %v7045 = vpop.f32.mrb[0].mxu0
    %v7046 = vadd.f32 0.0, %v7045
    %v7047 = vpop.f32.mrb[0].mxu0
    %v7048 = vpop.f32.mrb[0].mxu0
    %v7049 = vadd.f32 0.0, %v7048
    %v7050 = vpop.f32.mrb[0].mxu0
    %7051 = vmatprep.mubr.bf16.mxu0 0
    %7052 = vmatmul.mubr.bf16.gmra.mrb[0].mxu0 %v7009
    %v7053 = vpop.f32.mrb[0].mxu0
    %v7054 = vadd.f32 0.0, %v7053
    %v7055 = vpop.f32.mrb[0].mxu0
    %v7056 = vpop.f32.mrb[0].mxu0
    %v7057 = vadd.f32 0.0, %v7056
    %v7058 = vpop.f32.mrb[0].mxu0
    %7059 = vdwg.mxu0
    %v7060 = vpack.c.bf16 %v7049, %v7046
    %v7061 = vpack.c.bf16 %v7057, %v7054
    %v7063 = vsel %vm3898, %v7060, 0
    %v7066 = vsel %vm3898, %v7061, 0
    %7068 = vmatprep.subr.bf16.mxu0 0
    %7069 = vmatpush1.bf16.msra.mxu0 %v6925
    %7070 = vmatprep.subr.bf16.mxu0 0
    %7071 = vmatpush1.bf16.msra.mxu0 %v6926
    %7072 = vmatprep.subr.bf16.mxu0 0
    %7073 = vmatpush1.bf16.msra.mxu0 0
    %7074 = vmatprep.subr.bf16.mxu0 0
    %7075 = vmatpush1.bf16.msra.mxu0 0
    %7076 = vmatprep.subr.bf16.mxu0 0
    %7077 = vmatpush1.bf16.msra.mxu0 0
    %7078 = vmatprep.subr.bf16.mxu0 0
    %7079 = vmatpush1.bf16.msra.mxu0 0
    %7080 = vmatprep.subr.bf16.mxu0 0
    %7081 = vmatpush1.bf16.msra.mxu0 0
    %7082 = vmatprep.subr.bf16.mxu0 0
    %7083 = vmatpush1.bf16.msra.mxu0 0
    %7084 = vmatprep.subr.bf16.mxu0 0
    %7085 = vmatpush1.bf16.msra.mxu0 0
    %7086 = vmatprep.subr.bf16.mxu0 0
    %7087 = vmatpush1.bf16.msra.mxu0 0
    %7088 = vmatprep.subr.bf16.mxu0 0
    %7089 = vmatpush1.bf16.msra.mxu0 0
    %7090 = vmatprep.subr.bf16.mxu0 0
    %7091 = vmatpush1.bf16.msra.mxu0 0
    %7092 = vmatprep.subr.bf16.mxu0 0
    %7093 = vmatpush1.bf16.msra.mxu0 0
    %7094 = vmatprep.subr.bf16.mxu0 0
    %7095 = vmatpush1.bf16.msra.mxu0 0
    %7096 = vmatprep.subr.bf16.mxu0 0
    %7097 = vmatpush1.bf16.msra.mxu0 0
    %7098 = vmatprep.subr.bf16.mxu0 0
    %7099 = vmatpush1.bf16.msra.mxu0 0
    %7100 = vmatprep.mubr.bf16.mxu0 0
    %7101 = vmatmul.mubr.bf16.gmra.mrb[0].mxu0 %v7063
    %v7102 = vpop.f32.mrb[0].mxu0
    %v7103 = vadd.f32 0.0, %v7102
    %v7104 = vpop.f32.mrb[0].mxu0
    %v7105 = vpop.f32.mrb[0].mxu0
    %v7106 = vadd.f32 0.0, %v7105
    %v7107 = vpop.f32.mrb[0].mxu0
    %7108 = vmatprep.mubr.bf16.mxu0 0
    %7109 = vmatmul.mubr.bf16.gmra.mrb[0].mxu0 %v7066
    %v7110 = vpop.f32.mrb[0].mxu0
    %v7111 = vadd.f32 0.0, %v7110
    %v7112 = vpop.f32.mrb[0].mxu0
    %v7113 = vpop.f32.mrb[0].mxu0
    %v7114 = vadd.f32 0.0, %v7113
    %v7115 = vpop.f32.mrb[0].mxu0
    %7116 = vdwg.mxu0
    %v7118 = vsel %vm3898, %v7000, 0
    %v7121 = vsel %vm3898, %v7001, 0
    %7123 = vmatprep.subr.bf16.mxu0 0
    %7124 = vmatpush1.bf16.msra.mxu0 %v6923
    %7125 = vmatprep.subr.bf16.mxu0 0
    %7126 = vmatpush1.bf16.msra.mxu0 %v6924
    %7127 = vmatprep.subr.bf16.mxu0 0
    %7128 = vmatpush1.bf16.msra.mxu0 0
    %7129 = vmatprep.subr.bf16.mxu0 0
    %7130 = vmatpush1.bf16.msra.mxu0 0
    %7131 = vmatprep.subr.bf16.mxu0 0
    %7132 = vmatpush1.bf16.msra.mxu0 0
    %7133 = vmatprep.subr.bf16.mxu0 0
    %7134 = vmatpush1.bf16.msra.mxu0 0
    %7135 = vmatprep.subr.bf16.mxu0 0
    %7136 = vmatpush1.bf16.msra.mxu0 0
    %7137 = vmatprep.subr.bf16.mxu0 0
    %7138 = vmatpush1.bf16.msra.mxu0 0
    %7139 = vmatprep.subr.bf16.mxu0 0
    %7140 = vmatpush1.bf16.msra.mxu0 0
    %7141 = vmatprep.subr.bf16.mxu0 0
    %7142 = vmatpush1.bf16.msra.mxu0 0
    %7143 = vmatprep.subr.bf16.mxu0 0
    %7144 = vmatpush1.bf16.msra.mxu0 0
    %7145 = vmatprep.subr.bf16.mxu0 0
    %7146 = vmatpush1.bf16.msra.mxu0 0
    %7147 = vmatprep.subr.bf16.mxu0 0
    %7148 = vmatpush1.bf16.msra.mxu0 0
    %7149 = vmatprep.subr.bf16.mxu0 0
    %7150 = vmatpush1.bf16.msra.mxu0 0
    %7151 = vmatprep.subr.bf16.mxu0 0
    %7152 = vmatpush1.bf16.msra.mxu0 0
    %7153 = vmatprep.subr.bf16.mxu0 0
    %7154 = vmatpush1.bf16.msra.mxu0 0
    %7155 = vmatprep.mubr.bf16.mxu0 0
    %7156 = vmatmul.mubr.bf16.gmra.mrb[0].mxu0 %v7118
    %v7157 = vpop.f32.mrb[0].mxu0
    %v7158 = vadd.f32 %v7103, %v7157
    %v7159 = vpop.f32.mrb[0].mxu0
    %v7160 = vpop.f32.mrb[0].mxu0
    %v7161 = vadd.f32 %v7106, %v7160
    %v7162 = vpop.f32.mrb[0].mxu0
    %7163 = vmatprep.mubr.bf16.mxu0 0
    %7164 = vmatmul.mubr.bf16.gmra.mrb[0].mxu0 %v7121
    %v7165 = vpop.f32.mrb[0].mxu0
    %v7166 = vadd.f32 %v7111, %v7165
    %v7167 = vpop.f32.mrb[0].mxu0
    %v7168 = vpop.f32.mrb[0].mxu0
    %v7169 = vadd.f32 %v7114, %v7168
    %v7170 = vpop.f32.mrb[0].mxu0
    %7171 = vdwg.mxu0
    %s7172 = scalar_lea.vmem %s7, 32
    %v7173 = vld [vmem:[%s7172] sm:$0xff]
    %v7174 = vld [vmem:[%s7172 + $0x8] sm:$0xff]
    %v7176 = vsel %vm3898, %v7173, 0
    %v7179 = vsel %vm3898, %v7174, 0
    %7181 = vmatprep.subr.bf16.mxu0 0
    %7182 = vmatpush1.bf16.msra.mxu0 %v6941
    %7183 = vmatprep.subr.bf16.mxu0 0
    %7184 = vmatpush1.bf16.msra.mxu0 %v6942
    %7185 = vmatprep.subr.bf16.mxu0 0
    %7186 = vmatpush1.bf16.msra.mxu0 0
    %7187 = vmatprep.subr.bf16.mxu0 0
    %7188 = vmatpush1.bf16.msra.mxu0 0
    %7189 = vmatprep.subr.bf16.mxu0 0
    %7190 = vmatpush1.bf16.msra.mxu0 0
    %7191 = vmatprep.subr.bf16.mxu0 0
    %7192 = vmatpush1.bf16.msra.mxu0 0
    %7193 = vmatprep.subr.bf16.mxu0 0
    %7194 = vmatpush1.bf16.msra.mxu0 0
    %7195 = vmatprep.subr.bf16.mxu0 0
    %7196 = vmatpush1.bf16.msra.mxu0 0
    %7197 = vmatprep.subr.bf16.mxu0 0
    %7198 = vmatpush1.bf16.msra.mxu0 0
    %7199 = vmatprep.subr.bf16.mxu0 0
    %7200 = vmatpush1.bf16.msra.mxu0 0
    %7201 = vmatprep.subr.bf16.mxu0 0
    %7202 = vmatpush1.bf16.msra.mxu0 0
    %7203 = vmatprep.subr.bf16.mxu0 0
    %7204 = vmatpush1.bf16.msra.mxu0 0
    %7205 = vmatprep.subr.bf16.mxu0 0
    %7206 = vmatpush1.bf16.msra.mxu0 0
    %7207 = vmatprep.subr.bf16.mxu0 0
    %7208 = vmatpush1.bf16.msra.mxu0 0
    %7209 = vmatprep.subr.bf16.mxu0 0
    %7210 = vmatpush1.bf16.msra.mxu0 0
    %7211 = vmatprep.subr.bf16.mxu0 0
    %7212 = vmatpush1.bf16.msra.mxu0 0
    %7213 = vmatprep.mubr.bf16.mxu0 0
    %7214 = vmatmul.mubr.bf16.gmra.mrb[0].mxu0 %v7176
    %v7215 = vpop.f32.mrb[0].mxu0
    %v7216 = vadd.f32 0.0, %v7215
    %v7217 = vpop.f32.mrb[0].mxu0
    %v7218 = vpop.f32.mrb[0].mxu0
    %v7219 = vadd.f32 0.0, %v7218
    %v7220 = vpop.f32.mrb[0].mxu0
    %7221 = vmatprep.mubr.bf16.mxu0 0
    %7222 = vmatmul.mubr.bf16.gmra.mrb[0].mxu0 %v7179
    %v7223 = vpop.f32.mrb[0].mxu0
    %v7224 = vadd.f32 0.0, %v7223
    %v7225 = vpop.f32.mrb[0].mxu0
    %v7226 = vpop.f32.mrb[0].mxu0
    %v7227 = vadd.f32 0.0, %v7226
    %v7228 = vpop.f32.mrb[0].mxu0
    %7229 = vdwg.mxu0
    %v7230 = vpack.c.bf16 %v7219, %v7216
    %v7231 = vpack.c.bf16 %v7227, %v7224
    %v7233 = vsel %vm3898, %v7230, 0
    %v7236 = vsel %vm3898, %v7231, 0
    %7238 = vmatprep.subr.bf16.mxu0 0
    %7239 = vmatpush1.bf16.msra.mxu0 %v6927
    %7240 = vmatprep.subr.bf16.mxu0 0
    %7241 = vmatpush1.bf16.msra.mxu0 %v6928
    %7242 = vmatprep.subr.bf16.mxu0 0
    %7243 = vmatpush1.bf16.msra.mxu0 0
    %7244 = vmatprep.subr.bf16.mxu0 0
    %7245 = vmatpush1.bf16.msra.mxu0 0
    %7246 = vmatprep.subr.bf16.mxu0 0
    %7247 = vmatpush1.bf16.msra.mxu0 0
    %7248 = vmatprep.subr.bf16.mxu0 0
    %7249 = vmatpush1.bf16.msra.mxu0 0
    %7250 = vmatprep.subr.bf16.mxu0 0
    %7251 = vmatpush1.bf16.msra.mxu0 0
    %7252 = vmatprep.subr.bf16.mxu0 0
    %7253 = vmatpush1.bf16.msra.mxu0 0
    %7254 = vmatprep.subr.bf16.mxu0 0
    %7255 = vmatpush1.bf16.msra.mxu0 0
    %7256 = vmatprep.subr.bf16.mxu0 0
    %7257 = vmatpush1.bf16.msra.mxu0 0
    %7258 = vmatprep.subr.bf16.mxu0 0
    %7259 = vmatpush1.bf16.msra.mxu0 0
    %7260 = vmatprep.subr.bf16.mxu0 0
    %7261 = vmatpush1.bf16.msra.mxu0 0
    %7262 = vmatprep.subr.bf16.mxu0 0
    %7263 = vmatpush1.bf16.msra.mxu0 0
    %7264 = vmatprep.subr.bf16.mxu0 0
    %7265 = vmatpush1.bf16.msra.mxu0 0
    %7266 = vmatprep.subr.bf16.mxu0 0
    %7267 = vmatpush1.bf16.msra.mxu0 0
    %7268 = vmatprep.subr.bf16.mxu0 0
    %7269 = vmatpush1.bf16.msra.mxu0 0
    %7270 = vmatprep.mubr.bf16.mxu0 0
    %7271 = vmatmul.mubr.bf16.gmra.mrb[0].mxu0 %v7233
    %v7272 = vpop.f32.mrb[0].mxu0
    %v7273 = vadd.f32 0.0, %v7272
    %v7274 = vpop.f32.mrb[0].mxu0
    %v7275 = vpop.f32.mrb[0].mxu0
    %v7276 = vadd.f32 0.0, %v7275
    %v7277 = vpop.f32.mrb[0].mxu0
    %7278 = vmatprep.mubr.bf16.mxu0 0
    %7279 = vmatmul.mubr.bf16.gmra.mrb[0].mxu0 %v7236
    %v7280 = vpop.f32.mrb[0].mxu0
    %v7281 = vadd.f32 0.0, %v7280
    %v7282 = vpop.f32.mrb[0].mxu0
    %v7283 = vpop.f32.mrb[0].mxu0
    %v7284 = vadd.f32 0.0, %v7283
    %v7285 = vpop.f32.mrb[0].mxu0
    %7286 = vdwg.mxu0
    %v7287 = vadd.f32 %v7158, %v7273
    %v7288 = vadd.f32 %v7161, %v7276
    %v7289 = vadd.f32 %v7166, %v7281
    %v7290 = vadd.f32 %v7169, %v7284
    %s7291 = scalar_lea.vmem %s7, 48
    %v7292 = vld [vmem:[%s7291] sm:$0xff]
    %v7293 = vld [vmem:[%s7291 + $0x8] sm:$0xff]
    %v7295 = vsel %vm3898, %v7292, 0
    %v7298 = vsel %vm3898, %v7293, 0
    %7300 = vmatprep.subr.bf16.mxu0 0
    %7301 = vmatpush1.bf16.msra.mxu0 %v6941
    %7302 = vmatprep.subr.bf16.mxu0 0
    %7303 = vmatpush1.bf16.msra.mxu0 %v6942
    %7304 = vmatprep.subr.bf16.mxu0 0
    %7305 = vmatpush1.bf16.msra.mxu0 0
    %7306 = vmatprep.subr.bf16.mxu0 0
    %7307 = vmatpush1.bf16.msra.mxu0 0
    %7308 = vmatprep.subr.bf16.mxu0 0
    %7309 = vmatpush1.bf16.msra.mxu0 0
    %7310 = vmatprep.subr.bf16.mxu0 0
    %7311 = vmatpush1.bf16.msra.mxu0 0
    %7312 = vmatprep.subr.bf16.mxu0 0
    %7313 = vmatpush1.bf16.msra.mxu0 0
    %7314 = vmatprep.subr.bf16.mxu0 0
    %7315 = vmatpush1.bf16.msra.mxu0 0
    %7316 = vmatprep.subr.bf16.mxu0 0
    %7317 = vmatpush1.bf16.msra.mxu0 0
    %7318 = vmatprep.subr.bf16.mxu0 0
    %7319 = vmatpush1.bf16.msra.mxu0 0
    %7320 = vmatprep.subr.bf16.mxu0 0
    %7321 = vmatpush1.bf16.msra.mxu0 0
    %7322 = vmatprep.subr.bf16.mxu0 0
    %7323 = vmatpush1.bf16.msra.mxu0 0
    %7324 = vmatprep.subr.bf16.mxu0 0
    %7325 = vmatpush1.bf16.msra.mxu0 0
    %7326 = vmatprep.subr.bf16.mxu0 0
    %7327 = vmatpush1.bf16.msra.mxu0 0
    %7328 = vmatprep.subr.bf16.mxu0 0
    %7329 = vmatpush1.bf16.msra.mxu0 0
    %7330 = vmatprep.subr.bf16.mxu0 0
    %7331 = vmatpush1.bf16.msra.mxu0 0
    %7332 = vmatprep.mubr.bf16.mxu0 0
    %7333 = vmatmul.mubr.bf16.gmra.mrb[0].mxu0 %v7295
    %v7334 = vpop.f32.mrb[0].mxu0
    %v7335 = vadd.f32 0.0, %v7334
    %v7336 = vpop.f32.mrb[0].mxu0
    %v7337 = vpop.f32.mrb[0].mxu0
    %v7338 = vadd.f32 0.0, %v7337
    %v7339 = vpop.f32.mrb[0].mxu0
    %7340 = vmatprep.mubr.bf16.mxu0 0
    %7341 = vmatmul.mubr.bf16.gmra.mrb[0].mxu0 %v7298
    %v7342 = vpop.f32.mrb[0].mxu0
    %v7343 = vadd.f32 0.0, %v7342
    %v7344 = vpop.f32.mrb[0].mxu0
    %v7345 = vpop.f32.mrb[0].mxu0
    %v7346 = vadd.f32 0.0, %v7345
    %v7347 = vpop.f32.mrb[0].mxu0
    %7348 = vdwg.mxu0
    %v7349 = vpack.c.bf16 %v7338, %v7335
    %v7350 = vpack.c.bf16 %v7346, %v7343
    %v7352 = vsel %vm3898, %v7349, 0
    %v7355 = vsel %vm3898, %v7350, 0
    %7357 = vmatprep.subr.bf16.mxu0 0
    %7358 = vmatpush1.bf16.msra.mxu0 %v6929
    %7359 = vmatprep.subr.bf16.mxu0 0
    %7360 = vmatpush1.bf16.msra.mxu0 %v6930
    %7361 = vmatprep.subr.bf16.mxu0 0
    %7362 = vmatpush1.bf16.msra.mxu0 0
    %7363 = vmatprep.subr.bf16.mxu0 0
    %7364 = vmatpush1.bf16.msra.mxu0 0
    %7365 = vmatprep.subr.bf16.mxu0 0
    %7366 = vmatpush1.bf16.msra.mxu0 0
    %7367 = vmatprep.subr.bf16.mxu0 0
    %7368 = vmatpush1.bf16.msra.mxu0 0
    %7369 = vmatprep.subr.bf16.mxu0 0
    %7370 = vmatpush1.bf16.msra.mxu0 0
    %7371 = vmatprep.subr.bf16.mxu0 0
    %7372 = vmatpush1.bf16.msra.mxu0 0
    %7373 = vmatprep.subr.bf16.mxu0 0
    %7374 = vmatpush1.bf16.msra.mxu0 0
    %7375 = vmatprep.subr.bf16.mxu0 0
    %7376 = vmatpush1.bf16.msra.mxu0 0
    %7377 = vmatprep.subr.bf16.mxu0 0
    %7378 = vmatpush1.bf16.msra.mxu0 0
    %7379 = vmatprep.subr.bf16.mxu0 0
    %7380 = vmatpush1.bf16.msra.mxu0 0
    %7381 = vmatprep.subr.bf16.mxu0 0
    %7382 = vmatpush1.bf16.msra.mxu0 0
    %7383 = vmatprep.subr.bf16.mxu0 0
    %7384 = vmatpush1.bf16.msra.mxu0 0
    %7385 = vmatprep.subr.bf16.mxu0 0
    %7386 = vmatpush1.bf16.msra.mxu0 0
    %7387 = vmatprep.subr.bf16.mxu0 0
    %7388 = vmatpush1.bf16.msra.mxu0 0
    %7389 = vmatprep.mubr.bf16.mxu0 0
    %7390 = vmatmul.mubr.bf16.gmra.mrb[0].mxu0 %v7352
    %v7391 = vpop.f32.mrb[0].mxu0
    %v7392 = vadd.f32 0.0, %v7391
    %v7393 = vpop.f32.mrb[0].mxu0
    %v7394 = vpop.f32.mrb[0].mxu0
    %v7395 = vadd.f32 0.0, %v7394
    %v7396 = vpop.f32.mrb[0].mxu0
    %7397 = vmatprep.mubr.bf16.mxu0 0
    %7398 = vmatmul.mubr.bf16.gmra.mrb[0].mxu0 %v7355
    %v7399 = vpop.f32.mrb[0].mxu0
    %v7400 = vadd.f32 0.0, %v7399
    %v7401 = vpop.f32.mrb[0].mxu0
    %v7402 = vpop.f32.mrb[0].mxu0
    %v7403 = vadd.f32 0.0, %v7402
    %v7404 = vpop.f32.mrb[0].mxu0
    %7405 = vdwg.mxu0
    %v7406 = vadd.f32 %v7287, %v7392
    %v7407 = vadd.f32 %v7288, %v7395
    %v7408 = vadd.f32 %v7289, %v7400
    %v7409 = vadd.f32 %v7290, %v7403
    %s7410 = scalar_lea.vmem %s7, 64
    %v7411 = vld [vmem:[%s7410] sm:$0xff]
    %v7412 = vld [vmem:[%s7410 + $0x8] sm:$0xff]
    %v7414 = vsel %vm3898, %v7411, 0
    %v7417 = vsel %vm3898, %v7412, 0
    %7419 = vmatprep.subr.bf16.mxu0 0
    %7420 = vmatpush1.bf16.msra.mxu0 %v6941
    %7421 = vmatprep.subr.bf16.mxu0 0
    %7422 = vmatpush1.bf16.msra.mxu0 %v6942
    %7423 = vmatprep.subr.bf16.mxu0 0
    %7424 = vmatpush1.bf16.msra.mxu0 0
    %7425 = vmatprep.subr.bf16.mxu0 0
    %7426 = vmatpush1.bf16.msra.mxu0 0
    %7427 = vmatprep.subr.bf16.mxu0 0
    %7428 = vmatpush1.bf16.msra.mxu0 0
    %7429 = vmatprep.subr.bf16.mxu0 0
    %7430 = vmatpush1.bf16.msra.mxu0 0
    %7431 = vmatprep.subr.bf16.mxu0 0
    %7432 = vmatpush1.bf16.msra.mxu0 0
    %7433 = vmatprep.subr.bf16.mxu0 0
    %7434 = vmatpush1.bf16.msra.mxu0 0
    %7435 = vmatprep.subr.bf16.mxu0 0
    %7436 = vmatpush1.bf16.msra.mxu0 0
    %7437 = vmatprep.subr.bf16.mxu0 0
    %7438 = vmatpush1.bf16.msra.mxu0 0
    %7439 = vmatprep.subr.bf16.mxu0 0
    %7440 = vmatpush1.bf16.msra.mxu0 0
    %7441 = vmatprep.subr.bf16.mxu0 0
    %7442 = vmatpush1.bf16.msra.mxu0 0
    %7443 = vmatprep.subr.bf16.mxu0 0
    %7444 = vmatpush1.bf16.msra.mxu0 0
    %7445 = vmatprep.subr.bf16.mxu0 0
    %7446 = vmatpush1.bf16.msra.mxu0 0
    %7447 = vmatprep.subr.bf16.mxu0 0
    %7448 = vmatpush1.bf16.msra.mxu0 0
    %7449 = vmatprep.subr.bf16.mxu0 0
    %7450 = vmatpush1.bf16.msra.mxu0 0
    %7451 = vmatprep.mubr.bf16.mxu0 0
    %7452 = vmatmul.mubr.bf16.gmra.mrb[0].mxu0 %v7414
    %v7453 = vpop.f32.mrb[0].mxu0
    %v7454 = vadd.f32 0.0, %v7453
    %v7455 = vpop.f32.mrb[0].mxu0
    %v7456 = vpop.f32.mrb[0].mxu0
    %v7457 = vadd.f32 0.0, %v7456
    %v7458 = vpop.f32.mrb[0].mxu0
    %7459 = vmatprep.mubr.bf16.mxu0 0
    %7460 = vmatmul.mubr.bf16.gmra.mrb[0].mxu0 %v7417
    %v7461 = vpop.f32.mrb[0].mxu0
    %v7462 = vadd.f32 0.0, %v7461
    %v7463 = vpop.f32.mrb[0].mxu0
    %v7464 = vpop.f32.mrb[0].mxu0
    %v7465 = vadd.f32 0.0, %v7464
    %v7466 = vpop.f32.mrb[0].mxu0
    %7467 = vdwg.mxu0
    %v7468 = vpack.c.bf16 %v7457, %v7454
    %v7469 = vpack.c.bf16 %v7465, %v7462
    %v7471 = vsel %vm3898, %v7468, 0
    %v7474 = vsel %vm3898, %v7469, 0
    %7476 = vmatprep.subr.bf16.mxu0 0
    %7477 = vmatpush1.bf16.msra.mxu0 %v6931
    %7478 = vmatprep.subr.bf16.mxu0 0
    %7479 = vmatpush1.bf16.msra.mxu0 %v6932
    %7480 = vmatprep.subr.bf16.mxu0 0
    %7481 = vmatpush1.bf16.msra.mxu0 0
    %7482 = vmatprep.subr.bf16.mxu0 0
    %7483 = vmatpush1.bf16.msra.mxu0 0
    %7484 = vmatprep.subr.bf16.mxu0 0
    %7485 = vmatpush1.bf16.msra.mxu0 0
    %7486 = vmatprep.subr.bf16.mxu0 0
    %7487 = vmatpush1.bf16.msra.mxu0 0
    %7488 = vmatprep.subr.bf16.mxu0 0
    %7489 = vmatpush1.bf16.msra.mxu0 0
    %7490 = vmatprep.subr.bf16.mxu0 0
    %7491 = vmatpush1.bf16.msra.mxu0 0
    %7492 = vmatprep.subr.bf16.mxu0 0
    %7493 = vmatpush1.bf16.msra.mxu0 0
    %7494 = vmatprep.subr.bf16.mxu0 0
    %7495 = vmatpush1.bf16.msra.mxu0 0
    %7496 = vmatprep.subr.bf16.mxu0 0
    %7497 = vmatpush1.bf16.msra.mxu0 0
    %7498 = vmatprep.subr.bf16.mxu0 0
    %7499 = vmatpush1.bf16.msra.mxu0 0
    %7500 = vmatprep.subr.bf16.mxu0 0
    %7501 = vmatpush1.bf16.msra.mxu0 0
    %7502 = vmatprep.subr.bf16.mxu0 0
    %7503 = vmatpush1.bf16.msra.mxu0 0
    %7504 = vmatprep.subr.bf16.mxu0 0
    %7505 = vmatpush1.bf16.msra.mxu0 0
    %7506 = vmatprep.subr.bf16.mxu0 0
    %7507 = vmatpush1.bf16.msra.mxu0 0
    %7508 = vmatprep.mubr.bf16.mxu0 0
    %7509 = vmatmul.mubr.bf16.gmra.mrb[0].mxu0 %v7471
    %v7510 = vpop.f32.mrb[0].mxu0
    %v7511 = vadd.f32 0.0, %v7510
    %v7512 = vpop.f32.mrb[0].mxu0
    %v7513 = vpop.f32.mrb[0].mxu0
    %v7514 = vadd.f32 0.0, %v7513
    %v7515 = vpop.f32.mrb[0].mxu0
    %7516 = vmatprep.mubr.bf16.mxu0 0
    %7517 = vmatmul.mubr.bf16.gmra.mrb[0].mxu0 %v7474
    %v7518 = vpop.f32.mrb[0].mxu0
    %v7519 = vadd.f32 0.0, %v7518
    %v7520 = vpop.f32.mrb[0].mxu0
    %v7521 = vpop.f32.mrb[0].mxu0
    %v7522 = vadd.f32 0.0, %v7521
    %v7523 = vpop.f32.mrb[0].mxu0
    %7524 = vdwg.mxu0
    %v7525 = vadd.f32 %v7406, %v7511
    %v7526 = vadd.f32 %v7407, %v7514
    %v7527 = vadd.f32 %v7408, %v7519
    %v7528 = vadd.f32 %v7409, %v7522
    %s7529 = scalar_lea.vmem %s7, 80
    %v7530 = vld [vmem:[%s7529] sm:$0xff]
    %v7531 = vld [vmem:[%s7529 + $0x8] sm:$0xff]
    %v7533 = vsel %vm3898, %v7530, 0
    %v7536 = vsel %vm3898, %v7531, 0
    %7538 = vmatprep.subr.bf16.mxu0 0
    %7539 = vmatpush1.bf16.msra.mxu0 %v6941
    %7540 = vmatprep.subr.bf16.mxu0 0
    %7541 = vmatpush1.bf16.msra.mxu0 %v6942
    %7542 = vmatprep.subr.bf16.mxu0 0
    %7543 = vmatpush1.bf16.msra.mxu0 0
    %7544 = vmatprep.subr.bf16.mxu0 0
    %7545 = vmatpush1.bf16.msra.mxu0 0
    %7546 = vmatprep.subr.bf16.mxu0 0
    %7547 = vmatpush1.bf16.msra.mxu0 0
    %7548 = vmatprep.subr.bf16.mxu0 0
    %7549 = vmatpush1.bf16.msra.mxu0 0
    %7550 = vmatprep.subr.bf16.mxu0 0
    %7551 = vmatpush1.bf16.msra.mxu0 0
    %7552 = vmatprep.subr.bf16.mxu0 0
    %7553 = vmatpush1.bf16.msra.mxu0 0
    %7554 = vmatprep.subr.bf16.mxu0 0
    %7555 = vmatpush1.bf16.msra.mxu0 0
    %7556 = vmatprep.subr.bf16.mxu0 0
    %7557 = vmatpush1.bf16.msra.mxu0 0
    %7558 = vmatprep.subr.bf16.mxu0 0
    %7559 = vmatpush1.bf16.msra.mxu0 0
    %7560 = vmatprep.subr.bf16.mxu0 0
    %7561 = vmatpush1.bf16.msra.mxu0 0
    %7562 = vmatprep.subr.bf16.mxu0 0
    %7563 = vmatpush1.bf16.msra.mxu0 0
    %7564 = vmatprep.subr.bf16.mxu0 0
    %7565 = vmatpush1.bf16.msra.mxu0 0
    %7566 = vmatprep.subr.bf16.mxu0 0
    %7567 = vmatpush1.bf16.msra.mxu0 0
    %7568 = vmatprep.subr.bf16.mxu0 0
    %7569 = vmatpush1.bf16.msra.mxu0 0
    %7570 = vmatprep.mubr.bf16.mxu0 0
    %7571 = vmatmul.mubr.bf16.gmra.mrb[0].mxu0 %v7533
    %v7572 = vpop.f32.mrb[0].mxu0
    %v7573 = vadd.f32 0.0, %v7572
    %v7574 = vpop.f32.mrb[0].mxu0
    %v7575 = vpop.f32.mrb[0].mxu0
    %v7576 = vadd.f32 0.0, %v7575
    %v7577 = vpop.f32.mrb[0].mxu0
    %7578 = vmatprep.mubr.bf16.mxu0 0
    %7579 = vmatmul.mubr.bf16.gmra.mrb[0].mxu0 %v7536
    %v7580 = vpop.f32.mrb[0].mxu0
    %v7581 = vadd.f32 0.0, %v7580
    %v7582 = vpop.f32.mrb[0].mxu0
    %v7583 = vpop.f32.mrb[0].mxu0
    %v7584 = vadd.f32 0.0, %v7583
    %v7585 = vpop.f32.mrb[0].mxu0
    %7586 = vdwg.mxu0
    %v7587 = vpack.c.bf16 %v7576, %v7573
    %v7588 = vpack.c.bf16 %v7584, %v7581
    %v7590 = vsel %vm3898, %v7587, 0
    %v7593 = vsel %vm3898, %v7588, 0
    %7595 = vmatprep.subr.bf16.mxu0 0
    %7596 = vmatpush1.bf16.msra.mxu0 %v6933
    %7597 = vmatprep.subr.bf16.mxu0 0
    %7598 = vmatpush1.bf16.msra.mxu0 %v6934
    %7599 = vmatprep.subr.bf16.mxu0 0
    %7600 = vmatpush1.bf16.msra.mxu0 0
    %7601 = vmatprep.subr.bf16.mxu0 0
    %7602 = vmatpush1.bf16.msra.mxu0 0
    %7603 = vmatprep.subr.bf16.mxu0 0
    %7604 = vmatpush1.bf16.msra.mxu0 0
    %7605 = vmatprep.subr.bf16.mxu0 0
    %7606 = vmatpush1.bf16.msra.mxu0 0
    %7607 = vmatprep.subr.bf16.mxu0 0
    %7608 = vmatpush1.bf16.msra.mxu0 0
    %7609 = vmatprep.subr.bf16.mxu0 0
    %7610 = vmatpush1.bf16.msra.mxu0 0
    %7611 = vmatprep.subr.bf16.mxu0 0
    %7612 = vmatpush1.bf16.msra.mxu0 0
    %7613 = vmatprep.subr.bf16.mxu0 0
    %7614 = vmatpush1.bf16.msra.mxu0 0
    %7615 = vmatprep.subr.bf16.mxu0 0
    %7616 = vmatpush1.bf16.msra.mxu0 0
    %7617 = vmatprep.subr.bf16.mxu0 0
    %7618 = vmatpush1.bf16.msra.mxu0 0
    %7619 = vmatprep.subr.bf16.mxu0 0
    %7620 = vmatpush1.bf16.msra.mxu0 0
    %7621 = vmatprep.subr.bf16.mxu0 0
    %7622 = vmatpush1.bf16.msra.mxu0 0
    %7623 = vmatprep.subr.bf16.mxu0 0
    %7624 = vmatpush1.bf16.msra.mxu0 0
    %7625 = vmatprep.subr.bf16.mxu0 0
    %7626 = vmatpush1.bf16.msra.mxu0 0
    %7627 = vmatprep.mubr.bf16.mxu0 0
    %7628 = vmatmul.mubr.bf16.gmra.mrb[0].mxu0 %v7590
    %v7629 = vpop.f32.mrb[0].mxu0
    %v7630 = vadd.f32 0.0, %v7629
    %v7631 = vpop.f32.mrb[0].mxu0
    %v7632 = vpop.f32.mrb[0].mxu0
    %v7633 = vadd.f32 0.0, %v7632
    %v7634 = vpop.f32.mrb[0].mxu0
    %7635 = vmatprep.mubr.bf16.mxu0 0
    %7636 = vmatmul.mubr.bf16.gmra.mrb[0].mxu0 %v7593
    %v7637 = vpop.f32.mrb[0].mxu0
    %v7638 = vadd.f32 0.0, %v7637
    %v7639 = vpop.f32.mrb[0].mxu0
    %v7640 = vpop.f32.mrb[0].mxu0
    %v7641 = vadd.f32 0.0, %v7640
    %v7642 = vpop.f32.mrb[0].mxu0
    %7643 = vdwg.mxu0
    %v7644 = vadd.f32 %v7525, %v7630
    %v7645 = vadd.f32 %v7526, %v7633
    %v7646 = vadd.f32 %v7527, %v7638
    %v7647 = vadd.f32 %v7528, %v7641
    %s7648 = scalar_lea.vmem %s7, 96
    %v7649 = vld [vmem:[%s7648] sm:$0xff]
    %v7650 = vld [vmem:[%s7648 + $0x8] sm:$0xff]
    %v7652 = vsel %vm3898, %v7649, 0
    %v7655 = vsel %vm3898, %v7650, 0
    %7657 = vmatprep.subr.bf16.mxu0 0
    %7658 = vmatpush1.bf16.msra.mxu0 %v6941
    %7659 = vmatprep.subr.bf16.mxu0 0
    %7660 = vmatpush1.bf16.msra.mxu0 %v6942
    %7661 = vmatprep.subr.bf16.mxu0 0
    %7662 = vmatpush1.bf16.msra.mxu0 0
    %7663 = vmatprep.subr.bf16.mxu0 0
    %7664 = vmatpush1.bf16.msra.mxu0 0
    %7665 = vmatprep.subr.bf16.mxu0 0
    %7666 = vmatpush1.bf16.msra.mxu0 0
    %7667 = vmatprep.subr.bf16.mxu0 0
    %7668 = vmatpush1.bf16.msra.mxu0 0
    %7669 = vmatprep.subr.bf16.mxu0 0
    %7670 = vmatpush1.bf16.msra.mxu0 0
    %7671 = vmatprep.subr.bf16.mxu0 0
    %7672 = vmatpush1.bf16.msra.mxu0 0
    %7673 = vmatprep.subr.bf16.mxu0 0
    %7674 = vmatpush1.bf16.msra.mxu0 0
    %7675 = vmatprep.subr.bf16.mxu0 0
    %7676 = vmatpush1.bf16.msra.mxu0 0
    %7677 = vmatprep.subr.bf16.mxu0 0
    %7678 = vmatpush1.bf16.msra.mxu0 0
    %7679 = vmatprep.subr.bf16.mxu0 0
    %7680 = vmatpush1.bf16.msra.mxu0 0
    %7681 = vmatprep.subr.bf16.mxu0 0
    %7682 = vmatpush1.bf16.msra.mxu0 0
    %7683 = vmatprep.subr.bf16.mxu0 0
    %7684 = vmatpush1.bf16.msra.mxu0 0
    %7685 = vmatprep.subr.bf16.mxu0 0
    %7686 = vmatpush1.bf16.msra.mxu0 0
    %7687 = vmatprep.subr.bf16.mxu0 0
    %7688 = vmatpush1.bf16.msra.mxu0 0
    %7689 = vmatprep.mubr.bf16.mxu0 0
    %7690 = vmatmul.mubr.bf16.gmra.mrb[0].mxu0 %v7652
    %v7691 = vpop.f32.mrb[0].mxu0
    %v7692 = vadd.f32 0.0, %v7691
    %v7693 = vpop.f32.mrb[0].mxu0
    %v7694 = vpop.f32.mrb[0].mxu0
    %v7695 = vadd.f32 0.0, %v7694
    %v7696 = vpop.f32.mrb[0].mxu0
    %7697 = vmatprep.mubr.bf16.mxu0 0
    %7698 = vmatmul.mubr.bf16.gmra.mrb[0].mxu0 %v7655
    %v7699 = vpop.f32.mrb[0].mxu0
    %v7700 = vadd.f32 0.0, %v7699
    %v7701 = vpop.f32.mrb[0].mxu0
    %v7702 = vpop.f32.mrb[0].mxu0
    %v7703 = vadd.f32 0.0, %v7702
    %v7704 = vpop.f32.mrb[0].mxu0
    %7705 = vdwg.mxu0
    %v7706 = vpack.c.bf16 %v7695, %v7692
    %v7707 = vpack.c.bf16 %v7703, %v7700
    %v7709 = vsel %vm3898, %v7706, 0
    %v7712 = vsel %vm3898, %v7707, 0
    %7714 = vmatprep.subr.bf16.mxu0 0
    %7715 = vmatpush1.bf16.msra.mxu0 %v6935
    %7716 = vmatprep.subr.bf16.mxu0 0
    %7717 = vmatpush1.bf16.msra.mxu0 %v6936
    %7718 = vmatprep.subr.bf16.mxu0 0
    %7719 = vmatpush1.bf16.msra.mxu0 0
    %7720 = vmatprep.subr.bf16.mxu0 0
    %7721 = vmatpush1.bf16.msra.mxu0 0
    %7722 = vmatprep.subr.bf16.mxu0 0
    %7723 = vmatpush1.bf16.msra.mxu0 0
    %7724 = vmatprep.subr.bf16.mxu0 0
    %7725 = vmatpush1.bf16.msra.mxu0 0
    %7726 = vmatprep.subr.bf16.mxu0 0
    %7727 = vmatpush1.bf16.msra.mxu0 0
    %7728 = vmatprep.subr.bf16.mxu0 0
    %7729 = vmatpush1.bf16.msra.mxu0 0
    %7730 = vmatprep.subr.bf16.mxu0 0
    %7731 = vmatpush1.bf16.msra.mxu0 0
    %7732 = vmatprep.subr.bf16.mxu0 0
    %7733 = vmatpush1.bf16.msra.mxu0 0
    %7734 = vmatprep.subr.bf16.mxu0 0
    %7735 = vmatpush1.bf16.msra.mxu0 0
    %7736 = vmatprep.subr.bf16.mxu0 0
    %7737 = vmatpush1.bf16.msra.mxu0 0
    %7738 = vmatprep.subr.bf16.mxu0 0
    %7739 = vmatpush1.bf16.msra.mxu0 0
    %7740 = vmatprep.subr.bf16.mxu0 0
    %7741 = vmatpush1.bf16.msra.mxu0 0
    %7742 = vmatprep.subr.bf16.mxu0 0
    %7743 = vmatpush1.bf16.msra.mxu0 0
    %7744 = vmatprep.subr.bf16.mxu0 0
    %7745 = vmatpush1.bf16.msra.mxu0 0
    %7746 = vmatprep.mubr.bf16.mxu0 0
    %7747 = vmatmul.mubr.bf16.gmra.mrb[0].mxu0 %v7709
    %v7748 = vpop.f32.mrb[0].mxu0
    %v7749 = vadd.f32 0.0, %v7748
    %v7750 = vpop.f32.mrb[0].mxu0
    %v7751 = vpop.f32.mrb[0].mxu0
    %v7752 = vadd.f32 0.0, %v7751
    %v7753 = vpop.f32.mrb[0].mxu0
    %7754 = vmatprep.mubr.bf16.mxu0 0
    %7755 = vmatmul.mubr.bf16.gmra.mrb[0].mxu0 %v7712
    %v7756 = vpop.f32.mrb[0].mxu0
    %v7757 = vadd.f32 0.0, %v7756
    %v7758 = vpop.f32.mrb[0].mxu0
    %v7759 = vpop.f32.mrb[0].mxu0
    %v7760 = vadd.f32 0.0, %v7759
    %v7761 = vpop.f32.mrb[0].mxu0
    %7762 = vdwg.mxu0
    %v7763 = vadd.f32 %v7644, %v7749
    %v7764 = vadd.f32 %v7645, %v7752
    %v7765 = vadd.f32 %v7646, %v7757
    %v7766 = vadd.f32 %v7647, %v7760
    %s7767 = scalar_lea.vmem %s7, 112
    %v7768 = vld [vmem:[%s7767] sm:$0xff]
    %v7769 = vld [vmem:[%s7767 + $0x8] sm:$0xff]
    %v7771 = vsel %vm3898, %v7768, 0
    %v7774 = vsel %vm3898, %v7769, 0
    %7776 = vmatprep.subr.bf16.mxu0 0
    %7777 = vmatpush1.bf16.msra.mxu0 %v6941
    %7778 = vmatprep.subr.bf16.mxu0 0
    %7779 = vmatpush1.bf16.msra.mxu0 %v6942
    %7780 = vmatprep.subr.bf16.mxu0 0
    %7781 = vmatpush1.bf16.msra.mxu0 0
    %7782 = vmatprep.subr.bf16.mxu0 0
    %7783 = vmatpush1.bf16.msra.mxu0 0
    %7784 = vmatprep.subr.bf16.mxu0 0
    %7785 = vmatpush1.bf16.msra.mxu0 0
    %7786 = vmatprep.subr.bf16.mxu0 0
    %7787 = vmatpush1.bf16.msra.mxu0 0
    %7788 = vmatprep.subr.bf16.mxu0 0
    %7789 = vmatpush1.bf16.msra.mxu0 0
    %7790 = vmatprep.subr.bf16.mxu0 0
    %7791 = vmatpush1.bf16.msra.mxu0 0
    %7792 = vmatprep.subr.bf16.mxu0 0
    %7793 = vmatpush1.bf16.msra.mxu0 0
    %7794 = vmatprep.subr.bf16.mxu0 0
    %7795 = vmatpush1.bf16.msra.mxu0 0
    %7796 = vmatprep.subr.bf16.mxu0 0
    %7797 = vmatpush1.bf16.msra.mxu0 0
    %7798 = vmatprep.subr.bf16.mxu0 0
    %7799 = vmatpush1.bf16.msra.mxu0 0
    %7800 = vmatprep.subr.bf16.mxu0 0
    %7801 = vmatpush1.bf16.msra.mxu0 0
    %7802 = vmatprep.subr.bf16.mxu0 0
    %7803 = vmatpush1.bf16.msra.mxu0 0
    %7804 = vmatprep.subr.bf16.mxu0 0
    %7805 = vmatpush1.bf16.msra.mxu0 0
    %7806 = vmatprep.subr.bf16.mxu0 0
    %7807 = vmatpush1.bf16.msra.mxu0 0
    %7808 = vmatprep.mubr.bf16.mxu0 0
    %7809 = vmatmul.mubr.bf16.gmra.mrb[0].mxu0 %v7771
    %v7810 = vpop.f32.mrb[0].mxu0
    %v7811 = vadd.f32 0.0, %v7810
    %v7812 = vpop.f32.mrb[0].mxu0
    %v7813 = vpop.f32.mrb[0].mxu0
    %v7814 = vadd.f32 0.0, %v7813
    %v7815 = vpop.f32.mrb[0].mxu0
    %7816 = vmatprep.mubr.bf16.mxu0 0
    %7817 = vmatmul.mubr.bf16.gmra.mrb[0].mxu0 %v7774
    %v7818 = vpop.f32.mrb[0].mxu0
    %v7819 = vadd.f32 0.0, %v7818
    %v7820 = vpop.f32.mrb[0].mxu0
    %v7821 = vpop.f32.mrb[0].mxu0
    %v7822 = vadd.f32 0.0, %v7821
    %v7823 = vpop.f32.mrb[0].mxu0
    %7824 = vdwg.mxu0
    %v7825 = vpack.c.bf16 %v7814, %v7811
    %v7826 = vpack.c.bf16 %v7822, %v7819
    %v7828 = vsel %vm3898, %v7825, 0
    %v7831 = vsel %vm3898, %v7826, 0
    %7833 = vmatprep.subr.bf16.mxu0 0
    %7834 = vmatpush1.bf16.msra.mxu0 %v6937
    %7835 = vmatprep.subr.bf16.mxu0 0
    %7836 = vmatpush1.bf16.msra.mxu0 %v6938
    %7837 = vmatprep.subr.bf16.mxu0 0
    %7838 = vmatpush1.bf16.msra.mxu0 0
    %7839 = vmatprep.subr.bf16.mxu0 0
    %7840 = vmatpush1.bf16.msra.mxu0 0
    %7841 = vmatprep.subr.bf16.mxu0 0
    %7842 = vmatpush1.bf16.msra.mxu0 0
    %7843 = vmatprep.subr.bf16.mxu0 0
    %7844 = vmatpush1.bf16.msra.mxu0 0
    %7845 = vmatprep.subr.bf16.mxu0 0
    %7846 = vmatpush1.bf16.msra.mxu0 0
    %7847 = vmatprep.subr.bf16.mxu0 0
    %7848 = vmatpush1.bf16.msra.mxu0 0
    %7849 = vmatprep.subr.bf16.mxu0 0
    %7850 = vmatpush1.bf16.msra.mxu0 0
    %7851 = vmatprep.subr.bf16.mxu0 0
    %7852 = vmatpush1.bf16.msra.mxu0 0
    %7853 = vmatprep.subr.bf16.mxu0 0
    %7854 = vmatpush1.bf16.msra.mxu0 0
    %7855 = vmatprep.subr.bf16.mxu0 0
    %7856 = vmatpush1.bf16.msra.mxu0 0
    %7857 = vmatprep.subr.bf16.mxu0 0
    %7858 = vmatpush1.bf16.msra.mxu0 0
    %7859 = vmatprep.subr.bf16.mxu0 0
    %7860 = vmatpush1.bf16.msra.mxu0 0
    %7861 = vmatprep.subr.bf16.mxu0 0
    %7862 = vmatpush1.bf16.msra.mxu0 0
    %7863 = vmatprep.subr.bf16.mxu0 0
    %7864 = vmatpush1.bf16.msra.mxu0 0
    %7865 = vmatprep.mubr.bf16.mxu0 0
    %7866 = vmatmul.mubr.bf16.gmra.mrb[0].mxu0 %v7828
    %v7867 = vpop.f32.mrb[0].mxu0
    %v7868 = vadd.f32 0.0, %v7867
    %v7869 = vpop.f32.mrb[0].mxu0
    %v7870 = vpop.f32.mrb[0].mxu0
    %v7871 = vadd.f32 0.0, %v7870
    %v7872 = vpop.f32.mrb[0].mxu0
    %7873 = vmatprep.mubr.bf16.mxu0 0
    %7874 = vmatmul.mubr.bf16.gmra.mrb[0].mxu0 %v7831
    %v7875 = vpop.f32.mrb[0].mxu0
    %v7876 = vadd.f32 0.0, %v7875
    %v7877 = vpop.f32.mrb[0].mxu0
    %v7878 = vpop.f32.mrb[0].mxu0
    %v7879 = vadd.f32 0.0, %v7878
    %v7880 = vpop.f32.mrb[0].mxu0
    %7881 = vdwg.mxu0
    %v7882 = vadd.f32 %v7763, %v7868
    %v7883 = vadd.f32 %v7764, %v7871
    %v7884 = vadd.f32 %v7765, %v7876
    %v7885 = vadd.f32 %v7766, %v7879
    %s7886 = scalar_lea.vmem %s7, 128
    %v7887 = vld [vmem:[%s7886] sm:$0xff]
    %v7888 = vld [vmem:[%s7886 + $0x8] sm:$0xff]
    %v7890 = vsel %vm3898, %v7887, 0
    %v7893 = vsel %vm3898, %v7888, 0
    %7895 = vmatprep.subr.bf16.mxu0 0
    %7896 = vmatpush1.bf16.msra.mxu0 %v6941
    %7897 = vmatprep.subr.bf16.mxu0 0
    %7898 = vmatpush1.bf16.msra.mxu0 %v6942
    %7899 = vmatprep.subr.bf16.mxu0 0
    %7900 = vmatpush1.bf16.msra.mxu0 0
    %7901 = vmatprep.subr.bf16.mxu0 0
    %7902 = vmatpush1.bf16.msra.mxu0 0
    %7903 = vmatprep.subr.bf16.mxu0 0
    %7904 = vmatpush1.bf16.msra.mxu0 0
    %7905 = vmatprep.subr.bf16.mxu0 0
    %7906 = vmatpush1.bf16.msra.mxu0 0
    %7907 = vmatprep.subr.bf16.mxu0 0
    %7908 = vmatpush1.bf16.msra.mxu0 0
    %7909 = vmatprep.subr.bf16.mxu0 0
    %7910 = vmatpush1.bf16.msra.mxu0 0
    %7911 = vmatprep.subr.bf16.mxu0 0
    %7912 = vmatpush1.bf16.msra.mxu0 0
    %7913 = vmatprep.subr.bf16.mxu0 0
    %7914 = vmatpush1.bf16.msra.mxu0 0
    %7915 = vmatprep.subr.bf16.mxu0 0
    %7916 = vmatpush1.bf16.msra.mxu0 0
    %7917 = vmatprep.subr.bf16.mxu0 0
    %7918 = vmatpush1.bf16.msra.mxu0 0
    %7919 = vmatprep.subr.bf16.mxu0 0
    %7920 = vmatpush1.bf16.msra.mxu0 0
    %7921 = vmatprep.subr.bf16.mxu0 0
    %7922 = vmatpush1.bf16.msra.mxu0 0
    %7923 = vmatprep.subr.bf16.mxu0 0
    %7924 = vmatpush1.bf16.msra.mxu0 0
    %7925 = vmatprep.subr.bf16.mxu0 0
    %7926 = vmatpush1.bf16.msra.mxu0 0
    %7927 = vmatprep.mubr.bf16.mxu0 0
    %7928 = vmatmul.mubr.bf16.gmra.mrb[0].mxu0 %v7890
    %v7929 = vpop.f32.mrb[0].mxu0
    %v7930 = vadd.f32 0.0, %v7929
    %v7931 = vpop.f32.mrb[0].mxu0
    %v7932 = vpop.f32.mrb[0].mxu0
    %v7933 = vadd.f32 0.0, %v7932
    %v7934 = vpop.f32.mrb[0].mxu0
    %7935 = vmatprep.mubr.bf16.mxu0 0
    %7936 = vmatmul.mubr.bf16.gmra.mrb[0].mxu0 %v7893
    %v7937 = vpop.f32.mrb[0].mxu0
    %v7938 = vadd.f32 0.0, %v7937
    %v7939 = vpop.f32.mrb[0].mxu0
    %v7940 = vpop.f32.mrb[0].mxu0
    %v7941 = vadd.f32 0.0, %v7940
    %v7942 = vpop.f32.mrb[0].mxu0
    %7943 = vdwg.mxu0
    %v7944 = vpack.c.bf16 %v7933, %v7930
    %v7945 = vpack.c.bf16 %v7941, %v7938
    %v7947 = vsel %vm3898, %v7944, 0
    %v7950 = vsel %vm3898, %v7945, 0
    %7952 = vmatprep.subr.bf16.mxu0 0
    %7953 = vmatpush1.bf16.msra.mxu0 %v6939
    %7954 = vmatprep.subr.bf16.mxu0 0
    %7955 = vmatpush1.bf16.msra.mxu0 %v6940
    %7956 = vmatprep.subr.bf16.mxu0 0
    %7957 = vmatpush1.bf16.msra.mxu0 0
    %7958 = vmatprep.subr.bf16.mxu0 0
    %7959 = vmatpush1.bf16.msra.mxu0 0
    %7960 = vmatprep.subr.bf16.mxu0 0
    %7961 = vmatpush1.bf16.msra.mxu0 0
    %7962 = vmatprep.subr.bf16.mxu0 0
    %7963 = vmatpush1.bf16.msra.mxu0 0
    %7964 = vmatprep.subr.bf16.mxu0 0
    %7965 = vmatpush1.bf16.msra.mxu0 0
    %7966 = vmatprep.subr.bf16.mxu0 0
    %7967 = vmatpush1.bf16.msra.mxu0 0
    %7968 = vmatprep.subr.bf16.mxu0 0
    %7969 = vmatpush1.bf16.msra.mxu0 0
    %7970 = vmatprep.subr.bf16.mxu0 0
    %7971 = vmatpush1.bf16.msra.mxu0 0
    %7972 = vmatprep.subr.bf16.mxu0 0
    %7973 = vmatpush1.bf16.msra.mxu0 0
    %7974 = vmatprep.subr.bf16.mxu0 0
    %7975 = vmatpush1.bf16.msra.mxu0 0
    %7976 = vmatprep.subr.bf16.mxu0 0
    %7977 = vmatpush1.bf16.msra.mxu0 0
    %7978 = vmatprep.subr.bf16.mxu0 0
    %7979 = vmatpush1.bf16.msra.mxu0 0
    %7980 = vmatprep.subr.bf16.mxu0 0
    %7981 = vmatpush1.bf16.msra.mxu0 0
    %7982 = vmatprep.subr.bf16.mxu0 0
    %7983 = vmatpush1.bf16.msra.mxu0 0
    %7984 = vmatprep.mubr.bf16.mxu0 0
    %7985 = vmatmul.mubr.bf16.gmra.mrb[0].mxu0 %v7947
    %v7986 = vpop.f32.mrb[0].mxu0
    %v7987 = vadd.f32 0.0, %v7986
    %v7988 = vpop.f32.mrb[0].mxu0
    %v7989 = vpop.f32.mrb[0].mxu0
    %v7990 = vadd.f32 0.0, %v7989
    %v7991 = vpop.f32.mrb[0].mxu0
    %7992 = vmatprep.mubr.bf16.mxu0 0
    %7993 = vmatmul.mubr.bf16.gmra.mrb[0].mxu0 %v7950
    %v7994 = vpop.f32.mrb[0].mxu0
    %v7995 = vadd.f32 0.0, %v7994
    %v7996 = vpop.f32.mrb[0].mxu0
    %v7997 = vpop.f32.mrb[0].mxu0
    %v7998 = vadd.f32 0.0, %v7997
    %v7999 = vpop.f32.mrb[0].mxu0
    %8000 = vdwg.mxu0
    %v8001 = vadd.f32 %v7882, %v7987
    %v8002 = vadd.f32 %v7883, %v7990
    %v8003 = vadd.f32 %v7884, %v7995
    %v8004 = vadd.f32 %v7885, %v7998
    %v8005 = vsel %vm3898, %v8001, 0.0
    %v8006 = vsel %vm3898, %v8002, 0.0
    %v8007 = vadd.f32 %v8005, %v8006
    %v8008 = vsel %vm3898, %v8003, 0.0
    %v8009 = vadd.f32 %v8007, %v8008
    %v8010 = vsel %vm3898, %v8004, 0.0
    %v8011 = vadd.f32 %v8009, %v8010
    %v8012 = vrot.slane %v8011, 4
    %v8013 = vadd.f32 %v8011, %v8012
    %v8014 = vrot.slane %v8013, 2
    %v8015 = vadd.f32 %v8013, %v8014
    %v8016 = vrot.slane %v8015, 1
    %v8017 = vadd.f32 %v8015, %v8016
    %v8018 = vrcp.pop 32.0
    %v8019 = vmul.f32 %v8017, %v8018
    %v8020 = vsub.f32 %v8001, %v8019
    %v8021 = vsub.f32 %v8002, %v8019
    %v8022 = vsub.f32 %v8003, %v8019
    %v8023 = vsub.f32 %v8004, %v8019
    %v8024 = vmul.f32 %v8020, %v8020
    %v8025 = vmul.f32 %v8021, %v8021
    %v8026 = vmul.f32 %v8022, %v8022
    %v8027 = vmul.f32 %v8023, %v8023
    %v8028 = vsel %vm3898, %v8024, 0.0
    %v8029 = vsel %vm3898, %v8025, 0.0
    %v8030 = vadd.f32 %v8028, %v8029
    %v8031 = vsel %vm3898, %v8026, 0.0
    %v8032 = vadd.f32 %v8030, %v8031
    %v8033 = vsel %vm3898, %v8027, 0.0
    %v8034 = vadd.f32 %v8032, %v8033
    %v8035 = vrot.slane %v8034, 4
    %v8036 = vadd.f32 %v8034, %v8035
    %v8037 = vrot.slane %v8036, 2
    %v8038 = vadd.f32 %v8036, %v8037
    %v8039 = vrot.slane %v8038, 1
    %v8040 = vadd.f32 %v8038, %v8039
    %v8041 = vmul.f32 %v8040, %v8018
    %v8042 = vadd.f32 %v8041, 1e-05
    %v8043 = vrsqrt.pop %v8042
    %v8044 = vmul.f32 %v3264, %v8043
    %v8045 = vmul.f32 %v8019, %v8044
    %v8046 = vsub.f32 %v3265, %v8045
    %v8047 = vlaneseq
    %v8048 = vshrl.u32 %v8047, 7
    %v8049 = vsub.s32 2, %v8048
    %v8050 = vrot.slane %v8044, %v8049
    %v8051 = vmul.f32 %v8001, %v8050
    %v8052 = vmul.f32 %v8002, %v8050
    %v8053 = vmul.f32 %v8003, %v8050
    %v8054 = vmul.f32 %v8004, %v8050
    %v8055 = vlaneseq
    %v8056 = vshrl.u32 %v8055, 7
    %v8057 = vsub.s32 2, %v8056
    %v8058 = vrot.slane %v8046, %v8057
    %v8059 = vadd.f32 %v8051, %v8058
    %v8060 = vadd.f32 %v8052, %v8058
    %v8061 = vadd.f32 %v8053, %v8058
    %v8062 = vadd.f32 %v8054, %v8058
    %v8063 = vmax.f32 %v8059, %v8060
    %v8064 = vmax.f32 %v8061, %v8062
    %v8065 = vmax.f32 %v8063, %v8064
    %v8066 = vmax.f32 %v8065, 0.0
    %v8067 = vld [vmem:[%s3] sm:$0xff]
    %v8068 = vld [vmem:[%s3 + $0x8] sm:$0xff]
    %v8069 = vld [vmem:[%s3 + $0x10] sm:$0xff]
    %v8070 = vld [vmem:[%s3 + $0x18] sm:$0xff]
    %v8071 = vld [vmem:[%s3 + $0x20] sm:$0xff]
    %v8072 = vld [vmem:[%s3 + $0x28] sm:$0xff]
    %v8073 = vld [vmem:[%s3 + $0x30] sm:$0xff]
    %v8074 = vld [vmem:[%s3 + $0x38] sm:$0xff]
    %v8075 = vld [vmem:[%s3 + $0x40] sm:$0xff]
    %v8076 = vld [vmem:[%s3 + $0x48] sm:$0xff]
    %v8077 = vld [vmem:[%s3 + $0x50] sm:$0xff]
    %v8078 = vld [vmem:[%s3 + $0x58] sm:$0xff]
    %v8079 = vld [vmem:[%s3 + $0x60] sm:$0xff]
    %v8080 = vld [vmem:[%s3 + $0x68] sm:$0xff]
    %v8081 = vld [vmem:[%s3 + $0x70] sm:$0xff]
    %v8082 = vld [vmem:[%s3 + $0x78] sm:$0xff]
    %v8083 = vld [vmem:[%s3 + $0x80] sm:$0xff]
    %v8084 = vld [vmem:[%s3 + $0x88] sm:$0xff]
    %v8085 = vpack.c.bf16 %v8066, %v8066
    %v8086 = vld [vmem:[%s8] sm:$0xf]
    %vm8087 = vcmask 64512
    %v8089 = vsel %vm8087, %v8086, 0
    %vm8091 = vcmask 1043456
    %v8093 = vsel %vm8091, %v8085, 0
    %8095 = vmatprep.subr.bf16.mxu0 0
    %8096 = vmatpush1.bf16.msra.mxu0 %v8093
    %8097 = vmatprep.subr.bf16.mxu0 0
    %8098 = vmatpush1.bf16.msra.mxu0 0
    %8099 = vmatprep.subr.bf16.mxu0 0
    %8100 = vmatpush1.bf16.msra.mxu0 0
    %8101 = vmatprep.subr.bf16.mxu0 0
    %8102 = vmatpush1.bf16.msra.mxu0 0
    %8103 = vmatprep.subr.bf16.mxu0 0
    %8104 = vmatpush1.bf16.msra.mxu0 0
    %8105 = vmatprep.subr.bf16.mxu0 0
    %8106 = vmatpush1.bf16.msra.mxu0 0
    %8107 = vmatprep.subr.bf16.mxu0 0
    %8108 = vmatpush1.bf16.msra.mxu0 0
    %8109 = vmatprep.subr.bf16.mxu0 0
    %8110 = vmatpush1.bf16.msra.mxu0 0
    %8111 = vmatprep.subr.bf16.mxu0 0
    %8112 = vmatpush1.bf16.msra.mxu0 0
    %8113 = vmatprep.subr.bf16.mxu0 0
    %8114 = vmatpush1.bf16.msra.mxu0 0
    %8115 = vmatprep.subr.bf16.mxu0 0
    %8116 = vmatpush1.bf16.msra.mxu0 0
    %8117 = vmatprep.subr.bf16.mxu0 0
    %8118 = vmatpush1.bf16.msra.mxu0 0
    %8119 = vmatprep.subr.bf16.mxu0 0
    %8120 = vmatpush1.bf16.msra.mxu0 0
    %8121 = vmatprep.subr.bf16.mxu0 0
    %8122 = vmatpush1.bf16.msra.mxu0 0
    %8123 = vmatprep.subr.bf16.mxu0 0
    %8124 = vmatpush1.bf16.msra.mxu0 0
    %8125 = vmatprep.subr.bf16.mxu0 0
    %8126 = vmatpush1.bf16.msra.mxu0 0
    %8127 = vmatprep.mubr.bf16.mxu0 0
    %8128 = vmatmul.mubr.bf16.gmra.mrb[0].mxu0 %v8089
    %v8129 = vpop.f32.mrb[0].mxu0
    %v8130 = vadd.f32 0.0, %v8129
    %v8131 = vpop.f32.mrb[0].mxu0
    %v8132 = vpop.f32.mrb[0].mxu0
    %v8133 = vpop.f32.mrb[0].mxu0
    %8134 = vdwg.mxu0
    %v8135 = vpack.c.bf16 %v8130, %v8130
    %s8136 = scalar_lea.vmem %s8, 4
    %v8137 = vld [vmem:[%s8136] sm:$0xf]
    %v8139 = vsel %vm8087, %v8137, 0
    %8141 = vmatprep.subr.bf16.mxu0 0
    %8142 = vmatpush1.bf16.msra.mxu0 %v8093
    %8143 = vmatprep.subr.bf16.mxu0 0
    %8144 = vmatpush1.bf16.msra.mxu0 0
    %8145 = vmatprep.subr.bf16.mxu0 0
    %8146 = vmatpush1.bf16.msra.mxu0 0
    %8147 = vmatprep.subr.bf16.mxu0 0
    %8148 = vmatpush1.bf16.msra.mxu0 0
    %8149 = vmatprep.subr.bf16.mxu0 0
    %8150 = vmatpush1.bf16.msra.mxu0 0
    %8151 = vmatprep.subr.bf16.mxu0 0
    %8152 = vmatpush1.bf16.msra.mxu0 0
    %8153 = vmatprep.subr.bf16.mxu0 0
    %8154 = vmatpush1.bf16.msra.mxu0 0
    %8155 = vmatprep.subr.bf16.mxu0 0
    %8156 = vmatpush1.bf16.msra.mxu0 0
    %8157 = vmatprep.subr.bf16.mxu0 0
    %8158 = vmatpush1.bf16.msra.mxu0 0
    %8159 = vmatprep.subr.bf16.mxu0 0
    %8160 = vmatpush1.bf16.msra.mxu0 0
    %8161 = vmatprep.subr.bf16.mxu0 0
    %8162 = vmatpush1.bf16.msra.mxu0 0
    %8163 = vmatprep.subr.bf16.mxu0 0
    %8164 = vmatpush1.bf16.msra.mxu0 0
    %8165 = vmatprep.subr.bf16.mxu0 0
    %8166 = vmatpush1.bf16.msra.mxu0 0
    %8167 = vmatprep.subr.bf16.mxu0 0
    %8168 = vmatpush1.bf16.msra.mxu0 0
    %8169 = vmatprep.subr.bf16.mxu0 0
    %8170 = vmatpush1.bf16.msra.mxu0 0
    %8171 = vmatprep.subr.bf16.mxu0 0
    %8172 = vmatpush1.bf16.msra.mxu0 0
    %8173 = vmatprep.mubr.bf16.mxu0 0
    %8174 = vmatmul.mubr.bf16.gmra.mrb[0].mxu0 %v8139
    %v8175 = vpop.f32.mrb[0].mxu0
    %v8176 = vadd.f32 0.0, %v8175
    %v8177 = vpop.f32.mrb[0].mxu0
    %v8178 = vpop.f32.mrb[0].mxu0
    %v8179 = vpop.f32.mrb[0].mxu0
    %8180 = vdwg.mxu0
    %v8181 = vpack.c.bf16 %v8176, %v8176
    %v8183 = vsel %vm3898, %v8181, 0
    %8185 = vmatprep.subr.bf16.mxu0 0
    %8186 = vmatpush1.bf16.msra.mxu0 %v8069
    %8187 = vmatprep.subr.bf16.mxu0 0
    %8188 = vmatpush1.bf16.msra.mxu0 %v8070
    %8189 = vmatprep.subr.bf16.mxu0 0
    %8190 = vmatpush1.bf16.msra.mxu0 0
    %8191 = vmatprep.subr.bf16.mxu0 0
    %8192 = vmatpush1.bf16.msra.mxu0 0
    %8193 = vmatprep.subr.bf16.mxu0 0
    %8194 = vmatpush1.bf16.msra.mxu0 0
    %8195 = vmatprep.subr.bf16.mxu0 0
    %8196 = vmatpush1.bf16.msra.mxu0 0
    %8197 = vmatprep.subr.bf16.mxu0 0
    %8198 = vmatpush1.bf16.msra.mxu0 0
    %8199 = vmatprep.subr.bf16.mxu0 0
    %8200 = vmatpush1.bf16.msra.mxu0 0
    %8201 = vmatprep.subr.bf16.mxu0 0
    %8202 = vmatpush1.bf16.msra.mxu0 0
    %8203 = vmatprep.subr.bf16.mxu0 0
    %8204 = vmatpush1.bf16.msra.mxu0 0
    %8205 = vmatprep.subr.bf16.mxu0 0
    %8206 = vmatpush1.bf16.msra.mxu0 0
    %8207 = vmatprep.subr.bf16.mxu0 0
    %8208 = vmatpush1.bf16.msra.mxu0 0
    %8209 = vmatprep.subr.bf16.mxu0 0
    %8210 = vmatpush1.bf16.msra.mxu0 0
    %8211 = vmatprep.subr.bf16.mxu0 0
    %8212 = vmatpush1.bf16.msra.mxu0 0
    %8213 = vmatprep.subr.bf16.mxu0 0
    %8214 = vmatpush1.bf16.msra.mxu0 0
    %8215 = vmatprep.subr.bf16.mxu0 0
    %8216 = vmatpush1.bf16.msra.mxu0 0
    %8217 = vmatprep.mubr.bf16.mxu0 0
    %8218 = vmatmul.mubr.bf16.gmra.mrb[0].mxu0 %v8183
    %v8219 = vpop.f32.mrb[0].mxu0
    %v8220 = vadd.f32 0.0, %v8219
    %v8221 = vpop.f32.mrb[0].mxu0
    %v8222 = vpop.f32.mrb[0].mxu0
    %v8223 = vpop.f32.mrb[0].mxu0
    %8224 = vdwg.mxu0
    %v8226 = vsel %vm3898, %v8135, 0
    %8228 = vmatprep.subr.bf16.mxu0 0
    %8229 = vmatpush1.bf16.msra.mxu0 %v8067
    %8230 = vmatprep.subr.bf16.mxu0 0
    %8231 = vmatpush1.bf16.msra.mxu0 %v8068
    %8232 = vmatprep.subr.bf16.mxu0 0
    %8233 = vmatpush1.bf16.msra.mxu0 0
    %8234 = vmatprep.subr.bf16.mxu0 0
    %8235 = vmatpush1.bf16.msra.mxu0 0
    %8236 = vmatprep.subr.bf16.mxu0 0
    %8237 = vmatpush1.bf16.msra.mxu0 0
    %8238 = vmatprep.subr.bf16.mxu0 0
    %8239 = vmatpush1.bf16.msra.mxu0 0
    %8240 = vmatprep.subr.bf16.mxu0 0
    %8241 = vmatpush1.bf16.msra.mxu0 0
    %8242 = vmatprep.subr.bf16.mxu0 0
    %8243 = vmatpush1.bf16.msra.mxu0 0
    %8244 = vmatprep.subr.bf16.mxu0 0
    %8245 = vmatpush1.bf16.msra.mxu0 0
    %8246 = vmatprep.subr.bf16.mxu0 0
    %8247 = vmatpush1.bf16.msra.mxu0 0
    %8248 = vmatprep.subr.bf16.mxu0 0
    %8249 = vmatpush1.bf16.msra.mxu0 0
    %8250 = vmatprep.subr.bf16.mxu0 0
    %8251 = vmatpush1.bf16.msra.mxu0 0
    %8252 = vmatprep.subr.bf16.mxu0 0
    %8253 = vmatpush1.bf16.msra.mxu0 0
    %8254 = vmatprep.subr.bf16.mxu0 0
    %8255 = vmatpush1.bf16.msra.mxu0 0
    %8256 = vmatprep.subr.bf16.mxu0 0
    %8257 = vmatpush1.bf16.msra.mxu0 0
    %8258 = vmatprep.subr.bf16.mxu0 0
    %8259 = vmatpush1.bf16.msra.mxu0 0
    %8260 = vmatprep.mubr.bf16.mxu0 0
    %8261 = vmatmul.mubr.bf16.gmra.mrb[0].mxu0 %v8226
    %v8262 = vpop.f32.mrb[0].mxu0
    %v8263 = vadd.f32 %v8220, %v8262
    %v8264 = vpop.f32.mrb[0].mxu0
    %v8265 = vpop.f32.mrb[0].mxu0
    %v8266 = vpop.f32.mrb[0].mxu0
    %8267 = vdwg.mxu0
    %s8268 = scalar_lea.vmem %s8, 8
    %v8269 = vld [vmem:[%s8268] sm:$0xf]
    %v8271 = vsel %vm8087, %v8269, 0
    %8273 = vmatprep.subr.bf16.mxu0 0
    %8274 = vmatpush1.bf16.msra.mxu0 %v8093
    %8275 = vmatprep.subr.bf16.mxu0 0
    %8276 = vmatpush1.bf16.msra.mxu0 0
    %8277 = vmatprep.subr.bf16.mxu0 0
    %8278 = vmatpush1.bf16.msra.mxu0 0
    %8279 = vmatprep.subr.bf16.mxu0 0
    %8280 = vmatpush1.bf16.msra.mxu0 0
    %8281 = vmatprep.subr.bf16.mxu0 0
    %8282 = vmatpush1.bf16.msra.mxu0 0
    %8283 = vmatprep.subr.bf16.mxu0 0
    %8284 = vmatpush1.bf16.msra.mxu0 0
    %8285 = vmatprep.subr.bf16.mxu0 0
    %8286 = vmatpush1.bf16.msra.mxu0 0
    %8287 = vmatprep.subr.bf16.mxu0 0
    %8288 = vmatpush1.bf16.msra.mxu0 0
    %8289 = vmatprep.subr.bf16.mxu0 0
    %8290 = vmatpush1.bf16.msra.mxu0 0
    %8291 = vmatprep.subr.bf16.mxu0 0
    %8292 = vmatpush1.bf16.msra.mxu0 0
    %8293 = vmatprep.subr.bf16.mxu0 0
    %8294 = vmatpush1.bf16.msra.mxu0 0
    %8295 = vmatprep.subr.bf16.mxu0 0
    %8296 = vmatpush1.bf16.msra.mxu0 0
    %8297 = vmatprep.subr.bf16.mxu0 0
    %8298 = vmatpush1.bf16.msra.mxu0 0
    %8299 = vmatprep.subr.bf16.mxu0 0
    %8300 = vmatpush1.bf16.msra.mxu0 0
    %8301 = vmatprep.subr.bf16.mxu0 0
    %8302 = vmatpush1.bf16.msra.mxu0 0
    %8303 = vmatprep.subr.bf16.mxu0 0
    %8304 = vmatpush1.bf16.msra.mxu0 0
    %8305 = vmatprep.mubr.bf16.mxu0 0
    %8306 = vmatmul.mubr.bf16.gmra.mrb[0].mxu0 %v8271
    %v8307 = vpop.f32.mrb[0].mxu0
    %v8308 = vadd.f32 0.0, %v8307
    %v8309 = vpop.f32.mrb[0].mxu0
    %v8310 = vpop.f32.mrb[0].mxu0
    %v8311 = vpop.f32.mrb[0].mxu0
    %8312 = vdwg.mxu0
    %v8313 = vpack.c.bf16 %v8308, %v8308
    %v8315 = vsel %vm3898, %v8313, 0
    %8317 = vmatprep.subr.bf16.mxu0 0
    %8318 = vmatpush1.bf16.msra.mxu0 %v8071
    %8319 = vmatprep.subr.bf16.mxu0 0
    %8320 = vmatpush1.bf16.msra.mxu0 %v8072
    %8321 = vmatprep.subr.bf16.mxu0 0
    %8322 = vmatpush1.bf16.msra.mxu0 0
    %8323 = vmatprep.subr.bf16.mxu0 0
    %8324 = vmatpush1.bf16.msra.mxu0 0
    %8325 = vmatprep.subr.bf16.mxu0 0
    %8326 = vmatpush1.bf16.msra.mxu0 0
    %8327 = vmatprep.subr.bf16.mxu0 0
    %8328 = vmatpush1.bf16.msra.mxu0 0
    %8329 = vmatprep.subr.bf16.mxu0 0
    %8330 = vmatpush1.bf16.msra.mxu0 0
    %8331 = vmatprep.subr.bf16.mxu0 0
    %8332 = vmatpush1.bf16.msra.mxu0 0
    %8333 = vmatprep.subr.bf16.mxu0 0
    %8334 = vmatpush1.bf16.msra.mxu0 0
    %8335 = vmatprep.subr.bf16.mxu0 0
    %8336 = vmatpush1.bf16.msra.mxu0 0
    %8337 = vmatprep.subr.bf16.mxu0 0
    %8338 = vmatpush1.bf16.msra.mxu0 0
    %8339 = vmatprep.subr.bf16.mxu0 0
    %8340 = vmatpush1.bf16.msra.mxu0 0
    %8341 = vmatprep.subr.bf16.mxu0 0
    %8342 = vmatpush1.bf16.msra.mxu0 0
    %8343 = vmatprep.subr.bf16.mxu0 0
    %8344 = vmatpush1.bf16.msra.mxu0 0
    %8345 = vmatprep.subr.bf16.mxu0 0
    %8346 = vmatpush1.bf16.msra.mxu0 0
    %8347 = vmatprep.subr.bf16.mxu0 0
    %8348 = vmatpush1.bf16.msra.mxu0 0
    %8349 = vmatprep.mubr.bf16.mxu0 0
    %8350 = vmatmul.mubr.bf16.gmra.mrb[0].mxu0 %v8315
    %v8351 = vpop.f32.mrb[0].mxu0
    %v8352 = vadd.f32 0.0, %v8351
    %v8353 = vpop.f32.mrb[0].mxu0
    %v8354 = vpop.f32.mrb[0].mxu0
    %v8355 = vpop.f32.mrb[0].mxu0
    %8356 = vdwg.mxu0
    %v8357 = vadd.f32 %v8263, %v8352
    %s8358 = scalar_lea.vmem %s8, 12
    %v8359 = vld [vmem:[%s8358] sm:$0xf]
    %v8361 = vsel %vm8087, %v8359, 0
    %8363 = vmatprep.subr.bf16.mxu0 0
    %8364 = vmatpush1.bf16.msra.mxu0 %v8093
    %8365 = vmatprep.subr.bf16.mxu0 0
    %8366 = vmatpush1.bf16.msra.mxu0 0
    %8367 = vmatprep.subr.bf16.mxu0 0
    %8368 = vmatpush1.bf16.msra.mxu0 0
    %8369 = vmatprep.subr.bf16.mxu0 0
    %8370 = vmatpush1.bf16.msra.mxu0 0
    %8371 = vmatprep.subr.bf16.mxu0 0
    %8372 = vmatpush1.bf16.msra.mxu0 0
    %8373 = vmatprep.subr.bf16.mxu0 0
    %8374 = vmatpush1.bf16.msra.mxu0 0
    %8375 = vmatprep.subr.bf16.mxu0 0
    %8376 = vmatpush1.bf16.msra.mxu0 0
    %8377 = vmatprep.subr.bf16.mxu0 0
    %8378 = vmatpush1.bf16.msra.mxu0 0
    %8379 = vmatprep.subr.bf16.mxu0 0
    %8380 = vmatpush1.bf16.msra.mxu0 0
    %8381 = vmatprep.subr.bf16.mxu0 0
    %8382 = vmatpush1.bf16.msra.mxu0 0
    %8383 = vmatprep.subr.bf16.mxu0 0
    %8384 = vmatpush1.bf16.msra.mxu0 0
    %8385 = vmatprep.subr.bf16.mxu0 0
    %8386 = vmatpush1.bf16.msra.mxu0 0
    %8387 = vmatprep.subr.bf16.mxu0 0
    %8388 = vmatpush1.bf16.msra.mxu0 0
    %8389 = vmatprep.subr.bf16.mxu0 0
    %8390 = vmatpush1.bf16.msra.mxu0 0
    %8391 = vmatprep.subr.bf16.mxu0 0
    %8392 = vmatpush1.bf16.msra.mxu0 0
    %8393 = vmatprep.subr.bf16.mxu0 0
    %8394 = vmatpush1.bf16.msra.mxu0 0
    %8395 = vmatprep.mubr.bf16.mxu0 0
    %8396 = vmatmul.mubr.bf16.gmra.mrb[0].mxu0 %v8361
    %v8397 = vpop.f32.mrb[0].mxu0
    %v8398 = vadd.f32 0.0, %v8397
    %v8399 = vpop.f32.mrb[0].mxu0
    %v8400 = vpop.f32.mrb[0].mxu0
    %v8401 = vpop.f32.mrb[0].mxu0
    %8402 = vdwg.mxu0
    %v8403 = vpack.c.bf16 %v8398, %v8398
    %v8405 = vsel %vm3898, %v8403, 0
    %8407 = vmatprep.subr.bf16.mxu0 0
    %8408 = vmatpush1.bf16.msra.mxu0 %v8073
    %8409 = vmatprep.subr.bf16.mxu0 0
    %8410 = vmatpush1.bf16.msra.mxu0 %v8074
    %8411 = vmatprep.subr.bf16.mxu0 0
    %8412 = vmatpush1.bf16.msra.mxu0 0
    %8413 = vmatprep.subr.bf16.mxu0 0
    %8414 = vmatpush1.bf16.msra.mxu0 0
    %8415 = vmatprep.subr.bf16.mxu0 0
    %8416 = vmatpush1.bf16.msra.mxu0 0
    %8417 = vmatprep.subr.bf16.mxu0 0
    %8418 = vmatpush1.bf16.msra.mxu0 0
    %8419 = vmatprep.subr.bf16.mxu0 0
    %8420 = vmatpush1.bf16.msra.mxu0 0
    %8421 = vmatprep.subr.bf16.mxu0 0
    %8422 = vmatpush1.bf16.msra.mxu0 0
    %8423 = vmatprep.subr.bf16.mxu0 0
    %8424 = vmatpush1.bf16.msra.mxu0 0
    %8425 = vmatprep.subr.bf16.mxu0 0
    %8426 = vmatpush1.bf16.msra.mxu0 0
    %8427 = vmatprep.subr.bf16.mxu0 0
    %8428 = vmatpush1.bf16.msra.mxu0 0
    %8429 = vmatprep.subr.bf16.mxu0 0
    %8430 = vmatpush1.bf16.msra.mxu0 0
    %8431 = vmatprep.subr.bf16.mxu0 0
    %8432 = vmatpush1.bf16.msra.mxu0 0
    %8433 = vmatprep.subr.bf16.mxu0 0
    %8434 = vmatpush1.bf16.msra.mxu0 0
    %8435 = vmatprep.subr.bf16.mxu0 0
    %8436 = vmatpush1.bf16.msra.mxu0 0
    %8437 = vmatprep.subr.bf16.mxu0 0
    %8438 = vmatpush1.bf16.msra.mxu0 0
    %8439 = vmatprep.mubr.bf16.mxu0 0
    %8440 = vmatmul.mubr.bf16.gmra.mrb[0].mxu0 %v8405
    %v8441 = vpop.f32.mrb[0].mxu0
    %v8442 = vadd.f32 0.0, %v8441
    %v8443 = vpop.f32.mrb[0].mxu0
    %v8444 = vpop.f32.mrb[0].mxu0
    %v8445 = vpop.f32.mrb[0].mxu0
    %8446 = vdwg.mxu0
    %v8447 = vadd.f32 %v8357, %v8442
    %s8448 = scalar_lea.vmem %s8, 16
    %v8449 = vld [vmem:[%s8448] sm:$0xf]
    %v8451 = vsel %vm8087, %v8449, 0
    %8453 = vmatprep.subr.bf16.mxu0 0
    %8454 = vmatpush1.bf16.msra.mxu0 %v8093
    %8455 = vmatprep.subr.bf16.mxu0 0
    %8456 = vmatpush1.bf16.msra.mxu0 0
    %8457 = vmatprep.subr.bf16.mxu0 0
    %8458 = vmatpush1.bf16.msra.mxu0 0
    %8459 = vmatprep.subr.bf16.mxu0 0
    %8460 = vmatpush1.bf16.msra.mxu0 0
    %8461 = vmatprep.subr.bf16.mxu0 0
    %8462 = vmatpush1.bf16.msra.mxu0 0
    %8463 = vmatprep.subr.bf16.mxu0 0
    %8464 = vmatpush1.bf16.msra.mxu0 0
    %8465 = vmatprep.subr.bf16.mxu0 0
    %8466 = vmatpush1.bf16.msra.mxu0 0
    %8467 = vmatprep.subr.bf16.mxu0 0
    %8468 = vmatpush1.bf16.msra.mxu0 0
    %8469 = vmatprep.subr.bf16.mxu0 0
    %8470 = vmatpush1.bf16.msra.mxu0 0
    %8471 = vmatprep.subr.bf16.mxu0 0
    %8472 = vmatpush1.bf16.msra.mxu0 0
    %8473 = vmatprep.subr.bf16.mxu0 0
    %8474 = vmatpush1.bf16.msra.mxu0 0
    %8475 = vmatprep.subr.bf16.mxu0 0
    %8476 = vmatpush1.bf16.msra.mxu0 0
    %8477 = vmatprep.subr.bf16.mxu0 0
    %8478 = vmatpush1.bf16.msra.mxu0 0
    %8479 = vmatprep.subr.bf16.mxu0 0
    %8480 = vmatpush1.bf16.msra.mxu0 0
    %8481 = vmatprep.subr.bf16.mxu0 0
    %8482 = vmatpush1.bf16.msra.mxu0 0
    %8483 = vmatprep.subr.bf16.mxu0 0
    %8484 = vmatpush1.bf16.msra.mxu0 0
    %8485 = vmatprep.mubr.bf16.mxu0 0
    %8486 = vmatmul.mubr.bf16.gmra.mrb[0].mxu0 %v8451
    %v8487 = vpop.f32.mrb[0].mxu0
    %v8488 = vadd.f32 0.0, %v8487
    %v8489 = vpop.f32.mrb[0].mxu0
    %v8490 = vpop.f32.mrb[0].mxu0
    %v8491 = vpop.f32.mrb[0].mxu0
    %8492 = vdwg.mxu0
    %v8493 = vpack.c.bf16 %v8488, %v8488
    %v8495 = vsel %vm3898, %v8493, 0
    %8497 = vmatprep.subr.bf16.mxu0 0
    %8498 = vmatpush1.bf16.msra.mxu0 %v8075
    %8499 = vmatprep.subr.bf16.mxu0 0
    %8500 = vmatpush1.bf16.msra.mxu0 %v8076
    %8501 = vmatprep.subr.bf16.mxu0 0
    %8502 = vmatpush1.bf16.msra.mxu0 0
    %8503 = vmatprep.subr.bf16.mxu0 0
    %8504 = vmatpush1.bf16.msra.mxu0 0
    %8505 = vmatprep.subr.bf16.mxu0 0
    %8506 = vmatpush1.bf16.msra.mxu0 0
    %8507 = vmatprep.subr.bf16.mxu0 0
    %8508 = vmatpush1.bf16.msra.mxu0 0
    %8509 = vmatprep.subr.bf16.mxu0 0
    %8510 = vmatpush1.bf16.msra.mxu0 0
    %8511 = vmatprep.subr.bf16.mxu0 0
    %8512 = vmatpush1.bf16.msra.mxu0 0
    %8513 = vmatprep.subr.bf16.mxu0 0
    %8514 = vmatpush1.bf16.msra.mxu0 0
    %8515 = vmatprep.subr.bf16.mxu0 0
    %8516 = vmatpush1.bf16.msra.mxu0 0
    %8517 = vmatprep.subr.bf16.mxu0 0
    %8518 = vmatpush1.bf16.msra.mxu0 0
    %8519 = vmatprep.subr.bf16.mxu0 0
    %8520 = vmatpush1.bf16.msra.mxu0 0
    %8521 = vmatprep.subr.bf16.mxu0 0
    %8522 = vmatpush1.bf16.msra.mxu0 0
    %8523 = vmatprep.subr.bf16.mxu0 0
    %8524 = vmatpush1.bf16.msra.mxu0 0
    %8525 = vmatprep.subr.bf16.mxu0 0
    %8526 = vmatpush1.bf16.msra.mxu0 0
    %8527 = vmatprep.subr.bf16.mxu0 0
    %8528 = vmatpush1.bf16.msra.mxu0 0
    %8529 = vmatprep.mubr.bf16.mxu0 0
    %8530 = vmatmul.mubr.bf16.gmra.mrb[0].mxu0 %v8495
    %v8531 = vpop.f32.mrb[0].mxu0
    %v8532 = vadd.f32 0.0, %v8531
    %v8533 = vpop.f32.mrb[0].mxu0
    %v8534 = vpop.f32.mrb[0].mxu0
    %v8535 = vpop.f32.mrb[0].mxu0
    %8536 = vdwg.mxu0
    %v8537 = vadd.f32 %v8447, %v8532
    %s8538 = scalar_lea.vmem %s8, 20
    %v8539 = vld [vmem:[%s8538] sm:$0xf]
    %v8541 = vsel %vm8087, %v8539, 0
    %8543 = vmatprep.subr.bf16.mxu0 0
    %8544 = vmatpush1.bf16.msra.mxu0 %v8093
    %8545 = vmatprep.subr.bf16.mxu0 0
    %8546 = vmatpush1.bf16.msra.mxu0 0
    %8547 = vmatprep.subr.bf16.mxu0 0
    %8548 = vmatpush1.bf16.msra.mxu0 0
    %8549 = vmatprep.subr.bf16.mxu0 0
    %8550 = vmatpush1.bf16.msra.mxu0 0
    %8551 = vmatprep.subr.bf16.mxu0 0
    %8552 = vmatpush1.bf16.msra.mxu0 0
    %8553 = vmatprep.subr.bf16.mxu0 0
    %8554 = vmatpush1.bf16.msra.mxu0 0
    %8555 = vmatprep.subr.bf16.mxu0 0
    %8556 = vmatpush1.bf16.msra.mxu0 0
    %8557 = vmatprep.subr.bf16.mxu0 0
    %8558 = vmatpush1.bf16.msra.mxu0 0
    %8559 = vmatprep.subr.bf16.mxu0 0
    %8560 = vmatpush1.bf16.msra.mxu0 0
    %8561 = vmatprep.subr.bf16.mxu0 0
    %8562 = vmatpush1.bf16.msra.mxu0 0
    %8563 = vmatprep.subr.bf16.mxu0 0
    %8564 = vmatpush1.bf16.msra.mxu0 0
    %8565 = vmatprep.subr.bf16.mxu0 0
    %8566 = vmatpush1.bf16.msra.mxu0 0
    %8567 = vmatprep.subr.bf16.mxu0 0
    %8568 = vmatpush1.bf16.msra.mxu0 0
    %8569 = vmatprep.subr.bf16.mxu0 0
    %8570 = vmatpush1.bf16.msra.mxu0 0
    %8571 = vmatprep.subr.bf16.mxu0 0
    %8572 = vmatpush1.bf16.msra.mxu0 0
    %8573 = vmatprep.subr.bf16.mxu0 0
    %8574 = vmatpush1.bf16.msra.mxu0 0
    %8575 = vmatprep.mubr.bf16.mxu0 0
    %8576 = vmatmul.mubr.bf16.gmra.mrb[0].mxu0 %v8541
    %v8577 = vpop.f32.mrb[0].mxu0
    %v8578 = vadd.f32 0.0, %v8577
    %v8579 = vpop.f32.mrb[0].mxu0
    %v8580 = vpop.f32.mrb[0].mxu0
    %v8581 = vpop.f32.mrb[0].mxu0
    %8582 = vdwg.mxu0
    %v8583 = vpack.c.bf16 %v8578, %v8578
    %v8585 = vsel %vm3898, %v8583, 0
    %8587 = vmatprep.subr.bf16.mxu0 0
    %8588 = vmatpush1.bf16.msra.mxu0 %v8077
    %8589 = vmatprep.subr.bf16.mxu0 0
    %8590 = vmatpush1.bf16.msra.mxu0 %v8078
    %8591 = vmatprep.subr.bf16.mxu0 0
    %8592 = vmatpush1.bf16.msra.mxu0 0
    %8593 = vmatprep.subr.bf16.mxu0 0
    %8594 = vmatpush1.bf16.msra.mxu0 0
    %8595 = vmatprep.subr.bf16.mxu0 0
    %8596 = vmatpush1.bf16.msra.mxu0 0
    %8597 = vmatprep.subr.bf16.mxu0 0
    %8598 = vmatpush1.bf16.msra.mxu0 0
    %8599 = vmatprep.subr.bf16.mxu0 0
    %8600 = vmatpush1.bf16.msra.mxu0 0
    %8601 = vmatprep.subr.bf16.mxu0 0
    %8602 = vmatpush1.bf16.msra.mxu0 0
    %8603 = vmatprep.subr.bf16.mxu0 0
    %8604 = vmatpush1.bf16.msra.mxu0 0
    %8605 = vmatprep.subr.bf16.mxu0 0
    %8606 = vmatpush1.bf16.msra.mxu0 0
    %8607 = vmatprep.subr.bf16.mxu0 0
    %8608 = vmatpush1.bf16.msra.mxu0 0
    %8609 = vmatprep.subr.bf16.mxu0 0
    %8610 = vmatpush1.bf16.msra.mxu0 0
    %8611 = vmatprep.subr.bf16.mxu0 0
    %8612 = vmatpush1.bf16.msra.mxu0 0
    %8613 = vmatprep.subr.bf16.mxu0 0
    %8614 = vmatpush1.bf16.msra.mxu0 0
    %8615 = vmatprep.subr.bf16.mxu0 0
    %8616 = vmatpush1.bf16.msra.mxu0 0
    %8617 = vmatprep.subr.bf16.mxu0 0
    %8618 = vmatpush1.bf16.msra.mxu0 0
    %8619 = vmatprep.mubr.bf16.mxu0 0
    %8620 = vmatmul.mubr.bf16.gmra.mrb[0].mxu0 %v8585
    %v8621 = vpop.f32.mrb[0].mxu0
    %v8622 = vadd.f32 0.0, %v8621
    %v8623 = vpop.f32.mrb[0].mxu0
    %v8624 = vpop.f32.mrb[0].mxu0
    %v8625 = vpop.f32.mrb[0].mxu0
    %8626 = vdwg.mxu0
    %v8627 = vadd.f32 %v8537, %v8622
    %s8628 = scalar_lea.vmem %s8, 24
    %v8629 = vld [vmem:[%s8628] sm:$0xf]
    %v8631 = vsel %vm8087, %v8629, 0
    %8633 = vmatprep.subr.bf16.mxu0 0
    %8634 = vmatpush1.bf16.msra.mxu0 %v8093
    %8635 = vmatprep.subr.bf16.mxu0 0
    %8636 = vmatpush1.bf16.msra.mxu0 0
    %8637 = vmatprep.subr.bf16.mxu0 0
    %8638 = vmatpush1.bf16.msra.mxu0 0
    %8639 = vmatprep.subr.bf16.mxu0 0
    %8640 = vmatpush1.bf16.msra.mxu0 0
    %8641 = vmatprep.subr.bf16.mxu0 0
    %8642 = vmatpush1.bf16.msra.mxu0 0
    %8643 = vmatprep.subr.bf16.mxu0 0
    %8644 = vmatpush1.bf16.msra.mxu0 0
    %8645 = vmatprep.subr.bf16.mxu0 0
    %8646 = vmatpush1.bf16.msra.mxu0 0
    %8647 = vmatprep.subr.bf16.mxu0 0
    %8648 = vmatpush1.bf16.msra.mxu0 0
    %8649 = vmatprep.subr.bf16.mxu0 0
    %8650 = vmatpush1.bf16.msra.mxu0 0
    %8651 = vmatprep.subr.bf16.mxu0 0
    %8652 = vmatpush1.bf16.msra.mxu0 0
    %8653 = vmatprep.subr.bf16.mxu0 0
    %8654 = vmatpush1.bf16.msra.mxu0 0
    %8655 = vmatprep.subr.bf16.mxu0 0
    %8656 = vmatpush1.bf16.msra.mxu0 0
    %8657 = vmatprep.subr.bf16.mxu0 0
    %8658 = vmatpush1.bf16.msra.mxu0 0
    %8659 = vmatprep.subr.bf16.mxu0 0
    %8660 = vmatpush1.bf16.msra.mxu0 0
    %8661 = vmatprep.subr.bf16.mxu0 0
    %8662 = vmatpush1.bf16.msra.mxu0 0
    %8663 = vmatprep.subr.bf16.mxu0 0
    %8664 = vmatpush1.bf16.msra.mxu0 0
    %8665 = vmatprep.mubr.bf16.mxu0 0
    %8666 = vmatmul.mubr.bf16.gmra.mrb[0].mxu0 %v8631
    %v8667 = vpop.f32.mrb[0].mxu0
    %v8668 = vadd.f32 0.0, %v8667
    %v8669 = vpop.f32.mrb[0].mxu0
    %v8670 = vpop.f32.mrb[0].mxu0
    %v8671 = vpop.f32.mrb[0].mxu0
    %8672 = vdwg.mxu0
    %v8673 = vpack.c.bf16 %v8668, %v8668
    %v8675 = vsel %vm3898, %v8673, 0
    %8677 = vmatprep.subr.bf16.mxu0 0
    %8678 = vmatpush1.bf16.msra.mxu0 %v8079
    %8679 = vmatprep.subr.bf16.mxu0 0
    %8680 = vmatpush1.bf16.msra.mxu0 %v8080
    %8681 = vmatprep.subr.bf16.mxu0 0
    %8682 = vmatpush1.bf16.msra.mxu0 0
    %8683 = vmatprep.subr.bf16.mxu0 0
    %8684 = vmatpush1.bf16.msra.mxu0 0
    %8685 = vmatprep.subr.bf16.mxu0 0
    %8686 = vmatpush1.bf16.msra.mxu0 0
    %8687 = vmatprep.subr.bf16.mxu0 0
    %8688 = vmatpush1.bf16.msra.mxu0 0
    %8689 = vmatprep.subr.bf16.mxu0 0
    %8690 = vmatpush1.bf16.msra.mxu0 0
    %8691 = vmatprep.subr.bf16.mxu0 0
    %8692 = vmatpush1.bf16.msra.mxu0 0
    %8693 = vmatprep.subr.bf16.mxu0 0
    %8694 = vmatpush1.bf16.msra.mxu0 0
    %8695 = vmatprep.subr.bf16.mxu0 0
    %8696 = vmatpush1.bf16.msra.mxu0 0
    %8697 = vmatprep.subr.bf16.mxu0 0
    %8698 = vmatpush1.bf16.msra.mxu0 0
    %8699 = vmatprep.subr.bf16.mxu0 0
    %8700 = vmatpush1.bf16.msra.mxu0 0
    %8701 = vmatprep.subr.bf16.mxu0 0
    %8702 = vmatpush1.bf16.msra.mxu0 0
    %8703 = vmatprep.subr.bf16.mxu0 0
    %8704 = vmatpush1.bf16.msra.mxu0 0
    %8705 = vmatprep.subr.bf16.mxu0 0
    %8706 = vmatpush1.bf16.msra.mxu0 0
    %8707 = vmatprep.subr.bf16.mxu0 0
    %8708 = vmatpush1.bf16.msra.mxu0 0
    %8709 = vmatprep.mubr.bf16.mxu0 0
    %8710 = vmatmul.mubr.bf16.gmra.mrb[0].mxu0 %v8675
    %v8711 = vpop.f32.mrb[0].mxu0
    %v8712 = vadd.f32 0.0, %v8711
    %v8713 = vpop.f32.mrb[0].mxu0
    %v8714 = vpop.f32.mrb[0].mxu0
    %v8715 = vpop.f32.mrb[0].mxu0
    %8716 = vdwg.mxu0
    %v8717 = vadd.f32 %v8627, %v8712
    %s8718 = scalar_lea.vmem %s8, 28
    %v8719 = vld [vmem:[%s8718] sm:$0xf]
    %v8721 = vsel %vm8087, %v8719, 0
    %8723 = vmatprep.subr.bf16.mxu0 0
    %8724 = vmatpush1.bf16.msra.mxu0 %v8093
    %8725 = vmatprep.subr.bf16.mxu0 0
    %8726 = vmatpush1.bf16.msra.mxu0 0
    %8727 = vmatprep.subr.bf16.mxu0 0
    %8728 = vmatpush1.bf16.msra.mxu0 0
    %8729 = vmatprep.subr.bf16.mxu0 0
    %8730 = vmatpush1.bf16.msra.mxu0 0
    %8731 = vmatprep.subr.bf16.mxu0 0
    %8732 = vmatpush1.bf16.msra.mxu0 0
    %8733 = vmatprep.subr.bf16.mxu0 0
    %8734 = vmatpush1.bf16.msra.mxu0 0
    %8735 = vmatprep.subr.bf16.mxu0 0
    %8736 = vmatpush1.bf16.msra.mxu0 0
    %8737 = vmatprep.subr.bf16.mxu0 0
    %8738 = vmatpush1.bf16.msra.mxu0 0
    %8739 = vmatprep.subr.bf16.mxu0 0
    %8740 = vmatpush1.bf16.msra.mxu0 0
    %8741 = vmatprep.subr.bf16.mxu0 0
    %8742 = vmatpush1.bf16.msra.mxu0 0
    %8743 = vmatprep.subr.bf16.mxu0 0
    %8744 = vmatpush1.bf16.msra.mxu0 0
    %8745 = vmatprep.subr.bf16.mxu0 0
    %8746 = vmatpush1.bf16.msra.mxu0 0
    %8747 = vmatprep.subr.bf16.mxu0 0
    %8748 = vmatpush1.bf16.msra.mxu0 0
    %8749 = vmatprep.subr.bf16.mxu0 0
    %8750 = vmatpush1.bf16.msra.mxu0 0
    %8751 = vmatprep.subr.bf16.mxu0 0
    %8752 = vmatpush1.bf16.msra.mxu0 0
    %8753 = vmatprep.subr.bf16.mxu0 0
    %8754 = vmatpush1.bf16.msra.mxu0 0
    %8755 = vmatprep.mubr.bf16.mxu0 0
    %8756 = vmatmul.mubr.bf16.gmra.mrb[0].mxu0 %v8721
    %v8757 = vpop.f32.mrb[0].mxu0
    %v8758 = vadd.f32 0.0, %v8757
    %v8759 = vpop.f32.mrb[0].mxu0
    %v8760 = vpop.f32.mrb[0].mxu0
    %v8761 = vpop.f32.mrb[0].mxu0
    %8762 = vdwg.mxu0
    %v8763 = vpack.c.bf16 %v8758, %v8758
    %v8765 = vsel %vm3898, %v8763, 0
    %8767 = vmatprep.subr.bf16.mxu0 0
    %8768 = vmatpush1.bf16.msra.mxu0 %v8081
    %8769 = vmatprep.subr.bf16.mxu0 0
    %8770 = vmatpush1.bf16.msra.mxu0 %v8082
    %8771 = vmatprep.subr.bf16.mxu0 0
    %8772 = vmatpush1.bf16.msra.mxu0 0
    %8773 = vmatprep.subr.bf16.mxu0 0
    %8774 = vmatpush1.bf16.msra.mxu0 0
    %8775 = vmatprep.subr.bf16.mxu0 0
    %8776 = vmatpush1.bf16.msra.mxu0 0
    %8777 = vmatprep.subr.bf16.mxu0 0
    %8778 = vmatpush1.bf16.msra.mxu0 0
    %8779 = vmatprep.subr.bf16.mxu0 0
    %8780 = vmatpush1.bf16.msra.mxu0 0
    %8781 = vmatprep.subr.bf16.mxu0 0
    %8782 = vmatpush1.bf16.msra.mxu0 0
    %8783 = vmatprep.subr.bf16.mxu0 0
    %8784 = vmatpush1.bf16.msra.mxu0 0
    %8785 = vmatprep.subr.bf16.mxu0 0
    %8786 = vmatpush1.bf16.msra.mxu0 0
    %8787 = vmatprep.subr.bf16.mxu0 0
    %8788 = vmatpush1.bf16.msra.mxu0 0
    %8789 = vmatprep.subr.bf16.mxu0 0
    %8790 = vmatpush1.bf16.msra.mxu0 0
    %8791 = vmatprep.subr.bf16.mxu0 0
    %8792 = vmatpush1.bf16.msra.mxu0 0
    %8793 = vmatprep.subr.bf16.mxu0 0
    %8794 = vmatpush1.bf16.msra.mxu0 0
    %8795 = vmatprep.subr.bf16.mxu0 0
    %8796 = vmatpush1.bf16.msra.mxu0 0
    %8797 = vmatprep.subr.bf16.mxu0 0
    %8798 = vmatpush1.bf16.msra.mxu0 0
    %8799 = vmatprep.mubr.bf16.mxu0 0
    %8800 = vmatmul.mubr.bf16.gmra.mrb[0].mxu0 %v8765
    %v8801 = vpop.f32.mrb[0].mxu0
    %v8802 = vadd.f32 0.0, %v8801
    %v8803 = vpop.f32.mrb[0].mxu0
    %v8804 = vpop.f32.mrb[0].mxu0
    %v8805 = vpop.f32.mrb[0].mxu0
    %8806 = vdwg.mxu0
    %v8807 = vadd.f32 %v8717, %v8802
    %s8808 = scalar_lea.vmem %s8, 32
    %v8809 = vld [vmem:[%s8808] sm:$0xf]
    %v8811 = vsel %vm8087, %v8809, 0
    %8813 = vmatprep.subr.bf16.mxu0 0
    %8814 = vmatpush1.bf16.msra.mxu0 %v8093
    %8815 = vmatprep.subr.bf16.mxu0 0
    %8816 = vmatpush1.bf16.msra.mxu0 0
    %8817 = vmatprep.subr.bf16.mxu0 0
    %8818 = vmatpush1.bf16.msra.mxu0 0
    %8819 = vmatprep.subr.bf16.mxu0 0
    %8820 = vmatpush1.bf16.msra.mxu0 0
    %8821 = vmatprep.subr.bf16.mxu0 0
    %8822 = vmatpush1.bf16.msra.mxu0 0
    %8823 = vmatprep.subr.bf16.mxu0 0
    %8824 = vmatpush1.bf16.msra.mxu0 0
    %8825 = vmatprep.subr.bf16.mxu0 0
    %8826 = vmatpush1.bf16.msra.mxu0 0
    %8827 = vmatprep.subr.bf16.mxu0 0
    %8828 = vmatpush1.bf16.msra.mxu0 0
    %8829 = vmatprep.subr.bf16.mxu0 0
    %8830 = vmatpush1.bf16.msra.mxu0 0
    %8831 = vmatprep.subr.bf16.mxu0 0
    %8832 = vmatpush1.bf16.msra.mxu0 0
    %8833 = vmatprep.subr.bf16.mxu0 0
    %8834 = vmatpush1.bf16.msra.mxu0 0
    %8835 = vmatprep.subr.bf16.mxu0 0
    %8836 = vmatpush1.bf16.msra.mxu0 0
    %8837 = vmatprep.subr.bf16.mxu0 0
    %8838 = vmatpush1.bf16.msra.mxu0 0
    %8839 = vmatprep.subr.bf16.mxu0 0
    %8840 = vmatpush1.bf16.msra.mxu0 0
    %8841 = vmatprep.subr.bf16.mxu0 0
    %8842 = vmatpush1.bf16.msra.mxu0 0
    %8843 = vmatprep.subr.bf16.mxu0 0
    %8844 = vmatpush1.bf16.msra.mxu0 0
    %8845 = vmatprep.mubr.bf16.mxu0 0
    %8846 = vmatmul.mubr.bf16.gmra.mrb[0].mxu0 %v8811
    %v8847 = vpop.f32.mrb[0].mxu0
    %v8848 = vadd.f32 0.0, %v8847
    %v8849 = vpop.f32.mrb[0].mxu0
    %v8850 = vpop.f32.mrb[0].mxu0
    %v8851 = vpop.f32.mrb[0].mxu0
    %8852 = vdwg.mxu0
    %v8853 = vpack.c.bf16 %v8848, %v8848
    %v8855 = vsel %vm3898, %v8853, 0
    %8857 = vmatprep.subr.bf16.mxu0 0
    %8858 = vmatpush1.bf16.msra.mxu0 %v8083
    %8859 = vmatprep.subr.bf16.mxu0 0
    %8860 = vmatpush1.bf16.msra.mxu0 %v8084
    %8861 = vmatprep.subr.bf16.mxu0 0
    %8862 = vmatpush1.bf16.msra.mxu0 0
    %8863 = vmatprep.subr.bf16.mxu0 0
    %8864 = vmatpush1.bf16.msra.mxu0 0
    %8865 = vmatprep.subr.bf16.mxu0 0
    %8866 = vmatpush1.bf16.msra.mxu0 0
    %8867 = vmatprep.subr.bf16.mxu0 0
    %8868 = vmatpush1.bf16.msra.mxu0 0
    %8869 = vmatprep.subr.bf16.mxu0 0
    %8870 = vmatpush1.bf16.msra.mxu0 0
    %8871 = vmatprep.subr.bf16.mxu0 0
    %8872 = vmatpush1.bf16.msra.mxu0 0
    %8873 = vmatprep.subr.bf16.mxu0 0
    %8874 = vmatpush1.bf16.msra.mxu0 0
    %8875 = vmatprep.subr.bf16.mxu0 0
    %8876 = vmatpush1.bf16.msra.mxu0 0
    %8877 = vmatprep.subr.bf16.mxu0 0
    %8878 = vmatpush1.bf16.msra.mxu0 0
    %8879 = vmatprep.subr.bf16.mxu0 0
    %8880 = vmatpush1.bf16.msra.mxu0 0
    %8881 = vmatprep.subr.bf16.mxu0 0
    %8882 = vmatpush1.bf16.msra.mxu0 0
    %8883 = vmatprep.subr.bf16.mxu0 0
    %8884 = vmatpush1.bf16.msra.mxu0 0
    %8885 = vmatprep.subr.bf16.mxu0 0
    %8886 = vmatpush1.bf16.msra.mxu0 0
    %8887 = vmatprep.subr.bf16.mxu0 0
    %8888 = vmatpush1.bf16.msra.mxu0 0
    %8889 = vmatprep.mubr.bf16.mxu0 0
    %8890 = vmatmul.mubr.bf16.gmra.mrb[0].mxu0 %v8855
    %v8891 = vpop.f32.mrb[0].mxu0
    %v8892 = vadd.f32 0.0, %v8891
    %v8893 = vpop.f32.mrb[0].mxu0
    %v8894 = vpop.f32.mrb[0].mxu0
    %v8895 = vpop.f32.mrb[0].mxu0
    %8896 = vdwg.mxu0
    %v8897 = vadd.f32 %v8807, %v8892
    %v8898 = vsel %vm3898, %v8897, 0.0
    %v8899 = vrot.slane %v8898, 4
    %v8900 = vadd.f32 %v8898, %v8899
    %v8901 = vrot.slane %v8900, 2
    %v8902 = vadd.f32 %v8900, %v8901
    %v8903 = vrot.slane %v8902, 1
    %v8904 = vadd.f32 %v8902, %v8903
    %v8905 = vrcp.pop 8.0
    %v8906 = vmul.f32 %v8904, %v8905
    %v8907 = vsub.f32 %v8897, %v8906
    %v8908 = vmul.f32 %v8907, %v8907
    %v8909 = vsel %vm3898, %v8908, 0.0
    %v8910 = vrot.slane %v8909, 4
    %v8911 = vadd.f32 %v8909, %v8910
    %v8912 = vrot.slane %v8911, 2
    %v8913 = vadd.f32 %v8911, %v8912
    %v8914 = vrot.slane %v8913, 1
    %v8915 = vadd.f32 %v8913, %v8914
    %v8916 = vmul.f32 %v8915, %v8905
    %v8917 = vadd.f32 %v8916, 1e-05
    %v8918 = vrsqrt.pop %v8917
    %v8919 = vmul.f32 %v3264, %v8918
    %v8920 = vmul.f32 %v8906, %v8919
    %v8921 = vsub.f32 %v3265, %v8920
    %v8922 = vlaneseq
    %v8923 = vshrl.u32 %v8922, 7
    %v8924 = vsub.s32 3, %v8923
    %v8925 = vrot.slane %v8919, %v8924
    %v8926 = vmul.f32 %v8897, %v8925
    %v8927 = vlaneseq
    %v8928 = vshrl.u32 %v8927, 7
    %v8929 = vsub.s32 3, %v8928
    %v8930 = vrot.slane %v8921, %v8929
    %v8931 = vadd.f32 %v8926, %v8930
    %v8933 = vrot.slane %v8931, 2
    %v8935 = vmax.f32 %v8931, %v8933
    %v8937 = vrot.slane %v8935, 4
    %v8939 = vmax.f32 %v8935, %v8937
    %v8940 = vmax.f32 %v8939, 0.0
    %vm8941 = vcmask 254976
    %8942 = vst.msk [vmem:[#allocation22] sm:$0x3] %vm8941, %v8940
    %v8943 = vpack.c.bf16 %v8940, %v8940
    %v8944 = vld [vmem:[%s9] sm:$0xff]
    %v8945 = vld [vmem:[%s9 + $0x8] sm:$0xff]
    %v8946 = vld [vmem:[%s10] sm:$0x1]
    %v8948 = vlaneseq
    %v8949 = vshrl.u32 %v8948, 7
    %v8950 = vsub.s32 0, %v8949
    %v8951 = vrot.slane %v8946, %v8950
    %v8954 = vsel %vm3898, %v8943, 0
    %8956 = vmatprep.subr.bf16.mxu0 0
    %8957 = vmatpush1.bf16.msra.mxu0 %v8944
    %8958 = vmatprep.subr.bf16.mxu0 0
    %8959 = vmatpush1.bf16.msra.mxu0 %v8945
    %8960 = vmatprep.subr.bf16.mxu0 0
    %8961 = vmatpush1.bf16.msra.mxu0 0
    %8962 = vmatprep.subr.bf16.mxu0 0
    %8963 = vmatpush1.bf16.msra.mxu0 0
    %8964 = vmatprep.subr.bf16.mxu0 0
    %8965 = vmatpush1.bf16.msra.mxu0 0
    %8966 = vmatprep.subr.bf16.mxu0 0
    %8967 = vmatpush1.bf16.msra.mxu0 0
    %8968 = vmatprep.subr.bf16.mxu0 0
    %8969 = vmatpush1.bf16.msra.mxu0 0
    %8970 = vmatprep.subr.bf16.mxu0 0
    %8971 = vmatpush1.bf16.msra.mxu0 0
    %8972 = vmatprep.subr.bf16.mxu0 0
    %8973 = vmatpush1.bf16.msra.mxu0 0
    %8974 = vmatprep.subr.bf16.mxu0 0
    %8975 = vmatpush1.bf16.msra.mxu0 0
    %8976 = vmatprep.subr.bf16.mxu0 0
    %8977 = vmatpush1.bf16.msra.mxu0 0
    %8978 = vmatprep.subr.bf16.mxu0 0
    %8979 = vmatpush1.bf16.msra.mxu0 0
    %8980 = vmatprep.subr.bf16.mxu0 0
    %8981 = vmatpush1.bf16.msra.mxu0 0
    %8982 = vmatprep.subr.bf16.mxu0 0
    %8983 = vmatpush1.bf16.msra.mxu0 0
    %8984 = vmatprep.subr.bf16.mxu0 0
    %8985 = vmatpush1.bf16.msra.mxu0 0
    %8986 = vmatprep.subr.bf16.mxu0 0
    %8987 = vmatpush1.bf16.msra.mxu0 0
    %8988 = vmatprep.mubr.bf16.mxu0 0
    %8989 = vmatmul.mubr.bf16.gmra.mrb[0].mxu0 %v8954
    %v8990 = vpop.f32.mrb[0].mxu0
    %v8991 = vadd.f32 %v8951, %v8990
    %v8992 = vpop.f32.mrb[0].mxu0
    %v8993 = vpop.f32.mrb[0].mxu0
    %v8994 = vpop.f32.mrb[0].mxu0
    %8995 = vdwg.mxu0
    %vm8996 = vcmask 33792
    %8997 = vst.msk [vmem:[#allocation24] sm:$0x3] %vm8996, %v8991
    // Predicated region
    $region62: #{net4cnn_forward.2} parent=1 // pred_check
      _
    $region63: #{net4cnn_forward.2} parent=1 // pred_check_branch
      %8999 = sbr.rel (0) target = $region65
    $region64: #{net4cnn_forward.2} parent=1 // pred_region
      %s9001 = ssub.s32 32, 32
      %9002 = vsyncadd [#allocation23], %s9001
      %s9004 = sshll.u32 [#allocation22], 4
      %s9005 = int_to_ptr.vmem [resolvable:$true] %s9004
      %9007 = dma.vmem_to_hbm [thread:$0]  %s9005, 32, %s16, [#allocation23]
    $region65: #{net4cnn_forward.2} parent=1 // pred_fallthru
      _
    // Predicated region
    $region66: #{net4cnn_forward.2} parent=1 // pred_check
      _
    $region67: #{net4cnn_forward.2} parent=1 // pred_check_branch
      %9009 = sbr.rel (0) target = $region69
    $region68: #{net4cnn_forward.2} parent=1 // pred_region
      %s9011 = ssub.s32 32, 32
      %9012 = vsyncadd [#allocation25], %s9011
      %s9014 = sshll.u32 [#allocation24], 4
      %s9015 = int_to_ptr.vmem [resolvable:$true] %s9014
      %9017 = dma.vmem_to_hbm [thread:$0]  %s9015, 32, %s17, [#allocation25]
    $region69: #{net4cnn_forward.2} parent=1 // pred_fallthru
      _
    // Predicated region
    $region70: #{net4cnn_forward.2} parent=1 // pred_check
      _
    $region71: #{net4cnn_forward.2} parent=1 // pred_check_branch
      %9019 = sbr.rel (0) target = $region73
    $region72: #{net4cnn_forward.2} parent=1 // pred_region
      %9020 = dma.done [#allocation23], 32
    $region73: #{net4cnn_forward.2} parent=1 // pred_fallthru
      _
    // Predicated region
    $region74: #{net4cnn_forward.2} parent=1 // pred_check
      _
    $region75: #{net4cnn_forward.2} parent=1 // pred_check_branch
      %9022 = sbr.rel (0) target = $region77
    $region76: #{net4cnn_forward.2} parent=1 // pred_region
      %9023 = dma.done [#allocation25], 32
    $region77: #{net4cnn_forward.2} parent=1 // pred_fallthru
      _
    %9024 = vsyncpa [#allocation23], 1
    %9025 = vsyncpa [#allocation25], 1

</llo_original>
